<compile_context>
chip_gen: v5e
topology: v5e:2x2
jax: 0.10.0
libtpu: 0.0.40
codegen_flags: <defaults>
</compile_context>

<pallas_src>
import functools

import jax
import jax.numpy as jnp
from jax.experimental import pallas as pl
from jax.experimental.pallas import tpu as pltpu


def _round_up(x, m):
    return (x + m - 1) // m * m


# ----------------------------------------------------------------------------
# Pallas kernel: ResnetPointnet forward for bB point clouds per grid step
# ----------------------------------------------------------------------------
def resnet_pointnet_kernel(
    p_ref,          # (bB*T, 8)    f32   points (clouds consecutive, cols 3..7 zero)
    fcpos_w_ref,    # (3, 2Hp)     f32   fc_pos weight (halves padded separately)
    fcpos_b_ref,    # (1, 2Hp)     f32
    blk0_w0_ref,    # (2Hp, Hp)    cdt   block-0 fc_0 weight (fused K = 2Hp)
    blk0_b0_ref,    # (1, Hp)      f32
    blk0_w1_ref,    # (Hp, Hp)     cdt
    blk0_b1_ref,    # (1, Hp)      f32
    blk0_sc_ref,    # (2Hp, Hp)    cdt   block-0 shortcut weight (fused K = 2Hp)
    blk_w0a_ref,    # (4, Hp, Hp)  cdt   blocks 1..4 fc_0 weight rows [0:H]   (net half)
    blk_w0b_ref,    # (4, Hp, Hp)  cdt   blocks 1..4 fc_0 weight rows [H:2H]  (pooled half)
    blk_b0_ref,     # (4, 1, Hp)   f32
    blk_w1_ref,     # (4, Hp, Hp)  cdt
    blk_b1_ref,     # (4, 1, Hp)   f32
    blk_sca_ref,    # (4, Hp, Hp)  cdt   shortcut rows [0:H]
    blk_scb_ref,    # (4, Hp, Hp)  cdt   shortcut rows [H:2H]
    fcc_w_ref,      # (Hp, Dp)     cdt
    fcc_b_ref,      # (1, Dp)      f32
    out_ref,        # (1, bB, Dp)  f32
    *,
    clouds,         # bB  (static)
    point_count,    # T   (static)
):
    bB, T = clouds, point_count
    M = bB * T
    Hp = blk0_w1_ref.shape[0]
    cdt = blk0_w0_ref.dtype          # MXU compute dtype (bf16)
    f32 = jnp.float32

    def mm(a, w):                    # MXU matmul, f32 accumulation
        return jnp.dot(a, w, preferred_element_type=f32)

    def relu(x):
        return jnp.maximum(x, 0.0)

    # ---- fc_pos on the VPU (K=3 is far below MXU tile depth) ------------------
    p = p_ref[...]                                                   # (M, 8)
    wp = fcpos_w_ref[...]
    net2 = (p[:, 0:1] * wp[0:1, :]
            + p[:, 1:2] * wp[1:2, :]
            + p[:, 2:3] * wp[2:3, :]
            + fcpos_b_ref[...])                                      # (M, 2Hp) f32

    # ---- block 0: fused K = 2Hp matmuls ---------------------------------------
    net2_c = net2.astype(cdt)
    nh = mm(relu(net2_c), blk0_w0_ref[...]) + blk0_b0_ref[...]       # (M, Hp)
    dx = mm(relu(nh).astype(cdt), blk0_w1_ref[...]) + blk0_b1_ref[...]
    net = mm(net2_c, blk0_sc_ref[...]) + dx                          # (M, Hp) f32

    # ---- blocks 1..4: concat([net, broadcast(pool(net))]) folded as a K-split,
    #      pooled half batched over all bB clouds at once -----------------------
    for i in range(4):
        w0a, w0b = blk_w0a_ref[i], blk_w0b_ref[i]
        sca, scb = blk_sca_ref[i], blk_scb_ref[i]
        w1 = blk_w1_ref[i]
        b0, b1 = blk_b0_ref[i], blk_b1_ref[i]

        pooled = jnp.max(net.reshape(bB, T, Hp), axis=1)             # (bB, Hp) f32
        net_c = net.astype(cdt)                                      # cast once
        pooled_c = pooled.astype(cdt)

        nh_pool = mm(relu(pooled_c), w0b) + b0                       # (bB, Hp)
        nh = (mm(relu(net_c), w0a).reshape(bB, T, Hp)
              + nh_pool[:, None, :]).reshape(M, Hp)                  # (M, Hp)

        xs_pool = mm(pooled_c, scb) + b1                             # (bB, Hp), b1 folded
        xs = (mm(net_c, sca).reshape(bB, T, Hp)
              + xs_pool[:, None, :]).reshape(M, Hp)                  # (M, Hp)

        net = xs + mm(relu(nh).astype(cdt), w1)                      # (M, Hp)

    # ---- final pool over each cloud + fc_c(relu(.)) ---------------------------
    pooled = jnp.max(net.reshape(bB, T, Hp), axis=1)                 # (bB, Hp)
    c = mm(relu(pooled).astype(cdt), fcc_w_ref[...]) + fcc_b_ref[...]
    out_ref[0] = c                                                   # (bB, Dp)


# ----------------------------------------------------------------------------
# Parameter preparation: split/fuse concat halves, zero-pad to lane-dense dims
# ----------------------------------------------------------------------------
def prepare_params(params, compute_dtype=jnp.bfloat16):
    H, D = params["fcc_w"].shape
    Hp, Dp = _round_up(H, 128), _round_up(D, 128)
    f32 = jnp.float32
    cdt = compute_dtype

    def pad(x, shape):
        return jnp.pad(x, [(0, s - d) for d, s in zip(x.shape, shape)])

    def split_cols(w):  # (..., 2H) -> (..., 2Hp), halves padded separately
        return jnp.concatenate(
            [pad(w[..., :H], w.shape[:-1] + (Hp,)),
             pad(w[..., H:], w.shape[:-1] + (Hp,))], axis=-1)

    def split_rows(w):  # (2H, H) -> (2Hp, Hp), halves padded separately
        return jnp.concatenate(
            [pad(w[:H], (Hp, Hp)), pad(w[H:], (Hp, Hp))], axis=0)

    fc0_w, fc0_b = params["blk_fc0_w"], params["blk_fc0_b"]
    fc1_w, fc1_b = params["blk_fc1_w"], params["blk_fc1_b"]
    sc_w = params["blk_sc_w"]

    kp = {
        "fcpos_w": split_cols(params["fcpos_w"].astype(f32)),            # (3, 2Hp)
        "fcpos_b": split_cols(params["fcpos_b"][None, :].astype(f32)),   # (1, 2Hp)
        # block 0: fused K = 2Hp weights
        "blk0_w0": split_rows(fc0_w[0]).astype(cdt),                     # (2Hp, Hp)
        "blk0_b0": pad(fc0_b[0][None, :].astype(f32), (1, Hp)),
        "blk0_w1": pad(fc1_w[0], (Hp, Hp)).astype(cdt),
        "blk0_b1": pad(fc1_b[0][None, :].astype(f32), (1, Hp)),
        "blk0_sc": split_rows(sc_w[0]).astype(cdt),                      # (2Hp, Hp)
        # blocks 1..4: K-split (net half / pooled half)
        "blk_w0a": pad(fc0_w[1:, :H, :], (4, Hp, Hp)).astype(cdt),
        "blk_w0b": pad(fc0_w[1:, H:, :], (4, Hp, Hp)).astype(cdt),
        "blk_b0": pad(fc0_b[1:, None, :].astype(f32), (4, 1, Hp)),
        "blk_w1": pad(fc1_w[1:], (4, Hp, Hp)).astype(cdt),
        "blk_b1": pad(fc1_b[1:, None, :].astype(f32), (4, 1, Hp)),
        "blk_sca": pad(sc_w[1:, :H, :], (4, Hp, Hp)).astype(cdt),
        "blk_scb": pad(sc_w[1:, H:, :], (4, Hp, Hp)).astype(cdt),
        "fcc_w": pad(params["fcc_w"], (Hp, Dp)).astype(cdt),
        "fcc_b": pad(params["fcc_b"][None, :].astype(f32), (1, Dp)),
    }
    return kp, H, D, Hp, Dp


_WEIGHT_ORDER = ("fcpos_w", "fcpos_b",
                 "blk0_w0", "blk0_b0", "blk0_w1", "blk0_b1", "blk0_sc",
                 "blk_w0a", "blk_w0b", "blk_b0", "blk_w1", "blk_b1",
                 "blk_sca", "blk_scb", "fcc_w", "fcc_b")


# ----------------------------------------------------------------------------
# Wrapper
# ----------------------------------------------------------------------------
def resnet_pointnet(p, params, *, compute_dtype=jnp.bfloat16, block_batch=None):
    """Pallas forward pass.  p: (B, T, 3) -> (B, out_dim) float32."""
    B, T, dim = p.shape
    assert dim == 3
    p = p.astype(jnp.float32)
    kp, H, D, Hp, Dp = prepare_params(params, compute_dtype)

    # Pad the point axis to a multiple of 8 by repeating the first point
    # (duplicate points do not change the max-pool, so results are unchanged).
    Tp = _round_up(T, 8)
    if Tp != T:
        p = jnp.concatenate(
            [p, jnp.broadcast_to(p[:, :1, :], (B, Tp - T, 3))], axis=1)

    # Clouds per grid step: target ~1024 MXU rows per step, keep >= 2 grid
    # steps (v7x megacore), prefer a multiple of 8 (sublane-aligned output).
    if block_batch is None:
        bB = max(1, min(B, pl.cdiv(1024, Tp)))
        if B >= 2:
            bB = min(bB, max(1, B // 2))     # G >= 2 so both v7x TCs get work
        if bB >= 8:
            bB = (bB // 8) * 8
    else:
        bB = int(block_batch)
    Bp = _round_up(B, bB)
    if Bp != B:
        p = jnp.pad(p, ((0, Bp - B), (0, 0), (0, 0)))
    G = Bp // bB

    # Flatten to a clean 2-D point slab; pad minor dim 3 -> 8 (denser DMA rows).
    p_flat = jnp.pad(p.reshape(Bp * Tp, 3), ((0, 0), (0, 5)))

    # Advisory cost estimate for XLA scheduling around the custom call.
    M_total, H2p = Bp * Tp, 2 * Hp
    flops = (2 * M_total * 3 * H2p                       # fc_pos
             + 2 * M_total * H2p * Hp * 2                # block-0 fc_0 + shortcut
             + 2 * M_total * Hp * Hp                     # block-0 fc_1
             + 4 * (2 * M_total * Hp * Hp * 3            # blocks 1..4 big matmuls
                    + 2 * Bp * Hp * Hp * 2)              # blocks 1..4 pooled matmuls
             + 2 * Bp * Hp * Dp)                         # fc_c
    bytes_accessed = int(p_flat.size * 4 + Bp * Dp * 4
                         + sum(int(v.size) * v.dtype.itemsize for v in kp.values()))

    def wspec(name):
        nd = kp[name].ndim
        return pl.BlockSpec(kp[name].shape, lambda b, _n=nd: (0,) * _n)

    kernel = functools.partial(resnet_pointnet_kernel, clouds=bB, point_count=Tp)

    out = pl.pallas_call(
        kernel,
        out_shape=jax.ShapeDtypeStruct((G, bB, Dp), jnp.float32),
        grid=(G,),
        in_specs=[pl.BlockSpec((bB * Tp, 8), lambda b: (b, 0))]
                 + [wspec(n) for n in _WEIGHT_ORDER],
        out_specs=pl.BlockSpec((1, bB, Dp), lambda b: (b, 0, 0)),
        compiler_params=pltpu.CompilerParams(
            dimension_semantics=("parallel",)),          # batch steps independent
        cost_estimate=pl.CostEstimate(flops=int(flops), transcendentals=0,
                                      bytes_accessed=bytes_accessed),
    )(p_flat, *(kp[n] for n in _WEIGHT_ORDER))

    return out.reshape(Bp, Dp)[:B, :D]


# ----------------------------------------------------------------------------
# Deterministic parameter init (mirrors the torch module's shapes / zero-init)
# ----------------------------------------------------------------------------
def init_params(key, hidden_dim, out_dim, dtype=jnp.float32):
    H, H2 = hidden_dim, 2 * hidden_dim
    ks = jax.random.split(key, 8)

    def u(k, fan_in, shape):
        bound = 1.0 / (fan_in ** 0.5)
        return jax.random.uniform(k, shape, dtype, -bound, bound)

    return {
        "fcpos_w": u(ks[0], 3, (3, H2)),
        "fcpos_b": u(ks[1], 3, (H2,)),
        "blk_fc0_w": u(ks[2], H2, (5, H2, H)),
        "blk_fc0_b": u(ks[3], H2, (5, H)),
        "blk_fc1_w": jnp.zeros((5, H, H), dtype),   # torch zero-inits fc_1.weight
        "blk_fc1_b": u(ks[4], H, (5, H)),
        "blk_sc_w": u(ks[5], H2, (5, H2, H)),
        "fcc_w": u(ks[6], H, (H, out_dim)),
        "fcc_b": u(ks[7], H, (out_dim,)),
    }


# ----------------------------------------------------------------------------
# Pure-JAX reference with the PyTorch module's structure (concat form).
# compute_dtype controls only the matmul-input precision (f32 accumulation).
# ----------------------------------------------------------------------------
def resnet_pointnet_reference(p, params, compute_dtype=jnp.float32):
    relu = jax.nn.relu

    def mm(a, w):
        return jnp.dot(a.astype(compute_dtype), w.astype(compute_dtype),
                       preferred_element_type=jnp.float32)

    def block(x, i):
        nh = mm(relu(x), params["blk_fc0_w"][i]) + params["blk_fc0_b"][i]
        dx = mm(relu(nh), params["blk_fc1_w"][i]) + params["blk_fc1_b"][i]
        return mm(x, params["blk_sc_w"][i]) + dx

    net = jnp.einsum("btd,dk->btk", p, params["fcpos_w"]) + params["fcpos_b"]
    net = block(net, 0)
    for i in range(1, 5):
        pooled = jnp.max(net, axis=1, keepdims=True)
        net = jnp.concatenate([net, jnp.broadcast_to(pooled, net.shape)], axis=-1)
        net = block(net, i)
    pooled = jnp.max(net, axis=1)
    return mm(relu(pooled), params["fcc_w"]) + params["fcc_b"]


if __name__ == "__main__":
    B, T = 8, 64          # 8 point clouds, 64 points each
    hidden_dim = 32       # H  (feature widths 64 / 32 before lane padding)
    out_dim = 16          # latent code dimension

    key = jax.random.PRNGKey(0)
    k_p, k_w, k_fc1, k_p2 = jax.random.split(key, 4)
    p = jax.random.normal(k_p, (B, T, 3), dtype=jnp.float32)
    params = init_params(k_w, hidden_dim, out_dim)

    c = jax.block_until_ready(resnet_pointnet(p, params))
    assert c.shape == (B, out_dim)

    # Tight check vs a reference using the same bf16 matmul precision.
    c_bf = resnet_pointnet_reference(p, params, compute_dtype=jnp.bfloat16)
    assert jnp.allclose(c, c_bf, atol=1e-2, rtol=1e-2), (
        f"bf16-matched max abs err {jnp.max(jnp.abs(c - c_bf))}")

    # Loose sanity check vs the full-f32 module semantics.
    c_f32 = resnet_pointnet_reference(p, params, compute_dtype=jnp.float32)
    assert jnp.allclose(c, c_f32, atol=6e-2, rtol=6e-2), (
        f"f32 max abs err {jnp.max(jnp.abs(c - c_f32))}")

    # The module zero-inits fc_1.weight, which would mask bugs in the fc_0/fc_1
    # path; re-check with non-zero fc_1 weights so that path is exercised too.
    params2 = dict(params)
    params2["blk_fc1_w"] = 0.1 * jax.random.normal(
        k_fc1, params["blk_fc1_w"].shape, jnp.float32)
    c2 = jax.block_until_ready(resnet_pointnet(p, params2))
    c2_bf = resnet_pointnet_reference(p, params2, compute_dtype=jnp.bfloat16)
    assert jnp.allclose(c2, c2_bf, atol=1e-2, rtol=1e-2), (
        f"bf16-matched (nonzero fc_1) max abs err {jnp.max(jnp.abs(c2 - c2_bf))}")

    # Ragged shapes: T not a multiple of 8, odd block_batch from the heuristic.
    B3, T3 = 6, 50
    p3 = jax.random.normal(k_p2, (B3, T3, 3), dtype=jnp.float32)
    c3 = jax.block_until_ready(resnet_pointnet(p3, params2))
    c3_bf = resnet_pointnet_reference(p3, params2, compute_dtype=jnp.bfloat16)
    assert c3.shape == (B3, out_dim)
    assert jnp.allclose(c3, c3_bf, atol=1e-2, rtol=1e-2), (
        f"bf16-matched (ragged) max abs err {jnp.max(jnp.abs(c3 - c3_bf))}")

    print("KERNEL_OK")
</pallas_src>

<mosaic_0001>
module attributes {stable_mosaic.version = 11 : i64} {
  func.func @resnet_pointnet_kernel(%arg0: i32, %arg1: memref<256x8xf32, #tpu.memory_space<vmem>>, %arg2: memref<3x256xf32, #tpu.memory_space<vmem>>, %arg3: memref<1x256xf32, #tpu.memory_space<vmem>>, %arg4: memref<256x128xbf16, #tpu.memory_space<vmem>>, %arg5: memref<1x128xf32, #tpu.memory_space<vmem>>, %arg6: memref<128x128xbf16, #tpu.memory_space<vmem>>, %arg7: memref<1x128xf32, #tpu.memory_space<vmem>>, %arg8: memref<256x128xbf16, #tpu.memory_space<vmem>>, %arg9: memref<4x128x128xbf16, #tpu.memory_space<vmem>>, %arg10: memref<4x128x128xbf16, #tpu.memory_space<vmem>>, %arg11: memref<4x1x128xf32, #tpu.memory_space<vmem>>, %arg12: memref<4x128x128xbf16, #tpu.memory_space<vmem>>, %arg13: memref<4x1x128xf32, #tpu.memory_space<vmem>>, %arg14: memref<4x128x128xbf16, #tpu.memory_space<vmem>>, %arg15: memref<4x128x128xbf16, #tpu.memory_space<vmem>>, %arg16: memref<128x128xbf16, #tpu.memory_space<vmem>>, %arg17: memref<1x128xf32, #tpu.memory_space<vmem>>, %arg18: memref<1x4x128xf32, #tpu.memory_space<vmem>>) attributes {dimension_semantics = [#tpu.dimension_semantics<parallel>], iteration_bounds = array<i64: 2>, scalar_prefetch = 0 : i64, scratch_operands = 0 : i64, tpu.core_type = #tpu.core_type<tc>, window_params = [{transform_indices = @transform_0, window_bounds = array<i64: 256, 8>}, {pipeline_mode = #tpu.pipeline_mode<synchronous>, transform_indices = @transform_1, window_bounds = array<i64: 3, 256>}, {pipeline_mode = #tpu.pipeline_mode<synchronous>, transform_indices = @transform_2, window_bounds = array<i64: 1, 256>}, {pipeline_mode = #tpu.pipeline_mode<synchronous>, transform_indices = @transform_3, window_bounds = array<i64: 256, 128>}, {pipeline_mode = #tpu.pipeline_mode<synchronous>, transform_indices = @transform_4, window_bounds = array<i64: 1, 128>}, {pipeline_mode = #tpu.pipeline_mode<synchronous>, transform_indices = @transform_5, window_bounds = array<i64: 128, 128>}, {pipeline_mode = #tpu.pipeline_mode<synchronous>, transform_indices = @transform_6, window_bounds = array<i64: 1, 128>}, {pipeline_mode = #tpu.pipeline_mode<synchronous>, transform_indices = @transform_7, window_bounds = array<i64: 256, 128>}, {pipeline_mode = #tpu.pipeline_mode<synchronous>, transform_indices = @transform_8, window_bounds = array<i64: 4, 128, 128>}, {pipeline_mode = #tpu.pipeline_mode<synchronous>, transform_indices = @transform_9, window_bounds = array<i64: 4, 128, 128>}, {pipeline_mode = #tpu.pipeline_mode<synchronous>, transform_indices = @transform_10, window_bounds = array<i64: 4, 1, 128>}, {pipeline_mode = #tpu.pipeline_mode<synchronous>, transform_indices = @transform_11, window_bounds = array<i64: 4, 128, 128>}, {pipeline_mode = #tpu.pipeline_mode<synchronous>, transform_indices = @transform_12, window_bounds = array<i64: 4, 1, 128>}, {pipeline_mode = #tpu.pipeline_mode<synchronous>, transform_indices = @transform_13, window_bounds = array<i64: 4, 128, 128>}, {pipeline_mode = #tpu.pipeline_mode<synchronous>, transform_indices = @transform_14, window_bounds = array<i64: 4, 128, 128>}, {pipeline_mode = #tpu.pipeline_mode<synchronous>, transform_indices = @transform_15, window_bounds = array<i64: 128, 128>}, {pipeline_mode = #tpu.pipeline_mode<synchronous>, transform_indices = @transform_16, window_bounds = array<i64: 1, 128>}, {transform_indices = @transform_17, window_bounds = array<i64: 1, 4, 128>}]} {
    %c0 = arith.constant 0 : index
    %c0_0 = arith.constant 0 : index
    %0 = vector.load %arg1[%c0, %c0_0] : memref<256x8xf32, #tpu.memory_space<vmem>>, vector<256x8xf32>
    %c0_1 = arith.constant 0 : index
    %c0_2 = arith.constant 0 : index
    %1 = vector.load %arg2[%c0_1, %c0_2] : memref<3x256xf32, #tpu.memory_space<vmem>>, vector<3x256xf32>
    %2 = vector.extract_strided_slice %0 {offsets = [0, 0], sizes = [256, 1], strides = [1, 1]} : vector<256x8xf32> to vector<256x1xf32>
    %3 = vector.extract_strided_slice %1 {offsets = [0, 0], sizes = [1, 256], strides = [1, 1]} : vector<3x256xf32> to vector<1x256xf32>
    %4 = vector.broadcast %2 : vector<256x1xf32> to vector<256x256xf32>
    %5 = vector.broadcast %3 : vector<1x256xf32> to vector<256x256xf32>
    %6 = arith.mulf %4, %5 : vector<256x256xf32>
    %7 = vector.extract_strided_slice %0 {offsets = [0, 1], sizes = [256, 1], strides = [1, 1]} : vector<256x8xf32> to vector<256x1xf32>
    %8 = vector.extract_strided_slice %1 {offsets = [1, 0], sizes = [1, 256], strides = [1, 1]} : vector<3x256xf32> to vector<1x256xf32>
    %9 = vector.broadcast %7 : vector<256x1xf32> to vector<256x256xf32>
    %10 = vector.broadcast %8 : vector<1x256xf32> to vector<256x256xf32>
    %11 = arith.mulf %9, %10 : vector<256x256xf32>
    %12 = arith.addf %6, %11 : vector<256x256xf32>
    %13 = vector.extract_strided_slice %0 {offsets = [0, 2], sizes = [256, 1], strides = [1, 1]} : vector<256x8xf32> to vector<256x1xf32>
    %14 = vector.extract_strided_slice %1 {offsets = [2, 0], sizes = [1, 256], strides = [1, 1]} : vector<3x256xf32> to vector<1x256xf32>
    %15 = vector.broadcast %13 : vector<256x1xf32> to vector<256x256xf32>
    %16 = vector.broadcast %14 : vector<1x256xf32> to vector<256x256xf32>
    %17 = arith.mulf %15, %16 : vector<256x256xf32>
    %18 = arith.addf %12, %17 : vector<256x256xf32>
    %c0_3 = arith.constant 0 : index
    %c0_4 = arith.constant 0 : index
    %19 = vector.load %arg3[%c0_3, %c0_4] : memref<1x256xf32, #tpu.memory_space<vmem>>, vector<1x256xf32>
    %20 = vector.broadcast %19 : vector<1x256xf32> to vector<256x256xf32>
    %21 = arith.addf %18, %20 : vector<256x256xf32>
    %22 = arith.truncf %21 : vector<256x256xf32> to vector<256x256xbf16>
    %cst = arith.constant 0.000000e+00 : bf16
    %23 = vector.broadcast %cst : bf16 to vector<256x256xbf16>
    %24 = arith.maximumf %22, %23 : vector<256x256xbf16>
    %c0_5 = arith.constant 0 : index
    %c0_6 = arith.constant 0 : index
    %25 = vector.load %arg4[%c0_5, %c0_6] : memref<256x128xbf16, #tpu.memory_space<vmem>>, vector<256x128xbf16>
    %cst_7 = arith.constant dense<0.000000e+00> : vector<256x128xf32>
    %26 = tpu.matmul %24, %25, %cst_7 {dimension_numbers = #tpu.dot_dimension_numbers<[1], [0], [0], [1], [0, 0, 1, 1], [], []>} : vector<256x256xbf16>, vector<256x128xbf16>, vector<256x128xf32> -> vector<256x128xf32>
    %c0_8 = arith.constant 0 : index
    %c0_9 = arith.constant 0 : index
    %27 = vector.load %arg5[%c0_8, %c0_9] : memref<1x128xf32, #tpu.memory_space<vmem>>, vector<1x128xf32>
    %28 = vector.broadcast %27 : vector<1x128xf32> to vector<256x128xf32>
    %29 = arith.addf %26, %28 : vector<256x128xf32>
    %cst_10 = arith.constant 0.000000e+00 : f32
    %30 = vector.broadcast %cst_10 : f32 to vector<256x128xf32>
    %31 = arith.maximumf %29, %30 : vector<256x128xf32>
    %32 = arith.truncf %31 : vector<256x128xf32> to vector<256x128xbf16>
    %c0_11 = arith.constant 0 : index
    %c0_12 = arith.constant 0 : index
    %33 = vector.load %arg6[%c0_11, %c0_12] : memref<128x128xbf16, #tpu.memory_space<vmem>>, vector<128x128xbf16>
    %cst_13 = arith.constant dense<0.000000e+00> : vector<256x128xf32>
    %34 = tpu.matmul %32, %33, %cst_13 {dimension_numbers = #tpu.dot_dimension_numbers<[1], [0], [0], [1], [0, 0, 1, 1], [], []>} : vector<256x128xbf16>, vector<128x128xbf16>, vector<256x128xf32> -> vector<256x128xf32>
    %c0_14 = arith.constant 0 : index
    %c0_15 = arith.constant 0 : index
    %35 = vector.load %arg7[%c0_14, %c0_15] : memref<1x128xf32, #tpu.memory_space<vmem>>, vector<1x128xf32>
    %36 = vector.broadcast %35 : vector<1x128xf32> to vector<256x128xf32>
    %37 = arith.addf %34, %36 : vector<256x128xf32>
    %c0_16 = arith.constant 0 : index
    %c0_17 = arith.constant 0 : index
    %38 = vector.load %arg8[%c0_16, %c0_17] : memref<256x128xbf16, #tpu.memory_space<vmem>>, vector<256x128xbf16>
    %cst_18 = arith.constant dense<0.000000e+00> : vector<256x128xf32>
    %39 = tpu.matmul %22, %38, %cst_18 {dimension_numbers = #tpu.dot_dimension_numbers<[1], [0], [0], [1], [0, 0, 1, 1], [], []>} : vector<256x256xbf16>, vector<256x128xbf16>, vector<256x128xf32> -> vector<256x128xf32>
    %40 = arith.addf %39, %37 : vector<256x128xf32>
    %c0_19 = arith.constant 0 : index
    %c0_20 = arith.constant 0 : index
    %c0_21 = arith.constant 0 : index
    %41 = vector.load %arg9[%c0_19, %c0_20, %c0_21] : memref<4x128x128xbf16, #tpu.memory_space<vmem>>, vector<1x128x128xbf16>
    %42 = vector.shape_cast %41 : vector<1x128x128xbf16> to vector<128x128xbf16>
    %c0_22 = arith.constant 0 : index
    %c0_23 = arith.constant 0 : index
    %c0_24 = arith.constant 0 : index
    %43 = vector.load %arg10[%c0_22, %c0_23, %c0_24] : memref<4x128x128xbf16, #tpu.memory_space<vmem>>, vector<1x128x128xbf16>
    %44 = vector.shape_cast %43 : vector<1x128x128xbf16> to vector<128x128xbf16>
    %c0_25 = arith.constant 0 : index
    %c0_26 = arith.constant 0 : index
    %c0_27 = arith.constant 0 : index
    %45 = vector.load %arg14[%c0_25, %c0_26, %c0_27] : memref<4x128x128xbf16, #tpu.memory_space<vmem>>, vector<1x128x128xbf16>
    %46 = vector.shape_cast %45 : vector<1x128x128xbf16> to vector<128x128xbf16>
    %c0_28 = arith.constant 0 : index
    %c0_29 = arith.constant 0 : index
    %c0_30 = arith.constant 0 : index
    %47 = vector.load %arg15[%c0_28, %c0_29, %c0_30] : memref<4x128x128xbf16, #tpu.memory_space<vmem>>, vector<1x128x128xbf16>
    %48 = vector.shape_cast %47 : vector<1x128x128xbf16> to vector<128x128xbf16>
    %c0_31 = arith.constant 0 : index
    %c0_32 = arith.constant 0 : index
    %c0_33 = arith.constant 0 : index
    %49 = vector.load %arg12[%c0_31, %c0_32, %c0_33] : memref<4x128x128xbf16, #tpu.memory_space<vmem>>, vector<1x128x128xbf16>
    %50 = vector.shape_cast %49 : vector<1x128x128xbf16> to vector<128x128xbf16>
    %c0_34 = arith.constant 0 : index
    %c0_35 = arith.constant 0 : index
    %c0_36 = arith.constant 0 : index
    %51 = vector.load %arg11[%c0_34, %c0_35, %c0_36] : memref<4x1x128xf32, #tpu.memory_space<vmem>>, vector<1x1x128xf32>
    %52 = vector.shape_cast %51 : vector<1x1x128xf32> to vector<1x128xf32>
    %c0_37 = arith.constant 0 : index
    %c0_38 = arith.constant 0 : index
    %c0_39 = arith.constant 0 : index
    %53 = vector.load %arg13[%c0_37, %c0_38, %c0_39] : memref<4x1x128xf32, #tpu.memory_space<vmem>>, vector<1x1x128xf32>
    %54 = vector.shape_cast %53 : vector<1x1x128xf32> to vector<1x128xf32>
    %55 = vector.shape_cast %40 : vector<256x128xf32> to vector<4x64x128xf32>
    %cst_40 = arith.constant dense<0xFF800000> : vector<4x128xf32>
    %56 = vector.multi_reduction <maximumf>, %55, %cst_40 [1] : vector<4x64x128xf32> to vector<4x128xf32>
    %57 = arith.truncf %40 : vector<256x128xf32> to vector<256x128xbf16>
    %58 = arith.truncf %56 : vector<4x128xf32> to vector<4x128xbf16>
    %cst_41 = arith.constant 0.000000e+00 : bf16
    %59 = vector.broadcast %cst_41 : bf16 to vector<4x128xbf16>
    %60 = arith.maximumf %58, %59 : vector<4x128xbf16>
    %cst_42 = arith.constant dense<0.000000e+00> : vector<4x128xf32>
    %61 = tpu.matmul %60, %44, %cst_42 {dimension_numbers = #tpu.dot_dimension_numbers<[1], [0], [0], [1], [0, 0, 1, 1], [], []>} : vector<4x128xbf16>, vector<128x128xbf16>, vector<4x128xf32> -> vector<4x128xf32>
    %62 = vector.broadcast %52 : vector<1x128xf32> to vector<4x128xf32>
    %63 = arith.addf %61, %62 : vector<4x128xf32>
    %cst_43 = arith.constant 0.000000e+00 : bf16
    %64 = vector.broadcast %cst_43 : bf16 to vector<256x128xbf16>
    %65 = arith.maximumf %57, %64 : vector<256x128xbf16>
    %cst_44 = arith.constant dense<0.000000e+00> : vector<256x128xf32>
    %66 = tpu.matmul %65, %42, %cst_44 {dimension_numbers = #tpu.dot_dimension_numbers<[1], [0], [0], [1], [0, 0, 1, 1], [], []>} : vector<256x128xbf16>, vector<128x128xbf16>, vector<256x128xf32> -> vector<256x128xf32>
    %67 = vector.shape_cast %66 : vector<256x128xf32> to vector<4x64x128xf32>
    %68 = vector.shape_cast %63 : vector<4x128xf32> to vector<4x1x128xf32>
    %69 = vector.broadcast %68 : vector<4x1x128xf32> to vector<4x64x128xf32>
    %70 = arith.addf %67, %69 : vector<4x64x128xf32>
    %71 = vector.shape_cast %70 : vector<4x64x128xf32> to vector<256x128xf32>
    %cst_45 = arith.constant dense<0.000000e+00> : vector<4x128xf32>
    %72 = tpu.matmul %58, %48, %cst_45 {dimension_numbers = #tpu.dot_dimension_numbers<[1], [0], [0], [1], [0, 0, 1, 1], [], []>} : vector<4x128xbf16>, vector<128x128xbf16>, vector<4x128xf32> -> vector<4x128xf32>
    %73 = vector.broadcast %54 : vector<1x128xf32> to vector<4x128xf32>
    %74 = arith.addf %72, %73 : vector<4x128xf32>
    %cst_46 = arith.constant dense<0.000000e+00> : vector<256x128xf32>
    %75 = tpu.matmul %57, %46, %cst_46 {dimension_numbers = #tpu.dot_dimension_numbers<[1], [0], [0], [1], [0, 0, 1, 1], [], []>} : vector<256x128xbf16>, vector<128x128xbf16>, vector<256x128xf32> -> vector<256x128xf32>
    %76 = vector.shape_cast %75 : vector<256x128xf32> to vector<4x64x128xf32>
    %77 = vector.shape_cast %74 : vector<4x128xf32> to vector<4x1x128xf32>
    %78 = vector.broadcast %77 : vector<4x1x128xf32> to vector<4x64x128xf32>
    %79 = arith.addf %76, %78 : vector<4x64x128xf32>
    %80 = vector.shape_cast %79 : vector<4x64x128xf32> to vector<256x128xf32>
    %cst_47 = arith.constant 0.000000e+00 : f32
    %81 = vector.broadcast %cst_47 : f32 to vector<256x128xf32>
    %82 = arith.maximumf %71, %81 : vector<256x128xf32>
    %83 = arith.truncf %82 : vector<256x128xf32> to vector<256x128xbf16>
    %cst_48 = arith.constant dense<0.000000e+00> : vector<256x128xf32>
    %84 = tpu.matmul %83, %50, %cst_48 {dimension_numbers = #tpu.dot_dimension_numbers<[1], [0], [0], [1], [0, 0, 1, 1], [], []>} : vector<256x128xbf16>, vector<128x128xbf16>, vector<256x128xf32> -> vector<256x128xf32>
    %85 = arith.addf %80, %84 : vector<256x128xf32>
    %c1 = arith.constant 1 : index
    %c0_49 = arith.constant 0 : index
    %c0_50 = arith.constant 0 : index
    %86 = vector.load %arg9[%c1, %c0_49, %c0_50] : memref<4x128x128xbf16, #tpu.memory_space<vmem>>, vector<1x128x128xbf16>
    %87 = vector.shape_cast %86 : vector<1x128x128xbf16> to vector<128x128xbf16>
    %c1_51 = arith.constant 1 : index
    %c0_52 = arith.constant 0 : index
    %c0_53 = arith.constant 0 : index
    %88 = vector.load %arg10[%c1_51, %c0_52, %c0_53] : memref<4x128x128xbf16, #tpu.memory_space<vmem>>, vector<1x128x128xbf16>
    %89 = vector.shape_cast %88 : vector<1x128x128xbf16> to vector<128x128xbf16>
    %c1_54 = arith.constant 1 : index
    %c0_55 = arith.constant 0 : index
    %c0_56 = arith.constant 0 : index
    %90 = vector.load %arg14[%c1_54, %c0_55, %c0_56] : memref<4x128x128xbf16, #tpu.memory_space<vmem>>, vector<1x128x128xbf16>
    %91 = vector.shape_cast %90 : vector<1x128x128xbf16> to vector<128x128xbf16>
    %c1_57 = arith.constant 1 : index
    %c0_58 = arith.constant 0 : index
    %c0_59 = arith.constant 0 : index
    %92 = vector.load %arg15[%c1_57, %c0_58, %c0_59] : memref<4x128x128xbf16, #tpu.memory_space<vmem>>, vector<1x128x128xbf16>
    %93 = vector.shape_cast %92 : vector<1x128x128xbf16> to vector<128x128xbf16>
    %c1_60 = arith.constant 1 : index
    %c0_61 = arith.constant 0 : index
    %c0_62 = arith.constant 0 : index
    %94 = vector.load %arg12[%c1_60, %c0_61, %c0_62] : memref<4x128x128xbf16, #tpu.memory_space<vmem>>, vector<1x128x128xbf16>
    %95 = vector.shape_cast %94 : vector<1x128x128xbf16> to vector<128x128xbf16>
    %c1_63 = arith.constant 1 : index
    %c0_64 = arith.constant 0 : index
    %c0_65 = arith.constant 0 : index
    %96 = vector.load %arg11[%c1_63, %c0_64, %c0_65] : memref<4x1x128xf32, #tpu.memory_space<vmem>>, vector<1x1x128xf32>
    %97 = vector.shape_cast %96 : vector<1x1x128xf32> to vector<1x128xf32>
    %c1_66 = arith.constant 1 : index
    %c0_67 = arith.constant 0 : index
    %c0_68 = arith.constant 0 : index
    %98 = vector.load %arg13[%c1_66, %c0_67, %c0_68] : memref<4x1x128xf32, #tpu.memory_space<vmem>>, vector<1x1x128xf32>
    %99 = vector.shape_cast %98 : vector<1x1x128xf32> to vector<1x128xf32>
    %100 = vector.shape_cast %85 : vector<256x128xf32> to vector<4x64x128xf32>
    %cst_69 = arith.constant dense<0xFF800000> : vector<4x128xf32>
    %101 = vector.multi_reduction <maximumf>, %100, %cst_69 [1] : vector<4x64x128xf32> to vector<4x128xf32>
    %102 = arith.truncf %85 : vector<256x128xf32> to vector<256x128xbf16>
    %103 = arith.truncf %101 : vector<4x128xf32> to vector<4x128xbf16>
    %cst_70 = arith.constant 0.000000e+00 : bf16
    %104 = vector.broadcast %cst_70 : bf16 to vector<4x128xbf16>
    %105 = arith.maximumf %103, %104 : vector<4x128xbf16>
    %cst_71 = arith.constant dense<0.000000e+00> : vector<4x128xf32>
    %106 = tpu.matmul %105, %89, %cst_71 {dimension_numbers = #tpu.dot_dimension_numbers<[1], [0], [0], [1], [0, 0, 1, 1], [], []>} : vector<4x128xbf16>, vector<128x128xbf16>, vector<4x128xf32> -> vector<4x128xf32>
    %107 = vector.broadcast %97 : vector<1x128xf32> to vector<4x128xf32>
    %108 = arith.addf %106, %107 : vector<4x128xf32>
    %cst_72 = arith.constant 0.000000e+00 : bf16
    %109 = vector.broadcast %cst_72 : bf16 to vector<256x128xbf16>
    %110 = arith.maximumf %102, %109 : vector<256x128xbf16>
    %cst_73 = arith.constant dense<0.000000e+00> : vector<256x128xf32>
    %111 = tpu.matmul %110, %87, %cst_73 {dimension_numbers = #tpu.dot_dimension_numbers<[1], [0], [0], [1], [0, 0, 1, 1], [], []>} : vector<256x128xbf16>, vector<128x128xbf16>, vector<256x128xf32> -> vector<256x128xf32>
    %112 = vector.shape_cast %111 : vector<256x128xf32> to vector<4x64x128xf32>
    %113 = vector.shape_cast %108 : vector<4x128xf32> to vector<4x1x128xf32>
    %114 = vector.broadcast %113 : vector<4x1x128xf32> to vector<4x64x128xf32>
    %115 = arith.addf %112, %114 : vector<4x64x128xf32>
    %116 = vector.shape_cast %115 : vector<4x64x128xf32> to vector<256x128xf32>
    %cst_74 = arith.constant dense<0.000000e+00> : vector<4x128xf32>
    %117 = tpu.matmul %103, %93, %cst_74 {dimension_numbers = #tpu.dot_dimension_numbers<[1], [0], [0], [1], [0, 0, 1, 1], [], []>} : vector<4x128xbf16>, vector<128x128xbf16>, vector<4x128xf32> -> vector<4x128xf32>
    %118 = vector.broadcast %99 : vector<1x128xf32> to vector<4x128xf32>
    %119 = arith.addf %117, %118 : vector<4x128xf32>
    %cst_75 = arith.constant dense<0.000000e+00> : vector<256x128xf32>
    %120 = tpu.matmul %102, %91, %cst_75 {dimension_numbers = #tpu.dot_dimension_numbers<[1], [0], [0], [1], [0, 0, 1, 1], [], []>} : vector<256x128xbf16>, vector<128x128xbf16>, vector<256x128xf32> -> vector<256x128xf32>
    %121 = vector.shape_cast %120 : vector<256x128xf32> to vector<4x64x128xf32>
    %122 = vector.shape_cast %119 : vector<4x128xf32> to vector<4x1x128xf32>
    %123 = vector.broadcast %122 : vector<4x1x128xf32> to vector<4x64x128xf32>
    %124 = arith.addf %121, %123 : vector<4x64x128xf32>
    %125 = vector.shape_cast %124 : vector<4x64x128xf32> to vector<256x128xf32>
    %cst_76 = arith.constant 0.000000e+00 : f32
    %126 = vector.broadcast %cst_76 : f32 to vector<256x128xf32>
    %127 = arith.maximumf %116, %126 : vector<256x128xf32>
    %128 = arith.truncf %127 : vector<256x128xf32> to vector<256x128xbf16>
    %cst_77 = arith.constant dense<0.000000e+00> : vector<256x128xf32>
    %129 = tpu.matmul %128, %95, %cst_77 {dimension_numbers = #tpu.dot_dimension_numbers<[1], [0], [0], [1], [0, 0, 1, 1], [], []>} : vector<256x128xbf16>, vector<128x128xbf16>, vector<256x128xf32> -> vector<256x128xf32>
    %130 = arith.addf %125, %129 : vector<256x128xf32>
    %c2 = arith.constant 2 : index
    %c0_78 = arith.constant 0 : index
    %c0_79 = arith.constant 0 : index
    %131 = vector.load %arg9[%c2, %c0_78, %c0_79] : memref<4x128x128xbf16, #tpu.memory_space<vmem>>, vector<1x128x128xbf16>
    %132 = vector.shape_cast %131 : vector<1x128x128xbf16> to vector<128x128xbf16>
    %c2_80 = arith.constant 2 : index
    %c0_81 = arith.constant 0 : index
    %c0_82 = arith.constant 0 : index
    %133 = vector.load %arg10[%c2_80, %c0_81, %c0_82] : memref<4x128x128xbf16, #tpu.memory_space<vmem>>, vector<1x128x128xbf16>
    %134 = vector.shape_cast %133 : vector<1x128x128xbf16> to vector<128x128xbf16>
    %c2_83 = arith.constant 2 : index
    %c0_84 = arith.constant 0 : index
    %c0_85 = arith.constant 0 : index
    %135 = vector.load %arg14[%c2_83, %c0_84, %c0_85] : memref<4x128x128xbf16, #tpu.memory_space<vmem>>, vector<1x128x128xbf16>
    %136 = vector.shape_cast %135 : vector<1x128x128xbf16> to vector<128x128xbf16>
    %c2_86 = arith.constant 2 : index
    %c0_87 = arith.constant 0 : index
    %c0_88 = arith.constant 0 : index
    %137 = vector.load %arg15[%c2_86, %c0_87, %c0_88] : memref<4x128x128xbf16, #tpu.memory_space<vmem>>, vector<1x128x128xbf16>
    %138 = vector.shape_cast %137 : vector<1x128x128xbf16> to vector<128x128xbf16>
    %c2_89 = arith.constant 2 : index
    %c0_90 = arith.constant 0 : index
    %c0_91 = arith.constant 0 : index
    %139 = vector.load %arg12[%c2_89, %c0_90, %c0_91] : memref<4x128x128xbf16, #tpu.memory_space<vmem>>, vector<1x128x128xbf16>
    %140 = vector.shape_cast %139 : vector<1x128x128xbf16> to vector<128x128xbf16>
    %c2_92 = arith.constant 2 : index
    %c0_93 = arith.constant 0 : index
    %c0_94 = arith.constant 0 : index
    %141 = vector.load %arg11[%c2_92, %c0_93, %c0_94] : memref<4x1x128xf32, #tpu.memory_space<vmem>>, vector<1x1x128xf32>
    %142 = vector.shape_cast %141 : vector<1x1x128xf32> to vector<1x128xf32>
    %c2_95 = arith.constant 2 : index
    %c0_96 = arith.constant 0 : index
    %c0_97 = arith.constant 0 : index
    %143 = vector.load %arg13[%c2_95, %c0_96, %c0_97] : memref<4x1x128xf32, #tpu.memory_space<vmem>>, vector<1x1x128xf32>
    %144 = vector.shape_cast %143 : vector<1x1x128xf32> to vector<1x128xf32>
    %145 = vector.shape_cast %130 : vector<256x128xf32> to vector<4x64x128xf32>
    %cst_98 = arith.constant dense<0xFF800000> : vector<4x128xf32>
    %146 = vector.multi_reduction <maximumf>, %145, %cst_98 [1] : vector<4x64x128xf32> to vector<4x128xf32>
    %147 = arith.truncf %130 : vector<256x128xf32> to vector<256x128xbf16>
    %148 = arith.truncf %146 : vector<4x128xf32> to vector<4x128xbf16>
    %cst_99 = arith.constant 0.000000e+00 : bf16
    %149 = vector.broadcast %cst_99 : bf16 to vector<4x128xbf16>
    %150 = arith.maximumf %148, %149 : vector<4x128xbf16>
    %cst_100 = arith.constant dense<0.000000e+00> : vector<4x128xf32>
    %151 = tpu.matmul %150, %134, %cst_100 {dimension_numbers = #tpu.dot_dimension_numbers<[1], [0], [0], [1], [0, 0, 1, 1], [], []>} : vector<4x128xbf16>, vector<128x128xbf16>, vector<4x128xf32> -> vector<4x128xf32>
    %152 = vector.broadcast %142 : vector<1x128xf32> to vector<4x128xf32>
    %153 = arith.addf %151, %152 : vector<4x128xf32>
    %cst_101 = arith.constant 0.000000e+00 : bf16
    %154 = vector.broadcast %cst_101 : bf16 to vector<256x128xbf16>
    %155 = arith.maximumf %147, %154 : vector<256x128xbf16>
    %cst_102 = arith.constant dense<0.000000e+00> : vector<256x128xf32>
    %156 = tpu.matmul %155, %132, %cst_102 {dimension_numbers = #tpu.dot_dimension_numbers<[1], [0], [0], [1], [0, 0, 1, 1], [], []>} : vector<256x128xbf16>, vector<128x128xbf16>, vector<256x128xf32> -> vector<256x128xf32>
    %157 = vector.shape_cast %156 : vector<256x128xf32> to vector<4x64x128xf32>
    %158 = vector.shape_cast %153 : vector<4x128xf32> to vector<4x1x128xf32>
    %159 = vector.broadcast %158 : vector<4x1x128xf32> to vector<4x64x128xf32>
    %160 = arith.addf %157, %159 : vector<4x64x128xf32>
    %161 = vector.shape_cast %160 : vector<4x64x128xf32> to vector<256x128xf32>
    %cst_103 = arith.constant dense<0.000000e+00> : vector<4x128xf32>
    %162 = tpu.matmul %148, %138, %cst_103 {dimension_numbers = #tpu.dot_dimension_numbers<[1], [0], [0], [1], [0, 0, 1, 1], [], []>} : vector<4x128xbf16>, vector<128x128xbf16>, vector<4x128xf32> -> vector<4x128xf32>
    %163 = vector.broadcast %144 : vector<1x128xf32> to vector<4x128xf32>
    %164 = arith.addf %162, %163 : vector<4x128xf32>
    %cst_104 = arith.constant dense<0.000000e+00> : vector<256x128xf32>
    %165 = tpu.matmul %147, %136, %cst_104 {dimension_numbers = #tpu.dot_dimension_numbers<[1], [0], [0], [1], [0, 0, 1, 1], [], []>} : vector<256x128xbf16>, vector<128x128xbf16>, vector<256x128xf32> -> vector<256x128xf32>
    %166 = vector.shape_cast %165 : vector<256x128xf32> to vector<4x64x128xf32>
    %167 = vector.shape_cast %164 : vector<4x128xf32> to vector<4x1x128xf32>
    %168 = vector.broadcast %167 : vector<4x1x128xf32> to vector<4x64x128xf32>
    %169 = arith.addf %166, %168 : vector<4x64x128xf32>
    %170 = vector.shape_cast %169 : vector<4x64x128xf32> to vector<256x128xf32>
    %cst_105 = arith.constant 0.000000e+00 : f32
    %171 = vector.broadcast %cst_105 : f32 to vector<256x128xf32>
    %172 = arith.maximumf %161, %171 : vector<256x128xf32>
    %173 = arith.truncf %172 : vector<256x128xf32> to vector<256x128xbf16>
    %cst_106 = arith.constant dense<0.000000e+00> : vector<256x128xf32>
    %174 = tpu.matmul %173, %140, %cst_106 {dimension_numbers = #tpu.dot_dimension_numbers<[1], [0], [0], [1], [0, 0, 1, 1], [], []>} : vector<256x128xbf16>, vector<128x128xbf16>, vector<256x128xf32> -> vector<256x128xf32>
    %175 = arith.addf %170, %174 : vector<256x128xf32>
    %c3 = arith.constant 3 : index
    %c0_107 = arith.constant 0 : index
    %c0_108 = arith.constant 0 : index
    %176 = vector.load %arg9[%c3, %c0_107, %c0_108] : memref<4x128x128xbf16, #tpu.memory_space<vmem>>, vector<1x128x128xbf16>
    %177 = vector.shape_cast %176 : vector<1x128x128xbf16> to vector<128x128xbf16>
    %c3_109 = arith.constant 3 : index
    %c0_110 = arith.constant 0 : index
    %c0_111 = arith.constant 0 : index
    %178 = vector.load %arg10[%c3_109, %c0_110, %c0_111] : memref<4x128x128xbf16, #tpu.memory_space<vmem>>, vector<1x128x128xbf16>
    %179 = vector.shape_cast %178 : vector<1x128x128xbf16> to vector<128x128xbf16>
    %c3_112 = arith.constant 3 : index
    %c0_113 = arith.constant 0 : index
    %c0_114 = arith.constant 0 : index
    %180 = vector.load %arg14[%c3_112, %c0_113, %c0_114] : memref<4x128x128xbf16, #tpu.memory_space<vmem>>, vector<1x128x128xbf16>
    %181 = vector.shape_cast %180 : vector<1x128x128xbf16> to vector<128x128xbf16>
    %c3_115 = arith.constant 3 : index
    %c0_116 = arith.constant 0 : index
    %c0_117 = arith.constant 0 : index
    %182 = vector.load %arg15[%c3_115, %c0_116, %c0_117] : memref<4x128x128xbf16, #tpu.memory_space<vmem>>, vector<1x128x128xbf16>
    %183 = vector.shape_cast %182 : vector<1x128x128xbf16> to vector<128x128xbf16>
    %c3_118 = arith.constant 3 : index
    %c0_119 = arith.constant 0 : index
    %c0_120 = arith.constant 0 : index
    %184 = vector.load %arg12[%c3_118, %c0_119, %c0_120] : memref<4x128x128xbf16, #tpu.memory_space<vmem>>, vector<1x128x128xbf16>
    %185 = vector.shape_cast %184 : vector<1x128x128xbf16> to vector<128x128xbf16>
    %c3_121 = arith.constant 3 : index
    %c0_122 = arith.constant 0 : index
    %c0_123 = arith.constant 0 : index
    %186 = vector.load %arg11[%c3_121, %c0_122, %c0_123] : memref<4x1x128xf32, #tpu.memory_space<vmem>>, vector<1x1x128xf32>
    %187 = vector.shape_cast %186 : vector<1x1x128xf32> to vector<1x128xf32>
    %c3_124 = arith.constant 3 : index
    %c0_125 = arith.constant 0 : index
    %c0_126 = arith.constant 0 : index
    %188 = vector.load %arg13[%c3_124, %c0_125, %c0_126] : memref<4x1x128xf32, #tpu.memory_space<vmem>>, vector<1x1x128xf32>
    %189 = vector.shape_cast %188 : vector<1x1x128xf32> to vector<1x128xf32>
    %190 = vector.shape_cast %175 : vector<256x128xf32> to vector<4x64x128xf32>
    %cst_127 = arith.constant dense<0xFF800000> : vector<4x128xf32>
    %191 = vector.multi_reduction <maximumf>, %190, %cst_127 [1] : vector<4x64x128xf32> to vector<4x128xf32>
    %192 = arith.truncf %175 : vector<256x128xf32> to vector<256x128xbf16>
    %193 = arith.truncf %191 : vector<4x128xf32> to vector<4x128xbf16>
    %cst_128 = arith.constant 0.000000e+00 : bf16
    %194 = vector.broadcast %cst_128 : bf16 to vector<4x128xbf16>
    %195 = arith.maximumf %193, %194 : vector<4x128xbf16>
    %cst_129 = arith.constant dense<0.000000e+00> : vector<4x128xf32>
    %196 = tpu.matmul %195, %179, %cst_129 {dimension_numbers = #tpu.dot_dimension_numbers<[1], [0], [0], [1], [0, 0, 1, 1], [], []>} : vector<4x128xbf16>, vector<128x128xbf16>, vector<4x128xf32> -> vector<4x128xf32>
    %197 = vector.broadcast %187 : vector<1x128xf32> to vector<4x128xf32>
    %198 = arith.addf %196, %197 : vector<4x128xf32>
    %cst_130 = arith.constant 0.000000e+00 : bf16
    %199 = vector.broadcast %cst_130 : bf16 to vector<256x128xbf16>
    %200 = arith.maximumf %192, %199 : vector<256x128xbf16>
    %cst_131 = arith.constant dense<0.000000e+00> : vector<256x128xf32>
    %201 = tpu.matmul %200, %177, %cst_131 {dimension_numbers = #tpu.dot_dimension_numbers<[1], [0], [0], [1], [0, 0, 1, 1], [], []>} : vector<256x128xbf16>, vector<128x128xbf16>, vector<256x128xf32> -> vector<256x128xf32>
    %202 = vector.shape_cast %201 : vector<256x128xf32> to vector<4x64x128xf32>
    %203 = vector.shape_cast %198 : vector<4x128xf32> to vector<4x1x128xf32>
    %204 = vector.broadcast %203 : vector<4x1x128xf32> to vector<4x64x128xf32>
    %205 = arith.addf %202, %204 : vector<4x64x128xf32>
    %206 = vector.shape_cast %205 : vector<4x64x128xf32> to vector<256x128xf32>
    %cst_132 = arith.constant dense<0.000000e+00> : vector<4x128xf32>
    %207 = tpu.matmul %193, %183, %cst_132 {dimension_numbers = #tpu.dot_dimension_numbers<[1], [0], [0], [1], [0, 0, 1, 1], [], []>} : vector<4x128xbf16>, vector<128x128xbf16>, vector<4x128xf32> -> vector<4x128xf32>
    %208 = vector.broadcast %189 : vector<1x128xf32> to vector<4x128xf32>
    %209 = arith.addf %207, %208 : vector<4x128xf32>
    %cst_133 = arith.constant dense<0.000000e+00> : vector<256x128xf32>
    %210 = tpu.matmul %192, %181, %cst_133 {dimension_numbers = #tpu.dot_dimension_numbers<[1], [0], [0], [1], [0, 0, 1, 1], [], []>} : vector<256x128xbf16>, vector<128x128xbf16>, vector<256x128xf32> -> vector<256x128xf32>
    %211 = vector.shape_cast %210 : vector<256x128xf32> to vector<4x64x128xf32>
    %212 = vector.shape_cast %209 : vector<4x128xf32> to vector<4x1x128xf32>
    %213 = vector.broadcast %212 : vector<4x1x128xf32> to vector<4x64x128xf32>
    %214 = arith.addf %211, %213 : vector<4x64x128xf32>
    %215 = vector.shape_cast %214 : vector<4x64x128xf32> to vector<256x128xf32>
    %cst_134 = arith.constant 0.000000e+00 : f32
    %216 = vector.broadcast %cst_134 : f32 to vector<256x128xf32>
    %217 = arith.maximumf %206, %216 : vector<256x128xf32>
    %218 = arith.truncf %217 : vector<256x128xf32> to vector<256x128xbf16>
    %cst_135 = arith.constant dense<0.000000e+00> : vector<256x128xf32>
    %219 = tpu.matmul %218, %185, %cst_135 {dimension_numbers = #tpu.dot_dimension_numbers<[1], [0], [0], [1], [0, 0, 1, 1], [], []>} : vector<256x128xbf16>, vector<128x128xbf16>, vector<256x128xf32> -> vector<256x128xf32>
    %220 = arith.addf %215, %219 : vector<256x128xf32>
    %221 = vector.shape_cast %220 : vector<256x128xf32> to vector<4x64x128xf32>
    %cst_136 = arith.constant dense<0xFF800000> : vector<4x128xf32>
    %222 = vector.multi_reduction <maximumf>, %221, %cst_136 [1] : vector<4x64x128xf32> to vector<4x128xf32>
    %cst_137 = arith.constant 0.000000e+00 : f32
    %223 = vector.broadcast %cst_137 : f32 to vector<4x128xf32>
    %224 = arith.maximumf %222, %223 : vector<4x128xf32>
    %225 = arith.truncf %224 : vector<4x128xf32> to vector<4x128xbf16>
    %c0_138 = arith.constant 0 : index
    %c0_139 = arith.constant 0 : index
    %226 = vector.load %arg16[%c0_138, %c0_139] : memref<128x128xbf16, #tpu.memory_space<vmem>>, vector<128x128xbf16>
    %cst_140 = arith.constant dense<0.000000e+00> : vector<4x128xf32>
    %227 = tpu.matmul %225, %226, %cst_140 {dimension_numbers = #tpu.dot_dimension_numbers<[1], [0], [0], [1], [0, 0, 1, 1], [], []>} : vector<4x128xbf16>, vector<128x128xbf16>, vector<4x128xf32> -> vector<4x128xf32>
    %c0_141 = arith.constant 0 : index
    %c0_142 = arith.constant 0 : index
    %228 = vector.load %arg17[%c0_141, %c0_142] : memref<1x128xf32, #tpu.memory_space<vmem>>, vector<1x128xf32>
    %229 = vector.broadcast %228 : vector<1x128xf32> to vector<4x128xf32>
    %230 = arith.addf %227, %229 : vector<4x128xf32>
    %c0_143 = arith.constant 0 : index
    %c0_144 = arith.constant 0 : index
    %c0_145 = arith.constant 0 : index
    %231 = vector.load %arg18[%c0_143, %c0_144, %c0_145] : memref<1x4x128xf32, #tpu.memory_space<vmem>>, vector<1x4x128xf32>
    %232 = vector.shape_cast %231 : vector<1x4x128xf32> to vector<4x128xf32>
    %233 = vector.shape_cast %230 : vector<4x128xf32> to vector<1x4x128xf32>
    tpu.vector_store %arg18[%c0_143, %c0_144, %c0_145], %233 {strides = array<i32>} : memref<1x4x128xf32, #tpu.memory_space<vmem>>, vector<1x4x128xf32>,
    return
  }
  func.func @transform_0(%arg0: i32) -> (i32, i32) {
    %c0_i32 = arith.constant 0 : i32
    %c0_i32_0 = arith.constant 0 : i32
    return %arg0, %c0_i32 : i32, i32
  }
  func.func @transform_1(%arg0: i32) -> (i32, i32) {
    %c0_i32 = arith.constant 0 : i32
    %c0_i32_0 = arith.constant 0 : i32
    %c0_i32_1 = arith.constant 0 : i32
    return %c0_i32, %c0_i32_0 : i32, i32
  }
  func.func @transform_2(%arg0: i32) -> (i32, i32) {
    %c0_i32 = arith.constant 0 : i32
    %c0_i32_0 = arith.constant 0 : i32
    %c0_i32_1 = arith.constant 0 : i32
    return %c0_i32, %c0_i32_0 : i32, i32
  }
  func.func @transform_3(%arg0: i32) -> (i32, i32) {
    %c0_i32 = arith.constant 0 : i32
    %c0_i32_0 = arith.constant 0 : i32
    %c0_i32_1 = arith.constant 0 : i32
    return %c0_i32, %c0_i32_0 : i32, i32
  }
  func.func @transform_4(%arg0: i32) -> (i32, i32) {
    %c0_i32 = arith.constant 0 : i32
    %c0_i32_0 = arith.constant 0 : i32
    %c0_i32_1 = arith.constant 0 : i32
    return %c0_i32, %c0_i32_0 : i32, i32
  }
  func.func @transform_5(%arg0: i32) -> (i32, i32) {
    %c0_i32 = arith.constant 0 : i32
    %c0_i32_0 = arith.constant 0 : i32
    %c0_i32_1 = arith.constant 0 : i32
    return %c0_i32, %c0_i32_0 : i32, i32
  }
  func.func @transform_6(%arg0: i32) -> (i32, i32) {
    %c0_i32 = arith.constant 0 : i32
    %c0_i32_0 = arith.constant 0 : i32
    %c0_i32_1 = arith.constant 0 : i32
    return %c0_i32, %c0_i32_0 : i32, i32
  }
  func.func @transform_7(%arg0: i32) -> (i32, i32) {
    %c0_i32 = arith.constant 0 : i32
    %c0_i32_0 = arith.constant 0 : i32
    %c0_i32_1 = arith.constant 0 : i32
    return %c0_i32, %c0_i32_0 : i32, i32
  }
  func.func @transform_8(%arg0: i32) -> (i32, i32, i32) {
    %c0_i32 = arith.constant 0 : i32
    %c0_i32_0 = arith.constant 0 : i32
    %c0_i32_1 = arith.constant 0 : i32
    %c0_i32_2 = arith.constant 0 : i32
    return %c0_i32, %c0_i32_0, %c0_i32_1 : i32, i32, i32
  }
  func.func @transform_9(%arg0: i32) -> (i32, i32, i32) {
    %c0_i32 = arith.constant 0 : i32
    %c0_i32_0 = arith.constant 0 : i32
    %c0_i32_1 = arith.constant 0 : i32
    %c0_i32_2 = arith.constant 0 : i32
    return %c0_i32, %c0_i32_0, %c0_i32_1 : i32, i32, i32
  }
  func.func @transform_10(%arg0: i32) -> (i32, i32, i32) {
    %c0_i32 = arith.constant 0 : i32
    %c0_i32_0 = arith.constant 0 : i32
    %c0_i32_1 = arith.constant 0 : i32
    %c0_i32_2 = arith.constant 0 : i32
    return %c0_i32, %c0_i32_0, %c0_i32_1 : i32, i32, i32
  }
  func.func @transform_11(%arg0: i32) -> (i32, i32, i32) {
    %c0_i32 = arith.constant 0 : i32
    %c0_i32_0 = arith.constant 0 : i32
    %c0_i32_1 = arith.constant 0 : i32
    %c0_i32_2 = arith.constant 0 : i32
    return %c0_i32, %c0_i32_0, %c0_i32_1 : i32, i32, i32
  }
  func.func @transform_12(%arg0: i32) -> (i32, i32, i32) {
    %c0_i32 = arith.constant 0 : i32
    %c0_i32_0 = arith.constant 0 : i32
    %c0_i32_1 = arith.constant 0 : i32
    %c0_i32_2 = arith.constant 0 : i32
    return %c0_i32, %c0_i32_0, %c0_i32_1 : i32, i32, i32
  }
  func.func @transform_13(%arg0: i32) -> (i32, i32, i32) {
    %c0_i32 = arith.constant 0 : i32
    %c0_i32_0 = arith.constant 0 : i32
    %c0_i32_1 = arith.constant 0 : i32
    %c0_i32_2 = arith.constant 0 : i32
    return %c0_i32, %c0_i32_0, %c0_i32_1 : i32, i32, i32
  }
  func.func @transform_14(%arg0: i32) -> (i32, i32, i32) {
    %c0_i32 = arith.constant 0 : i32
    %c0_i32_0 = arith.constant 0 : i32
    %c0_i32_1 = arith.constant 0 : i32
    %c0_i32_2 = arith.constant 0 : i32
    return %c0_i32, %c0_i32_0, %c0_i32_1 : i32, i32, i32
  }
  func.func @transform_15(%arg0: i32) -> (i32, i32) {
    %c0_i32 = arith.constant 0 : i32
    %c0_i32_0 = arith.constant 0 : i32
    %c0_i32_1 = arith.constant 0 : i32
    return %c0_i32, %c0_i32_0 : i32, i32
  }
  func.func @transform_16(%arg0: i32) -> (i32, i32) {
    %c0_i32 = arith.constant 0 : i32
    %c0_i32_0 = arith.constant 0 : i32
    %c0_i32_1 = arith.constant 0 : i32
    return %c0_i32, %c0_i32_0 : i32, i32
  }
  func.func @transform_17(%arg0: i32) -> (i32, i32, i32) {
    %c0_i32 = arith.constant 0 : i32
    %c0_i32_0 = arith.constant 0 : i32
    %c0_i32_1 = arith.constant 0 : i32
    return %arg0, %c0_i32, %c0_i32_0 : i32, i32, i32
  }
}

</mosaic_0001>

<llo_original>
// kernel: tpu_custom_call.1
$region0: #{tpu_custom_call.1}
  #allocation0 [shape = 'u32[]', space=smem, size = 0x4, offset = 0x4, fixed_abs, tag = 'smem constant byte address 0x4 - core index']
  #allocation1 [shape = 'u32[72,128]{1,0:T(1,128)}', space=vmem, size = 0x9000, scoped, tag = 'internal scratch']
  %s0 = inlined_call_operand.vmem [shape: f32[512,8], index: 0, kind: input, shape index: {}]
  %s1 = inlined_call_operand.vmem [shape: f32[3,256], index: 1, kind: input, shape index: {}]
  %s2 = inlined_call_operand.vmem [shape: f32[1,256], index: 2, kind: input, shape index: {}]
  %s3 = inlined_call_operand.hbm [shape: bf16[256,128], index: 3, kind: input, shape index: {}]
  %s4 = inlined_call_operand.vmem [shape: f32[1,128], index: 4, kind: input, shape index: {}]
  %s5 = inlined_call_operand.hbm [shape: bf16[128,128], index: 5, kind: input, shape index: {}]
  %s6 = inlined_call_operand.vmem [shape: f32[1,128], index: 6, kind: input, shape index: {}]
  %s7 = inlined_call_operand.hbm [shape: bf16[256,128], index: 7, kind: input, shape index: {}]
  %s8 = inlined_call_operand.vmem [shape: bf16[4,128,128], index: 8, kind: input, shape index: {}]
  %s9 = inlined_call_operand.vmem [shape: bf16[4,128,128], index: 9, kind: input, shape index: {}]
  %s10 = inlined_call_operand.vmem [shape: f32[4,1,128], index: 10, kind: input, shape index: {}]
  %s11 = inlined_call_operand.hbm [shape: bf16[4,128,128], index: 11, kind: input, shape index: {}]
  %s12 = inlined_call_operand.vmem [shape: f32[4,1,128], index: 12, kind: input, shape index: {}]
  %s13 = inlined_call_operand.hbm [shape: bf16[4,128,128], index: 13, kind: input, shape index: {}]
  %s14 = inlined_call_operand.hbm [shape: bf16[4,128,128], index: 14, kind: input, shape index: {}]
  %s15 = inlined_call_operand.hbm [shape: bf16[128,128], index: 15, kind: input, shape index: {}]
  %s16 = inlined_call_operand.vmem [shape: f32[1,128], index: 16, kind: input, shape index: {}]
  %s17 = inlined_call_operand.hbm [shape: f32[2,4,128], index: 17, kind: output, shape index: {}]
  %s18 = sld [smem:[#allocation0]]
  $region129: #{tpu_custom_call.1} parent=0
    _
  %s20 = ssub.s32 1, %s18
  %s21 = scalar_select 0, %s20, %s18
  $region1: #{tpu_custom_call.1} parent=0
    #allocation2 [shape = 'u8[65536]{0}', space=vmem, size = 0x10000, scoped, tag = 'input window, operand 3, single buffered']
    #allocation3 [shape = 's32[2]{0}', space=sflag, size = 0x8, scoped, tag = 'scoped memory for tpu_custom_call.1']
    #allocation4 [shape = 's32[2]{0}', space=sflag, size = 0x8, scoped, tag = 'scoped memory for tpu_custom_call.1']
    #allocation5 [shape = 'u8[32768]{0}', space=vmem, size = 0x8000, scoped, tag = 'input window, operand 5, single buffered']
    #allocation6 [shape = 's32[1]{0}', space=sflag, size = 0x4, scoped, tag = 'scoped memory for tpu_custom_call.1']
    #allocation7 [shape = 'u8[65536]{0}', space=vmem, size = 0x10000, scoped, tag = 'input window, operand 7, single buffered']
    #allocation8 [shape = 'u8[131072]{0}', space=vmem, size = 0x20000, scoped, tag = 'input window, operand 11, single buffered']
    #allocation9 [shape = 's32[1]{0}', space=sflag, size = 0x4, scoped, tag = 'scoped memory for tpu_custom_call.1']
    #allocation10 [shape = 'u8[131072]{0}', space=vmem, size = 0x20000, scoped, tag = 'input window, operand 13, single buffered']
    #allocation11 [shape = 'u8[131072]{0}', space=vmem, size = 0x20000, scoped, tag = 'input window, operand 14, single buffered']
    #allocation12 [shape = 's32[1]{0}', space=sflag, size = 0x4, scoped, tag = 'scoped memory for tpu_custom_call.1']
    #allocation13 [shape = 'u8[32768]{0}', space=vmem, size = 0x8000, scoped, tag = 'input window, operand 15, single buffered']
    #allocation14 [shape = 'u8[4096]{0}', space=vmem, size = 0x1000, scoped, tag = 'output window, operand 0']
    %22 = vsyncpa [#allocation3], 0
    %23 = vsyncpa [#allocation6], 0
    %24 = vsyncpa [#allocation9], 0
    %25 = vsyncpa [#allocation12], 0
    %26 = vsyncpa [#allocation4], 0
    %s27 = scalar_lea.sflag [#allocation4], 1
    %28 = vsyncpa %s27, 0
    loop: start=0, step=1, limit=4
    $region2: #{tpu_custom_call.1} parent=1 // loop_pre_header
      _
    $region3: #{tpu_custom_call.1} parent=1 // loop_header
      %s30 = sphi 0, %s34
      %p31 = scmp.ge.s32.totalorder %s30, 4
      %s40 = sphi 0, %s42
      %s43 = sphi 0, %s40
      %s44 = sphi 0, %s43
      %s60 = sphi 0, %s44
      %s64 = sphi 0, %s64
      %s66 = sphi 0, %s64
      %s67 = sphi 0, %s66
      %s81 = sphi 0, %s67
      %s85 = sphi 0, %s85
      %s87 = sphi 0, %s85
      %s88 = sphi 0, %s87
      %s102 = sphi 0, %s88
      %s106 = sphi 0, %s106
      %s108 = sphi 0, %s106
      %s109 = sphi 0, %s108
      %s123 = sphi 0, %s109
      %s127 = sphi 0, %s127
      %s129 = sphi 0, %s127
      %s130 = sphi 0, %s129
      %s144 = sphi 0, %s130
      %s148 = sphi 0, %s148
      %s150 = sphi 0, %s148
      %s151 = sphi 0, %s150
      %s165 = sphi 0, %s151
      %s169 = sphi 0, %s169
      %s171 = sphi 0, %s169
      %s172 = sphi 0, %s171
      %s186 = sphi 0, %s172
      %s190 = sphi 0, %s190
      %s192 = sphi 0, %s190
      %s193 = sphi 0, %s192
      %s207 = sphi 0, %s193
      %s211 = sphi 0, %s211
      %s213 = sphi 0, %s211
      %s214 = sphi 0, %s213
      %s228 = sphi 0, %s214
      %s232 = sphi 0, %s232
      %s234 = sphi 0, %s232
      %s235 = sphi 0, %s234
      %s249 = sphi 0, %s235
      %s253 = sphi 0, %s253
      %s255 = sphi 0, %s253
      %s256 = sphi 0, %s255
      %s270 = sphi 0, %s256
      %s274 = sphi 0, %s274
      %s276 = sphi 0, %s274
      %s277 = sphi 0, %s276
      %s291 = sphi 0, %s277
      %s295 = sphi 0, %s295
      %s297 = sphi 0, %s295
      %s298 = sphi 0, %s297
      %s312 = sphi 0, %s298
      %s316 = sphi 0, %s316
      %s318 = sphi 0, %s316
      %s319 = sphi 0, %s318
      %s333 = sphi 0, %s319
      %s337 = sphi 0, %s337
      %s339 = sphi 0, %s337
      %s340 = sphi 0, %s339
      %s354 = sphi 0, %s340
      %s358 = sphi 0, %s358
      %s360 = sphi 0, %s358
      %s361 = sphi 0, %s360
      %s375 = sphi 0, %s361
      %s379 = sphi 0, %s379
      %s381 = sphi 0, %s379
      %s382 = sphi 0, %s381
      %s396 = sphi 0, %s382
      %s402 = sphi 0, %s404
      %s405 = sphi 0, %s402
      %s406 = sphi 0, %s405
      %s422 = sphi 0, %s406
    $region4: #{tpu_custom_call.1} parent=1 // loop_header_branch
      %33 = sbr.rel (%p31) target = $region8
    $region5: #{tpu_custom_call.1} parent=1 // loop_body
      %s35 = ssub.s32 %s30, 1
      %s36 = ssub.s32 %s30, 2
      %s37 = sadd.s32 %s30, 1
      %s38 = ssub.s32 %s30, %s37
      %p39 = scmp.eq.s32.totalorder %s38, 0
      %s41 = sadd.s32 %s40, 1
      %s42 = scalar_select %p39, %s40, %s41
      %p45 = pneg %p39
      %p46 = scmp.eq.s32.totalorder %s30, 1
      %p47 = por %p45, %p46
      %p48 = scmp.ne.s32.totalorder %s40, %s43
      %p49 = scmp.eq.s32.totalorder %s30, 0
      %p50 = por %p48, %p49
      %p51 = scmp.ne.s32.totalorder %s40, %s43
      %p52 = scmp.eq.s32.totalorder %s35, 1
      %p53 = por %p51, %p52
      %p54 = scmp.ne.s32.totalorder %s43, %s44
      %p55 = scmp.eq.s32.totalorder %s35, 0
      %p56 = por %p54, %p55
      %p57 = scmp.ne.s32.totalorder %s43, %s44
      %p58 = scmp.eq.s32.totalorder %s36, 1
      %p59 = por %p57, %p58
      %p61 = scmp.ne.s32.totalorder %s44, %s60
      %p62 = scmp.eq.s32.totalorder %s36, 0
      %p63 = por %p61, %p62
      %s65 = sadd.s32 %s64, 1
      %p68 = scmp.eq.s32.totalorder %s30, 1
      %p69 = scmp.ne.s32.totalorder %s64, %s66
      %p70 = scmp.eq.s32.totalorder %s30, 0
      %p71 = por %p69, %p70
      %p72 = scmp.ne.s32.totalorder %s64, %s66
      %p73 = scmp.eq.s32.totalorder %s35, 1
      %p74 = por %p72, %p73
      %p75 = scmp.ne.s32.totalorder %s66, %s67
      %p76 = scmp.eq.s32.totalorder %s35, 0
      %p77 = por %p75, %p76
      %p78 = scmp.ne.s32.totalorder %s66, %s67
      %p79 = scmp.eq.s32.totalorder %s36, 1
      %p80 = por %p78, %p79
      %p82 = scmp.ne.s32.totalorder %s67, %s81
      %p83 = scmp.eq.s32.totalorder %s36, 0
      %p84 = por %p82, %p83
      %s86 = sadd.s32 %s85, 1
      %p89 = scmp.eq.s32.totalorder %s30, 1
      %p90 = scmp.ne.s32.totalorder %s85, %s87
      %p91 = scmp.eq.s32.totalorder %s30, 0
      %p92 = por %p90, %p91
      %p93 = scmp.ne.s32.totalorder %s85, %s87
      %p94 = scmp.eq.s32.totalorder %s35, 1
      %p95 = por %p93, %p94
      %p96 = scmp.ne.s32.totalorder %s87, %s88
      %p97 = scmp.eq.s32.totalorder %s35, 0
      %p98 = por %p96, %p97
      %p99 = scmp.ne.s32.totalorder %s87, %s88
      %p100 = scmp.eq.s32.totalorder %s36, 1
      %p101 = por %p99, %p100
      %p103 = scmp.ne.s32.totalorder %s88, %s102
      %p104 = scmp.eq.s32.totalorder %s36, 0
      %p105 = por %p103, %p104
      %s107 = sadd.s32 %s106, 1
      %p110 = scmp.eq.s32.totalorder %s30, 1
      %p111 = scmp.ne.s32.totalorder %s106, %s108
      %p112 = scmp.eq.s32.totalorder %s30, 0
      %p113 = por %p111, %p112
      %p114 = scmp.ne.s32.totalorder %s106, %s108
      %p115 = scmp.eq.s32.totalorder %s35, 1
      %p116 = por %p114, %p115
      %p117 = scmp.ne.s32.totalorder %s108, %s109
      %p118 = scmp.eq.s32.totalorder %s35, 0
      %p119 = por %p117, %p118
      %p120 = scmp.ne.s32.totalorder %s108, %s109
      %p121 = scmp.eq.s32.totalorder %s36, 1
      %p122 = por %p120, %p121
      %p124 = scmp.ne.s32.totalorder %s109, %s123
      %p125 = scmp.eq.s32.totalorder %s36, 0
      %p126 = por %p124, %p125
      %s128 = sadd.s32 %s127, 1
      %p131 = scmp.eq.s32.totalorder %s30, 1
      %p132 = scmp.ne.s32.totalorder %s127, %s129
      %p133 = scmp.eq.s32.totalorder %s30, 0
      %p134 = por %p132, %p133
      %p135 = scmp.ne.s32.totalorder %s127, %s129
      %p136 = scmp.eq.s32.totalorder %s35, 1
      %p137 = por %p135, %p136
      %p138 = scmp.ne.s32.totalorder %s129, %s130
      %p139 = scmp.eq.s32.totalorder %s35, 0
      %p140 = por %p138, %p139
      %p141 = scmp.ne.s32.totalorder %s129, %s130
      %p142 = scmp.eq.s32.totalorder %s36, 1
      %p143 = por %p141, %p142
      %p145 = scmp.ne.s32.totalorder %s130, %s144
      %p146 = scmp.eq.s32.totalorder %s36, 0
      %p147 = por %p145, %p146
      %s149 = sadd.s32 %s148, 1
      %p152 = scmp.eq.s32.totalorder %s30, 1
      %p153 = scmp.ne.s32.totalorder %s148, %s150
      %p154 = scmp.eq.s32.totalorder %s30, 0
      %p155 = por %p153, %p154
      %p156 = scmp.ne.s32.totalorder %s148, %s150
      %p157 = scmp.eq.s32.totalorder %s35, 1
      %p158 = por %p156, %p157
      %p159 = scmp.ne.s32.totalorder %s150, %s151
      %p160 = scmp.eq.s32.totalorder %s35, 0
      %p161 = por %p159, %p160
      %p162 = scmp.ne.s32.totalorder %s150, %s151
      %p163 = scmp.eq.s32.totalorder %s36, 1
      %p164 = por %p162, %p163
      %p166 = scmp.ne.s32.totalorder %s151, %s165
      %p167 = scmp.eq.s32.totalorder %s36, 0
      %p168 = por %p166, %p167
      %s170 = sadd.s32 %s169, 1
      %p173 = scmp.eq.s32.totalorder %s30, 1
      %p174 = scmp.ne.s32.totalorder %s169, %s171
      %p175 = scmp.eq.s32.totalorder %s30, 0
      %p176 = por %p174, %p175
      %p177 = scmp.ne.s32.totalorder %s169, %s171
      %p178 = scmp.eq.s32.totalorder %s35, 1
      %p179 = por %p177, %p178
      %p180 = scmp.ne.s32.totalorder %s171, %s172
      %p181 = scmp.eq.s32.totalorder %s35, 0
      %p182 = por %p180, %p181
      %p183 = scmp.ne.s32.totalorder %s171, %s172
      %p184 = scmp.eq.s32.totalorder %s36, 1
      %p185 = por %p183, %p184
      %p187 = scmp.ne.s32.totalorder %s172, %s186
      %p188 = scmp.eq.s32.totalorder %s36, 0
      %p189 = por %p187, %p188
      %s191 = sadd.s32 %s190, 1
      %p194 = scmp.eq.s32.totalorder %s30, 1
      %p195 = scmp.ne.s32.totalorder %s190, %s192
      %p196 = scmp.eq.s32.totalorder %s30, 0
      %p197 = por %p195, %p196
      %p198 = scmp.ne.s32.totalorder %s190, %s192
      %p199 = scmp.eq.s32.totalorder %s35, 1
      %p200 = por %p198, %p199
      %p201 = scmp.ne.s32.totalorder %s192, %s193
      %p202 = scmp.eq.s32.totalorder %s35, 0
      %p203 = por %p201, %p202
      %p204 = scmp.ne.s32.totalorder %s192, %s193
      %p205 = scmp.eq.s32.totalorder %s36, 1
      %p206 = por %p204, %p205
      %p208 = scmp.ne.s32.totalorder %s193, %s207
      %p209 = scmp.eq.s32.totalorder %s36, 0
      %p210 = por %p208, %p209
      %s212 = sadd.s32 %s211, 1
      %p215 = scmp.eq.s32.totalorder %s30, 1
      %p216 = scmp.ne.s32.totalorder %s211, %s213
      %p217 = scmp.eq.s32.totalorder %s30, 0
      %p218 = por %p216, %p217
      %p219 = scmp.ne.s32.totalorder %s211, %s213
      %p220 = scmp.eq.s32.totalorder %s35, 1
      %p221 = por %p219, %p220
      %p222 = scmp.ne.s32.totalorder %s213, %s214
      %p223 = scmp.eq.s32.totalorder %s35, 0
      %p224 = por %p222, %p223
      %p225 = scmp.ne.s32.totalorder %s213, %s214
      %p226 = scmp.eq.s32.totalorder %s36, 1
      %p227 = por %p225, %p226
      %p229 = scmp.ne.s32.totalorder %s214, %s228
      %p230 = scmp.eq.s32.totalorder %s36, 0
      %p231 = por %p229, %p230
      %s233 = sadd.s32 %s232, 1
      %p236 = scmp.eq.s32.totalorder %s30, 1
      %p237 = scmp.ne.s32.totalorder %s232, %s234
      %p238 = scmp.eq.s32.totalorder %s30, 0
      %p239 = por %p237, %p238
      %p240 = scmp.ne.s32.totalorder %s232, %s234
      %p241 = scmp.eq.s32.totalorder %s35, 1
      %p242 = por %p240, %p241
      %p243 = scmp.ne.s32.totalorder %s234, %s235
      %p244 = scmp.eq.s32.totalorder %s35, 0
      %p245 = por %p243, %p244
      %p246 = scmp.ne.s32.totalorder %s234, %s235
      %p247 = scmp.eq.s32.totalorder %s36, 1
      %p248 = por %p246, %p247
      %p250 = scmp.ne.s32.totalorder %s235, %s249
      %p251 = scmp.eq.s32.totalorder %s36, 0
      %p252 = por %p250, %p251
      %s254 = sadd.s32 %s253, 1
      %p257 = scmp.eq.s32.totalorder %s30, 1
      %p258 = scmp.ne.s32.totalorder %s253, %s255
      %p259 = scmp.eq.s32.totalorder %s30, 0
      %p260 = por %p258, %p259
      %p261 = scmp.ne.s32.totalorder %s253, %s255
      %p262 = scmp.eq.s32.totalorder %s35, 1
      %p263 = por %p261, %p262
      %p264 = scmp.ne.s32.totalorder %s255, %s256
      %p265 = scmp.eq.s32.totalorder %s35, 0
      %p266 = por %p264, %p265
      %p267 = scmp.ne.s32.totalorder %s255, %s256
      %p268 = scmp.eq.s32.totalorder %s36, 1
      %p269 = por %p267, %p268
      %p271 = scmp.ne.s32.totalorder %s256, %s270
      %p272 = scmp.eq.s32.totalorder %s36, 0
      %p273 = por %p271, %p272
      %s275 = sadd.s32 %s274, 1
      %p278 = scmp.eq.s32.totalorder %s30, 1
      %p279 = scmp.ne.s32.totalorder %s274, %s276
      %p280 = scmp.eq.s32.totalorder %s30, 0
      %p281 = por %p279, %p280
      %p282 = scmp.ne.s32.totalorder %s274, %s276
      %p283 = scmp.eq.s32.totalorder %s35, 1
      %p284 = por %p282, %p283
      %p285 = scmp.ne.s32.totalorder %s276, %s277
      %p286 = scmp.eq.s32.totalorder %s35, 0
      %p287 = por %p285, %p286
      %p288 = scmp.ne.s32.totalorder %s276, %s277
      %p289 = scmp.eq.s32.totalorder %s36, 1
      %p290 = por %p288, %p289
      %p292 = scmp.ne.s32.totalorder %s277, %s291
      %p293 = scmp.eq.s32.totalorder %s36, 0
      %p294 = por %p292, %p293
      %s296 = sadd.s32 %s295, 1
      %p299 = scmp.eq.s32.totalorder %s30, 1
      %p300 = scmp.ne.s32.totalorder %s295, %s297
      %p301 = scmp.eq.s32.totalorder %s30, 0
      %p302 = por %p300, %p301
      %p303 = scmp.ne.s32.totalorder %s295, %s297
      %p304 = scmp.eq.s32.totalorder %s35, 1
      %p305 = por %p303, %p304
      %p306 = scmp.ne.s32.totalorder %s297, %s298
      %p307 = scmp.eq.s32.totalorder %s35, 0
      %p308 = por %p306, %p307
      %p309 = scmp.ne.s32.totalorder %s297, %s298
      %p310 = scmp.eq.s32.totalorder %s36, 1
      %p311 = por %p309, %p310
      %p313 = scmp.ne.s32.totalorder %s298, %s312
      %p314 = scmp.eq.s32.totalorder %s36, 0
      %p315 = por %p313, %p314
      %s317 = sadd.s32 %s316, 1
      %p320 = scmp.eq.s32.totalorder %s30, 1
      %p321 = scmp.ne.s32.totalorder %s316, %s318
      %p322 = scmp.eq.s32.totalorder %s30, 0
      %p323 = por %p321, %p322
      %p324 = scmp.ne.s32.totalorder %s316, %s318
      %p325 = scmp.eq.s32.totalorder %s35, 1
      %p326 = por %p324, %p325
      %p327 = scmp.ne.s32.totalorder %s318, %s319
      %p328 = scmp.eq.s32.totalorder %s35, 0
      %p329 = por %p327, %p328
      %p330 = scmp.ne.s32.totalorder %s318, %s319
      %p331 = scmp.eq.s32.totalorder %s36, 1
      %p332 = por %p330, %p331
      %p334 = scmp.ne.s32.totalorder %s319, %s333
      %p335 = scmp.eq.s32.totalorder %s36, 0
      %p336 = por %p334, %p335
      %s338 = sadd.s32 %s337, 1
      %p341 = scmp.eq.s32.totalorder %s30, 1
      %p342 = scmp.ne.s32.totalorder %s337, %s339
      %p343 = scmp.eq.s32.totalorder %s30, 0
      %p344 = por %p342, %p343
      %p345 = scmp.ne.s32.totalorder %s337, %s339
      %p346 = scmp.eq.s32.totalorder %s35, 1
      %p347 = por %p345, %p346
      %p348 = scmp.ne.s32.totalorder %s339, %s340
      %p349 = scmp.eq.s32.totalorder %s35, 0
      %p350 = por %p348, %p349
      %p351 = scmp.ne.s32.totalorder %s339, %s340
      %p352 = scmp.eq.s32.totalorder %s36, 1
      %p353 = por %p351, %p352
      %p355 = scmp.ne.s32.totalorder %s340, %s354
      %p356 = scmp.eq.s32.totalorder %s36, 0
      %p357 = por %p355, %p356
      %s359 = sadd.s32 %s358, 1
      %p362 = scmp.eq.s32.totalorder %s30, 1
      %p363 = scmp.ne.s32.totalorder %s358, %s360
      %p364 = scmp.eq.s32.totalorder %s30, 0
      %p365 = por %p363, %p364
      %p366 = scmp.ne.s32.totalorder %s358, %s360
      %p367 = scmp.eq.s32.totalorder %s35, 1
      %p368 = por %p366, %p367
      %p369 = scmp.ne.s32.totalorder %s360, %s361
      %p370 = scmp.eq.s32.totalorder %s35, 0
      %p371 = por %p369, %p370
      %p372 = scmp.ne.s32.totalorder %s360, %s361
      %p373 = scmp.eq.s32.totalorder %s36, 1
      %p374 = por %p372, %p373
      %p376 = scmp.ne.s32.totalorder %s361, %s375
      %p377 = scmp.eq.s32.totalorder %s36, 0
      %p378 = por %p376, %p377
      %s380 = sadd.s32 %s379, 1
      %p383 = scmp.eq.s32.totalorder %s30, 1
      %p384 = scmp.ne.s32.totalorder %s379, %s381
      %p385 = scmp.eq.s32.totalorder %s30, 0
      %p386 = por %p384, %p385
      %p387 = scmp.ne.s32.totalorder %s379, %s381
      %p388 = scmp.eq.s32.totalorder %s35, 1
      %p389 = por %p387, %p388
      %p390 = scmp.ne.s32.totalorder %s381, %s382
      %p391 = scmp.eq.s32.totalorder %s35, 0
      %p392 = por %p390, %p391
      %p393 = scmp.ne.s32.totalorder %s381, %s382
      %p394 = scmp.eq.s32.totalorder %s36, 1
      %p395 = por %p393, %p394
      %p397 = scmp.ne.s32.totalorder %s382, %s396
      %p398 = scmp.eq.s32.totalorder %s36, 0
      %p399 = por %p397, %p398
      %s400 = ssub.s32 %s30, %s37
      %p401 = scmp.eq.s32.totalorder %s400, 0
      %s403 = sadd.s32 %s402, 1
      %s404 = scalar_select %p401, %s402, %s403
      %p407 = pneg %p401
      %p408 = scmp.eq.s32.totalorder %s30, 1
      %p409 = por %p407, %p408
      %p410 = scmp.ne.s32.totalorder %s402, %s405
      %p411 = scmp.eq.s32.totalorder %s30, 0
      %p412 = por %p410, %p411
      %p413 = scmp.ne.s32.totalorder %s402, %s405
      %p414 = scmp.eq.s32.totalorder %s35, 1
      %p415 = por %p413, %p414
      %p416 = scmp.ne.s32.totalorder %s405, %s406
      %p417 = scmp.eq.s32.totalorder %s35, 0
      %p418 = por %p416, %p417
      %p419 = scmp.ne.s32.totalorder %s405, %s406
      %p420 = scmp.eq.s32.totalorder %s36, 1
      %p421 = por %p419, %p420
      %p423 = scmp.ne.s32.totalorder %s406, %s422
      %p424 = scmp.eq.s32.totalorder %s36, 0
      %p425 = por %p423, %p424
      %p426 = scmp.le.s32.totalorder 1, %s30
      %p427 = scmp.lt.s32.totalorder %s30, 3
      %p428 = pnand %p426, %p427
      %p429 = pneg %p428
      // Predicated region
      $region9: #{tpu_custom_call.1} parent=5 // pred_check
        _
      $region10: #{tpu_custom_call.1} parent=5 // pred_check_branch
        %431 = sbr.rel (%p428) target = $region12
      $region11: #{tpu_custom_call.1} parent=5 // pred_region
        %s432 = ssub.s32 %s30, 1
        // Predicated region
        $region13: #{tpu_custom_call.1} parent=11 // pred_check
          %p433 = pneg %p77
        $region14: #{tpu_custom_call.1} parent=11 // pred_check_branch
          %435 = sbr.rel (%p433) target = $region16
        $region15: #{tpu_custom_call.1} parent=11 // pred_region
          _
        $region16: #{tpu_custom_call.1} parent=11 // pred_fallthru
          _
        // Predicated region
        $region17: #{tpu_custom_call.1} parent=11 // pred_check
          %p436 = pneg %p98
        $region18: #{tpu_custom_call.1} parent=11 // pred_check_branch
          %438 = sbr.rel (%p436) target = $region20
        $region19: #{tpu_custom_call.1} parent=11 // pred_region
          _
        $region20: #{tpu_custom_call.1} parent=11 // pred_fallthru
          _
        // Predicated region
        $region21: #{tpu_custom_call.1} parent=11 // pred_check
          %p439 = pneg %p119
        $region22: #{tpu_custom_call.1} parent=11 // pred_check_branch
          %441 = sbr.rel (%p439) target = $region24
        $region23: #{tpu_custom_call.1} parent=11 // pred_region
          %443 = vsyncadd [#allocation3], 0
          %s444 = sshll.u32 %s3, 4
          %s445 = int_to_ptr.hbm [resolvable:$true] %s444
          %s446 = sshll.u32 [#allocation2], 4
          %s447 = int_to_ptr.vmem [resolvable:$true] %s446
          %452 = dma.hbm_to_vmem [thread:$0]  %s445, 2048, %s447, [#allocation3], 64, 64, 4
        $region24: #{tpu_custom_call.1} parent=11 // pred_fallthru
          _
        // Predicated region
        $region25: #{tpu_custom_call.1} parent=11 // pred_check
          %p453 = pneg %p140
        $region26: #{tpu_custom_call.1} parent=11 // pred_check_branch
          %455 = sbr.rel (%p453) target = $region28
        $region27: #{tpu_custom_call.1} parent=11 // pred_region
          _
        $region28: #{tpu_custom_call.1} parent=11 // pred_fallthru
          _
        // Predicated region
        $region29: #{tpu_custom_call.1} parent=11 // pred_check
          %p456 = pneg %p161
        $region30: #{tpu_custom_call.1} parent=11 // pred_check_branch
          %458 = sbr.rel (%p456) target = $region32
        $region31: #{tpu_custom_call.1} parent=11 // pred_region
          %460 = vsyncadd [#allocation6], 0
          %s461 = sshll.u32 %s5, 4
          %s462 = int_to_ptr.hbm [resolvable:$true] %s461
          %s463 = sshll.u32 [#allocation5], 4
          %s464 = int_to_ptr.vmem [resolvable:$true] %s463
          %469 = dma.hbm_to_vmem [thread:$0]  %s462, 1024, %s464, [#allocation6], 64, 64, 4
        $region32: #{tpu_custom_call.1} parent=11 // pred_fallthru
          _
        // Predicated region
        $region33: #{tpu_custom_call.1} parent=11 // pred_check
          %p470 = pneg %p182
        $region34: #{tpu_custom_call.1} parent=11 // pred_check_branch
          %472 = sbr.rel (%p470) target = $region36
        $region35: #{tpu_custom_call.1} parent=11 // pred_region
          _
        $region36: #{tpu_custom_call.1} parent=11 // pred_fallthru
          _
        // Predicated region
        $region37: #{tpu_custom_call.1} parent=11 // pred_check
          %p473 = pneg %p203
        $region38: #{tpu_custom_call.1} parent=11 // pred_check_branch
          %475 = sbr.rel (%p473) target = $region40
        $region39: #{tpu_custom_call.1} parent=11 // pred_region
          %477 = vsyncadd [#allocation6], 0
          %s478 = sshll.u32 %s7, 4
          %s479 = int_to_ptr.hbm [resolvable:$true] %s478
          %s480 = sshll.u32 [#allocation7], 4
          %s481 = int_to_ptr.vmem [resolvable:$true] %s480
          %486 = dma.hbm_to_vmem [thread:$0]  %s479, 2048, %s481, [#allocation6], 64, 64, 4
        $region40: #{tpu_custom_call.1} parent=11 // pred_fallthru
          _
        // Predicated region
        $region41: #{tpu_custom_call.1} parent=11 // pred_check
          %p487 = pneg %p224
        $region42: #{tpu_custom_call.1} parent=11 // pred_check_branch
          %489 = sbr.rel (%p487) target = $region44
        $region43: #{tpu_custom_call.1} parent=11 // pred_region
          _
        $region44: #{tpu_custom_call.1} parent=11 // pred_fallthru
          _
        // Predicated region
        $region45: #{tpu_custom_call.1} parent=11 // pred_check
          %p490 = pneg %p245
        $region46: #{tpu_custom_call.1} parent=11 // pred_check_branch
          %492 = sbr.rel (%p490) target = $region48
        $region47: #{tpu_custom_call.1} parent=11 // pred_region
          _
        $region48: #{tpu_custom_call.1} parent=11 // pred_fallthru
          _
        // Predicated region
        $region49: #{tpu_custom_call.1} parent=11 // pred_check
          %p493 = pneg %p266
        $region50: #{tpu_custom_call.1} parent=11 // pred_check_branch
          %495 = sbr.rel (%p493) target = $region52
        $region51: #{tpu_custom_call.1} parent=11 // pred_region
          _
        $region52: #{tpu_custom_call.1} parent=11 // pred_fallthru
          _
        // Predicated region
        $region53: #{tpu_custom_call.1} parent=11 // pred_check
          %p496 = pneg %p287
        $region54: #{tpu_custom_call.1} parent=11 // pred_check_branch
          %498 = sbr.rel (%p496) target = $region56
        $region55: #{tpu_custom_call.1} parent=11 // pred_region
          %500 = vsyncadd [#allocation9], 0
          %s501 = sshll.u32 %s11, 4
          %s502 = int_to_ptr.hbm [resolvable:$true] %s501
          %s503 = sshll.u32 [#allocation8], 4
          %s504 = int_to_ptr.vmem [resolvable:$true] %s503
          %509 = dma.hbm_to_vmem [thread:$0]  %s502, 4096, %s504, [#allocation9], 64, 64, 4
        $region56: #{tpu_custom_call.1} parent=11 // pred_fallthru
          _
        // Predicated region
        $region57: #{tpu_custom_call.1} parent=11 // pred_check
          %p510 = pneg %p308
        $region58: #{tpu_custom_call.1} parent=11 // pred_check_branch
          %512 = sbr.rel (%p510) target = $region60
        $region59: #{tpu_custom_call.1} parent=11 // pred_region
          _
        $region60: #{tpu_custom_call.1} parent=11 // pred_fallthru
          _
        // Predicated region
        $region61: #{tpu_custom_call.1} parent=11 // pred_check
          %p513 = pneg %p329
        $region62: #{tpu_custom_call.1} parent=11 // pred_check_branch
          %515 = sbr.rel (%p513) target = $region64
        $region63: #{tpu_custom_call.1} parent=11 // pred_region
          %517 = vsyncadd [#allocation9], 0
          %s518 = sshll.u32 %s13, 4
          %s519 = int_to_ptr.hbm [resolvable:$true] %s518
          %s520 = sshll.u32 [#allocation10], 4
          %s521 = int_to_ptr.vmem [resolvable:$true] %s520
          %526 = dma.hbm_to_vmem [thread:$0]  %s519, 4096, %s521, [#allocation9], 64, 64, 4
        $region64: #{tpu_custom_call.1} parent=11 // pred_fallthru
          _
        // Predicated region
        $region65: #{tpu_custom_call.1} parent=11 // pred_check
          %p527 = pneg %p350
        $region66: #{tpu_custom_call.1} parent=11 // pred_check_branch
          %529 = sbr.rel (%p527) target = $region68
        $region67: #{tpu_custom_call.1} parent=11 // pred_region
          %531 = vsyncadd [#allocation12], 0
          %s532 = sshll.u32 %s14, 4
          %s533 = int_to_ptr.hbm [resolvable:$true] %s532
          %s534 = sshll.u32 [#allocation11], 4
          %s535 = int_to_ptr.vmem [resolvable:$true] %s534
          %540 = dma.hbm_to_vmem [thread:$0]  %s533, 4096, %s535, [#allocation12], 64, 64, 4
        $region68: #{tpu_custom_call.1} parent=11 // pred_fallthru
          _
        // Predicated region
        $region69: #{tpu_custom_call.1} parent=11 // pred_check
          %p541 = pneg %p371
        $region70: #{tpu_custom_call.1} parent=11 // pred_check_branch
          %543 = sbr.rel (%p541) target = $region72
        $region71: #{tpu_custom_call.1} parent=11 // pred_region
          %545 = vsyncadd [#allocation12], 0
          %s546 = sshll.u32 %s15, 4
          %s547 = int_to_ptr.hbm [resolvable:$true] %s546
          %s548 = sshll.u32 [#allocation13], 4
          %s549 = int_to_ptr.vmem [resolvable:$true] %s548
          %554 = dma.hbm_to_vmem [thread:$0]  %s547, 1024, %s549, [#allocation12], 64, 64, 4
        $region72: #{tpu_custom_call.1} parent=11 // pred_fallthru
          _
        // Predicated region
        $region73: #{tpu_custom_call.1} parent=11 // pred_check
          %p555 = pneg %p392
        $region74: #{tpu_custom_call.1} parent=11 // pred_check_branch
          %557 = sbr.rel (%p555) target = $region76
        $region75: #{tpu_custom_call.1} parent=11 // pred_region
          _
        $region76: #{tpu_custom_call.1} parent=11 // pred_fallthru
          _
      $region12: #{tpu_custom_call.1} parent=5 // pred_fallthru
        _
      %p558 = scmp.lt.s32.totalorder %s30, 2
      // Predicated region
      $region77: #{tpu_custom_call.1} parent=5 // pred_check
        %p559 = pneg %p558
      $region78: #{tpu_custom_call.1} parent=5 // pred_check_branch
        %561 = sbr.rel (%p559) target = $region80
      $region79: #{tpu_custom_call.1} parent=5 // pred_region
        // Predicated region
        $region81: #{tpu_custom_call.1} parent=79 // pred_check
          %p562 = pneg %p50
        $region82: #{tpu_custom_call.1} parent=79 // pred_check_branch
          %564 = sbr.rel (%p562) target = $region84
        $region83: #{tpu_custom_call.1} parent=79 // pred_region
          %s565 = smul.u32 32, %s30
          %p566 = scmp.lt.s32.totalorder %s565, 63
          %s567 = scalar_select %p566, %s565, 63
          %s568 = smul.addr %s567, 8
          %s569 = scalar_lea.vmem %s0, %s568
          %s570 = smul.u32 32, %s30
        $region84: #{tpu_custom_call.1} parent=79 // pred_fallthru
          _
      $region80: #{tpu_custom_call.1} parent=5 // pred_fallthru
        _
      %p571 = scmp.le.s32.totalorder 1, %s30
      %p572 = scmp.lt.s32.totalorder %s30, 3
      %p573 = pnand %p571, %p572
      %p574 = pneg %p573
      // Predicated region
      $region85: #{tpu_custom_call.1} parent=5 // pred_check
        _
      $region86: #{tpu_custom_call.1} parent=5 // pred_check_branch
        %576 = sbr.rel (%p573) target = $region88
      $region87: #{tpu_custom_call.1} parent=5 // pred_region
        %s577 = ssub.s32 %s30, 1
        // Predicated region
        $region89: #{tpu_custom_call.1} parent=87 // pred_check
          %p578 = pneg %p119
        $region90: #{tpu_custom_call.1} parent=87 // pred_check_branch
          %580 = sbr.rel (%p578) target = $region92
        $region91: #{tpu_custom_call.1} parent=87 // pred_region
          %582 = dma.done [#allocation3], 2048
        $region92: #{tpu_custom_call.1} parent=87 // pred_fallthru
          _
        // Predicated region
        $region93: #{tpu_custom_call.1} parent=87 // pred_check
          %p583 = pneg %p161
        $region94: #{tpu_custom_call.1} parent=87 // pred_check_branch
          %585 = sbr.rel (%p583) target = $region96
        $region95: #{tpu_custom_call.1} parent=87 // pred_region
          %587 = dma.done [#allocation6], 1024
        $region96: #{tpu_custom_call.1} parent=87 // pred_fallthru
          _
        // Predicated region
        $region97: #{tpu_custom_call.1} parent=87 // pred_check
          %p588 = pneg %p203
        $region98: #{tpu_custom_call.1} parent=87 // pred_check_branch
          %590 = sbr.rel (%p588) target = $region100
        $region99: #{tpu_custom_call.1} parent=87 // pred_region
          %592 = dma.done [#allocation6], 2048
        $region100: #{tpu_custom_call.1} parent=87 // pred_fallthru
          _
        // Predicated region
        $region101: #{tpu_custom_call.1} parent=87 // pred_check
          %p593 = pneg %p287
        $region102: #{tpu_custom_call.1} parent=87 // pred_check_branch
          %595 = sbr.rel (%p593) target = $region104
        $region103: #{tpu_custom_call.1} parent=87 // pred_region
          %597 = dma.done [#allocation9], 4096
        $region104: #{tpu_custom_call.1} parent=87 // pred_fallthru
          _
        // Predicated region
        $region105: #{tpu_custom_call.1} parent=87 // pred_check
          %p598 = pneg %p329
        $region106: #{tpu_custom_call.1} parent=87 // pred_check_branch
          %600 = sbr.rel (%p598) target = $region108
        $region107: #{tpu_custom_call.1} parent=87 // pred_region
          %602 = dma.done [#allocation9], 4096
        $region108: #{tpu_custom_call.1} parent=87 // pred_fallthru
          _
        // Predicated region
        $region109: #{tpu_custom_call.1} parent=87 // pred_check
          %p603 = pneg %p350
        $region110: #{tpu_custom_call.1} parent=87 // pred_check_branch
          %605 = sbr.rel (%p603) target = $region112
        $region111: #{tpu_custom_call.1} parent=87 // pred_region
          %607 = dma.done [#allocation12], 4096
        $region112: #{tpu_custom_call.1} parent=87 // pred_fallthru
          _
        // Predicated region
        $region113: #{tpu_custom_call.1} parent=87 // pred_check
          %p608 = pneg %p371
        $region114: #{tpu_custom_call.1} parent=87 // pred_check_branch
          %610 = sbr.rel (%p608) target = $region116
        $region115: #{tpu_custom_call.1} parent=87 // pred_region
          %612 = dma.done [#allocation12], 1024
        $region116: #{tpu_custom_call.1} parent=87 // pred_fallthru
          _
        %s613 = smul.u32 32, %s35
        %p614 = scmp.lt.s32.totalorder %s613, 63
        %s615 = scalar_select %p614, %s613, 63
        %s616 = smul.addr %s615, 8
        %s617 = scalar_lea.vmem %s0, %s616
        %p618 = pneg %p56
        %p619 = pneg %p53
        %p620 = pneg %p77
        %p621 = pneg %p74
        %p622 = pneg %p98
        %p623 = pneg %p95
        %p624 = pneg %p119
        %p625 = pneg %p116
        %p626 = pneg %p140
        %p627 = pneg %p137
        %p628 = pneg %p161
        %p629 = pneg %p158
        %p630 = pneg %p182
        %p631 = pneg %p179
        %p632 = pneg %p203
        %p633 = pneg %p200
        %p634 = pneg %p224
        %p635 = pneg %p221
        %p636 = pneg %p245
        %p637 = pneg %p242
        %p638 = pneg %p266
        %p639 = pneg %p263
        %p640 = pneg %p287
        %p641 = pneg %p284
        %p642 = pneg %p308
        %p643 = pneg %p305
        %p644 = pneg %p329
        %p645 = pneg %p326
        %p646 = pneg %p350
        %p647 = pneg %p347
        %p648 = pneg %p371
        %p649 = pneg %p368
        %p650 = pneg %p392
        %p651 = pneg %p389
        %p652 = pneg %p418
        %p653 = pneg %p415
        %s654 = sand.u32 %s405, 1
        %s655 = scalar_lea.sflag [#allocation4], %s654
        %s656 = sand.u32 %s405, 1
        %s657 = smul.addr %s656, 4
        %s658 = scalar_lea.vmem [#allocation14], %s657
        %s659 = smul.u32 32, %s35
        %p660 = scmp.lt.s32.totalorder %s659, 63
        %s661 = scalar_select %p660, %s659, 63
        %s662 = smul.addr %s661, 8
        %s663 = scalar_lea.vmem %s0, %s662
        %s664 = smul.u32 32, %s35
        %v665 = vld [vmem:[%s663] sm:$0xff]
        %v666 = vld [vmem:[%s663 + $0x8] sm:$0xff]
        %v667 = vld [vmem:[%s663 + $0x10] sm:$0xff]
        %v668 = vld [vmem:[%s663 + $0x18] sm:$0xff]
        %v669 = vld [vmem:[%s663 + $0x20] sm:$0xff]
        %v670 = vld [vmem:[%s663 + $0x28] sm:$0xff]
        %v671 = vld [vmem:[%s663 + $0x30] sm:$0xff]
        %v672 = vld [vmem:[%s663 + $0x38] sm:$0xff]
        %v673 = vld [vmem:[%s663 + $0x40] sm:$0xff]
        %v674 = vld [vmem:[%s663 + $0x48] sm:$0xff]
        %v675 = vld [vmem:[%s663 + $0x50] sm:$0xff]
        %v676 = vld [vmem:[%s663 + $0x58] sm:$0xff]
        %v677 = vld [vmem:[%s663 + $0x60] sm:$0xff]
        %v678 = vld [vmem:[%s663 + $0x68] sm:$0xff]
        %v679 = vld [vmem:[%s663 + $0x70] sm:$0xff]
        %v680 = vld [vmem:[%s663 + $0x78] sm:$0xff]
        %v681 = vld [vmem:[%s663 + $0x80] sm:$0xff]
        %v682 = vld [vmem:[%s663 + $0x88] sm:$0xff]
        %v683 = vld [vmem:[%s663 + $0x90] sm:$0xff]
        %v684 = vld [vmem:[%s663 + $0x98] sm:$0xff]
        %v685 = vld [vmem:[%s663 + $0xa0] sm:$0xff]
        %v686 = vld [vmem:[%s663 + $0xa8] sm:$0xff]
        %v687 = vld [vmem:[%s663 + $0xb0] sm:$0xff]
        %v688 = vld [vmem:[%s663 + $0xb8] sm:$0xff]
        %v689 = vld [vmem:[%s663 + $0xc0] sm:$0xff]
        %v690 = vld [vmem:[%s663 + $0xc8] sm:$0xff]
        %v691 = vld [vmem:[%s663 + $0xd0] sm:$0xff]
        %v692 = vld [vmem:[%s663 + $0xd8] sm:$0xff]
        %v693 = vld [vmem:[%s663 + $0xe0] sm:$0xff]
        %v694 = vld [vmem:[%s663 + $0xe8] sm:$0xff]
        %v695 = vld [vmem:[%s663 + $0xf0] sm:$0xff]
        %v696 = vld [vmem:[%s663 + $0xf8] sm:$0xff]
        %v697 = vld [vmem:[%s1] sm:$0x77]
        %699 = vset.pattern.permute.xlu0 0
        %700 = vperm.xlu0 %699, %v665
        %v701 = vpop.permute.xlu0 %700
        %704 = vset.pattern.permute.xlu0 0
        %705 = vperm.xlu0 %704, %v666
        %v706 = vpop.permute.xlu0 %705
        %709 = vset.pattern.permute.xlu0 0
        %710 = vperm.xlu0 %709, %v667
        %v711 = vpop.permute.xlu0 %710
        %714 = vset.pattern.permute.xlu0 0
        %715 = vperm.xlu0 %714, %v668
        %v716 = vpop.permute.xlu0 %715
        %719 = vset.pattern.permute.xlu0 0
        %720 = vperm.xlu0 %719, %v669
        %v721 = vpop.permute.xlu0 %720
        %724 = vset.pattern.permute.xlu0 0
        %725 = vperm.xlu0 %724, %v670
        %v726 = vpop.permute.xlu0 %725
        %729 = vset.pattern.permute.xlu0 0
        %730 = vperm.xlu0 %729, %v671
        %v731 = vpop.permute.xlu0 %730
        %734 = vset.pattern.permute.xlu0 0
        %735 = vperm.xlu0 %734, %v672
        %v736 = vpop.permute.xlu0 %735
        %739 = vset.pattern.permute.xlu0 0
        %740 = vperm.xlu0 %739, %v673
        %v741 = vpop.permute.xlu0 %740
        %744 = vset.pattern.permute.xlu0 0
        %745 = vperm.xlu0 %744, %v674
        %v746 = vpop.permute.xlu0 %745
        %749 = vset.pattern.permute.xlu0 0
        %750 = vperm.xlu0 %749, %v675
        %v751 = vpop.permute.xlu0 %750
        %754 = vset.pattern.permute.xlu0 0
        %755 = vperm.xlu0 %754, %v676
        %v756 = vpop.permute.xlu0 %755
        %759 = vset.pattern.permute.xlu0 0
        %760 = vperm.xlu0 %759, %v677
        %v761 = vpop.permute.xlu0 %760
        %764 = vset.pattern.permute.xlu0 0
        %765 = vperm.xlu0 %764, %v678
        %v766 = vpop.permute.xlu0 %765
        %769 = vset.pattern.permute.xlu0 0
        %770 = vperm.xlu0 %769, %v679
        %v771 = vpop.permute.xlu0 %770
        %774 = vset.pattern.permute.xlu0 0
        %775 = vperm.xlu0 %774, %v680
        %v776 = vpop.permute.xlu0 %775
        %779 = vset.pattern.permute.xlu0 0
        %780 = vperm.xlu0 %779, %v681
        %v781 = vpop.permute.xlu0 %780
        %784 = vset.pattern.permute.xlu0 0
        %785 = vperm.xlu0 %784, %v682
        %v786 = vpop.permute.xlu0 %785
        %789 = vset.pattern.permute.xlu0 0
        %790 = vperm.xlu0 %789, %v683
        %v791 = vpop.permute.xlu0 %790
        %794 = vset.pattern.permute.xlu0 0
        %795 = vperm.xlu0 %794, %v684
        %v796 = vpop.permute.xlu0 %795
        %799 = vset.pattern.permute.xlu0 0
        %800 = vperm.xlu0 %799, %v685
        %v801 = vpop.permute.xlu0 %800
        %804 = vset.pattern.permute.xlu0 0
        %805 = vperm.xlu0 %804, %v686
        %v806 = vpop.permute.xlu0 %805
        %809 = vset.pattern.permute.xlu0 0
        %810 = vperm.xlu0 %809, %v687
        %v811 = vpop.permute.xlu0 %810
        %814 = vset.pattern.permute.xlu0 0
        %815 = vperm.xlu0 %814, %v688
        %v816 = vpop.permute.xlu0 %815
        %819 = vset.pattern.permute.xlu0 0
        %820 = vperm.xlu0 %819, %v689
        %v821 = vpop.permute.xlu0 %820
        %824 = vset.pattern.permute.xlu0 0
        %825 = vperm.xlu0 %824, %v690
        %v826 = vpop.permute.xlu0 %825
        %829 = vset.pattern.permute.xlu0 0
        %830 = vperm.xlu0 %829, %v691
        %v831 = vpop.permute.xlu0 %830
        %834 = vset.pattern.permute.xlu0 0
        %835 = vperm.xlu0 %834, %v692
        %v836 = vpop.permute.xlu0 %835
        %839 = vset.pattern.permute.xlu0 0
        %840 = vperm.xlu0 %839, %v693
        %v841 = vpop.permute.xlu0 %840
        %844 = vset.pattern.permute.xlu0 0
        %845 = vperm.xlu0 %844, %v694
        %v846 = vpop.permute.xlu0 %845
        %849 = vset.pattern.permute.xlu0 0
        %850 = vperm.xlu0 %849, %v695
        %v851 = vpop.permute.xlu0 %850
        %854 = vset.pattern.permute.xlu0 0
        %855 = vperm.xlu0 %854, %v696
        %v856 = vpop.permute.xlu0 %855
        %v859 = vperm.slane %v697, 0
        %v860 = vperm.slane %v697, 4
        %v863 = vperm.slane %v859, 0
        %v864 = vperm.slane %v860, 0
        %v865 = vmul.f32 %v701, %v863
        %v866 = vmul.f32 %v701, %v864
        %v867 = vmul.f32 %v706, %v863
        %v868 = vmul.f32 %v706, %v864
        %v869 = vmul.f32 %v711, %v863
        %v870 = vmul.f32 %v711, %v864
        %v871 = vmul.f32 %v716, %v863
        %v872 = vmul.f32 %v716, %v864
        %v873 = vmul.f32 %v721, %v863
        %v874 = vmul.f32 %v721, %v864
        %v875 = vmul.f32 %v726, %v863
        %v876 = vmul.f32 %v726, %v864
        %v877 = vmul.f32 %v731, %v863
        %v878 = vmul.f32 %v731, %v864
        %v879 = vmul.f32 %v736, %v863
        %v880 = vmul.f32 %v736, %v864
        %v881 = vmul.f32 %v741, %v863
        %v882 = vmul.f32 %v741, %v864
        %v883 = vmul.f32 %v746, %v863
        %v884 = vmul.f32 %v746, %v864
        %v885 = vmul.f32 %v751, %v863
        %v886 = vmul.f32 %v751, %v864
        %v887 = vmul.f32 %v756, %v863
        %v888 = vmul.f32 %v756, %v864
        %v889 = vmul.f32 %v761, %v863
        %v890 = vmul.f32 %v761, %v864
        %v891 = vmul.f32 %v766, %v863
        %v892 = vmul.f32 %v766, %v864
        %v893 = vmul.f32 %v771, %v863
        %v894 = vmul.f32 %v771, %v864
        %v895 = vmul.f32 %v776, %v863
        %v896 = vmul.f32 %v776, %v864
        %v897 = vmul.f32 %v781, %v863
        %v898 = vmul.f32 %v781, %v864
        %v899 = vmul.f32 %v786, %v863
        %v900 = vmul.f32 %v786, %v864
        %v901 = vmul.f32 %v791, %v863
        %v902 = vmul.f32 %v791, %v864
        %v903 = vmul.f32 %v796, %v863
        %v904 = vmul.f32 %v796, %v864
        %v905 = vmul.f32 %v801, %v863
        %v906 = vmul.f32 %v801, %v864
        %v907 = vmul.f32 %v806, %v863
        %v908 = vmul.f32 %v806, %v864
        %v909 = vmul.f32 %v811, %v863
        %v910 = vmul.f32 %v811, %v864
        %v911 = vmul.f32 %v816, %v863
        %v912 = vmul.f32 %v816, %v864
        %v913 = vmul.f32 %v821, %v863
        %v914 = vmul.f32 %v821, %v864
        %v915 = vmul.f32 %v826, %v863
        %v916 = vmul.f32 %v826, %v864
        %v917 = vmul.f32 %v831, %v863
        %v918 = vmul.f32 %v831, %v864
        %v919 = vmul.f32 %v836, %v863
        %v920 = vmul.f32 %v836, %v864
        %v921 = vmul.f32 %v841, %v863
        %v922 = vmul.f32 %v841, %v864
        %v923 = vmul.f32 %v846, %v863
        %v924 = vmul.f32 %v846, %v864
        %v925 = vmul.f32 %v851, %v863
        %v926 = vmul.f32 %v851, %v864
        %v927 = vmul.f32 %v856, %v863
        %v928 = vmul.f32 %v856, %v864
        %929 = vset.pattern.permute.xlu0 1
        %930 = vperm.xlu0 %929, %v665
        %v931 = vpop.permute.xlu0 %930
        %933 = vset.pattern.permute.xlu0 1
        %934 = vperm.xlu0 %933, %v666
        %v935 = vpop.permute.xlu0 %934
        %937 = vset.pattern.permute.xlu0 1
        %938 = vperm.xlu0 %937, %v667
        %v939 = vpop.permute.xlu0 %938
        %941 = vset.pattern.permute.xlu0 1
        %942 = vperm.xlu0 %941, %v668
        %v943 = vpop.permute.xlu0 %942
        %945 = vset.pattern.permute.xlu0 1
        %946 = vperm.xlu0 %945, %v669
        %v947 = vpop.permute.xlu0 %946
        %949 = vset.pattern.permute.xlu0 1
        %950 = vperm.xlu0 %949, %v670
        %v951 = vpop.permute.xlu0 %950
        %953 = vset.pattern.permute.xlu0 1
        %954 = vperm.xlu0 %953, %v671
        %v955 = vpop.permute.xlu0 %954
        %957 = vset.pattern.permute.xlu0 1
        %958 = vperm.xlu0 %957, %v672
        %v959 = vpop.permute.xlu0 %958
        %961 = vset.pattern.permute.xlu0 1
        %962 = vperm.xlu0 %961, %v673
        %v963 = vpop.permute.xlu0 %962
        %965 = vset.pattern.permute.xlu0 1
        %966 = vperm.xlu0 %965, %v674
        %v967 = vpop.permute.xlu0 %966
        %969 = vset.pattern.permute.xlu0 1
        %970 = vperm.xlu0 %969, %v675
        %v971 = vpop.permute.xlu0 %970
        %973 = vset.pattern.permute.xlu0 1
        %974 = vperm.xlu0 %973, %v676
        %v975 = vpop.permute.xlu0 %974
        %977 = vset.pattern.permute.xlu0 1
        %978 = vperm.xlu0 %977, %v677
        %v979 = vpop.permute.xlu0 %978
        %981 = vset.pattern.permute.xlu0 1
        %982 = vperm.xlu0 %981, %v678
        %v983 = vpop.permute.xlu0 %982
        %985 = vset.pattern.permute.xlu0 1
        %986 = vperm.xlu0 %985, %v679
        %v987 = vpop.permute.xlu0 %986
        %989 = vset.pattern.permute.xlu0 1
        %990 = vperm.xlu0 %989, %v680
        %v991 = vpop.permute.xlu0 %990
        %993 = vset.pattern.permute.xlu0 1
        %994 = vperm.xlu0 %993, %v681
        %v995 = vpop.permute.xlu0 %994
        %997 = vset.pattern.permute.xlu0 1
        %998 = vperm.xlu0 %997, %v682
        %v999 = vpop.permute.xlu0 %998
        %1001 = vset.pattern.permute.xlu0 1
        %1002 = vperm.xlu0 %1001, %v683
        %v1003 = vpop.permute.xlu0 %1002
        %1005 = vset.pattern.permute.xlu0 1
        %1006 = vperm.xlu0 %1005, %v684
        %v1007 = vpop.permute.xlu0 %1006
        %1009 = vset.pattern.permute.xlu0 1
        %1010 = vperm.xlu0 %1009, %v685
        %v1011 = vpop.permute.xlu0 %1010
        %1013 = vset.pattern.permute.xlu0 1
        %1014 = vperm.xlu0 %1013, %v686
        %v1015 = vpop.permute.xlu0 %1014
        %1017 = vset.pattern.permute.xlu0 1
        %1018 = vperm.xlu0 %1017, %v687
        %v1019 = vpop.permute.xlu0 %1018
        %1021 = vset.pattern.permute.xlu0 1
        %1022 = vperm.xlu0 %1021, %v688
        %v1023 = vpop.permute.xlu0 %1022
        %1025 = vset.pattern.permute.xlu0 1
        %1026 = vperm.xlu0 %1025, %v689
        %v1027 = vpop.permute.xlu0 %1026
        %1029 = vset.pattern.permute.xlu0 1
        %1030 = vperm.xlu0 %1029, %v690
        %v1031 = vpop.permute.xlu0 %1030
        %1033 = vset.pattern.permute.xlu0 1
        %1034 = vperm.xlu0 %1033, %v691
        %v1035 = vpop.permute.xlu0 %1034
        %1037 = vset.pattern.permute.xlu0 1
        %1038 = vperm.xlu0 %1037, %v692
        %v1039 = vpop.permute.xlu0 %1038
        %1041 = vset.pattern.permute.xlu0 1
        %1042 = vperm.xlu0 %1041, %v693
        %v1043 = vpop.permute.xlu0 %1042
        %1045 = vset.pattern.permute.xlu0 1
        %1046 = vperm.xlu0 %1045, %v694
        %v1047 = vpop.permute.xlu0 %1046
        %1049 = vset.pattern.permute.xlu0 1
        %1050 = vperm.xlu0 %1049, %v695
        %v1051 = vpop.permute.xlu0 %1050
        %1053 = vset.pattern.permute.xlu0 1
        %1054 = vperm.xlu0 %1053, %v696
        %v1055 = vpop.permute.xlu0 %1054
        %v1057 = vperm.slane %v697, 1
        %v1058 = vperm.slane %v697, 5
        %v1061 = vperm.slane %v1057, 1
        %v1062 = vperm.slane %v1058, 1
        %v1063 = vmul.f32 %v931, %v1061
        %v1064 = vmul.f32 %v931, %v1062
        %v1065 = vmul.f32 %v935, %v1061
        %v1066 = vmul.f32 %v935, %v1062
        %v1067 = vmul.f32 %v939, %v1061
        %v1068 = vmul.f32 %v939, %v1062
        %v1069 = vmul.f32 %v943, %v1061
        %v1070 = vmul.f32 %v943, %v1062
        %v1071 = vmul.f32 %v947, %v1061
        %v1072 = vmul.f32 %v947, %v1062
        %v1073 = vmul.f32 %v951, %v1061
        %v1074 = vmul.f32 %v951, %v1062
        %v1075 = vmul.f32 %v955, %v1061
        %v1076 = vmul.f32 %v955, %v1062
        %v1077 = vmul.f32 %v959, %v1061
        %v1078 = vmul.f32 %v959, %v1062
        %v1079 = vmul.f32 %v963, %v1061
        %v1080 = vmul.f32 %v963, %v1062
        %v1081 = vmul.f32 %v967, %v1061
        %v1082 = vmul.f32 %v967, %v1062
        %v1083 = vmul.f32 %v971, %v1061
        %v1084 = vmul.f32 %v971, %v1062
        %v1085 = vmul.f32 %v975, %v1061
        %v1086 = vmul.f32 %v975, %v1062
        %v1087 = vmul.f32 %v979, %v1061
        %v1088 = vmul.f32 %v979, %v1062
        %v1089 = vmul.f32 %v983, %v1061
        %v1090 = vmul.f32 %v983, %v1062
        %v1091 = vmul.f32 %v987, %v1061
        %v1092 = vmul.f32 %v987, %v1062
        %v1093 = vmul.f32 %v991, %v1061
        %v1094 = vmul.f32 %v991, %v1062
        %v1095 = vmul.f32 %v995, %v1061
        %v1096 = vmul.f32 %v995, %v1062
        %v1097 = vmul.f32 %v999, %v1061
        %v1098 = vmul.f32 %v999, %v1062
        %v1099 = vmul.f32 %v1003, %v1061
        %v1100 = vmul.f32 %v1003, %v1062
        %v1101 = vmul.f32 %v1007, %v1061
        %v1102 = vmul.f32 %v1007, %v1062
        %v1103 = vmul.f32 %v1011, %v1061
        %v1104 = vmul.f32 %v1011, %v1062
        %v1105 = vmul.f32 %v1015, %v1061
        %v1106 = vmul.f32 %v1015, %v1062
        %v1107 = vmul.f32 %v1019, %v1061
        %v1108 = vmul.f32 %v1019, %v1062
        %v1109 = vmul.f32 %v1023, %v1061
        %v1110 = vmul.f32 %v1023, %v1062
        %v1111 = vmul.f32 %v1027, %v1061
        %v1112 = vmul.f32 %v1027, %v1062
        %v1113 = vmul.f32 %v1031, %v1061
        %v1114 = vmul.f32 %v1031, %v1062
        %v1115 = vmul.f32 %v1035, %v1061
        %v1116 = vmul.f32 %v1035, %v1062
        %v1117 = vmul.f32 %v1039, %v1061
        %v1118 = vmul.f32 %v1039, %v1062
        %v1119 = vmul.f32 %v1043, %v1061
        %v1120 = vmul.f32 %v1043, %v1062
        %v1121 = vmul.f32 %v1047, %v1061
        %v1122 = vmul.f32 %v1047, %v1062
        %v1123 = vmul.f32 %v1051, %v1061
        %v1124 = vmul.f32 %v1051, %v1062
        %v1125 = vmul.f32 %v1055, %v1061
        %v1126 = vmul.f32 %v1055, %v1062
        %v1127 = vadd.f32 %v865, %v1063
        %v1128 = vadd.f32 %v866, %v1064
        %v1129 = vadd.f32 %v867, %v1065
        %v1130 = vadd.f32 %v868, %v1066
        %v1131 = vadd.f32 %v869, %v1067
        %v1132 = vadd.f32 %v870, %v1068
        %v1133 = vadd.f32 %v871, %v1069
        %v1134 = vadd.f32 %v872, %v1070
        %v1135 = vadd.f32 %v873, %v1071
        %v1136 = vadd.f32 %v874, %v1072
        %v1137 = vadd.f32 %v875, %v1073
        %v1138 = vadd.f32 %v876, %v1074
        %v1139 = vadd.f32 %v877, %v1075
        %v1140 = vadd.f32 %v878, %v1076
        %v1141 = vadd.f32 %v879, %v1077
        %v1142 = vadd.f32 %v880, %v1078
        %v1143 = vadd.f32 %v881, %v1079
        %v1144 = vadd.f32 %v882, %v1080
        %v1145 = vadd.f32 %v883, %v1081
        %v1146 = vadd.f32 %v884, %v1082
        %v1147 = vadd.f32 %v885, %v1083
        %v1148 = vadd.f32 %v886, %v1084
        %v1149 = vadd.f32 %v887, %v1085
        %v1150 = vadd.f32 %v888, %v1086
        %v1151 = vadd.f32 %v889, %v1087
        %v1152 = vadd.f32 %v890, %v1088
        %v1153 = vadd.f32 %v891, %v1089
        %v1154 = vadd.f32 %v892, %v1090
        %v1155 = vadd.f32 %v893, %v1091
        %v1156 = vadd.f32 %v894, %v1092
        %v1157 = vadd.f32 %v895, %v1093
        %v1158 = vadd.f32 %v896, %v1094
        %v1159 = vadd.f32 %v897, %v1095
        %v1160 = vadd.f32 %v898, %v1096
        %v1161 = vadd.f32 %v899, %v1097
        %v1162 = vadd.f32 %v900, %v1098
        %v1163 = vadd.f32 %v901, %v1099
        %v1164 = vadd.f32 %v902, %v1100
        %v1165 = vadd.f32 %v903, %v1101
        %v1166 = vadd.f32 %v904, %v1102
        %v1167 = vadd.f32 %v905, %v1103
        %v1168 = vadd.f32 %v906, %v1104
        %v1169 = vadd.f32 %v907, %v1105
        %v1170 = vadd.f32 %v908, %v1106
        %v1171 = vadd.f32 %v909, %v1107
        %v1172 = vadd.f32 %v910, %v1108
        %v1173 = vadd.f32 %v911, %v1109
        %v1174 = vadd.f32 %v912, %v1110
        %v1175 = vadd.f32 %v913, %v1111
        %v1176 = vadd.f32 %v914, %v1112
        %v1177 = vadd.f32 %v915, %v1113
        %v1178 = vadd.f32 %v916, %v1114
        %v1179 = vadd.f32 %v917, %v1115
        %v1180 = vadd.f32 %v918, %v1116
        %v1181 = vadd.f32 %v919, %v1117
        %v1182 = vadd.f32 %v920, %v1118
        %v1183 = vadd.f32 %v921, %v1119
        %v1184 = vadd.f32 %v922, %v1120
        %v1185 = vadd.f32 %v923, %v1121
        %v1186 = vadd.f32 %v924, %v1122
        %v1187 = vadd.f32 %v925, %v1123
        %v1188 = vadd.f32 %v926, %v1124
        %v1189 = vadd.f32 %v927, %v1125
        %v1190 = vadd.f32 %v928, %v1126
        %1191 = vset.pattern.permute.xlu0 2
        %1192 = vperm.xlu0 %1191, %v665
        %v1193 = vpop.permute.xlu0 %1192
        %1195 = vset.pattern.permute.xlu0 2
        %1196 = vperm.xlu0 %1195, %v666
        %v1197 = vpop.permute.xlu0 %1196
        %1199 = vset.pattern.permute.xlu0 2
        %1200 = vperm.xlu0 %1199, %v667
        %v1201 = vpop.permute.xlu0 %1200
        %1203 = vset.pattern.permute.xlu0 2
        %1204 = vperm.xlu0 %1203, %v668
        %v1205 = vpop.permute.xlu0 %1204
        %1207 = vset.pattern.permute.xlu0 2
        %1208 = vperm.xlu0 %1207, %v669
        %v1209 = vpop.permute.xlu0 %1208
        %1211 = vset.pattern.permute.xlu0 2
        %1212 = vperm.xlu0 %1211, %v670
        %v1213 = vpop.permute.xlu0 %1212
        %1215 = vset.pattern.permute.xlu0 2
        %1216 = vperm.xlu0 %1215, %v671
        %v1217 = vpop.permute.xlu0 %1216
        %1219 = vset.pattern.permute.xlu0 2
        %1220 = vperm.xlu0 %1219, %v672
        %v1221 = vpop.permute.xlu0 %1220
        %1223 = vset.pattern.permute.xlu0 2
        %1224 = vperm.xlu0 %1223, %v673
        %v1225 = vpop.permute.xlu0 %1224
        %1227 = vset.pattern.permute.xlu0 2
        %1228 = vperm.xlu0 %1227, %v674
        %v1229 = vpop.permute.xlu0 %1228
        %1231 = vset.pattern.permute.xlu0 2
        %1232 = vperm.xlu0 %1231, %v675
        %v1233 = vpop.permute.xlu0 %1232
        %1235 = vset.pattern.permute.xlu0 2
        %1236 = vperm.xlu0 %1235, %v676
        %v1237 = vpop.permute.xlu0 %1236
        %1239 = vset.pattern.permute.xlu0 2
        %1240 = vperm.xlu0 %1239, %v677
        %v1241 = vpop.permute.xlu0 %1240
        %1243 = vset.pattern.permute.xlu0 2
        %1244 = vperm.xlu0 %1243, %v678
        %v1245 = vpop.permute.xlu0 %1244
        %1247 = vset.pattern.permute.xlu0 2
        %1248 = vperm.xlu0 %1247, %v679
        %v1249 = vpop.permute.xlu0 %1248
        %1251 = vset.pattern.permute.xlu0 2
        %1252 = vperm.xlu0 %1251, %v680
        %v1253 = vpop.permute.xlu0 %1252
        %1255 = vset.pattern.permute.xlu0 2
        %1256 = vperm.xlu0 %1255, %v681
        %v1257 = vpop.permute.xlu0 %1256
        %1259 = vset.pattern.permute.xlu0 2
        %1260 = vperm.xlu0 %1259, %v682
        %v1261 = vpop.permute.xlu0 %1260
        %1263 = vset.pattern.permute.xlu0 2
        %1264 = vperm.xlu0 %1263, %v683
        %v1265 = vpop.permute.xlu0 %1264
        %1267 = vset.pattern.permute.xlu0 2
        %1268 = vperm.xlu0 %1267, %v684
        %v1269 = vpop.permute.xlu0 %1268
        %1271 = vset.pattern.permute.xlu0 2
        %1272 = vperm.xlu0 %1271, %v685
        %v1273 = vpop.permute.xlu0 %1272
        %1275 = vset.pattern.permute.xlu0 2
        %1276 = vperm.xlu0 %1275, %v686
        %v1277 = vpop.permute.xlu0 %1276
        %1279 = vset.pattern.permute.xlu0 2
        %1280 = vperm.xlu0 %1279, %v687
        %v1281 = vpop.permute.xlu0 %1280
        %1283 = vset.pattern.permute.xlu0 2
        %1284 = vperm.xlu0 %1283, %v688
        %v1285 = vpop.permute.xlu0 %1284
        %1287 = vset.pattern.permute.xlu0 2
        %1288 = vperm.xlu0 %1287, %v689
        %v1289 = vpop.permute.xlu0 %1288
        %1291 = vset.pattern.permute.xlu0 2
        %1292 = vperm.xlu0 %1291, %v690
        %v1293 = vpop.permute.xlu0 %1292
        %1295 = vset.pattern.permute.xlu0 2
        %1296 = vperm.xlu0 %1295, %v691
        %v1297 = vpop.permute.xlu0 %1296
        %1299 = vset.pattern.permute.xlu0 2
        %1300 = vperm.xlu0 %1299, %v692
        %v1301 = vpop.permute.xlu0 %1300
        %1303 = vset.pattern.permute.xlu0 2
        %1304 = vperm.xlu0 %1303, %v693
        %v1305 = vpop.permute.xlu0 %1304
        %1307 = vset.pattern.permute.xlu0 2
        %1308 = vperm.xlu0 %1307, %v694
        %v1309 = vpop.permute.xlu0 %1308
        %1311 = vset.pattern.permute.xlu0 2
        %1312 = vperm.xlu0 %1311, %v695
        %v1313 = vpop.permute.xlu0 %1312
        %1315 = vset.pattern.permute.xlu0 2
        %1316 = vperm.xlu0 %1315, %v696
        %v1317 = vpop.permute.xlu0 %1316
        %v1319 = vperm.slane %v697, 2
        %v1320 = vperm.slane %v697, 6
        %v1323 = vperm.slane %v1319, 2
        %v1324 = vperm.slane %v1320, 2
        %v1325 = vmul.f32 %v1193, %v1323
        %v1326 = vmul.f32 %v1193, %v1324
        %v1327 = vmul.f32 %v1197, %v1323
        %v1328 = vmul.f32 %v1197, %v1324
        %v1329 = vmul.f32 %v1201, %v1323
        %v1330 = vmul.f32 %v1201, %v1324
        %v1331 = vmul.f32 %v1205, %v1323
        %v1332 = vmul.f32 %v1205, %v1324
        %v1333 = vmul.f32 %v1209, %v1323
        %v1334 = vmul.f32 %v1209, %v1324
        %v1335 = vmul.f32 %v1213, %v1323
        %v1336 = vmul.f32 %v1213, %v1324
        %v1337 = vmul.f32 %v1217, %v1323
        %v1338 = vmul.f32 %v1217, %v1324
        %v1339 = vmul.f32 %v1221, %v1323
        %v1340 = vmul.f32 %v1221, %v1324
        %v1341 = vmul.f32 %v1225, %v1323
        %v1342 = vmul.f32 %v1225, %v1324
        %v1343 = vmul.f32 %v1229, %v1323
        %v1344 = vmul.f32 %v1229, %v1324
        %v1345 = vmul.f32 %v1233, %v1323
        %v1346 = vmul.f32 %v1233, %v1324
        %v1347 = vmul.f32 %v1237, %v1323
        %v1348 = vmul.f32 %v1237, %v1324
        %v1349 = vmul.f32 %v1241, %v1323
        %v1350 = vmul.f32 %v1241, %v1324
        %v1351 = vmul.f32 %v1245, %v1323
        %v1352 = vmul.f32 %v1245, %v1324
        %v1353 = vmul.f32 %v1249, %v1323
        %v1354 = vmul.f32 %v1249, %v1324
        %v1355 = vmul.f32 %v1253, %v1323
        %v1356 = vmul.f32 %v1253, %v1324
        %v1357 = vmul.f32 %v1257, %v1323
        %v1358 = vmul.f32 %v1257, %v1324
        %v1359 = vmul.f32 %v1261, %v1323
        %v1360 = vmul.f32 %v1261, %v1324
        %v1361 = vmul.f32 %v1265, %v1323
        %v1362 = vmul.f32 %v1265, %v1324
        %v1363 = vmul.f32 %v1269, %v1323
        %v1364 = vmul.f32 %v1269, %v1324
        %v1365 = vmul.f32 %v1273, %v1323
        %v1366 = vmul.f32 %v1273, %v1324
        %v1367 = vmul.f32 %v1277, %v1323
        %v1368 = vmul.f32 %v1277, %v1324
        %v1369 = vmul.f32 %v1281, %v1323
        %v1370 = vmul.f32 %v1281, %v1324
        %v1371 = vmul.f32 %v1285, %v1323
        %v1372 = vmul.f32 %v1285, %v1324
        %v1373 = vmul.f32 %v1289, %v1323
        %v1374 = vmul.f32 %v1289, %v1324
        %v1375 = vmul.f32 %v1293, %v1323
        %v1376 = vmul.f32 %v1293, %v1324
        %v1377 = vmul.f32 %v1297, %v1323
        %v1378 = vmul.f32 %v1297, %v1324
        %v1379 = vmul.f32 %v1301, %v1323
        %v1380 = vmul.f32 %v1301, %v1324
        %v1381 = vmul.f32 %v1305, %v1323
        %v1382 = vmul.f32 %v1305, %v1324
        %v1383 = vmul.f32 %v1309, %v1323
        %v1384 = vmul.f32 %v1309, %v1324
        %v1385 = vmul.f32 %v1313, %v1323
        %v1386 = vmul.f32 %v1313, %v1324
        %v1387 = vmul.f32 %v1317, %v1323
        %v1388 = vmul.f32 %v1317, %v1324
        %v1389 = vadd.f32 %v1127, %v1325
        %v1390 = vadd.f32 %v1128, %v1326
        %v1391 = vadd.f32 %v1129, %v1327
        %v1392 = vadd.f32 %v1130, %v1328
        %v1393 = vadd.f32 %v1131, %v1329
        %v1394 = vadd.f32 %v1132, %v1330
        %v1395 = vadd.f32 %v1133, %v1331
        %v1396 = vadd.f32 %v1134, %v1332
        %v1397 = vadd.f32 %v1135, %v1333
        %v1398 = vadd.f32 %v1136, %v1334
        %v1399 = vadd.f32 %v1137, %v1335
        %v1400 = vadd.f32 %v1138, %v1336
        %v1401 = vadd.f32 %v1139, %v1337
        %v1402 = vadd.f32 %v1140, %v1338
        %v1403 = vadd.f32 %v1141, %v1339
        %v1404 = vadd.f32 %v1142, %v1340
        %v1405 = vadd.f32 %v1143, %v1341
        %v1406 = vadd.f32 %v1144, %v1342
        %v1407 = vadd.f32 %v1145, %v1343
        %v1408 = vadd.f32 %v1146, %v1344
        %v1409 = vadd.f32 %v1147, %v1345
        %v1410 = vadd.f32 %v1148, %v1346
        %v1411 = vadd.f32 %v1149, %v1347
        %v1412 = vadd.f32 %v1150, %v1348
        %v1413 = vadd.f32 %v1151, %v1349
        %v1414 = vadd.f32 %v1152, %v1350
        %v1415 = vadd.f32 %v1153, %v1351
        %v1416 = vadd.f32 %v1154, %v1352
        %v1417 = vadd.f32 %v1155, %v1353
        %v1418 = vadd.f32 %v1156, %v1354
        %v1419 = vadd.f32 %v1157, %v1355
        %v1420 = vadd.f32 %v1158, %v1356
        %v1421 = vadd.f32 %v1159, %v1357
        %v1422 = vadd.f32 %v1160, %v1358
        %v1423 = vadd.f32 %v1161, %v1359
        %v1424 = vadd.f32 %v1162, %v1360
        %v1425 = vadd.f32 %v1163, %v1361
        %v1426 = vadd.f32 %v1164, %v1362
        %v1427 = vadd.f32 %v1165, %v1363
        %v1428 = vadd.f32 %v1166, %v1364
        %v1429 = vadd.f32 %v1167, %v1365
        %v1430 = vadd.f32 %v1168, %v1366
        %v1431 = vadd.f32 %v1169, %v1367
        %v1432 = vadd.f32 %v1170, %v1368
        %v1433 = vadd.f32 %v1171, %v1369
        %v1434 = vadd.f32 %v1172, %v1370
        %v1435 = vadd.f32 %v1173, %v1371
        %v1436 = vadd.f32 %v1174, %v1372
        %v1437 = vadd.f32 %v1175, %v1373
        %v1438 = vadd.f32 %v1176, %v1374
        %v1439 = vadd.f32 %v1177, %v1375
        %v1440 = vadd.f32 %v1178, %v1376
        %v1441 = vadd.f32 %v1179, %v1377
        %v1442 = vadd.f32 %v1180, %v1378
        %v1443 = vadd.f32 %v1181, %v1379
        %v1444 = vadd.f32 %v1182, %v1380
        %v1445 = vadd.f32 %v1183, %v1381
        %v1446 = vadd.f32 %v1184, %v1382
        %v1447 = vadd.f32 %v1185, %v1383
        %v1448 = vadd.f32 %v1186, %v1384
        %v1449 = vadd.f32 %v1187, %v1385
        %v1450 = vadd.f32 %v1188, %v1386
        %v1451 = vadd.f32 %v1189, %v1387
        %v1452 = vadd.f32 %v1190, %v1388
        %v1453 = vld [vmem:[%s2] sm:$0x3]
        %v1455 = vperm.slane %v1453, 0
        %v1456 = vperm.slane %v1453, 1
        %v1459 = vadd.f32 %v1389, %v1455
        %v1460 = vadd.f32 %v1390, %v1456
        %v1461 = vadd.f32 %v1391, %v1455
        %v1462 = vadd.f32 %v1392, %v1456
        %v1463 = vadd.f32 %v1393, %v1455
        %v1464 = vadd.f32 %v1394, %v1456
        %v1465 = vadd.f32 %v1395, %v1455
        %v1466 = vadd.f32 %v1396, %v1456
        %v1467 = vadd.f32 %v1397, %v1455
        %v1468 = vadd.f32 %v1398, %v1456
        %v1469 = vadd.f32 %v1399, %v1455
        %v1470 = vadd.f32 %v1400, %v1456
        %v1471 = vadd.f32 %v1401, %v1455
        %v1472 = vadd.f32 %v1402, %v1456
        %v1473 = vadd.f32 %v1403, %v1455
        %v1474 = vadd.f32 %v1404, %v1456
        %v1475 = vadd.f32 %v1405, %v1455
        %v1476 = vadd.f32 %v1406, %v1456
        %v1477 = vadd.f32 %v1407, %v1455
        %v1478 = vadd.f32 %v1408, %v1456
        %v1479 = vadd.f32 %v1409, %v1455
        %v1480 = vadd.f32 %v1410, %v1456
        %v1481 = vadd.f32 %v1411, %v1455
        %v1482 = vadd.f32 %v1412, %v1456
        %v1483 = vadd.f32 %v1413, %v1455
        %v1484 = vadd.f32 %v1414, %v1456
        %v1485 = vadd.f32 %v1415, %v1455
        %v1486 = vadd.f32 %v1416, %v1456
        %v1487 = vadd.f32 %v1417, %v1455
        %v1488 = vadd.f32 %v1418, %v1456
        %v1489 = vadd.f32 %v1419, %v1455
        %v1490 = vadd.f32 %v1420, %v1456
        %v1491 = vadd.f32 %v1421, %v1455
        %v1492 = vadd.f32 %v1422, %v1456
        %v1493 = vadd.f32 %v1423, %v1455
        %v1494 = vadd.f32 %v1424, %v1456
        %v1495 = vadd.f32 %v1425, %v1455
        %v1496 = vadd.f32 %v1426, %v1456
        %v1497 = vadd.f32 %v1427, %v1455
        %v1498 = vadd.f32 %v1428, %v1456
        %v1499 = vadd.f32 %v1429, %v1455
        %v1500 = vadd.f32 %v1430, %v1456
        %v1501 = vadd.f32 %v1431, %v1455
        %v1502 = vadd.f32 %v1432, %v1456
        %v1503 = vadd.f32 %v1433, %v1455
        %v1504 = vadd.f32 %v1434, %v1456
        %v1505 = vadd.f32 %v1435, %v1455
        %v1506 = vadd.f32 %v1436, %v1456
        %v1507 = vadd.f32 %v1437, %v1455
        %v1508 = vadd.f32 %v1438, %v1456
        %v1509 = vadd.f32 %v1439, %v1455
        %v1510 = vadd.f32 %v1440, %v1456
        %v1511 = vadd.f32 %v1441, %v1455
        %v1512 = vadd.f32 %v1442, %v1456
        %v1513 = vadd.f32 %v1443, %v1455
        %v1514 = vadd.f32 %v1444, %v1456
        %v1515 = vadd.f32 %v1445, %v1455
        %v1516 = vadd.f32 %v1446, %v1456
        %v1517 = vadd.f32 %v1447, %v1455
        %v1518 = vadd.f32 %v1448, %v1456
        %v1519 = vadd.f32 %v1449, %v1455
        %v1520 = vadd.f32 %v1450, %v1456
        %v1521 = vadd.f32 %v1451, %v1455
        %v1522 = vadd.f32 %v1452, %v1456
        %v1523 = vpack.c.bf16 %v1460, %v1459
        %v1524 = vpack.c.bf16 %v1462, %v1461
        %v1525 = vpack.c.bf16 %v1464, %v1463
        %v1526 = vpack.c.bf16 %v1466, %v1465
        %v1527 = vpack.c.bf16 %v1468, %v1467
        %v1528 = vpack.c.bf16 %v1470, %v1469
        %v1529 = vpack.c.bf16 %v1472, %v1471
        %v1530 = vpack.c.bf16 %v1474, %v1473
        %v1531 = vpack.c.bf16 %v1476, %v1475
        %v1532 = vpack.c.bf16 %v1478, %v1477
        %v1533 = vpack.c.bf16 %v1480, %v1479
        %v1534 = vpack.c.bf16 %v1482, %v1481
        %v1535 = vpack.c.bf16 %v1484, %v1483
        %v1536 = vpack.c.bf16 %v1486, %v1485
        %v1537 = vpack.c.bf16 %v1488, %v1487
        %v1538 = vpack.c.bf16 %v1490, %v1489
        %v1539 = vpack.c.bf16 %v1492, %v1491
        %v1540 = vpack.c.bf16 %v1494, %v1493
        %v1541 = vpack.c.bf16 %v1496, %v1495
        %v1542 = vpack.c.bf16 %v1498, %v1497
        %v1543 = vpack.c.bf16 %v1500, %v1499
        %v1544 = vpack.c.bf16 %v1502, %v1501
        %v1545 = vpack.c.bf16 %v1504, %v1503
        %v1546 = vpack.c.bf16 %v1506, %v1505
        %v1547 = vpack.c.bf16 %v1508, %v1507
        %v1548 = vpack.c.bf16 %v1510, %v1509
        %v1549 = vpack.c.bf16 %v1512, %v1511
        %v1550 = vpack.c.bf16 %v1514, %v1513
        %v1551 = vpack.c.bf16 %v1516, %v1515
        %v1552 = vpack.c.bf16 %v1518, %v1517
        %v1553 = vpack.c.bf16 %v1520, %v1519
        %v1554 = vpack.c.bf16 %v1522, %v1521
        %v1555 = vunpack.c.l.bf16 %v1523
        %v1556 = vunpack.c.h.bf16 %v1523
        %v1557 = vunpack.c.l.bf16 %v1524
        %v1558 = vunpack.c.h.bf16 %v1524
        %v1559 = vunpack.c.l.bf16 %v1525
        %v1560 = vunpack.c.h.bf16 %v1525
        %v1561 = vunpack.c.l.bf16 %v1526
        %v1562 = vunpack.c.h.bf16 %v1526
        %v1563 = vunpack.c.l.bf16 %v1527
        %v1564 = vunpack.c.h.bf16 %v1527
        %v1565 = vunpack.c.l.bf16 %v1528
        %v1566 = vunpack.c.h.bf16 %v1528
        %v1567 = vunpack.c.l.bf16 %v1529
        %v1568 = vunpack.c.h.bf16 %v1529
        %v1569 = vunpack.c.l.bf16 %v1530
        %v1570 = vunpack.c.h.bf16 %v1530
        %v1571 = vunpack.c.l.bf16 %v1531
        %v1572 = vunpack.c.h.bf16 %v1531
        %v1573 = vunpack.c.l.bf16 %v1532
        %v1574 = vunpack.c.h.bf16 %v1532
        %v1575 = vunpack.c.l.bf16 %v1533
        %v1576 = vunpack.c.h.bf16 %v1533
        %v1577 = vunpack.c.l.bf16 %v1534
        %v1578 = vunpack.c.h.bf16 %v1534
        %v1579 = vunpack.c.l.bf16 %v1535
        %v1580 = vunpack.c.h.bf16 %v1535
        %v1581 = vunpack.c.l.bf16 %v1536
        %v1582 = vunpack.c.h.bf16 %v1536
        %v1583 = vunpack.c.l.bf16 %v1537
        %v1584 = vunpack.c.h.bf16 %v1537
        %v1585 = vunpack.c.l.bf16 %v1538
        %v1586 = vunpack.c.h.bf16 %v1538
        %v1587 = vunpack.c.l.bf16 %v1539
        %v1588 = vunpack.c.h.bf16 %v1539
        %v1589 = vunpack.c.l.bf16 %v1540
        %v1590 = vunpack.c.h.bf16 %v1540
        %v1591 = vunpack.c.l.bf16 %v1541
        %v1592 = vunpack.c.h.bf16 %v1541
        %v1593 = vunpack.c.l.bf16 %v1542
        %v1594 = vunpack.c.h.bf16 %v1542
        %v1595 = vunpack.c.l.bf16 %v1543
        %v1596 = vunpack.c.h.bf16 %v1543
        %v1597 = vunpack.c.l.bf16 %v1544
        %v1598 = vunpack.c.h.bf16 %v1544
        %v1599 = vunpack.c.l.bf16 %v1545
        %v1600 = vunpack.c.h.bf16 %v1545
        %v1601 = vunpack.c.l.bf16 %v1546
        %v1602 = vunpack.c.h.bf16 %v1546
        %v1603 = vunpack.c.l.bf16 %v1547
        %v1604 = vunpack.c.h.bf16 %v1547
        %v1605 = vunpack.c.l.bf16 %v1548
        %v1606 = vunpack.c.h.bf16 %v1548
        %v1607 = vunpack.c.l.bf16 %v1549
        %v1608 = vunpack.c.h.bf16 %v1549
        %v1609 = vunpack.c.l.bf16 %v1550
        %v1610 = vunpack.c.h.bf16 %v1550
        %v1611 = vunpack.c.l.bf16 %v1551
        %v1612 = vunpack.c.h.bf16 %v1551
        %v1613 = vunpack.c.l.bf16 %v1552
        %v1614 = vunpack.c.h.bf16 %v1552
        %v1615 = vunpack.c.l.bf16 %v1553
        %v1616 = vunpack.c.h.bf16 %v1553
        %v1617 = vunpack.c.l.bf16 %v1554
        %v1618 = vunpack.c.h.bf16 %v1554
        %v1619 = vmax.f32 %v1555, 0.0
        %v1620 = vmax.f32 %v1556, 0.0
        %v1621 = vmax.f32 %v1557, 0.0
        %v1622 = vmax.f32 %v1558, 0.0
        %v1623 = vmax.f32 %v1559, 0.0
        %v1624 = vmax.f32 %v1560, 0.0
        %v1625 = vmax.f32 %v1561, 0.0
        %v1626 = vmax.f32 %v1562, 0.0
        %v1627 = vmax.f32 %v1563, 0.0
        %v1628 = vmax.f32 %v1564, 0.0
        %v1629 = vmax.f32 %v1565, 0.0
        %v1630 = vmax.f32 %v1566, 0.0
        %v1631 = vmax.f32 %v1567, 0.0
        %v1632 = vmax.f32 %v1568, 0.0
        %v1633 = vmax.f32 %v1569, 0.0
        %v1634 = vmax.f32 %v1570, 0.0
        %v1635 = vmax.f32 %v1571, 0.0
        %v1636 = vmax.f32 %v1572, 0.0
        %v1637 = vmax.f32 %v1573, 0.0
        %v1638 = vmax.f32 %v1574, 0.0
        %v1639 = vmax.f32 %v1575, 0.0
        %v1640 = vmax.f32 %v1576, 0.0
        %v1641 = vmax.f32 %v1577, 0.0
        %v1642 = vmax.f32 %v1578, 0.0
        %v1643 = vmax.f32 %v1579, 0.0
        %v1644 = vmax.f32 %v1580, 0.0
        %v1645 = vmax.f32 %v1581, 0.0
        %v1646 = vmax.f32 %v1582, 0.0
        %v1647 = vmax.f32 %v1583, 0.0
        %v1648 = vmax.f32 %v1584, 0.0
        %v1649 = vmax.f32 %v1585, 0.0
        %v1650 = vmax.f32 %v1586, 0.0
        %v1651 = vmax.f32 %v1587, 0.0
        %v1652 = vmax.f32 %v1588, 0.0
        %v1653 = vmax.f32 %v1589, 0.0
        %v1654 = vmax.f32 %v1590, 0.0
        %v1655 = vmax.f32 %v1591, 0.0
        %v1656 = vmax.f32 %v1592, 0.0
        %v1657 = vmax.f32 %v1593, 0.0
        %v1658 = vmax.f32 %v1594, 0.0
        %v1659 = vmax.f32 %v1595, 0.0
        %v1660 = vmax.f32 %v1596, 0.0
        %v1661 = vmax.f32 %v1597, 0.0
        %v1662 = vmax.f32 %v1598, 0.0
        %v1663 = vmax.f32 %v1599, 0.0
        %v1664 = vmax.f32 %v1600, 0.0
        %v1665 = vmax.f32 %v1601, 0.0
        %v1666 = vmax.f32 %v1602, 0.0
        %v1667 = vmax.f32 %v1603, 0.0
        %v1668 = vmax.f32 %v1604, 0.0
        %v1669 = vmax.f32 %v1605, 0.0
        %v1670 = vmax.f32 %v1606, 0.0
        %v1671 = vmax.f32 %v1607, 0.0
        %v1672 = vmax.f32 %v1608, 0.0
        %v1673 = vmax.f32 %v1609, 0.0
        %v1674 = vmax.f32 %v1610, 0.0
        %v1675 = vmax.f32 %v1611, 0.0
        %v1676 = vmax.f32 %v1612, 0.0
        %v1677 = vmax.f32 %v1613, 0.0
        %v1678 = vmax.f32 %v1614, 0.0
        %v1679 = vmax.f32 %v1615, 0.0
        %v1680 = vmax.f32 %v1616, 0.0
        %v1681 = vmax.f32 %v1617, 0.0
        %v1682 = vmax.f32 %v1618, 0.0
        %v1683 = vpack.c.bf16 %v1621, %v1619
        %v1684 = vpack.c.bf16 %v1622, %v1620
        %v1685 = vpack.c.bf16 %v1625, %v1623
        %v1686 = vpack.c.bf16 %v1626, %v1624
        %v1687 = vpack.c.bf16 %v1629, %v1627
        %v1688 = vpack.c.bf16 %v1630, %v1628
        %v1689 = vpack.c.bf16 %v1633, %v1631
        %v1690 = vpack.c.bf16 %v1634, %v1632
        %v1691 = vpack.c.bf16 %v1637, %v1635
        %v1692 = vpack.c.bf16 %v1638, %v1636
        %v1693 = vpack.c.bf16 %v1641, %v1639
        %v1694 = vpack.c.bf16 %v1642, %v1640
        %v1695 = vpack.c.bf16 %v1645, %v1643
        %v1696 = vpack.c.bf16 %v1646, %v1644
        %v1697 = vpack.c.bf16 %v1649, %v1647
        %v1698 = vpack.c.bf16 %v1650, %v1648
        %v1699 = vpack.c.bf16 %v1653, %v1651
        %v1700 = vpack.c.bf16 %v1654, %v1652
        %v1701 = vpack.c.bf16 %v1657, %v1655
        %v1702 = vpack.c.bf16 %v1658, %v1656
        %v1703 = vpack.c.bf16 %v1661, %v1659
        %v1704 = vpack.c.bf16 %v1662, %v1660
        %v1705 = vpack.c.bf16 %v1665, %v1663
        %v1706 = vpack.c.bf16 %v1666, %v1664
        %v1707 = vpack.c.bf16 %v1669, %v1667
        %v1708 = vpack.c.bf16 %v1670, %v1668
        %v1709 = vpack.c.bf16 %v1673, %v1671
        %v1710 = vpack.c.bf16 %v1674, %v1672
        %v1711 = vpack.c.bf16 %v1677, %v1675
        %v1712 = vpack.c.bf16 %v1678, %v1676
        %v1713 = vpack.c.bf16 %v1681, %v1679
        %v1714 = vpack.c.bf16 %v1682, %v1680
        %v1715 = vld [vmem:[#allocation2] sm:$0xf]
        %v1716 = vld [vmem:[#allocation2 + $0x4] sm:$0xf]
        %v1717 = vld [vmem:[#allocation2 + $0x8] sm:$0xf]
        %v1718 = vld [vmem:[#allocation2 + $0xc] sm:$0xf]
        %v1719 = vld [vmem:[#allocation2 + $0x10] sm:$0xf]
        %v1720 = vld [vmem:[#allocation2 + $0x14] sm:$0xf]
        %v1721 = vld [vmem:[#allocation2 + $0x18] sm:$0xf]
        %v1722 = vld [vmem:[#allocation2 + $0x1c] sm:$0xf]
        %v1723 = vld [vmem:[#allocation2 + $0x20] sm:$0xf]
        %v1724 = vld [vmem:[#allocation2 + $0x24] sm:$0xf]
        %v1725 = vld [vmem:[#allocation2 + $0x28] sm:$0xf]
        %v1726 = vld [vmem:[#allocation2 + $0x2c] sm:$0xf]
        %v1727 = vld [vmem:[#allocation2 + $0x30] sm:$0xf]
        %v1728 = vld [vmem:[#allocation2 + $0x34] sm:$0xf]
        %v1729 = vld [vmem:[#allocation2 + $0x38] sm:$0xf]
        %v1730 = vld [vmem:[#allocation2 + $0x3c] sm:$0xf]
        %v1731 = vld [vmem:[#allocation2 + $0x40] sm:$0xf]
        %v1732 = vld [vmem:[#allocation2 + $0x44] sm:$0xf]
        %v1733 = vld [vmem:[#allocation2 + $0x48] sm:$0xf]
        %v1734 = vld [vmem:[#allocation2 + $0x4c] sm:$0xf]
        %v1735 = vld [vmem:[#allocation2 + $0x50] sm:$0xf]
        %v1736 = vld [vmem:[#allocation2 + $0x54] sm:$0xf]
        %v1737 = vld [vmem:[#allocation2 + $0x58] sm:$0xf]
        %v1738 = vld [vmem:[#allocation2 + $0x5c] sm:$0xf]
        %v1739 = vld [vmem:[#allocation2 + $0x60] sm:$0xf]
        %v1740 = vld [vmem:[#allocation2 + $0x64] sm:$0xf]
        %v1741 = vld [vmem:[#allocation2 + $0x68] sm:$0xf]
        %v1742 = vld [vmem:[#allocation2 + $0x6c] sm:$0xf]
        %v1743 = vld [vmem:[#allocation2 + $0x70] sm:$0xf]
        %v1744 = vld [vmem:[#allocation2 + $0x74] sm:$0xf]
        %v1745 = vld [vmem:[#allocation2 + $0x78] sm:$0xf]
        %v1746 = vld [vmem:[#allocation2 + $0x7c] sm:$0xf]
        %v1747 = vld [vmem:[%s4] sm:$0x1]
        %v1749 = vperm.slane %v1747, 0
        %v1783 = vunpack.c.l.b16 %v1715
        %v1784 = vunpack.c.l.b16 %v1716
        %v1785 = vunpack.c.l.b16 %v1717
        %v1786 = vunpack.c.l.b16 %v1718
        %v1787 = vunpack.c.l.b16 %v1719
        %v1788 = vunpack.c.l.b16 %v1720
        %v1789 = vunpack.c.l.b16 %v1721
        %v1790 = vunpack.c.l.b16 %v1722
        %v1791 = vunpack.c.l.b16 %v1723
        %v1792 = vunpack.c.l.b16 %v1724
        %v1793 = vunpack.c.l.b16 %v1725
        %v1794 = vunpack.c.l.b16 %v1726
        %v1795 = vunpack.c.l.b16 %v1727
        %v1796 = vunpack.c.l.b16 %v1728
        %v1797 = vunpack.c.l.b16 %v1729
        %v1798 = vunpack.c.l.b16 %v1730
        %v1799 = vunpack.c.l.b16 %v1731
        %v1800 = vunpack.c.l.b16 %v1732
        %v1801 = vunpack.c.l.b16 %v1733
        %v1802 = vunpack.c.l.b16 %v1734
        %v1803 = vunpack.c.l.b16 %v1735
        %v1804 = vunpack.c.l.b16 %v1736
        %v1805 = vunpack.c.l.b16 %v1737
        %v1806 = vunpack.c.l.b16 %v1738
        %v1807 = vunpack.c.l.b16 %v1739
        %v1808 = vunpack.c.l.b16 %v1740
        %v1809 = vunpack.c.l.b16 %v1741
        %v1810 = vunpack.c.l.b16 %v1742
        %v1811 = vunpack.c.l.b16 %v1743
        %v1812 = vunpack.c.l.b16 %v1744
        %v1813 = vunpack.c.l.b16 %v1745
        %v1814 = vunpack.c.l.b16 %v1746
        %v1815 = vpack.c.b16 %v1784, %v1783
        %v1816 = vpack.c.b16 %v1786, %v1785
        %v1817 = vpack.c.b16 %v1788, %v1787
        %v1818 = vpack.c.b16 %v1790, %v1789
        %v1819 = vpack.c.b16 %v1792, %v1791
        %v1820 = vpack.c.b16 %v1794, %v1793
        %v1821 = vpack.c.b16 %v1796, %v1795
        %v1822 = vpack.c.b16 %v1798, %v1797
        %v1823 = vpack.c.b16 %v1800, %v1799
        %v1824 = vpack.c.b16 %v1802, %v1801
        %v1825 = vpack.c.b16 %v1804, %v1803
        %v1826 = vpack.c.b16 %v1806, %v1805
        %v1827 = vpack.c.b16 %v1808, %v1807
        %v1828 = vpack.c.b16 %v1810, %v1809
        %v1829 = vpack.c.b16 %v1812, %v1811
        %v1830 = vpack.c.b16 %v1814, %v1813
        %1847 = vmatpush.bf16.msra.mxu0 %v1822
        %1848 = vmatpush.bf16.msra.mxu0 %v1821
        %1849 = vmatpush.bf16.msra.mxu0 %v1820
        %1850 = vmatpush.bf16.msra.mxu0 %v1819
        %1851 = vmatpush.bf16.msra.mxu0 %v1818
        %1852 = vmatpush.bf16.msra.mxu0 %v1817
        %1853 = vmatpush.bf16.msra.mxu0 %v1816
        %1854 = vmatpush.bf16.msra.mxu0 %v1815
        %1855 = vmatmul.bf16.gmra.mxu0 %v1683
        %v1856 = vpop.f32.mrf.mxu0
        %v1857 = vadd.f32 %v1749, %v1856
        %v1858 = vpop.f32.mrf.mxu0
        %v1859 = vadd.f32 %v1749, %v1858
        %1860 = vmatmul.bf16.gmra.mxu0 %v1685
        %v1861 = vpop.f32.mrf.mxu0
        %v1862 = vadd.f32 %v1749, %v1861
        %v1863 = vpop.f32.mrf.mxu0
        %v1864 = vadd.f32 %v1749, %v1863
        %1865 = vmatmul.bf16.gmra.mxu0 %v1687
        %v1866 = vpop.f32.mrf.mxu0
        %v1867 = vadd.f32 %v1749, %v1866
        %v1868 = vpop.f32.mrf.mxu0
        %v1869 = vadd.f32 %v1749, %v1868
        %1870 = vmatmul.bf16.gmra.mxu0 %v1689
        %v1871 = vpop.f32.mrf.mxu0
        %v1872 = vadd.f32 %v1749, %v1871
        %v1873 = vpop.f32.mrf.mxu0
        %v1874 = vadd.f32 %v1749, %v1873
        %1875 = vmatmul.bf16.gmra.mxu0 %v1691
        %v1876 = vpop.f32.mrf.mxu0
        %v1877 = vadd.f32 %v1749, %v1876
        %v1878 = vpop.f32.mrf.mxu0
        %v1879 = vadd.f32 %v1749, %v1878
        %1880 = vmatmul.bf16.gmra.mxu0 %v1693
        %v1881 = vpop.f32.mrf.mxu0
        %v1882 = vadd.f32 %v1749, %v1881
        %v1883 = vpop.f32.mrf.mxu0
        %v1884 = vadd.f32 %v1749, %v1883
        %1885 = vmatmul.bf16.gmra.mxu0 %v1695
        %v1886 = vpop.f32.mrf.mxu0
        %v1887 = vadd.f32 %v1749, %v1886
        %v1888 = vpop.f32.mrf.mxu0
        %v1889 = vadd.f32 %v1749, %v1888
        %1890 = vmatmul.bf16.gmra.mxu0 %v1697
        %v1891 = vpop.f32.mrf.mxu0
        %v1892 = vadd.f32 %v1749, %v1891
        %v1893 = vpop.f32.mrf.mxu0
        %v1894 = vadd.f32 %v1749, %v1893
        %1895 = vmatmul.bf16.gmra.mxu0 %v1699
        %v1896 = vpop.f32.mrf.mxu0
        %v1897 = vadd.f32 %v1749, %v1896
        %v1898 = vpop.f32.mrf.mxu0
        %v1899 = vadd.f32 %v1749, %v1898
        %1900 = vmatmul.bf16.gmra.mxu0 %v1701
        %v1901 = vpop.f32.mrf.mxu0
        %v1902 = vadd.f32 %v1749, %v1901
        %v1903 = vpop.f32.mrf.mxu0
        %v1904 = vadd.f32 %v1749, %v1903
        %1905 = vmatmul.bf16.gmra.mxu0 %v1703
        %v1906 = vpop.f32.mrf.mxu0
        %v1907 = vadd.f32 %v1749, %v1906
        %v1908 = vpop.f32.mrf.mxu0
        %v1909 = vadd.f32 %v1749, %v1908
        %1910 = vmatmul.bf16.gmra.mxu0 %v1705
        %v1911 = vpop.f32.mrf.mxu0
        %v1912 = vadd.f32 %v1749, %v1911
        %v1913 = vpop.f32.mrf.mxu0
        %v1914 = vadd.f32 %v1749, %v1913
        %1915 = vmatmul.bf16.gmra.mxu0 %v1707
        %v1916 = vpop.f32.mrf.mxu0
        %v1917 = vadd.f32 %v1749, %v1916
        %v1918 = vpop.f32.mrf.mxu0
        %v1919 = vadd.f32 %v1749, %v1918
        %1920 = vmatmul.bf16.gmra.mxu0 %v1709
        %v1921 = vpop.f32.mrf.mxu0
        %v1922 = vadd.f32 %v1749, %v1921
        %v1923 = vpop.f32.mrf.mxu0
        %v1924 = vadd.f32 %v1749, %v1923
        %1925 = vmatmul.bf16.gmra.mxu0 %v1711
        %v1926 = vpop.f32.mrf.mxu0
        %v1927 = vadd.f32 %v1749, %v1926
        %v1928 = vpop.f32.mrf.mxu0
        %v1929 = vadd.f32 %v1749, %v1928
        %1930 = vmatmul.bf16.gmra.mxu0 %v1713
        %v1931 = vpop.f32.mrf.mxu0
        %v1932 = vadd.f32 %v1749, %v1931
        %v1933 = vpop.f32.mrf.mxu0
        %v1934 = vadd.f32 %v1749, %v1933
        %1935 = vdwg.mxu0
        %1936 = vmatpush.bf16.msra.mxu0 %v1830
        %1937 = vmatpush.bf16.msra.mxu0 %v1829
        %1938 = vmatpush.bf16.msra.mxu0 %v1828
        %1939 = vmatpush.bf16.msra.mxu0 %v1827
        %1940 = vmatpush.bf16.msra.mxu0 %v1826
        %1941 = vmatpush.bf16.msra.mxu0 %v1825
        %1942 = vmatpush.bf16.msra.mxu0 %v1824
        %1943 = vmatpush.bf16.msra.mxu0 %v1823
        %1944 = vmatmul.bf16.gmra.mxu0 %v1684
        %v1945 = vpop.f32.mrf.mxu0
        %v1946 = vadd.f32 %v1857, %v1945
        %v1947 = vpop.f32.mrf.mxu0
        %v1948 = vadd.f32 %v1859, %v1947
        %1949 = vmatmul.bf16.gmra.mxu0 %v1686
        %v1950 = vpop.f32.mrf.mxu0
        %v1951 = vadd.f32 %v1862, %v1950
        %v1952 = vpop.f32.mrf.mxu0
        %v1953 = vadd.f32 %v1864, %v1952
        %1954 = vmatmul.bf16.gmra.mxu0 %v1688
        %v1955 = vpop.f32.mrf.mxu0
        %v1956 = vadd.f32 %v1867, %v1955
        %v1957 = vpop.f32.mrf.mxu0
        %v1958 = vadd.f32 %v1869, %v1957
        %1959 = vmatmul.bf16.gmra.mxu0 %v1690
        %v1960 = vpop.f32.mrf.mxu0
        %v1961 = vadd.f32 %v1872, %v1960
        %v1962 = vpop.f32.mrf.mxu0
        %v1963 = vadd.f32 %v1874, %v1962
        %1964 = vmatmul.bf16.gmra.mxu0 %v1692
        %v1965 = vpop.f32.mrf.mxu0
        %v1966 = vadd.f32 %v1877, %v1965
        %v1967 = vpop.f32.mrf.mxu0
        %v1968 = vadd.f32 %v1879, %v1967
        %1969 = vmatmul.bf16.gmra.mxu0 %v1694
        %v1970 = vpop.f32.mrf.mxu0
        %v1971 = vadd.f32 %v1882, %v1970
        %v1972 = vpop.f32.mrf.mxu0
        %v1973 = vadd.f32 %v1884, %v1972
        %1974 = vmatmul.bf16.gmra.mxu0 %v1696
        %v1975 = vpop.f32.mrf.mxu0
        %v1976 = vadd.f32 %v1887, %v1975
        %v1977 = vpop.f32.mrf.mxu0
        %v1978 = vadd.f32 %v1889, %v1977
        %1979 = vmatmul.bf16.gmra.mxu0 %v1698
        %v1980 = vpop.f32.mrf.mxu0
        %v1981 = vadd.f32 %v1892, %v1980
        %v1982 = vpop.f32.mrf.mxu0
        %v1983 = vadd.f32 %v1894, %v1982
        %1984 = vmatmul.bf16.gmra.mxu0 %v1700
        %v1985 = vpop.f32.mrf.mxu0
        %v1986 = vadd.f32 %v1897, %v1985
        %v1987 = vpop.f32.mrf.mxu0
        %v1988 = vadd.f32 %v1899, %v1987
        %1989 = vmatmul.bf16.gmra.mxu0 %v1702
        %v1990 = vpop.f32.mrf.mxu0
        %v1991 = vadd.f32 %v1902, %v1990
        %v1992 = vpop.f32.mrf.mxu0
        %v1993 = vadd.f32 %v1904, %v1992
        %1994 = vmatmul.bf16.gmra.mxu0 %v1704
        %v1995 = vpop.f32.mrf.mxu0
        %v1996 = vadd.f32 %v1907, %v1995
        %v1997 = vpop.f32.mrf.mxu0
        %v1998 = vadd.f32 %v1909, %v1997
        %1999 = vmatmul.bf16.gmra.mxu0 %v1706
        %v2000 = vpop.f32.mrf.mxu0
        %v2001 = vadd.f32 %v1912, %v2000
        %v2002 = vpop.f32.mrf.mxu0
        %v2003 = vadd.f32 %v1914, %v2002
        %2004 = vmatmul.bf16.gmra.mxu0 %v1708
        %v2005 = vpop.f32.mrf.mxu0
        %v2006 = vadd.f32 %v1917, %v2005
        %v2007 = vpop.f32.mrf.mxu0
        %v2008 = vadd.f32 %v1919, %v2007
        %2009 = vmatmul.bf16.gmra.mxu0 %v1710
        %v2010 = vpop.f32.mrf.mxu0
        %v2011 = vadd.f32 %v1922, %v2010
        %v2012 = vpop.f32.mrf.mxu0
        %v2013 = vadd.f32 %v1924, %v2012
        %2014 = vmatmul.bf16.gmra.mxu0 %v1712
        %v2015 = vpop.f32.mrf.mxu0
        %v2016 = vadd.f32 %v1927, %v2015
        %v2017 = vpop.f32.mrf.mxu0
        %v2018 = vadd.f32 %v1929, %v2017
        %2019 = vmatmul.bf16.gmra.mxu0 %v1714
        %v2020 = vpop.f32.mrf.mxu0
        %v2021 = vadd.f32 %v1932, %v2020
        %v2022 = vpop.f32.mrf.mxu0
        %v2023 = vadd.f32 %v1934, %v2022
        %2024 = vdwg.mxu0
        %v2025 = vmax.f32 %v1946, 0.0
        %v2026 = vmax.f32 %v1948, 0.0
        %v2027 = vmax.f32 %v1951, 0.0
        %v2028 = vmax.f32 %v1953, 0.0
        %v2029 = vmax.f32 %v1956, 0.0
        %v2030 = vmax.f32 %v1958, 0.0
        %v2031 = vmax.f32 %v1961, 0.0
        %v2032 = vmax.f32 %v1963, 0.0
        %v2033 = vmax.f32 %v1966, 0.0
        %v2034 = vmax.f32 %v1968, 0.0
        %v2035 = vmax.f32 %v1971, 0.0
        %v2036 = vmax.f32 %v1973, 0.0
        %v2037 = vmax.f32 %v1976, 0.0
        %v2038 = vmax.f32 %v1978, 0.0
        %v2039 = vmax.f32 %v1981, 0.0
        %v2040 = vmax.f32 %v1983, 0.0
        %v2041 = vmax.f32 %v1986, 0.0
        %v2042 = vmax.f32 %v1988, 0.0
        %v2043 = vmax.f32 %v1991, 0.0
        %v2044 = vmax.f32 %v1993, 0.0
        %v2045 = vmax.f32 %v1996, 0.0
        %v2046 = vmax.f32 %v1998, 0.0
        %v2047 = vmax.f32 %v2001, 0.0
        %v2048 = vmax.f32 %v2003, 0.0
        %v2049 = vmax.f32 %v2006, 0.0
        %v2050 = vmax.f32 %v2008, 0.0
        %v2051 = vmax.f32 %v2011, 0.0
        %v2052 = vmax.f32 %v2013, 0.0
        %v2053 = vmax.f32 %v2016, 0.0
        %v2054 = vmax.f32 %v2018, 0.0
        %v2055 = vmax.f32 %v2021, 0.0
        %v2056 = vmax.f32 %v2023, 0.0
        %v2057 = vpack.c.bf16 %v2026, %v2025
        %v2058 = vpack.c.bf16 %v2028, %v2027
        %v2059 = vpack.c.bf16 %v2030, %v2029
        %v2060 = vpack.c.bf16 %v2032, %v2031
        %v2061 = vpack.c.bf16 %v2034, %v2033
        %v2062 = vpack.c.bf16 %v2036, %v2035
        %v2063 = vpack.c.bf16 %v2038, %v2037
        %v2064 = vpack.c.bf16 %v2040, %v2039
        %v2065 = vpack.c.bf16 %v2042, %v2041
        %v2066 = vpack.c.bf16 %v2044, %v2043
        %v2067 = vpack.c.bf16 %v2046, %v2045
        %v2068 = vpack.c.bf16 %v2048, %v2047
        %v2069 = vpack.c.bf16 %v2050, %v2049
        %v2070 = vpack.c.bf16 %v2052, %v2051
        %v2071 = vpack.c.bf16 %v2054, %v2053
        %v2072 = vpack.c.bf16 %v2056, %v2055
        %v2073 = vld [vmem:[#allocation5] sm:$0xf]
        %v2074 = vld [vmem:[#allocation5 + $0x4] sm:$0xf]
        %v2075 = vld [vmem:[#allocation5 + $0x8] sm:$0xf]
        %v2076 = vld [vmem:[#allocation5 + $0xc] sm:$0xf]
        %v2077 = vld [vmem:[#allocation5 + $0x10] sm:$0xf]
        %v2078 = vld [vmem:[#allocation5 + $0x14] sm:$0xf]
        %v2079 = vld [vmem:[#allocation5 + $0x18] sm:$0xf]
        %v2080 = vld [vmem:[#allocation5 + $0x1c] sm:$0xf]
        %v2081 = vld [vmem:[#allocation5 + $0x20] sm:$0xf]
        %v2082 = vld [vmem:[#allocation5 + $0x24] sm:$0xf]
        %v2083 = vld [vmem:[#allocation5 + $0x28] sm:$0xf]
        %v2084 = vld [vmem:[#allocation5 + $0x2c] sm:$0xf]
        %v2085 = vld [vmem:[#allocation5 + $0x30] sm:$0xf]
        %v2086 = vld [vmem:[#allocation5 + $0x34] sm:$0xf]
        %v2087 = vld [vmem:[#allocation5 + $0x38] sm:$0xf]
        %v2088 = vld [vmem:[#allocation5 + $0x3c] sm:$0xf]
        %v2089 = vld [vmem:[%s6] sm:$0x1]
        %v2091 = vperm.slane %v2089, 0
        %v2109 = vunpack.c.l.b16 %v2073
        %v2110 = vunpack.c.l.b16 %v2074
        %v2111 = vunpack.c.l.b16 %v2075
        %v2112 = vunpack.c.l.b16 %v2076
        %v2113 = vunpack.c.l.b16 %v2077
        %v2114 = vunpack.c.l.b16 %v2078
        %v2115 = vunpack.c.l.b16 %v2079
        %v2116 = vunpack.c.l.b16 %v2080
        %v2117 = vunpack.c.l.b16 %v2081
        %v2118 = vunpack.c.l.b16 %v2082
        %v2119 = vunpack.c.l.b16 %v2083
        %v2120 = vunpack.c.l.b16 %v2084
        %v2121 = vunpack.c.l.b16 %v2085
        %v2122 = vunpack.c.l.b16 %v2086
        %v2123 = vunpack.c.l.b16 %v2087
        %v2124 = vunpack.c.l.b16 %v2088
        %v2125 = vpack.c.b16 %v2110, %v2109
        %v2126 = vpack.c.b16 %v2112, %v2111
        %v2127 = vpack.c.b16 %v2114, %v2113
        %v2128 = vpack.c.b16 %v2116, %v2115
        %v2129 = vpack.c.b16 %v2118, %v2117
        %v2130 = vpack.c.b16 %v2120, %v2119
        %v2131 = vpack.c.b16 %v2122, %v2121
        %v2132 = vpack.c.b16 %v2124, %v2123
        %2141 = vmatpush.bf16.msra.mxu0 %v2132
        %2142 = vmatpush.bf16.msra.mxu0 %v2131
        %2143 = vmatpush.bf16.msra.mxu0 %v2130
        %2144 = vmatpush.bf16.msra.mxu0 %v2129
        %2145 = vmatpush.bf16.msra.mxu0 %v2128
        %2146 = vmatpush.bf16.msra.mxu0 %v2127
        %2147 = vmatpush.bf16.msra.mxu0 %v2126
        %2148 = vmatpush.bf16.msra.mxu0 %v2125
        %2149 = vmatmul.bf16.gmra.mxu0 %v2057
        %v2150 = vpop.f32.mrf.mxu0
        %v2151 = vadd.f32 %v2091, %v2150
        %v2152 = vpop.f32.mrf.mxu0
        %v2153 = vadd.f32 %v2091, %v2152
        %2154 = vmatmul.bf16.gmra.mxu0 %v2058
        %v2155 = vpop.f32.mrf.mxu0
        %v2156 = vadd.f32 %v2091, %v2155
        %v2157 = vpop.f32.mrf.mxu0
        %v2158 = vadd.f32 %v2091, %v2157
        %2159 = vmatmul.bf16.gmra.mxu0 %v2059
        %v2160 = vpop.f32.mrf.mxu0
        %v2161 = vadd.f32 %v2091, %v2160
        %v2162 = vpop.f32.mrf.mxu0
        %v2163 = vadd.f32 %v2091, %v2162
        %2164 = vmatmul.bf16.gmra.mxu0 %v2060
        %v2165 = vpop.f32.mrf.mxu0
        %v2166 = vadd.f32 %v2091, %v2165
        %v2167 = vpop.f32.mrf.mxu0
        %v2168 = vadd.f32 %v2091, %v2167
        %2169 = vmatmul.bf16.gmra.mxu0 %v2061
        %v2170 = vpop.f32.mrf.mxu0
        %v2171 = vadd.f32 %v2091, %v2170
        %v2172 = vpop.f32.mrf.mxu0
        %v2173 = vadd.f32 %v2091, %v2172
        %2174 = vmatmul.bf16.gmra.mxu0 %v2062
        %v2175 = vpop.f32.mrf.mxu0
        %v2176 = vadd.f32 %v2091, %v2175
        %v2177 = vpop.f32.mrf.mxu0
        %v2178 = vadd.f32 %v2091, %v2177
        %2179 = vmatmul.bf16.gmra.mxu0 %v2063
        %v2180 = vpop.f32.mrf.mxu0
        %v2181 = vadd.f32 %v2091, %v2180
        %v2182 = vpop.f32.mrf.mxu0
        %v2183 = vadd.f32 %v2091, %v2182
        %2184 = vmatmul.bf16.gmra.mxu0 %v2064
        %v2185 = vpop.f32.mrf.mxu0
        %v2186 = vadd.f32 %v2091, %v2185
        %v2187 = vpop.f32.mrf.mxu0
        %v2188 = vadd.f32 %v2091, %v2187
        %2189 = vmatmul.bf16.gmra.mxu0 %v2065
        %v2190 = vpop.f32.mrf.mxu0
        %v2191 = vadd.f32 %v2091, %v2190
        %v2192 = vpop.f32.mrf.mxu0
        %v2193 = vadd.f32 %v2091, %v2192
        %2194 = vmatmul.bf16.gmra.mxu0 %v2066
        %v2195 = vpop.f32.mrf.mxu0
        %v2196 = vadd.f32 %v2091, %v2195
        %v2197 = vpop.f32.mrf.mxu0
        %v2198 = vadd.f32 %v2091, %v2197
        %2199 = vmatmul.bf16.gmra.mxu0 %v2067
        %v2200 = vpop.f32.mrf.mxu0
        %v2201 = vadd.f32 %v2091, %v2200
        %v2202 = vpop.f32.mrf.mxu0
        %v2203 = vadd.f32 %v2091, %v2202
        %2204 = vmatmul.bf16.gmra.mxu0 %v2068
        %v2205 = vpop.f32.mrf.mxu0
        %v2206 = vadd.f32 %v2091, %v2205
        %v2207 = vpop.f32.mrf.mxu0
        %v2208 = vadd.f32 %v2091, %v2207
        %2209 = vmatmul.bf16.gmra.mxu0 %v2069
        %v2210 = vpop.f32.mrf.mxu0
        %v2211 = vadd.f32 %v2091, %v2210
        %v2212 = vpop.f32.mrf.mxu0
        %v2213 = vadd.f32 %v2091, %v2212
        %2214 = vmatmul.bf16.gmra.mxu0 %v2070
        %v2215 = vpop.f32.mrf.mxu0
        %v2216 = vadd.f32 %v2091, %v2215
        %v2217 = vpop.f32.mrf.mxu0
        %v2218 = vadd.f32 %v2091, %v2217
        %2219 = vmatmul.bf16.gmra.mxu0 %v2071
        %v2220 = vpop.f32.mrf.mxu0
        %v2221 = vadd.f32 %v2091, %v2220
        %v2222 = vpop.f32.mrf.mxu0
        %v2223 = vadd.f32 %v2091, %v2222
        %2224 = vmatmul.bf16.gmra.mxu0 %v2072
        %v2225 = vpop.f32.mrf.mxu0
        %v2226 = vadd.f32 %v2091, %v2225
        %v2227 = vpop.f32.mrf.mxu0
        %v2228 = vadd.f32 %v2091, %v2227
        %2229 = vdwg.mxu0
        %v2230 = vld [vmem:[#allocation7] sm:$0xf]
        %v2231 = vld [vmem:[#allocation7 + $0x4] sm:$0xf]
        %v2232 = vld [vmem:[#allocation7 + $0x8] sm:$0xf]
        %v2233 = vld [vmem:[#allocation7 + $0xc] sm:$0xf]
        %v2234 = vld [vmem:[#allocation7 + $0x10] sm:$0xf]
        %v2235 = vld [vmem:[#allocation7 + $0x14] sm:$0xf]
        %v2236 = vld [vmem:[#allocation7 + $0x18] sm:$0xf]
        %v2237 = vld [vmem:[#allocation7 + $0x1c] sm:$0xf]
        %v2238 = vld [vmem:[#allocation7 + $0x20] sm:$0xf]
        %v2239 = vld [vmem:[#allocation7 + $0x24] sm:$0xf]
        %v2240 = vld [vmem:[#allocation7 + $0x28] sm:$0xf]
        %v2241 = vld [vmem:[#allocation7 + $0x2c] sm:$0xf]
        %v2242 = vld [vmem:[#allocation7 + $0x30] sm:$0xf]
        %v2243 = vld [vmem:[#allocation7 + $0x34] sm:$0xf]
        %v2244 = vld [vmem:[#allocation7 + $0x38] sm:$0xf]
        %v2245 = vld [vmem:[#allocation7 + $0x3c] sm:$0xf]
        %v2246 = vld [vmem:[#allocation7 + $0x40] sm:$0xf]
        %v2247 = vld [vmem:[#allocation7 + $0x44] sm:$0xf]
        %v2248 = vld [vmem:[#allocation7 + $0x48] sm:$0xf]
        %v2249 = vld [vmem:[#allocation7 + $0x4c] sm:$0xf]
        %v2250 = vld [vmem:[#allocation7 + $0x50] sm:$0xf]
        %v2251 = vld [vmem:[#allocation7 + $0x54] sm:$0xf]
        %v2252 = vld [vmem:[#allocation7 + $0x58] sm:$0xf]
        %v2253 = vld [vmem:[#allocation7 + $0x5c] sm:$0xf]
        %v2254 = vld [vmem:[#allocation7 + $0x60] sm:$0xf]
        %v2255 = vld [vmem:[#allocation7 + $0x64] sm:$0xf]
        %v2256 = vld [vmem:[#allocation7 + $0x68] sm:$0xf]
        %v2257 = vld [vmem:[#allocation7 + $0x6c] sm:$0xf]
        %v2258 = vld [vmem:[#allocation7 + $0x70] sm:$0xf]
        %v2259 = vld [vmem:[#allocation7 + $0x74] sm:$0xf]
        %v2260 = vld [vmem:[#allocation7 + $0x78] sm:$0xf]
        %v2261 = vld [vmem:[#allocation7 + $0x7c] sm:$0xf]
        %v2294 = vunpack.c.l.b16 %v1523
        %v2295 = vunpack.c.h.b16 %v1523
        %v2296 = vunpack.c.l.b16 %v1524
        %v2297 = vunpack.c.h.b16 %v1524
        %v2298 = vunpack.c.l.b16 %v1525
        %v2299 = vunpack.c.h.b16 %v1525
        %v2300 = vunpack.c.l.b16 %v1526
        %v2301 = vunpack.c.h.b16 %v1526
        %v2302 = vunpack.c.l.b16 %v1527
        %v2303 = vunpack.c.h.b16 %v1527
        %v2304 = vunpack.c.l.b16 %v1528
        %v2305 = vunpack.c.h.b16 %v1528
        %v2306 = vunpack.c.l.b16 %v1529
        %v2307 = vunpack.c.h.b16 %v1529
        %v2308 = vunpack.c.l.b16 %v1530
        %v2309 = vunpack.c.h.b16 %v1530
        %v2310 = vunpack.c.l.b16 %v1531
        %v2311 = vunpack.c.h.b16 %v1531
        %v2312 = vunpack.c.l.b16 %v1532
        %v2313 = vunpack.c.h.b16 %v1532
        %v2314 = vunpack.c.l.b16 %v1533
        %v2315 = vunpack.c.h.b16 %v1533
        %v2316 = vunpack.c.l.b16 %v1534
        %v2317 = vunpack.c.h.b16 %v1534
        %v2318 = vunpack.c.l.b16 %v1535
        %v2319 = vunpack.c.h.b16 %v1535
        %v2320 = vunpack.c.l.b16 %v1536
        %v2321 = vunpack.c.h.b16 %v1536
        %v2322 = vunpack.c.l.b16 %v1537
        %v2323 = vunpack.c.h.b16 %v1537
        %v2324 = vunpack.c.l.b16 %v1538
        %v2325 = vunpack.c.h.b16 %v1538
        %v2326 = vunpack.c.l.b16 %v1539
        %v2327 = vunpack.c.h.b16 %v1539
        %v2328 = vunpack.c.l.b16 %v1540
        %v2329 = vunpack.c.h.b16 %v1540
        %v2330 = vunpack.c.l.b16 %v1541
        %v2331 = vunpack.c.h.b16 %v1541
        %v2332 = vunpack.c.l.b16 %v1542
        %v2333 = vunpack.c.h.b16 %v1542
        %v2334 = vunpack.c.l.b16 %v1543
        %v2335 = vunpack.c.h.b16 %v1543
        %v2336 = vunpack.c.l.b16 %v1544
        %v2337 = vunpack.c.h.b16 %v1544
        %v2338 = vunpack.c.l.b16 %v1545
        %v2339 = vunpack.c.h.b16 %v1545
        %v2340 = vunpack.c.l.b16 %v1546
        %v2341 = vunpack.c.h.b16 %v1546
        %v2342 = vunpack.c.l.b16 %v1547
        %v2343 = vunpack.c.h.b16 %v1547
        %v2344 = vunpack.c.l.b16 %v1548
        %v2345 = vunpack.c.h.b16 %v1548
        %v2346 = vunpack.c.l.b16 %v1549
        %v2347 = vunpack.c.h.b16 %v1549
        %v2348 = vunpack.c.l.b16 %v1550
        %v2349 = vunpack.c.h.b16 %v1550
        %v2350 = vunpack.c.l.b16 %v1551
        %v2351 = vunpack.c.h.b16 %v1551
        %v2352 = vunpack.c.l.b16 %v1552
        %v2353 = vunpack.c.h.b16 %v1552
        %v2354 = vunpack.c.l.b16 %v1553
        %v2355 = vunpack.c.h.b16 %v1553
        %v2356 = vunpack.c.l.b16 %v1554
        %v2357 = vunpack.c.h.b16 %v1554
        %v2358 = vpack.c.b16 %v2296, %v2294
        %v2359 = vpack.c.b16 %v2297, %v2295
        %v2360 = vpack.c.b16 %v2300, %v2298
        %v2361 = vpack.c.b16 %v2301, %v2299
        %v2362 = vpack.c.b16 %v2304, %v2302
        %v2363 = vpack.c.b16 %v2305, %v2303
        %v2364 = vpack.c.b16 %v2308, %v2306
        %v2365 = vpack.c.b16 %v2309, %v2307
        %v2366 = vpack.c.b16 %v2312, %v2310
        %v2367 = vpack.c.b16 %v2313, %v2311
        %v2368 = vpack.c.b16 %v2316, %v2314
        %v2369 = vpack.c.b16 %v2317, %v2315
        %v2370 = vpack.c.b16 %v2320, %v2318
        %v2371 = vpack.c.b16 %v2321, %v2319
        %v2372 = vpack.c.b16 %v2324, %v2322
        %v2373 = vpack.c.b16 %v2325, %v2323
        %v2374 = vpack.c.b16 %v2328, %v2326
        %v2375 = vpack.c.b16 %v2329, %v2327
        %v2376 = vpack.c.b16 %v2332, %v2330
        %v2377 = vpack.c.b16 %v2333, %v2331
        %v2378 = vpack.c.b16 %v2336, %v2334
        %v2379 = vpack.c.b16 %v2337, %v2335
        %v2380 = vpack.c.b16 %v2340, %v2338
        %v2381 = vpack.c.b16 %v2341, %v2339
        %v2382 = vpack.c.b16 %v2344, %v2342
        %v2383 = vpack.c.b16 %v2345, %v2343
        %v2384 = vpack.c.b16 %v2348, %v2346
        %v2385 = vpack.c.b16 %v2349, %v2347
        %v2386 = vpack.c.b16 %v2352, %v2350
        %v2387 = vpack.c.b16 %v2353, %v2351
        %v2388 = vpack.c.b16 %v2356, %v2354
        %v2389 = vpack.c.b16 %v2357, %v2355
        %v2454 = vunpack.c.l.b16 %v2230
        %v2455 = vunpack.c.l.b16 %v2231
        %v2456 = vunpack.c.l.b16 %v2232
        %v2457 = vunpack.c.l.b16 %v2233
        %v2458 = vunpack.c.l.b16 %v2234
        %v2459 = vunpack.c.l.b16 %v2235
        %v2460 = vunpack.c.l.b16 %v2236
        %v2461 = vunpack.c.l.b16 %v2237
        %v2462 = vunpack.c.l.b16 %v2238
        %v2463 = vunpack.c.l.b16 %v2239
        %v2464 = vunpack.c.l.b16 %v2240
        %v2465 = vunpack.c.l.b16 %v2241
        %v2466 = vunpack.c.l.b16 %v2242
        %v2467 = vunpack.c.l.b16 %v2243
        %v2468 = vunpack.c.l.b16 %v2244
        %v2469 = vunpack.c.l.b16 %v2245
        %v2470 = vunpack.c.l.b16 %v2246
        %v2471 = vunpack.c.l.b16 %v2247
        %v2472 = vunpack.c.l.b16 %v2248
        %v2473 = vunpack.c.l.b16 %v2249
        %v2474 = vunpack.c.l.b16 %v2250
        %v2475 = vunpack.c.l.b16 %v2251
        %v2476 = vunpack.c.l.b16 %v2252
        %v2477 = vunpack.c.l.b16 %v2253
        %v2478 = vunpack.c.l.b16 %v2254
        %v2479 = vunpack.c.l.b16 %v2255
        %v2480 = vunpack.c.l.b16 %v2256
        %v2481 = vunpack.c.l.b16 %v2257
        %v2482 = vunpack.c.l.b16 %v2258
        %v2483 = vunpack.c.l.b16 %v2259
        %v2484 = vunpack.c.l.b16 %v2260
        %v2485 = vunpack.c.l.b16 %v2261
        %v2486 = vpack.c.b16 %v2455, %v2454
        %v2487 = vpack.c.b16 %v2457, %v2456
        %v2488 = vpack.c.b16 %v2459, %v2458
        %v2489 = vpack.c.b16 %v2461, %v2460
        %v2490 = vpack.c.b16 %v2463, %v2462
        %v2491 = vpack.c.b16 %v2465, %v2464
        %v2492 = vpack.c.b16 %v2467, %v2466
        %v2493 = vpack.c.b16 %v2469, %v2468
        %v2494 = vpack.c.b16 %v2471, %v2470
        %v2495 = vpack.c.b16 %v2473, %v2472
        %v2496 = vpack.c.b16 %v2475, %v2474
        %v2497 = vpack.c.b16 %v2477, %v2476
        %v2498 = vpack.c.b16 %v2479, %v2478
        %v2499 = vpack.c.b16 %v2481, %v2480
        %v2500 = vpack.c.b16 %v2483, %v2482
        %v2501 = vpack.c.b16 %v2485, %v2484
        %2518 = vmatpush.bf16.msra.mxu0 %v2493
        %2519 = vmatpush.bf16.msra.mxu0 %v2492
        %2520 = vmatpush.bf16.msra.mxu0 %v2491
        %2521 = vmatpush.bf16.msra.mxu0 %v2490
        %2522 = vmatpush.bf16.msra.mxu0 %v2489
        %2523 = vmatpush.bf16.msra.mxu0 %v2488
        %2524 = vmatpush.bf16.msra.mxu0 %v2487
        %2525 = vmatpush.bf16.msra.mxu0 %v2486
        %2526 = vmatmul.bf16.gmra.mxu0 %v2358
        %v2527 = vpop.f32.mrf.mxu0
        %v2528 = vadd.f32 %v2151, %v2527
        %v2529 = vpop.f32.mrf.mxu0
        %v2530 = vadd.f32 %v2153, %v2529
        %2531 = vmatmul.bf16.gmra.mxu0 %v2360
        %v2532 = vpop.f32.mrf.mxu0
        %v2533 = vadd.f32 %v2156, %v2532
        %v2534 = vpop.f32.mrf.mxu0
        %v2535 = vadd.f32 %v2158, %v2534
        %2536 = vmatmul.bf16.gmra.mxu0 %v2362
        %v2537 = vpop.f32.mrf.mxu0
        %v2538 = vadd.f32 %v2161, %v2537
        %v2539 = vpop.f32.mrf.mxu0
        %v2540 = vadd.f32 %v2163, %v2539
        %2541 = vmatmul.bf16.gmra.mxu0 %v2364
        %v2542 = vpop.f32.mrf.mxu0
        %v2543 = vadd.f32 %v2166, %v2542
        %v2544 = vpop.f32.mrf.mxu0
        %v2545 = vadd.f32 %v2168, %v2544
        %2546 = vmatmul.bf16.gmra.mxu0 %v2366
        %v2547 = vpop.f32.mrf.mxu0
        %v2548 = vadd.f32 %v2171, %v2547
        %v2549 = vpop.f32.mrf.mxu0
        %v2550 = vadd.f32 %v2173, %v2549
        %2551 = vmatmul.bf16.gmra.mxu0 %v2368
        %v2552 = vpop.f32.mrf.mxu0
        %v2553 = vadd.f32 %v2176, %v2552
        %v2554 = vpop.f32.mrf.mxu0
        %v2555 = vadd.f32 %v2178, %v2554
        %2556 = vmatmul.bf16.gmra.mxu0 %v2370
        %v2557 = vpop.f32.mrf.mxu0
        %v2558 = vadd.f32 %v2181, %v2557
        %v2559 = vpop.f32.mrf.mxu0
        %v2560 = vadd.f32 %v2183, %v2559
        %2561 = vmatmul.bf16.gmra.mxu0 %v2372
        %v2562 = vpop.f32.mrf.mxu0
        %v2563 = vadd.f32 %v2186, %v2562
        %v2564 = vpop.f32.mrf.mxu0
        %v2565 = vadd.f32 %v2188, %v2564
        %2566 = vmatmul.bf16.gmra.mxu0 %v2374
        %v2567 = vpop.f32.mrf.mxu0
        %v2568 = vadd.f32 %v2191, %v2567
        %v2569 = vpop.f32.mrf.mxu0
        %v2570 = vadd.f32 %v2193, %v2569
        %2571 = vmatmul.bf16.gmra.mxu0 %v2376
        %v2572 = vpop.f32.mrf.mxu0
        %v2573 = vadd.f32 %v2196, %v2572
        %v2574 = vpop.f32.mrf.mxu0
        %v2575 = vadd.f32 %v2198, %v2574
        %2576 = vmatmul.bf16.gmra.mxu0 %v2378
        %v2577 = vpop.f32.mrf.mxu0
        %v2578 = vadd.f32 %v2201, %v2577
        %v2579 = vpop.f32.mrf.mxu0
        %v2580 = vadd.f32 %v2203, %v2579
        %2581 = vmatmul.bf16.gmra.mxu0 %v2380
        %v2582 = vpop.f32.mrf.mxu0
        %v2583 = vadd.f32 %v2206, %v2582
        %v2584 = vpop.f32.mrf.mxu0
        %v2585 = vadd.f32 %v2208, %v2584
        %2586 = vmatmul.bf16.gmra.mxu0 %v2382
        %v2587 = vpop.f32.mrf.mxu0
        %v2588 = vadd.f32 %v2211, %v2587
        %v2589 = vpop.f32.mrf.mxu0
        %v2590 = vadd.f32 %v2213, %v2589
        %2591 = vmatmul.bf16.gmra.mxu0 %v2384
        %v2592 = vpop.f32.mrf.mxu0
        %v2593 = vadd.f32 %v2216, %v2592
        %v2594 = vpop.f32.mrf.mxu0
        %v2595 = vadd.f32 %v2218, %v2594
        %2596 = vmatmul.bf16.gmra.mxu0 %v2386
        %v2597 = vpop.f32.mrf.mxu0
        %v2598 = vadd.f32 %v2221, %v2597
        %v2599 = vpop.f32.mrf.mxu0
        %v2600 = vadd.f32 %v2223, %v2599
        %2601 = vmatmul.bf16.gmra.mxu0 %v2388
        %v2602 = vpop.f32.mrf.mxu0
        %v2603 = vadd.f32 %v2226, %v2602
        %v2604 = vpop.f32.mrf.mxu0
        %v2605 = vadd.f32 %v2228, %v2604
        %2606 = vdwg.mxu0
        %2607 = vmatpush.bf16.msra.mxu0 %v2501
        %2608 = vmatpush.bf16.msra.mxu0 %v2500
        %2609 = vmatpush.bf16.msra.mxu0 %v2499
        %2610 = vmatpush.bf16.msra.mxu0 %v2498
        %2611 = vmatpush.bf16.msra.mxu0 %v2497
        %2612 = vmatpush.bf16.msra.mxu0 %v2496
        %2613 = vmatpush.bf16.msra.mxu0 %v2495
        %2614 = vmatpush.bf16.msra.mxu0 %v2494
        %2615 = vmatmul.bf16.gmra.mxu0 %v2359
        %v2616 = vpop.f32.mrf.mxu0
        %v2617 = vadd.f32 %v2528, %v2616
        %v2618 = vpop.f32.mrf.mxu0
        %v2619 = vadd.f32 %v2530, %v2618
        %2620 = vmatmul.bf16.gmra.mxu0 %v2361
        %v2621 = vpop.f32.mrf.mxu0
        %v2622 = vadd.f32 %v2533, %v2621
        %v2623 = vpop.f32.mrf.mxu0
        %v2624 = vadd.f32 %v2535, %v2623
        %2625 = vmatmul.bf16.gmra.mxu0 %v2363
        %v2626 = vpop.f32.mrf.mxu0
        %v2627 = vadd.f32 %v2538, %v2626
        %v2628 = vpop.f32.mrf.mxu0
        %v2629 = vadd.f32 %v2540, %v2628
        %2630 = vmatmul.bf16.gmra.mxu0 %v2365
        %v2631 = vpop.f32.mrf.mxu0
        %v2632 = vadd.f32 %v2543, %v2631
        %v2633 = vpop.f32.mrf.mxu0
        %v2634 = vadd.f32 %v2545, %v2633
        %2635 = vmatmul.bf16.gmra.mxu0 %v2367
        %v2636 = vpop.f32.mrf.mxu0
        %v2637 = vadd.f32 %v2548, %v2636
        %v2638 = vpop.f32.mrf.mxu0
        %v2639 = vadd.f32 %v2550, %v2638
        %2640 = vmatmul.bf16.gmra.mxu0 %v2369
        %v2641 = vpop.f32.mrf.mxu0
        %v2642 = vadd.f32 %v2553, %v2641
        %v2643 = vpop.f32.mrf.mxu0
        %v2644 = vadd.f32 %v2555, %v2643
        %2645 = vmatmul.bf16.gmra.mxu0 %v2371
        %v2646 = vpop.f32.mrf.mxu0
        %v2647 = vadd.f32 %v2558, %v2646
        %v2648 = vpop.f32.mrf.mxu0
        %v2649 = vadd.f32 %v2560, %v2648
        %2650 = vmatmul.bf16.gmra.mxu0 %v2373
        %v2651 = vpop.f32.mrf.mxu0
        %v2652 = vadd.f32 %v2563, %v2651
        %v2653 = vpop.f32.mrf.mxu0
        %v2654 = vadd.f32 %v2565, %v2653
        %2655 = vmatmul.bf16.gmra.mxu0 %v2375
        %v2656 = vpop.f32.mrf.mxu0
        %v2657 = vadd.f32 %v2568, %v2656
        %v2658 = vpop.f32.mrf.mxu0
        %v2659 = vadd.f32 %v2570, %v2658
        %2660 = vmatmul.bf16.gmra.mxu0 %v2377
        %v2661 = vpop.f32.mrf.mxu0
        %v2662 = vadd.f32 %v2573, %v2661
        %v2663 = vpop.f32.mrf.mxu0
        %v2664 = vadd.f32 %v2575, %v2663
        %2665 = vmatmul.bf16.gmra.mxu0 %v2379
        %v2666 = vpop.f32.mrf.mxu0
        %v2667 = vadd.f32 %v2578, %v2666
        %v2668 = vpop.f32.mrf.mxu0
        %v2669 = vadd.f32 %v2580, %v2668
        %2670 = vmatmul.bf16.gmra.mxu0 %v2381
        %v2671 = vpop.f32.mrf.mxu0
        %v2672 = vadd.f32 %v2583, %v2671
        %v2673 = vpop.f32.mrf.mxu0
        %v2674 = vadd.f32 %v2585, %v2673
        %2675 = vmatmul.bf16.gmra.mxu0 %v2383
        %v2676 = vpop.f32.mrf.mxu0
        %v2677 = vadd.f32 %v2588, %v2676
        %v2678 = vpop.f32.mrf.mxu0
        %v2679 = vadd.f32 %v2590, %v2678
        %2680 = vmatmul.bf16.gmra.mxu0 %v2385
        %v2681 = vpop.f32.mrf.mxu0
        %v2682 = vadd.f32 %v2593, %v2681
        %v2683 = vpop.f32.mrf.mxu0
        %v2684 = vadd.f32 %v2595, %v2683
        %2685 = vmatmul.bf16.gmra.mxu0 %v2387
        %v2686 = vpop.f32.mrf.mxu0
        %v2687 = vadd.f32 %v2598, %v2686
        %v2688 = vpop.f32.mrf.mxu0
        %v2689 = vadd.f32 %v2600, %v2688
        %2690 = vmatmul.bf16.gmra.mxu0 %v2389
        %v2691 = vpop.f32.mrf.mxu0
        %v2692 = vadd.f32 %v2603, %v2691
        %v2693 = vpop.f32.mrf.mxu0
        %v2694 = vadd.f32 %v2605, %v2693
        %2695 = vdwg.mxu0
        %v2696 = vld [vmem:[%s8] sm:$0xf]
        %v2697 = vld [vmem:[%s8 + $0x4] sm:$0xf]
        %v2698 = vld [vmem:[%s8 + $0x8] sm:$0xf]
        %v2699 = vld [vmem:[%s8 + $0xc] sm:$0xf]
        %v2700 = vld [vmem:[%s8 + $0x10] sm:$0xf]
        %v2701 = vld [vmem:[%s8 + $0x14] sm:$0xf]
        %v2702 = vld [vmem:[%s8 + $0x18] sm:$0xf]
        %v2703 = vld [vmem:[%s8 + $0x1c] sm:$0xf]
        %v2704 = vld [vmem:[%s8 + $0x20] sm:$0xf]
        %v2705 = vld [vmem:[%s8 + $0x24] sm:$0xf]
        %v2706 = vld [vmem:[%s8 + $0x28] sm:$0xf]
        %v2707 = vld [vmem:[%s8 + $0x2c] sm:$0xf]
        %v2708 = vld [vmem:[%s8 + $0x30] sm:$0xf]
        %v2709 = vld [vmem:[%s8 + $0x34] sm:$0xf]
        %v2710 = vld [vmem:[%s8 + $0x38] sm:$0xf]
        %v2711 = vld [vmem:[%s8 + $0x3c] sm:$0xf]
        %v2712 = vld [vmem:[%s9] sm:$0xf]
        %v2713 = vld [vmem:[%s9 + $0x4] sm:$0xf]
        %v2714 = vld [vmem:[%s9 + $0x8] sm:$0xf]
        %v2715 = vld [vmem:[%s9 + $0xc] sm:$0xf]
        %v2716 = vld [vmem:[%s9 + $0x10] sm:$0xf]
        %v2717 = vld [vmem:[%s9 + $0x14] sm:$0xf]
        %v2718 = vld [vmem:[%s9 + $0x18] sm:$0xf]
        %v2719 = vld [vmem:[%s9 + $0x1c] sm:$0xf]
        %v2720 = vld [vmem:[%s9 + $0x20] sm:$0xf]
        %v2721 = vld [vmem:[%s9 + $0x24] sm:$0xf]
        %v2722 = vld [vmem:[%s9 + $0x28] sm:$0xf]
        %v2723 = vld [vmem:[%s9 + $0x2c] sm:$0xf]
        %v2724 = vld [vmem:[%s9 + $0x30] sm:$0xf]
        %v2725 = vld [vmem:[%s9 + $0x34] sm:$0xf]
        %v2726 = vld [vmem:[%s9 + $0x38] sm:$0xf]
        %v2727 = vld [vmem:[%s9 + $0x3c] sm:$0xf]
        %v2728 = vld [vmem:[#allocation10] sm:$0xf]
        %v2729 = vld [vmem:[#allocation10 + $0x4] sm:$0xf]
        %v2730 = vld [vmem:[#allocation10 + $0x8] sm:$0xf]
        %v2731 = vld [vmem:[#allocation10 + $0xc] sm:$0xf]
        %v2732 = vld [vmem:[#allocation10 + $0x10] sm:$0xf]
        %v2733 = vld [vmem:[#allocation10 + $0x14] sm:$0xf]
        %v2734 = vld [vmem:[#allocation10 + $0x18] sm:$0xf]
        %v2735 = vld [vmem:[#allocation10 + $0x1c] sm:$0xf]
        %v2736 = vld [vmem:[#allocation10 + $0x20] sm:$0xf]
        %v2737 = vld [vmem:[#allocation10 + $0x24] sm:$0xf]
        %v2738 = vld [vmem:[#allocation10 + $0x28] sm:$0xf]
        %v2739 = vld [vmem:[#allocation10 + $0x2c] sm:$0xf]
        %v2740 = vld [vmem:[#allocation10 + $0x30] sm:$0xf]
        %v2741 = vld [vmem:[#allocation10 + $0x34] sm:$0xf]
        %v2742 = vld [vmem:[#allocation10 + $0x38] sm:$0xf]
        %v2743 = vld [vmem:[#allocation10 + $0x3c] sm:$0xf]
        %v2744 = vld [vmem:[#allocation11] sm:$0xf]
        %v2745 = vld [vmem:[#allocation11 + $0x4] sm:$0xf]
        %v2746 = vld [vmem:[#allocation11 + $0x8] sm:$0xf]
        %v2747 = vld [vmem:[#allocation11 + $0xc] sm:$0xf]
        %v2748 = vld [vmem:[#allocation11 + $0x10] sm:$0xf]
        %v2749 = vld [vmem:[#allocation11 + $0x14] sm:$0xf]
        %v2750 = vld [vmem:[#allocation11 + $0x18] sm:$0xf]
        %v2751 = vld [vmem:[#allocation11 + $0x1c] sm:$0xf]
        %v2752 = vld [vmem:[#allocation11 + $0x20] sm:$0xf]
        %v2753 = vld [vmem:[#allocation11 + $0x24] sm:$0xf]
        %v2754 = vld [vmem:[#allocation11 + $0x28] sm:$0xf]
        %v2755 = vld [vmem:[#allocation11 + $0x2c] sm:$0xf]
        %v2756 = vld [vmem:[#allocation11 + $0x30] sm:$0xf]
        %v2757 = vld [vmem:[#allocation11 + $0x34] sm:$0xf]
        %v2758 = vld [vmem:[#allocation11 + $0x38] sm:$0xf]
        %v2759 = vld [vmem:[#allocation11 + $0x3c] sm:$0xf]
        %v2760 = vld [vmem:[#allocation8] sm:$0xf]
        %v2761 = vld [vmem:[#allocation8 + $0x4] sm:$0xf]
        %v2762 = vld [vmem:[#allocation8 + $0x8] sm:$0xf]
        %v2763 = vld [vmem:[#allocation8 + $0xc] sm:$0xf]
        %v2764 = vld [vmem:[#allocation8 + $0x10] sm:$0xf]
        %v2765 = vld [vmem:[#allocation8 + $0x14] sm:$0xf]
        %v2766 = vld [vmem:[#allocation8 + $0x18] sm:$0xf]
        %v2767 = vld [vmem:[#allocation8 + $0x1c] sm:$0xf]
        %v2768 = vld [vmem:[#allocation8 + $0x20] sm:$0xf]
        %v2769 = vld [vmem:[#allocation8 + $0x24] sm:$0xf]
        %v2770 = vld [vmem:[#allocation8 + $0x28] sm:$0xf]
        %v2771 = vld [vmem:[#allocation8 + $0x2c] sm:$0xf]
        %v2772 = vld [vmem:[#allocation8 + $0x30] sm:$0xf]
        %v2773 = vld [vmem:[#allocation8 + $0x34] sm:$0xf]
        %v2774 = vld [vmem:[#allocation8 + $0x38] sm:$0xf]
        %v2775 = vld [vmem:[#allocation8 + $0x3c] sm:$0xf]
        %v2776 = vld [vmem:[%s10] sm:$0x1]
        %v2777 = vld [vmem:[%s12] sm:$0x1]
        %v2778 = vmax.f32 %v2617, %v2619
        %v2779 = vmax.f32 %v2778, %v2622
        %v2780 = vmax.f32 %v2779, %v2624
        %v2781 = vmax.f32 %v2780, %v2627
        %v2782 = vmax.f32 %v2781, %v2629
        %v2783 = vmax.f32 %v2782, %v2632
        %v2784 = vmax.f32 %v2783, %v2634
        %v2785 = vrot.slane %v2784, 4
        %v2786 = vmax.f32 %v2784, %v2785
        %v2787 = vrot.slane %v2786, 2
        %v2788 = vmax.f32 %v2786, %v2787
        %v2789 = vrot.slane %v2788, 1
        %v2790 = vmax.f32 %v2788, %v2789
        %v2791 = vmax.f32 %v2637, %v2639
        %v2792 = vmax.f32 %v2791, %v2642
        %v2793 = vmax.f32 %v2792, %v2644
        %v2794 = vmax.f32 %v2793, %v2647
        %v2795 = vmax.f32 %v2794, %v2649
        %v2796 = vmax.f32 %v2795, %v2652
        %v2797 = vmax.f32 %v2796, %v2654
        %v2798 = vrot.slane %v2797, 4
        %v2799 = vmax.f32 %v2797, %v2798
        %v2800 = vrot.slane %v2799, 2
        %v2801 = vmax.f32 %v2799, %v2800
        %v2802 = vrot.slane %v2801, 1
        %v2803 = vmax.f32 %v2801, %v2802
        %v2804 = vmax.f32 %v2657, %v2659
        %v2805 = vmax.f32 %v2804, %v2662
        %v2806 = vmax.f32 %v2805, %v2664
        %v2807 = vmax.f32 %v2806, %v2667
        %v2808 = vmax.f32 %v2807, %v2669
        %v2809 = vmax.f32 %v2808, %v2672
        %v2810 = vmax.f32 %v2809, %v2674
        %v2811 = vrot.slane %v2810, 4
        %v2812 = vmax.f32 %v2810, %v2811
        %v2813 = vrot.slane %v2812, 2
        %v2814 = vmax.f32 %v2812, %v2813
        %v2815 = vrot.slane %v2814, 1
        %v2816 = vmax.f32 %v2814, %v2815
        %v2817 = vmax.f32 %v2677, %v2679
        %v2818 = vmax.f32 %v2817, %v2682
        %v2819 = vmax.f32 %v2818, %v2684
        %v2820 = vmax.f32 %v2819, %v2687
        %v2821 = vmax.f32 %v2820, %v2689
        %v2822 = vmax.f32 %v2821, %v2692
        %v2823 = vmax.f32 %v2822, %v2694
        %v2824 = vrot.slane %v2823, 4
        %v2825 = vmax.f32 %v2823, %v2824
        %v2826 = vrot.slane %v2825, 2
        %v2827 = vmax.f32 %v2825, %v2826
        %v2828 = vrot.slane %v2827, 1
        %v2829 = vmax.f32 %v2827, %v2828
        %v2830 = vpack.c.bf16 %v2617, %v2617
        %v2831 = vpack.c.bf16 %v2619, %v2619
        %v2832 = vpack.c.bf16 %v2622, %v2622
        %v2833 = vpack.c.bf16 %v2624, %v2624
        %v2834 = vpack.c.bf16 %v2627, %v2627
        %v2835 = vpack.c.bf16 %v2629, %v2629
        %v2836 = vpack.c.bf16 %v2632, %v2632
        %v2837 = vpack.c.bf16 %v2634, %v2634
        %v2838 = vpack.c.bf16 %v2637, %v2637
        %v2839 = vpack.c.bf16 %v2639, %v2639
        %v2840 = vpack.c.bf16 %v2642, %v2642
        %v2841 = vpack.c.bf16 %v2644, %v2644
        %v2842 = vpack.c.bf16 %v2647, %v2647
        %v2843 = vpack.c.bf16 %v2649, %v2649
        %v2844 = vpack.c.bf16 %v2652, %v2652
        %v2845 = vpack.c.bf16 %v2654, %v2654
        %v2846 = vpack.c.bf16 %v2657, %v2657
        %v2847 = vpack.c.bf16 %v2659, %v2659
        %v2848 = vpack.c.bf16 %v2662, %v2662
        %v2849 = vpack.c.bf16 %v2664, %v2664
        %v2850 = vpack.c.bf16 %v2667, %v2667
        %v2851 = vpack.c.bf16 %v2669, %v2669
        %v2852 = vpack.c.bf16 %v2672, %v2672
        %v2853 = vpack.c.bf16 %v2674, %v2674
        %v2854 = vpack.c.bf16 %v2677, %v2677
        %v2855 = vpack.c.bf16 %v2679, %v2679
        %v2856 = vpack.c.bf16 %v2682, %v2682
        %v2857 = vpack.c.bf16 %v2684, %v2684
        %v2858 = vpack.c.bf16 %v2687, %v2687
        %v2859 = vpack.c.bf16 %v2689, %v2689
        %v2860 = vpack.c.bf16 %v2692, %v2692
        %v2861 = vpack.c.bf16 %v2694, %v2694
        %v2862 = vpack.c.bf16 %v2790, %v2790
        %v2863 = vpack.c.bf16 %v2803, %v2803
        %v2864 = vpack.c.bf16 %v2816, %v2816
        %v2865 = vpack.c.bf16 %v2829, %v2829
        %v2866 = vunpack.c.l.bf16 %v2862
        %v2867 = vunpack.c.l.bf16 %v2863
        %v2868 = vunpack.c.l.bf16 %v2864
        %v2869 = vunpack.c.l.bf16 %v2865
        %v2870 = vmax.f32 %v2866, 0.0
        %v2871 = vmax.f32 %v2867, 0.0
        %v2872 = vmax.f32 %v2868, 0.0
        %v2873 = vmax.f32 %v2869, 0.0
        %v2874 = vpack.c.bf16 %v2870, %v2870
        %v2875 = vpack.c.bf16 %v2871, %v2871
        %v2876 = vpack.c.bf16 %v2872, %v2872
        %v2877 = vpack.c.bf16 %v2873, %v2873
        %v2879 = vperm.slane %v2776, 0
        %v2885 = vunpack.c.l.b16 %v2874
        %v2886 = vunpack.c.l.b16 %v2875
        %v2887 = vunpack.c.l.b16 %v2876
        %v2888 = vunpack.c.l.b16 %v2877
        %vm2889 = vcmask 1041409
        %v2890 = vsel %vm2889, %v2886, %v2885
        %vm2891 = vcmask 1042434
        %v2892 = vsel %vm2891, %v2887, %v2890
        %vm2893 = vcmask 1043459
        %v2894 = vsel %vm2893, %v2888, %v2892
        %v2895 = vpack.c.b16 %v2894, %v2894
        %v2913 = vunpack.c.l.b16 %v2712
        %v2914 = vunpack.c.l.b16 %v2713
        %v2915 = vunpack.c.l.b16 %v2714
        %v2916 = vunpack.c.l.b16 %v2715
        %v2917 = vunpack.c.l.b16 %v2716
        %v2918 = vunpack.c.l.b16 %v2717
        %v2919 = vunpack.c.l.b16 %v2718
        %v2920 = vunpack.c.l.b16 %v2719
        %v2921 = vunpack.c.l.b16 %v2720
        %v2922 = vunpack.c.l.b16 %v2721
        %v2923 = vunpack.c.l.b16 %v2722
        %v2924 = vunpack.c.l.b16 %v2723
        %v2925 = vunpack.c.l.b16 %v2724
        %v2926 = vunpack.c.l.b16 %v2725
        %v2927 = vunpack.c.l.b16 %v2726
        %v2928 = vunpack.c.l.b16 %v2727
        %v2929 = vpack.c.b16 %v2914, %v2913
        %v2930 = vpack.c.b16 %v2916, %v2915
        %v2931 = vpack.c.b16 %v2918, %v2917
        %v2932 = vpack.c.b16 %v2920, %v2919
        %v2933 = vpack.c.b16 %v2922, %v2921
        %v2934 = vpack.c.b16 %v2924, %v2923
        %v2935 = vpack.c.b16 %v2926, %v2925
        %v2936 = vpack.c.b16 %v2928, %v2927
        %2945 = vmatpush.bf16.msra.mxu0 %v2936
        %2946 = vmatpush.bf16.msra.mxu0 %v2935
        %2947 = vmatpush.bf16.msra.mxu0 %v2934
        %2948 = vmatpush.bf16.msra.mxu0 %v2933
        %2949 = vmatpush.bf16.msra.mxu0 %v2932
        %2950 = vmatpush.bf16.msra.mxu0 %v2931
        %2951 = vmatpush.bf16.msra.mxu0 %v2930
        %2952 = vmatpush.bf16.msra.mxu0 %v2929
        %2953 = vmatmul.bf16.gmra.mxu0 %v2895
        %v2954 = vpop.f32.mrf.mxu0
        %v2955 = vadd.f32 %v2879, %v2954
        %v2956 = vpop.f32.mrf.mxu0
        %2957 = vdwg.mxu0
        %v2958 = vunpack.c.l.bf16 %v2830
        %v2959 = vunpack.c.l.bf16 %v2831
        %v2960 = vunpack.c.l.bf16 %v2832
        %v2961 = vunpack.c.l.bf16 %v2833
        %v2962 = vunpack.c.l.bf16 %v2834
        %v2963 = vunpack.c.l.bf16 %v2835
        %v2964 = vunpack.c.l.bf16 %v2836
        %v2965 = vunpack.c.l.bf16 %v2837
        %v2966 = vunpack.c.l.bf16 %v2838
        %v2967 = vunpack.c.l.bf16 %v2839
        %v2968 = vunpack.c.l.bf16 %v2840
        %v2969 = vunpack.c.l.bf16 %v2841
        %v2970 = vunpack.c.l.bf16 %v2842
        %v2971 = vunpack.c.l.bf16 %v2843
        %v2972 = vunpack.c.l.bf16 %v2844
        %v2973 = vunpack.c.l.bf16 %v2845
        %v2974 = vunpack.c.l.bf16 %v2846
        %v2975 = vunpack.c.l.bf16 %v2847
        %v2976 = vunpack.c.l.bf16 %v2848
        %v2977 = vunpack.c.l.bf16 %v2849
        %v2978 = vunpack.c.l.bf16 %v2850
        %v2979 = vunpack.c.l.bf16 %v2851
        %v2980 = vunpack.c.l.bf16 %v2852
        %v2981 = vunpack.c.l.bf16 %v2853
        %v2982 = vunpack.c.l.bf16 %v2854
        %v2983 = vunpack.c.l.bf16 %v2855
        %v2984 = vunpack.c.l.bf16 %v2856
        %v2985 = vunpack.c.l.bf16 %v2857
        %v2986 = vunpack.c.l.bf16 %v2858
        %v2987 = vunpack.c.l.bf16 %v2859
        %v2988 = vunpack.c.l.bf16 %v2860
        %v2989 = vunpack.c.l.bf16 %v2861
        %v2990 = vmax.f32 %v2958, 0.0
        %v2991 = vmax.f32 %v2959, 0.0
        %v2992 = vmax.f32 %v2960, 0.0
        %v2993 = vmax.f32 %v2961, 0.0
        %v2994 = vmax.f32 %v2962, 0.0
        %v2995 = vmax.f32 %v2963, 0.0
        %v2996 = vmax.f32 %v2964, 0.0
        %v2997 = vmax.f32 %v2965, 0.0
        %v2998 = vmax.f32 %v2966, 0.0
        %v2999 = vmax.f32 %v2967, 0.0
        %v3000 = vmax.f32 %v2968, 0.0
        %v3001 = vmax.f32 %v2969, 0.0
        %v3002 = vmax.f32 %v2970, 0.0
        %v3003 = vmax.f32 %v2971, 0.0
        %v3004 = vmax.f32 %v2972, 0.0
        %v3005 = vmax.f32 %v2973, 0.0
        %v3006 = vmax.f32 %v2974, 0.0
        %v3007 = vmax.f32 %v2975, 0.0
        %v3008 = vmax.f32 %v2976, 0.0
        %v3009 = vmax.f32 %v2977, 0.0
        %v3010 = vmax.f32 %v2978, 0.0
        %v3011 = vmax.f32 %v2979, 0.0
        %v3012 = vmax.f32 %v2980, 0.0
        %v3013 = vmax.f32 %v2981, 0.0
        %v3014 = vmax.f32 %v2982, 0.0
        %v3015 = vmax.f32 %v2983, 0.0
        %v3016 = vmax.f32 %v2984, 0.0
        %v3017 = vmax.f32 %v2985, 0.0
        %v3018 = vmax.f32 %v2986, 0.0
        %v3019 = vmax.f32 %v2987, 0.0
        %v3020 = vmax.f32 %v2988, 0.0
        %v3021 = vmax.f32 %v2989, 0.0
        %v3022 = vpack.c.bf16 %v2991, %v2990
        %v3023 = vpack.c.bf16 %v2993, %v2992
        %v3024 = vpack.c.bf16 %v2995, %v2994
        %v3025 = vpack.c.bf16 %v2997, %v2996
        %v3026 = vpack.c.bf16 %v2999, %v2998
        %v3027 = vpack.c.bf16 %v3001, %v3000
        %v3028 = vpack.c.bf16 %v3003, %v3002
        %v3029 = vpack.c.bf16 %v3005, %v3004
        %v3030 = vpack.c.bf16 %v3007, %v3006
        %v3031 = vpack.c.bf16 %v3009, %v3008
        %v3032 = vpack.c.bf16 %v3011, %v3010
        %v3033 = vpack.c.bf16 %v3013, %v3012
        %v3034 = vpack.c.bf16 %v3015, %v3014
        %v3035 = vpack.c.bf16 %v3017, %v3016
        %v3036 = vpack.c.bf16 %v3019, %v3018
        %v3037 = vpack.c.bf16 %v3021, %v3020
        %v3054 = vunpack.c.l.b16 %v2696
        %v3055 = vunpack.c.l.b16 %v2697
        %v3056 = vunpack.c.l.b16 %v2698
        %v3057 = vunpack.c.l.b16 %v2699
        %v3058 = vunpack.c.l.b16 %v2700
        %v3059 = vunpack.c.l.b16 %v2701
        %v3060 = vunpack.c.l.b16 %v2702
        %v3061 = vunpack.c.l.b16 %v2703
        %v3062 = vunpack.c.l.b16 %v2704
        %v3063 = vunpack.c.l.b16 %v2705
        %v3064 = vunpack.c.l.b16 %v2706
        %v3065 = vunpack.c.l.b16 %v2707
        %v3066 = vunpack.c.l.b16 %v2708
        %v3067 = vunpack.c.l.b16 %v2709
        %v3068 = vunpack.c.l.b16 %v2710
        %v3069 = vunpack.c.l.b16 %v2711
        %v3070 = vpack.c.b16 %v3055, %v3054
        %v3071 = vpack.c.b16 %v3057, %v3056
        %v3072 = vpack.c.b16 %v3059, %v3058
        %v3073 = vpack.c.b16 %v3061, %v3060
        %v3074 = vpack.c.b16 %v3063, %v3062
        %v3075 = vpack.c.b16 %v3065, %v3064
        %v3076 = vpack.c.b16 %v3067, %v3066
        %v3077 = vpack.c.b16 %v3069, %v3068
        %3086 = vmatpush.bf16.msra.mxu0 %v3077
        %3087 = vmatpush.bf16.msra.mxu0 %v3076
        %3088 = vmatpush.bf16.msra.mxu0 %v3075
        %3089 = vmatpush.bf16.msra.mxu0 %v3074
        %3090 = vmatpush.bf16.msra.mxu0 %v3073
        %3091 = vmatpush.bf16.msra.mxu0 %v3072
        %3092 = vmatpush.bf16.msra.mxu0 %v3071
        %3093 = vmatpush.bf16.msra.mxu0 %v3070
        %3094 = vmatmul.bf16.gmra.mxu0 %v3022
        %v3095 = vpop.f32.mrf.mxu0
        %v3096 = vadd.f32 0.0, %v3095
        %v3097 = vpop.f32.mrf.mxu0
        %v3098 = vadd.f32 0.0, %v3097
        %3099 = vmatmul.bf16.gmra.mxu0 %v3023
        %v3100 = vpop.f32.mrf.mxu0
        %v3101 = vadd.f32 0.0, %v3100
        %v3102 = vpop.f32.mrf.mxu0
        %v3103 = vadd.f32 0.0, %v3102
        %3104 = vmatmul.bf16.gmra.mxu0 %v3024
        %v3105 = vpop.f32.mrf.mxu0
        %v3106 = vadd.f32 0.0, %v3105
        %v3107 = vpop.f32.mrf.mxu0
        %v3108 = vadd.f32 0.0, %v3107
        %3109 = vmatmul.bf16.gmra.mxu0 %v3025
        %v3110 = vpop.f32.mrf.mxu0
        %v3111 = vadd.f32 0.0, %v3110
        %v3112 = vpop.f32.mrf.mxu0
        %v3113 = vadd.f32 0.0, %v3112
        %3114 = vmatmul.bf16.gmra.mxu0 %v3026
        %v3115 = vpop.f32.mrf.mxu0
        %v3116 = vadd.f32 0.0, %v3115
        %v3117 = vpop.f32.mrf.mxu0
        %v3118 = vadd.f32 0.0, %v3117
        %3119 = vmatmul.bf16.gmra.mxu0 %v3027
        %v3120 = vpop.f32.mrf.mxu0
        %v3121 = vadd.f32 0.0, %v3120
        %v3122 = vpop.f32.mrf.mxu0
        %v3123 = vadd.f32 0.0, %v3122
        %3124 = vmatmul.bf16.gmra.mxu0 %v3028
        %v3125 = vpop.f32.mrf.mxu0
        %v3126 = vadd.f32 0.0, %v3125
        %v3127 = vpop.f32.mrf.mxu0
        %v3128 = vadd.f32 0.0, %v3127
        %3129 = vmatmul.bf16.gmra.mxu0 %v3029
        %v3130 = vpop.f32.mrf.mxu0
        %v3131 = vadd.f32 0.0, %v3130
        %v3132 = vpop.f32.mrf.mxu0
        %v3133 = vadd.f32 0.0, %v3132
        %3134 = vmatmul.bf16.gmra.mxu0 %v3030
        %v3135 = vpop.f32.mrf.mxu0
        %v3136 = vadd.f32 0.0, %v3135
        %v3137 = vpop.f32.mrf.mxu0
        %v3138 = vadd.f32 0.0, %v3137
        %3139 = vmatmul.bf16.gmra.mxu0 %v3031
        %v3140 = vpop.f32.mrf.mxu0
        %v3141 = vadd.f32 0.0, %v3140
        %v3142 = vpop.f32.mrf.mxu0
        %v3143 = vadd.f32 0.0, %v3142
        %3144 = vmatmul.bf16.gmra.mxu0 %v3032
        %v3145 = vpop.f32.mrf.mxu0
        %v3146 = vadd.f32 0.0, %v3145
        %v3147 = vpop.f32.mrf.mxu0
        %v3148 = vadd.f32 0.0, %v3147
        %3149 = vmatmul.bf16.gmra.mxu0 %v3033
        %v3150 = vpop.f32.mrf.mxu0
        %v3151 = vadd.f32 0.0, %v3150
        %v3152 = vpop.f32.mrf.mxu0
        %v3153 = vadd.f32 0.0, %v3152
        %3154 = vmatmul.bf16.gmra.mxu0 %v3034
        %v3155 = vpop.f32.mrf.mxu0
        %v3156 = vadd.f32 0.0, %v3155
        %v3157 = vpop.f32.mrf.mxu0
        %v3158 = vadd.f32 0.0, %v3157
        %3159 = vmatmul.bf16.gmra.mxu0 %v3035
        %v3160 = vpop.f32.mrf.mxu0
        %v3161 = vadd.f32 0.0, %v3160
        %v3162 = vpop.f32.mrf.mxu0
        %v3163 = vadd.f32 0.0, %v3162
        %3164 = vmatmul.bf16.gmra.mxu0 %v3036
        %v3165 = vpop.f32.mrf.mxu0
        %v3166 = vadd.f32 0.0, %v3165
        %v3167 = vpop.f32.mrf.mxu0
        %v3168 = vadd.f32 0.0, %v3167
        %3169 = vmatmul.bf16.gmra.mxu0 %v3037
        %v3170 = vpop.f32.mrf.mxu0
        %v3171 = vadd.f32 0.0, %v3170
        %v3172 = vpop.f32.mrf.mxu0
        %v3173 = vadd.f32 0.0, %v3172
        %3174 = vdwg.mxu0
        %v3176 = vrot.slane %v2955, 1
        %v3177 = vrot.slane %v2955, 2
        %v3178 = vrot.slane %v2955, 3
        %v3179 = vperm.slane %v2955, 0
        %v3180 = vperm.slane %v3176, 0
        %v3181 = vperm.slane %v3177, 0
        %v3182 = vperm.slane %v3178, 0
        %v3187 = vadd.f32 %v3096, %v3179
        %v3188 = vadd.f32 %v3098, %v3179
        %v3189 = vadd.f32 %v3101, %v3179
        %v3190 = vadd.f32 %v3103, %v3179
        %v3191 = vadd.f32 %v3106, %v3179
        %v3192 = vadd.f32 %v3108, %v3179
        %v3193 = vadd.f32 %v3111, %v3179
        %v3194 = vadd.f32 %v3113, %v3179
        %v3195 = vadd.f32 %v3116, %v3180
        %v3196 = vadd.f32 %v3118, %v3180
        %v3197 = vadd.f32 %v3121, %v3180
        %v3198 = vadd.f32 %v3123, %v3180
        %v3199 = vadd.f32 %v3126, %v3180
        %v3200 = vadd.f32 %v3128, %v3180
        %v3201 = vadd.f32 %v3131, %v3180
        %v3202 = vadd.f32 %v3133, %v3180
        %v3203 = vadd.f32 %v3136, %v3181
        %v3204 = vadd.f32 %v3138, %v3181
        %v3205 = vadd.f32 %v3141, %v3181
        %v3206 = vadd.f32 %v3143, %v3181
        %v3207 = vadd.f32 %v3146, %v3181
        %v3208 = vadd.f32 %v3148, %v3181
        %v3209 = vadd.f32 %v3151, %v3181
        %v3210 = vadd.f32 %v3153, %v3181
        %v3211 = vadd.f32 %v3156, %v3182
        %v3212 = vadd.f32 %v3158, %v3182
        %v3213 = vadd.f32 %v3161, %v3182
        %v3214 = vadd.f32 %v3163, %v3182
        %v3215 = vadd.f32 %v3166, %v3182
        %v3216 = vadd.f32 %v3168, %v3182
        %v3217 = vadd.f32 %v3171, %v3182
        %v3218 = vadd.f32 %v3173, %v3182
        %v3220 = vperm.slane %v2777, 0
        %v3226 = vperm.slane %v2862, 0
        %v3227 = vperm.slane %v2863, 0
        %v3228 = vperm.slane %v2864, 0
        %v3229 = vperm.slane %v2865, 0
        %v3230 = vunpack.c.l.b16 %v3226
        %v3231 = vunpack.c.l.b16 %v3227
        %v3232 = vunpack.c.l.b16 %v3228
        %v3233 = vunpack.c.l.b16 %v3229
        %v3234 = vsel %vm2889, %v3231, %v3230
        %v3235 = vsel %vm2891, %v3232, %v3234
        %v3236 = vsel %vm2893, %v3233, %v3235
        %v3237 = vpack.c.b16 %v3236, %v3236
        %v3255 = vunpack.c.l.b16 %v2744
        %v3256 = vunpack.c.l.b16 %v2745
        %v3257 = vunpack.c.l.b16 %v2746
        %v3258 = vunpack.c.l.b16 %v2747
        %v3259 = vunpack.c.l.b16 %v2748
        %v3260 = vunpack.c.l.b16 %v2749
        %v3261 = vunpack.c.l.b16 %v2750
        %v3262 = vunpack.c.l.b16 %v2751
        %v3263 = vunpack.c.l.b16 %v2752
        %v3264 = vunpack.c.l.b16 %v2753
        %v3265 = vunpack.c.l.b16 %v2754
        %v3266 = vunpack.c.l.b16 %v2755
        %v3267 = vunpack.c.l.b16 %v2756
        %v3268 = vunpack.c.l.b16 %v2757
        %v3269 = vunpack.c.l.b16 %v2758
        %v3270 = vunpack.c.l.b16 %v2759
        %v3271 = vpack.c.b16 %v3256, %v3255
        %v3272 = vpack.c.b16 %v3258, %v3257
        %v3273 = vpack.c.b16 %v3260, %v3259
        %v3274 = vpack.c.b16 %v3262, %v3261
        %v3275 = vpack.c.b16 %v3264, %v3263
        %v3276 = vpack.c.b16 %v3266, %v3265
        %v3277 = vpack.c.b16 %v3268, %v3267
        %v3278 = vpack.c.b16 %v3270, %v3269
        %3287 = vmatpush.bf16.msra.mxu0 %v3278
        %3288 = vmatpush.bf16.msra.mxu0 %v3277
        %3289 = vmatpush.bf16.msra.mxu0 %v3276
        %3290 = vmatpush.bf16.msra.mxu0 %v3275
        %3291 = vmatpush.bf16.msra.mxu0 %v3274
        %3292 = vmatpush.bf16.msra.mxu0 %v3273
        %3293 = vmatpush.bf16.msra.mxu0 %v3272
        %3294 = vmatpush.bf16.msra.mxu0 %v3271
        %3295 = vmatmul.bf16.gmra.mxu0 %v3237
        %v3296 = vpop.f32.mrf.mxu0
        %v3297 = vadd.f32 %v3220, %v3296
        %v3298 = vpop.f32.mrf.mxu0
        %3299 = vdwg.mxu0
        %v3332 = vunpack.c.l.b16 %v2830
        %v3333 = vunpack.c.l.b16 %v2831
        %v3334 = vunpack.c.l.b16 %v2832
        %v3335 = vunpack.c.l.b16 %v2833
        %v3336 = vunpack.c.l.b16 %v2834
        %v3337 = vunpack.c.l.b16 %v2835
        %v3338 = vunpack.c.l.b16 %v2836
        %v3339 = vunpack.c.l.b16 %v2837
        %v3340 = vunpack.c.l.b16 %v2838
        %v3341 = vunpack.c.l.b16 %v2839
        %v3342 = vunpack.c.l.b16 %v2840
        %v3343 = vunpack.c.l.b16 %v2841
        %v3344 = vunpack.c.l.b16 %v2842
        %v3345 = vunpack.c.l.b16 %v2843
        %v3346 = vunpack.c.l.b16 %v2844
        %v3347 = vunpack.c.l.b16 %v2845
        %v3348 = vunpack.c.l.b16 %v2846
        %v3349 = vunpack.c.l.b16 %v2847
        %v3350 = vunpack.c.l.b16 %v2848
        %v3351 = vunpack.c.l.b16 %v2849
        %v3352 = vunpack.c.l.b16 %v2850
        %v3353 = vunpack.c.l.b16 %v2851
        %v3354 = vunpack.c.l.b16 %v2852
        %v3355 = vunpack.c.l.b16 %v2853
        %v3356 = vunpack.c.l.b16 %v2854
        %v3357 = vunpack.c.l.b16 %v2855
        %v3358 = vunpack.c.l.b16 %v2856
        %v3359 = vunpack.c.l.b16 %v2857
        %v3360 = vunpack.c.l.b16 %v2858
        %v3361 = vunpack.c.l.b16 %v2859
        %v3362 = vunpack.c.l.b16 %v2860
        %v3363 = vunpack.c.l.b16 %v2861
        %v3364 = vpack.c.b16 %v3333, %v3332
        %v3365 = vpack.c.b16 %v3335, %v3334
        %v3366 = vpack.c.b16 %v3337, %v3336
        %v3367 = vpack.c.b16 %v3339, %v3338
        %v3368 = vpack.c.b16 %v3341, %v3340
        %v3369 = vpack.c.b16 %v3343, %v3342
        %v3370 = vpack.c.b16 %v3345, %v3344
        %v3371 = vpack.c.b16 %v3347, %v3346
        %v3372 = vpack.c.b16 %v3349, %v3348
        %v3373 = vpack.c.b16 %v3351, %v3350
        %v3374 = vpack.c.b16 %v3353, %v3352
        %v3375 = vpack.c.b16 %v3355, %v3354
        %v3376 = vpack.c.b16 %v3357, %v3356
        %v3377 = vpack.c.b16 %v3359, %v3358
        %v3378 = vpack.c.b16 %v3361, %v3360
        %v3379 = vpack.c.b16 %v3363, %v3362
        %v3412 = vunpack.c.l.b16 %v2728
        %v3413 = vunpack.c.l.b16 %v2729
        %v3414 = vunpack.c.l.b16 %v2730
        %v3415 = vunpack.c.l.b16 %v2731
        %v3416 = vunpack.c.l.b16 %v2732
        %v3417 = vunpack.c.l.b16 %v2733
        %v3418 = vunpack.c.l.b16 %v2734
        %v3419 = vunpack.c.l.b16 %v2735
        %v3420 = vunpack.c.l.b16 %v2736
        %v3421 = vunpack.c.l.b16 %v2737
        %v3422 = vunpack.c.l.b16 %v2738
        %v3423 = vunpack.c.l.b16 %v2739
        %v3424 = vunpack.c.l.b16 %v2740
        %v3425 = vunpack.c.l.b16 %v2741
        %v3426 = vunpack.c.l.b16 %v2742
        %v3427 = vunpack.c.l.b16 %v2743
        %v3428 = vpack.c.b16 %v3413, %v3412
        %v3429 = vpack.c.b16 %v3415, %v3414
        %v3430 = vpack.c.b16 %v3417, %v3416
        %v3431 = vpack.c.b16 %v3419, %v3418
        %v3432 = vpack.c.b16 %v3421, %v3420
        %v3433 = vpack.c.b16 %v3423, %v3422
        %v3434 = vpack.c.b16 %v3425, %v3424
        %v3435 = vpack.c.b16 %v3427, %v3426
        %3444 = vmatpush.bf16.msra.mxu0 %v3435
        %3445 = vmatpush.bf16.msra.mxu0 %v3434
        %3446 = vmatpush.bf16.msra.mxu0 %v3433
        %3447 = vmatpush.bf16.msra.mxu0 %v3432
        %3448 = vmatpush.bf16.msra.mxu0 %v3431
        %3449 = vmatpush.bf16.msra.mxu0 %v3430
        %3450 = vmatpush.bf16.msra.mxu0 %v3429
        %3451 = vmatpush.bf16.msra.mxu0 %v3428
        %3452 = vmatmul.bf16.gmra.mxu0 %v3364
        %v3453 = vpop.f32.mrf.mxu0
        %v3454 = vadd.f32 0.0, %v3453
        %v3455 = vpop.f32.mrf.mxu0
        %v3456 = vadd.f32 0.0, %v3455
        %3457 = vmatmul.bf16.gmra.mxu0 %v3365
        %v3458 = vpop.f32.mrf.mxu0
        %v3459 = vadd.f32 0.0, %v3458
        %v3460 = vpop.f32.mrf.mxu0
        %v3461 = vadd.f32 0.0, %v3460
        %3462 = vmatmul.bf16.gmra.mxu0 %v3366
        %v3463 = vpop.f32.mrf.mxu0
        %v3464 = vadd.f32 0.0, %v3463
        %v3465 = vpop.f32.mrf.mxu0
        %v3466 = vadd.f32 0.0, %v3465
        %3467 = vmatmul.bf16.gmra.mxu0 %v3367
        %v3468 = vpop.f32.mrf.mxu0
        %v3469 = vadd.f32 0.0, %v3468
        %v3470 = vpop.f32.mrf.mxu0
        %v3471 = vadd.f32 0.0, %v3470
        %3472 = vmatmul.bf16.gmra.mxu0 %v3368
        %v3473 = vpop.f32.mrf.mxu0
        %v3474 = vadd.f32 0.0, %v3473
        %v3475 = vpop.f32.mrf.mxu0
        %v3476 = vadd.f32 0.0, %v3475
        %3477 = vmatmul.bf16.gmra.mxu0 %v3369
        %v3478 = vpop.f32.mrf.mxu0
        %v3479 = vadd.f32 0.0, %v3478
        %v3480 = vpop.f32.mrf.mxu0
        %v3481 = vadd.f32 0.0, %v3480
        %3482 = vmatmul.bf16.gmra.mxu0 %v3370
        %v3483 = vpop.f32.mrf.mxu0
        %v3484 = vadd.f32 0.0, %v3483
        %v3485 = vpop.f32.mrf.mxu0
        %v3486 = vadd.f32 0.0, %v3485
        %3487 = vmatmul.bf16.gmra.mxu0 %v3371
        %v3488 = vpop.f32.mrf.mxu0
        %v3489 = vadd.f32 0.0, %v3488
        %v3490 = vpop.f32.mrf.mxu0
        %v3491 = vadd.f32 0.0, %v3490
        %3492 = vmatmul.bf16.gmra.mxu0 %v3372
        %v3493 = vpop.f32.mrf.mxu0
        %v3494 = vadd.f32 0.0, %v3493
        %v3495 = vpop.f32.mrf.mxu0
        %v3496 = vadd.f32 0.0, %v3495
        %3497 = vmatmul.bf16.gmra.mxu0 %v3373
        %v3498 = vpop.f32.mrf.mxu0
        %v3499 = vadd.f32 0.0, %v3498
        %v3500 = vpop.f32.mrf.mxu0
        %v3501 = vadd.f32 0.0, %v3500
        %3502 = vmatmul.bf16.gmra.mxu0 %v3374
        %v3503 = vpop.f32.mrf.mxu0
        %v3504 = vadd.f32 0.0, %v3503
        %v3505 = vpop.f32.mrf.mxu0
        %v3506 = vadd.f32 0.0, %v3505
        %3507 = vmatmul.bf16.gmra.mxu0 %v3375
        %v3508 = vpop.f32.mrf.mxu0
        %v3509 = vadd.f32 0.0, %v3508
        %v3510 = vpop.f32.mrf.mxu0
        %v3511 = vadd.f32 0.0, %v3510
        %3512 = vmatmul.bf16.gmra.mxu0 %v3376
        %v3513 = vpop.f32.mrf.mxu0
        %v3514 = vadd.f32 0.0, %v3513
        %v3515 = vpop.f32.mrf.mxu0
        %v3516 = vadd.f32 0.0, %v3515
        %3517 = vmatmul.bf16.gmra.mxu0 %v3377
        %v3518 = vpop.f32.mrf.mxu0
        %v3519 = vadd.f32 0.0, %v3518
        %v3520 = vpop.f32.mrf.mxu0
        %v3521 = vadd.f32 0.0, %v3520
        %3522 = vmatmul.bf16.gmra.mxu0 %v3378
        %v3523 = vpop.f32.mrf.mxu0
        %v3524 = vadd.f32 0.0, %v3523
        %v3525 = vpop.f32.mrf.mxu0
        %v3526 = vadd.f32 0.0, %v3525
        %3527 = vmatmul.bf16.gmra.mxu0 %v3379
        %v3528 = vpop.f32.mrf.mxu0
        %v3529 = vadd.f32 0.0, %v3528
        %v3530 = vpop.f32.mrf.mxu0
        %v3531 = vadd.f32 0.0, %v3530
        %3532 = vdwg.mxu0
        %v3534 = vrot.slane %v3297, 1
        %v3535 = vrot.slane %v3297, 2
        %v3536 = vrot.slane %v3297, 3
        %v3537 = vperm.slane %v3297, 0
        %v3538 = vperm.slane %v3534, 0
        %v3539 = vperm.slane %v3535, 0
        %v3540 = vperm.slane %v3536, 0
        %v3545 = vadd.f32 %v3454, %v3537
        %v3546 = vadd.f32 %v3456, %v3537
        %v3547 = vadd.f32 %v3459, %v3537
        %v3548 = vadd.f32 %v3461, %v3537
        %v3549 = vadd.f32 %v3464, %v3537
        %v3550 = vadd.f32 %v3466, %v3537
        %v3551 = vadd.f32 %v3469, %v3537
        %v3552 = vadd.f32 %v3471, %v3537
        %v3553 = vadd.f32 %v3474, %v3538
        %v3554 = vadd.f32 %v3476, %v3538
        %v3555 = vadd.f32 %v3479, %v3538
        %v3556 = vadd.f32 %v3481, %v3538
        %v3557 = vadd.f32 %v3484, %v3538
        %v3558 = vadd.f32 %v3486, %v3538
        %v3559 = vadd.f32 %v3489, %v3538
        %v3560 = vadd.f32 %v3491, %v3538
        %v3561 = vadd.f32 %v3494, %v3539
        %v3562 = vadd.f32 %v3496, %v3539
        %v3563 = vadd.f32 %v3499, %v3539
        %v3564 = vadd.f32 %v3501, %v3539
        %v3565 = vadd.f32 %v3504, %v3539
        %v3566 = vadd.f32 %v3506, %v3539
        %v3567 = vadd.f32 %v3509, %v3539
        %v3568 = vadd.f32 %v3511, %v3539
        %v3569 = vadd.f32 %v3514, %v3540
        %v3570 = vadd.f32 %v3516, %v3540
        %v3571 = vadd.f32 %v3519, %v3540
        %v3572 = vadd.f32 %v3521, %v3540
        %v3573 = vadd.f32 %v3524, %v3540
        %v3574 = vadd.f32 %v3526, %v3540
        %v3575 = vadd.f32 %v3529, %v3540
        %v3576 = vadd.f32 %v3531, %v3540
        %v3577 = vmax.f32 %v3187, 0.0
        %v3578 = vmax.f32 %v3188, 0.0
        %v3579 = vmax.f32 %v3189, 0.0
        %v3580 = vmax.f32 %v3190, 0.0
        %v3581 = vmax.f32 %v3191, 0.0
        %v3582 = vmax.f32 %v3192, 0.0
        %v3583 = vmax.f32 %v3193, 0.0
        %v3584 = vmax.f32 %v3194, 0.0
        %v3585 = vmax.f32 %v3195, 0.0
        %v3586 = vmax.f32 %v3196, 0.0
        %v3587 = vmax.f32 %v3197, 0.0
        %v3588 = vmax.f32 %v3198, 0.0
        %v3589 = vmax.f32 %v3199, 0.0
        %v3590 = vmax.f32 %v3200, 0.0
        %v3591 = vmax.f32 %v3201, 0.0
        %v3592 = vmax.f32 %v3202, 0.0
        %v3593 = vmax.f32 %v3203, 0.0
        %v3594 = vmax.f32 %v3204, 0.0
        %v3595 = vmax.f32 %v3205, 0.0
        %v3596 = vmax.f32 %v3206, 0.0
        %v3597 = vmax.f32 %v3207, 0.0
        %v3598 = vmax.f32 %v3208, 0.0
        %v3599 = vmax.f32 %v3209, 0.0
        %v3600 = vmax.f32 %v3210, 0.0
        %v3601 = vmax.f32 %v3211, 0.0
        %v3602 = vmax.f32 %v3212, 0.0
        %v3603 = vmax.f32 %v3213, 0.0
        %v3604 = vmax.f32 %v3214, 0.0
        %v3605 = vmax.f32 %v3215, 0.0
        %v3606 = vmax.f32 %v3216, 0.0
        %v3607 = vmax.f32 %v3217, 0.0
        %v3608 = vmax.f32 %v3218, 0.0
        %v3609 = vpack.c.bf16 %v3578, %v3577
        %v3610 = vpack.c.bf16 %v3580, %v3579
        %v3611 = vpack.c.bf16 %v3582, %v3581
        %v3612 = vpack.c.bf16 %v3584, %v3583
        %v3613 = vpack.c.bf16 %v3586, %v3585
        %v3614 = vpack.c.bf16 %v3588, %v3587
        %v3615 = vpack.c.bf16 %v3590, %v3589
        %v3616 = vpack.c.bf16 %v3592, %v3591
        %v3617 = vpack.c.bf16 %v3594, %v3593
        %v3618 = vpack.c.bf16 %v3596, %v3595
        %v3619 = vpack.c.bf16 %v3598, %v3597
        %v3620 = vpack.c.bf16 %v3600, %v3599
        %v3621 = vpack.c.bf16 %v3602, %v3601
        %v3622 = vpack.c.bf16 %v3604, %v3603
        %v3623 = vpack.c.bf16 %v3606, %v3605
        %v3624 = vpack.c.bf16 %v3608, %v3607
        %v3641 = vunpack.c.l.b16 %v2760
        %v3642 = vunpack.c.l.b16 %v2761
        %v3643 = vunpack.c.l.b16 %v2762
        %v3644 = vunpack.c.l.b16 %v2763
        %v3645 = vunpack.c.l.b16 %v2764
        %v3646 = vunpack.c.l.b16 %v2765
        %v3647 = vunpack.c.l.b16 %v2766
        %v3648 = vunpack.c.l.b16 %v2767
        %v3649 = vunpack.c.l.b16 %v2768
        %v3650 = vunpack.c.l.b16 %v2769
        %v3651 = vunpack.c.l.b16 %v2770
        %v3652 = vunpack.c.l.b16 %v2771
        %v3653 = vunpack.c.l.b16 %v2772
        %v3654 = vunpack.c.l.b16 %v2773
        %v3655 = vunpack.c.l.b16 %v2774
        %v3656 = vunpack.c.l.b16 %v2775
        %v3657 = vpack.c.b16 %v3642, %v3641
        %v3658 = vpack.c.b16 %v3644, %v3643
        %v3659 = vpack.c.b16 %v3646, %v3645
        %v3660 = vpack.c.b16 %v3648, %v3647
        %v3661 = vpack.c.b16 %v3650, %v3649
        %v3662 = vpack.c.b16 %v3652, %v3651
        %v3663 = vpack.c.b16 %v3654, %v3653
        %v3664 = vpack.c.b16 %v3656, %v3655
        %3673 = vmatpush.bf16.msra.mxu0 %v3664
        %3674 = vmatpush.bf16.msra.mxu0 %v3663
        %3675 = vmatpush.bf16.msra.mxu0 %v3662
        %3676 = vmatpush.bf16.msra.mxu0 %v3661
        %3677 = vmatpush.bf16.msra.mxu0 %v3660
        %3678 = vmatpush.bf16.msra.mxu0 %v3659
        %3679 = vmatpush.bf16.msra.mxu0 %v3658
        %3680 = vmatpush.bf16.msra.mxu0 %v3657
        %3681 = vmatmul.bf16.gmra.mxu0 %v3609
        %v3682 = vpop.f32.mrf.mxu0
        %v3683 = vadd.f32 0.0, %v3682
        %v3684 = vpop.f32.mrf.mxu0
        %v3685 = vadd.f32 0.0, %v3684
        %3686 = vmatmul.bf16.gmra.mxu0 %v3610
        %v3687 = vpop.f32.mrf.mxu0
        %v3688 = vadd.f32 0.0, %v3687
        %v3689 = vpop.f32.mrf.mxu0
        %v3690 = vadd.f32 0.0, %v3689
        %3691 = vmatmul.bf16.gmra.mxu0 %v3611
        %v3692 = vpop.f32.mrf.mxu0
        %v3693 = vadd.f32 0.0, %v3692
        %v3694 = vpop.f32.mrf.mxu0
        %v3695 = vadd.f32 0.0, %v3694
        %3696 = vmatmul.bf16.gmra.mxu0 %v3612
        %v3697 = vpop.f32.mrf.mxu0
        %v3698 = vadd.f32 0.0, %v3697
        %v3699 = vpop.f32.mrf.mxu0
        %v3700 = vadd.f32 0.0, %v3699
        %3701 = vmatmul.bf16.gmra.mxu0 %v3613
        %v3702 = vpop.f32.mrf.mxu0
        %v3703 = vadd.f32 0.0, %v3702
        %v3704 = vpop.f32.mrf.mxu0
        %v3705 = vadd.f32 0.0, %v3704
        %3706 = vmatmul.bf16.gmra.mxu0 %v3614
        %v3707 = vpop.f32.mrf.mxu0
        %v3708 = vadd.f32 0.0, %v3707
        %v3709 = vpop.f32.mrf.mxu0
        %v3710 = vadd.f32 0.0, %v3709
        %3711 = vmatmul.bf16.gmra.mxu0 %v3615
        %v3712 = vpop.f32.mrf.mxu0
        %v3713 = vadd.f32 0.0, %v3712
        %v3714 = vpop.f32.mrf.mxu0
        %v3715 = vadd.f32 0.0, %v3714
        %3716 = vmatmul.bf16.gmra.mxu0 %v3616
        %v3717 = vpop.f32.mrf.mxu0
        %v3718 = vadd.f32 0.0, %v3717
        %v3719 = vpop.f32.mrf.mxu0
        %v3720 = vadd.f32 0.0, %v3719
        %3721 = vmatmul.bf16.gmra.mxu0 %v3617
        %v3722 = vpop.f32.mrf.mxu0
        %v3723 = vadd.f32 0.0, %v3722
        %v3724 = vpop.f32.mrf.mxu0
        %v3725 = vadd.f32 0.0, %v3724
        %3726 = vmatmul.bf16.gmra.mxu0 %v3618
        %v3727 = vpop.f32.mrf.mxu0
        %v3728 = vadd.f32 0.0, %v3727
        %v3729 = vpop.f32.mrf.mxu0
        %v3730 = vadd.f32 0.0, %v3729
        %3731 = vmatmul.bf16.gmra.mxu0 %v3619
        %v3732 = vpop.f32.mrf.mxu0
        %v3733 = vadd.f32 0.0, %v3732
        %v3734 = vpop.f32.mrf.mxu0
        %v3735 = vadd.f32 0.0, %v3734
        %3736 = vmatmul.bf16.gmra.mxu0 %v3620
        %v3737 = vpop.f32.mrf.mxu0
        %v3738 = vadd.f32 0.0, %v3737
        %v3739 = vpop.f32.mrf.mxu0
        %v3740 = vadd.f32 0.0, %v3739
        %3741 = vmatmul.bf16.gmra.mxu0 %v3621
        %v3742 = vpop.f32.mrf.mxu0
        %v3743 = vadd.f32 0.0, %v3742
        %v3744 = vpop.f32.mrf.mxu0
        %v3745 = vadd.f32 0.0, %v3744
        %3746 = vmatmul.bf16.gmra.mxu0 %v3622
        %v3747 = vpop.f32.mrf.mxu0
        %v3748 = vadd.f32 0.0, %v3747
        %v3749 = vpop.f32.mrf.mxu0
        %v3750 = vadd.f32 0.0, %v3749
        %3751 = vmatmul.bf16.gmra.mxu0 %v3623
        %v3752 = vpop.f32.mrf.mxu0
        %v3753 = vadd.f32 0.0, %v3752
        %v3754 = vpop.f32.mrf.mxu0
        %v3755 = vadd.f32 0.0, %v3754
        %3756 = vmatmul.bf16.gmra.mxu0 %v3624
        %v3757 = vpop.f32.mrf.mxu0
        %v3758 = vadd.f32 0.0, %v3757
        %v3759 = vpop.f32.mrf.mxu0
        %v3760 = vadd.f32 0.0, %v3759
        %3761 = vdwg.mxu0
        %v3762 = vadd.f32 %v3545, %v3683
        %v3763 = vadd.f32 %v3546, %v3685
        %v3764 = vadd.f32 %v3547, %v3688
        %v3765 = vadd.f32 %v3548, %v3690
        %v3766 = vadd.f32 %v3549, %v3693
        %v3767 = vadd.f32 %v3550, %v3695
        %v3768 = vadd.f32 %v3551, %v3698
        %v3769 = vadd.f32 %v3552, %v3700
        %v3770 = vadd.f32 %v3553, %v3703
        %v3771 = vadd.f32 %v3554, %v3705
        %v3772 = vadd.f32 %v3555, %v3708
        %v3773 = vadd.f32 %v3556, %v3710
        %v3774 = vadd.f32 %v3557, %v3713
        %v3775 = vadd.f32 %v3558, %v3715
        %v3776 = vadd.f32 %v3559, %v3718
        %v3777 = vadd.f32 %v3560, %v3720
        %v3778 = vadd.f32 %v3561, %v3723
        %v3779 = vadd.f32 %v3562, %v3725
        %v3780 = vadd.f32 %v3563, %v3728
        %v3781 = vadd.f32 %v3564, %v3730
        %v3782 = vadd.f32 %v3565, %v3733
        %v3783 = vadd.f32 %v3566, %v3735
        %v3784 = vadd.f32 %v3567, %v3738
        %v3785 = vadd.f32 %v3568, %v3740
        %v3786 = vadd.f32 %v3569, %v3743
        %v3787 = vadd.f32 %v3570, %v3745
        %v3788 = vadd.f32 %v3571, %v3748
        %v3789 = vadd.f32 %v3572, %v3750
        %v3790 = vadd.f32 %v3573, %v3753
        %v3791 = vadd.f32 %v3574, %v3755
        %v3792 = vadd.f32 %v3575, %v3758
        %v3793 = vadd.f32 %v3576, %v3760
        %s3794 = scalar_lea.vmem %s8, 64
        %v3795 = vld [vmem:[%s3794] sm:$0xf]
        %v3796 = vld [vmem:[%s3794 + $0x4] sm:$0xf]
        %v3797 = vld [vmem:[%s3794 + $0x8] sm:$0xf]
        %v3798 = vld [vmem:[%s3794 + $0xc] sm:$0xf]
        %v3799 = vld [vmem:[%s3794 + $0x10] sm:$0xf]
        %v3800 = vld [vmem:[%s3794 + $0x14] sm:$0xf]
        %v3801 = vld [vmem:[%s3794 + $0x18] sm:$0xf]
        %v3802 = vld [vmem:[%s3794 + $0x1c] sm:$0xf]
        %v3803 = vld [vmem:[%s3794 + $0x20] sm:$0xf]
        %v3804 = vld [vmem:[%s3794 + $0x24] sm:$0xf]
        %v3805 = vld [vmem:[%s3794 + $0x28] sm:$0xf]
        %v3806 = vld [vmem:[%s3794 + $0x2c] sm:$0xf]
        %v3807 = vld [vmem:[%s3794 + $0x30] sm:$0xf]
        %v3808 = vld [vmem:[%s3794 + $0x34] sm:$0xf]
        %v3809 = vld [vmem:[%s3794 + $0x38] sm:$0xf]
        %v3810 = vld [vmem:[%s3794 + $0x3c] sm:$0xf]
        %s3811 = scalar_lea.vmem %s9, 64
        %v3812 = vld [vmem:[%s3811] sm:$0xf]
        %v3813 = vld [vmem:[%s3811 + $0x4] sm:$0xf]
        %v3814 = vld [vmem:[%s3811 + $0x8] sm:$0xf]
        %v3815 = vld [vmem:[%s3811 + $0xc] sm:$0xf]
        %v3816 = vld [vmem:[%s3811 + $0x10] sm:$0xf]
        %v3817 = vld [vmem:[%s3811 + $0x14] sm:$0xf]
        %v3818 = vld [vmem:[%s3811 + $0x18] sm:$0xf]
        %v3819 = vld [vmem:[%s3811 + $0x1c] sm:$0xf]
        %v3820 = vld [vmem:[%s3811 + $0x20] sm:$0xf]
        %v3821 = vld [vmem:[%s3811 + $0x24] sm:$0xf]
        %v3822 = vld [vmem:[%s3811 + $0x28] sm:$0xf]
        %v3823 = vld [vmem:[%s3811 + $0x2c] sm:$0xf]
        %v3824 = vld [vmem:[%s3811 + $0x30] sm:$0xf]
        %v3825 = vld [vmem:[%s3811 + $0x34] sm:$0xf]
        %v3826 = vld [vmem:[%s3811 + $0x38] sm:$0xf]
        %v3827 = vld [vmem:[%s3811 + $0x3c] sm:$0xf]
        %s3828 = scalar_lea.vmem [#allocation10], 64
        %v3829 = vld [vmem:[%s3828] sm:$0xf]
        %v3830 = vld [vmem:[%s3828 + $0x4] sm:$0xf]
        %v3831 = vld [vmem:[%s3828 + $0x8] sm:$0xf]
        %v3832 = vld [vmem:[%s3828 + $0xc] sm:$0xf]
        %v3833 = vld [vmem:[%s3828 + $0x10] sm:$0xf]
        %v3834 = vld [vmem:[%s3828 + $0x14] sm:$0xf]
        %v3835 = vld [vmem:[%s3828 + $0x18] sm:$0xf]
        %v3836 = vld [vmem:[%s3828 + $0x1c] sm:$0xf]
        %v3837 = vld [vmem:[%s3828 + $0x20] sm:$0xf]
        %v3838 = vld [vmem:[%s3828 + $0x24] sm:$0xf]
        %v3839 = vld [vmem:[%s3828 + $0x28] sm:$0xf]
        %v3840 = vld [vmem:[%s3828 + $0x2c] sm:$0xf]
        %v3841 = vld [vmem:[%s3828 + $0x30] sm:$0xf]
        %v3842 = vld [vmem:[%s3828 + $0x34] sm:$0xf]
        %v3843 = vld [vmem:[%s3828 + $0x38] sm:$0xf]
        %v3844 = vld [vmem:[%s3828 + $0x3c] sm:$0xf]
        %s3845 = scalar_lea.vmem [#allocation11], 64
        %v3846 = vld [vmem:[%s3845] sm:$0xf]
        %v3847 = vld [vmem:[%s3845 + $0x4] sm:$0xf]
        %v3848 = vld [vmem:[%s3845 + $0x8] sm:$0xf]
        %v3849 = vld [vmem:[%s3845 + $0xc] sm:$0xf]
        %v3850 = vld [vmem:[%s3845 + $0x10] sm:$0xf]
        %v3851 = vld [vmem:[%s3845 + $0x14] sm:$0xf]
        %v3852 = vld [vmem:[%s3845 + $0x18] sm:$0xf]
        %v3853 = vld [vmem:[%s3845 + $0x1c] sm:$0xf]
        %v3854 = vld [vmem:[%s3845 + $0x20] sm:$0xf]
        %v3855 = vld [vmem:[%s3845 + $0x24] sm:$0xf]
        %v3856 = vld [vmem:[%s3845 + $0x28] sm:$0xf]
        %v3857 = vld [vmem:[%s3845 + $0x2c] sm:$0xf]
        %v3858 = vld [vmem:[%s3845 + $0x30] sm:$0xf]
        %v3859 = vld [vmem:[%s3845 + $0x34] sm:$0xf]
        %v3860 = vld [vmem:[%s3845 + $0x38] sm:$0xf]
        %v3861 = vld [vmem:[%s3845 + $0x3c] sm:$0xf]
        %s3862 = scalar_lea.vmem [#allocation8], 64
        %v3863 = vld [vmem:[%s3862] sm:$0xf]
        %v3864 = vld [vmem:[%s3862 + $0x4] sm:$0xf]
        %v3865 = vld [vmem:[%s3862 + $0x8] sm:$0xf]
        %v3866 = vld [vmem:[%s3862 + $0xc] sm:$0xf]
        %v3867 = vld [vmem:[%s3862 + $0x10] sm:$0xf]
        %v3868 = vld [vmem:[%s3862 + $0x14] sm:$0xf]
        %v3869 = vld [vmem:[%s3862 + $0x18] sm:$0xf]
        %v3870 = vld [vmem:[%s3862 + $0x1c] sm:$0xf]
        %v3871 = vld [vmem:[%s3862 + $0x20] sm:$0xf]
        %v3872 = vld [vmem:[%s3862 + $0x24] sm:$0xf]
        %v3873 = vld [vmem:[%s3862 + $0x28] sm:$0xf]
        %v3874 = vld [vmem:[%s3862 + $0x2c] sm:$0xf]
        %v3875 = vld [vmem:[%s3862 + $0x30] sm:$0xf]
        %v3876 = vld [vmem:[%s3862 + $0x34] sm:$0xf]
        %v3877 = vld [vmem:[%s3862 + $0x38] sm:$0xf]
        %v3878 = vld [vmem:[%s3862 + $0x3c] sm:$0xf]
        %s3879 = scalar_lea.vmem %s10, 1
        %v3880 = vld [vmem:[%s3879] sm:$0x1]
        %s3881 = scalar_lea.vmem %s12, 1
        %v3882 = vld [vmem:[%s3881] sm:$0x1]
        %v3883 = vmax.f32 %v3762, %v3763
        %v3884 = vmax.f32 %v3883, %v3764
        %v3885 = vmax.f32 %v3884, %v3765
        %v3886 = vmax.f32 %v3885, %v3766
        %v3887 = vmax.f32 %v3886, %v3767
        %v3888 = vmax.f32 %v3887, %v3768
        %v3889 = vmax.f32 %v3888, %v3769
        %v3890 = vrot.slane %v3889, 4
        %v3891 = vmax.f32 %v3889, %v3890
        %v3892 = vrot.slane %v3891, 2
        %v3893 = vmax.f32 %v3891, %v3892
        %v3894 = vrot.slane %v3893, 1
        %v3895 = vmax.f32 %v3893, %v3894
        %v3896 = vmax.f32 %v3770, %v3771
        %v3897 = vmax.f32 %v3896, %v3772
        %v3898 = vmax.f32 %v3897, %v3773
        %v3899 = vmax.f32 %v3898, %v3774
        %v3900 = vmax.f32 %v3899, %v3775
        %v3901 = vmax.f32 %v3900, %v3776
        %v3902 = vmax.f32 %v3901, %v3777
        %v3903 = vrot.slane %v3902, 4
        %v3904 = vmax.f32 %v3902, %v3903
        %v3905 = vrot.slane %v3904, 2
        %v3906 = vmax.f32 %v3904, %v3905
        %v3907 = vrot.slane %v3906, 1
        %v3908 = vmax.f32 %v3906, %v3907
        %v3909 = vmax.f32 %v3778, %v3779
        %v3910 = vmax.f32 %v3909, %v3780
        %v3911 = vmax.f32 %v3910, %v3781
        %v3912 = vmax.f32 %v3911, %v3782
        %v3913 = vmax.f32 %v3912, %v3783
        %v3914 = vmax.f32 %v3913, %v3784
        %v3915 = vmax.f32 %v3914, %v3785
        %v3916 = vrot.slane %v3915, 4
        %v3917 = vmax.f32 %v3915, %v3916
        %v3918 = vrot.slane %v3917, 2
        %v3919 = vmax.f32 %v3917, %v3918
        %v3920 = vrot.slane %v3919, 1
        %v3921 = vmax.f32 %v3919, %v3920
        %v3922 = vmax.f32 %v3786, %v3787
        %v3923 = vmax.f32 %v3922, %v3788
        %v3924 = vmax.f32 %v3923, %v3789
        %v3925 = vmax.f32 %v3924, %v3790
        %v3926 = vmax.f32 %v3925, %v3791
        %v3927 = vmax.f32 %v3926, %v3792
        %v3928 = vmax.f32 %v3927, %v3793
        %v3929 = vrot.slane %v3928, 4
        %v3930 = vmax.f32 %v3928, %v3929
        %v3931 = vrot.slane %v3930, 2
        %v3932 = vmax.f32 %v3930, %v3931
        %v3933 = vrot.slane %v3932, 1
        %v3934 = vmax.f32 %v3932, %v3933
        %v3935 = vpack.c.bf16 %v3762, %v3762
        %v3936 = vpack.c.bf16 %v3763, %v3763
        %v3937 = vpack.c.bf16 %v3764, %v3764
        %v3938 = vpack.c.bf16 %v3765, %v3765
        %v3939 = vpack.c.bf16 %v3766, %v3766
        %v3940 = vpack.c.bf16 %v3767, %v3767
        %v3941 = vpack.c.bf16 %v3768, %v3768
        %v3942 = vpack.c.bf16 %v3769, %v3769
        %v3943 = vpack.c.bf16 %v3770, %v3770
        %v3944 = vpack.c.bf16 %v3771, %v3771
        %v3945 = vpack.c.bf16 %v3772, %v3772
        %v3946 = vpack.c.bf16 %v3773, %v3773
        %v3947 = vpack.c.bf16 %v3774, %v3774
        %v3948 = vpack.c.bf16 %v3775, %v3775
        %v3949 = vpack.c.bf16 %v3776, %v3776
        %v3950 = vpack.c.bf16 %v3777, %v3777
        %v3951 = vpack.c.bf16 %v3778, %v3778
        %v3952 = vpack.c.bf16 %v3779, %v3779
        %v3953 = vpack.c.bf16 %v3780, %v3780
        %v3954 = vpack.c.bf16 %v3781, %v3781
        %v3955 = vpack.c.bf16 %v3782, %v3782
        %v3956 = vpack.c.bf16 %v3783, %v3783
        %v3957 = vpack.c.bf16 %v3784, %v3784
        %v3958 = vpack.c.bf16 %v3785, %v3785
        %v3959 = vpack.c.bf16 %v3786, %v3786
        %v3960 = vpack.c.bf16 %v3787, %v3787
        %v3961 = vpack.c.bf16 %v3788, %v3788
        %v3962 = vpack.c.bf16 %v3789, %v3789
        %v3963 = vpack.c.bf16 %v3790, %v3790
        %v3964 = vpack.c.bf16 %v3791, %v3791
        %v3965 = vpack.c.bf16 %v3792, %v3792
        %v3966 = vpack.c.bf16 %v3793, %v3793
        %v3967 = vpack.c.bf16 %v3895, %v3895
        %v3968 = vpack.c.bf16 %v3908, %v3908
        %v3969 = vpack.c.bf16 %v3921, %v3921
        %v3970 = vpack.c.bf16 %v3934, %v3934
        %v3971 = vunpack.c.l.bf16 %v3967
        %v3972 = vunpack.c.l.bf16 %v3968
        %v3973 = vunpack.c.l.bf16 %v3969
        %v3974 = vunpack.c.l.bf16 %v3970
        %v3975 = vmax.f32 %v3971, 0.0
        %v3976 = vmax.f32 %v3972, 0.0
        %v3977 = vmax.f32 %v3973, 0.0
        %v3978 = vmax.f32 %v3974, 0.0
        %v3979 = vpack.c.bf16 %v3975, %v3975
        %v3980 = vpack.c.bf16 %v3976, %v3976
        %v3981 = vpack.c.bf16 %v3977, %v3977
        %v3982 = vpack.c.bf16 %v3978, %v3978
        %v3984 = vperm.slane %v3880, 0
        %v3990 = vunpack.c.l.b16 %v3979
        %v3991 = vunpack.c.l.b16 %v3980
        %v3992 = vunpack.c.l.b16 %v3981
        %v3993 = vunpack.c.l.b16 %v3982
        %v3994 = vsel %vm2889, %v3991, %v3990
        %v3995 = vsel %vm2891, %v3992, %v3994
        %v3996 = vsel %vm2893, %v3993, %v3995
        %v3997 = vpack.c.b16 %v3996, %v3996
        %v4015 = vunpack.c.l.b16 %v3812
        %v4016 = vunpack.c.l.b16 %v3813
        %v4017 = vunpack.c.l.b16 %v3814
        %v4018 = vunpack.c.l.b16 %v3815
        %v4019 = vunpack.c.l.b16 %v3816
        %v4020 = vunpack.c.l.b16 %v3817
        %v4021 = vunpack.c.l.b16 %v3818
        %v4022 = vunpack.c.l.b16 %v3819
        %v4023 = vunpack.c.l.b16 %v3820
        %v4024 = vunpack.c.l.b16 %v3821
        %v4025 = vunpack.c.l.b16 %v3822
        %v4026 = vunpack.c.l.b16 %v3823
        %v4027 = vunpack.c.l.b16 %v3824
        %v4028 = vunpack.c.l.b16 %v3825
        %v4029 = vunpack.c.l.b16 %v3826
        %v4030 = vunpack.c.l.b16 %v3827
        %v4031 = vpack.c.b16 %v4016, %v4015
        %v4032 = vpack.c.b16 %v4018, %v4017
        %v4033 = vpack.c.b16 %v4020, %v4019
        %v4034 = vpack.c.b16 %v4022, %v4021
        %v4035 = vpack.c.b16 %v4024, %v4023
        %v4036 = vpack.c.b16 %v4026, %v4025
        %v4037 = vpack.c.b16 %v4028, %v4027
        %v4038 = vpack.c.b16 %v4030, %v4029
        %4047 = vmatpush.bf16.msra.mxu0 %v4038
        %4048 = vmatpush.bf16.msra.mxu0 %v4037
        %4049 = vmatpush.bf16.msra.mxu0 %v4036
        %4050 = vmatpush.bf16.msra.mxu0 %v4035
        %4051 = vmatpush.bf16.msra.mxu0 %v4034
        %4052 = vmatpush.bf16.msra.mxu0 %v4033
        %4053 = vmatpush.bf16.msra.mxu0 %v4032
        %4054 = vmatpush.bf16.msra.mxu0 %v4031
        %4055 = vmatmul.bf16.gmra.mxu0 %v3997
        %v4056 = vpop.f32.mrf.mxu0
        %v4057 = vadd.f32 %v3984, %v4056
        %v4058 = vpop.f32.mrf.mxu0
        %4059 = vdwg.mxu0
        %v4060 = vunpack.c.l.bf16 %v3935
        %v4061 = vunpack.c.l.bf16 %v3936
        %v4062 = vunpack.c.l.bf16 %v3937
        %v4063 = vunpack.c.l.bf16 %v3938
        %v4064 = vunpack.c.l.bf16 %v3939
        %v4065 = vunpack.c.l.bf16 %v3940
        %v4066 = vunpack.c.l.bf16 %v3941
        %v4067 = vunpack.c.l.bf16 %v3942
        %v4068 = vunpack.c.l.bf16 %v3943
        %v4069 = vunpack.c.l.bf16 %v3944
        %v4070 = vunpack.c.l.bf16 %v3945
        %v4071 = vunpack.c.l.bf16 %v3946
        %v4072 = vunpack.c.l.bf16 %v3947
        %v4073 = vunpack.c.l.bf16 %v3948
        %v4074 = vunpack.c.l.bf16 %v3949
        %v4075 = vunpack.c.l.bf16 %v3950
        %v4076 = vunpack.c.l.bf16 %v3951
        %v4077 = vunpack.c.l.bf16 %v3952
        %v4078 = vunpack.c.l.bf16 %v3953
        %v4079 = vunpack.c.l.bf16 %v3954
        %v4080 = vunpack.c.l.bf16 %v3955
        %v4081 = vunpack.c.l.bf16 %v3956
        %v4082 = vunpack.c.l.bf16 %v3957
        %v4083 = vunpack.c.l.bf16 %v3958
        %v4084 = vunpack.c.l.bf16 %v3959
        %v4085 = vunpack.c.l.bf16 %v3960
        %v4086 = vunpack.c.l.bf16 %v3961
        %v4087 = vunpack.c.l.bf16 %v3962
        %v4088 = vunpack.c.l.bf16 %v3963
        %v4089 = vunpack.c.l.bf16 %v3964
        %v4090 = vunpack.c.l.bf16 %v3965
        %v4091 = vunpack.c.l.bf16 %v3966
        %v4092 = vmax.f32 %v4060, 0.0
        %v4093 = vmax.f32 %v4061, 0.0
        %v4094 = vmax.f32 %v4062, 0.0
        %v4095 = vmax.f32 %v4063, 0.0
        %v4096 = vmax.f32 %v4064, 0.0
        %v4097 = vmax.f32 %v4065, 0.0
        %v4098 = vmax.f32 %v4066, 0.0
        %v4099 = vmax.f32 %v4067, 0.0
        %v4100 = vmax.f32 %v4068, 0.0
        %v4101 = vmax.f32 %v4069, 0.0
        %v4102 = vmax.f32 %v4070, 0.0
        %v4103 = vmax.f32 %v4071, 0.0
        %v4104 = vmax.f32 %v4072, 0.0
        %v4105 = vmax.f32 %v4073, 0.0
        %v4106 = vmax.f32 %v4074, 0.0
        %v4107 = vmax.f32 %v4075, 0.0
        %v4108 = vmax.f32 %v4076, 0.0
        %v4109 = vmax.f32 %v4077, 0.0
        %v4110 = vmax.f32 %v4078, 0.0
        %v4111 = vmax.f32 %v4079, 0.0
        %v4112 = vmax.f32 %v4080, 0.0
        %v4113 = vmax.f32 %v4081, 0.0
        %v4114 = vmax.f32 %v4082, 0.0
        %v4115 = vmax.f32 %v4083, 0.0
        %v4116 = vmax.f32 %v4084, 0.0
        %v4117 = vmax.f32 %v4085, 0.0
        %v4118 = vmax.f32 %v4086, 0.0
        %v4119 = vmax.f32 %v4087, 0.0
        %v4120 = vmax.f32 %v4088, 0.0
        %v4121 = vmax.f32 %v4089, 0.0
        %v4122 = vmax.f32 %v4090, 0.0
        %v4123 = vmax.f32 %v4091, 0.0
        %v4124 = vpack.c.bf16 %v4093, %v4092
        %v4125 = vpack.c.bf16 %v4095, %v4094
        %v4126 = vpack.c.bf16 %v4097, %v4096
        %v4127 = vpack.c.bf16 %v4099, %v4098
        %v4128 = vpack.c.bf16 %v4101, %v4100
        %v4129 = vpack.c.bf16 %v4103, %v4102
        %v4130 = vpack.c.bf16 %v4105, %v4104
        %v4131 = vpack.c.bf16 %v4107, %v4106
        %v4132 = vpack.c.bf16 %v4109, %v4108
        %v4133 = vpack.c.bf16 %v4111, %v4110
        %v4134 = vpack.c.bf16 %v4113, %v4112
        %v4135 = vpack.c.bf16 %v4115, %v4114
        %v4136 = vpack.c.bf16 %v4117, %v4116
        %v4137 = vpack.c.bf16 %v4119, %v4118
        %v4138 = vpack.c.bf16 %v4121, %v4120
        %v4139 = vpack.c.bf16 %v4123, %v4122
        %v4156 = vunpack.c.l.b16 %v3795
        %v4157 = vunpack.c.l.b16 %v3796
        %v4158 = vunpack.c.l.b16 %v3797
        %v4159 = vunpack.c.l.b16 %v3798
        %v4160 = vunpack.c.l.b16 %v3799
        %v4161 = vunpack.c.l.b16 %v3800
        %v4162 = vunpack.c.l.b16 %v3801
        %v4163 = vunpack.c.l.b16 %v3802
        %v4164 = vunpack.c.l.b16 %v3803
        %v4165 = vunpack.c.l.b16 %v3804
        %v4166 = vunpack.c.l.b16 %v3805
        %v4167 = vunpack.c.l.b16 %v3806
        %v4168 = vunpack.c.l.b16 %v3807
        %v4169 = vunpack.c.l.b16 %v3808
        %v4170 = vunpack.c.l.b16 %v3809
        %v4171 = vunpack.c.l.b16 %v3810
        %v4172 = vpack.c.b16 %v4157, %v4156
        %v4173 = vpack.c.b16 %v4159, %v4158
        %v4174 = vpack.c.b16 %v4161, %v4160
        %v4175 = vpack.c.b16 %v4163, %v4162
        %v4176 = vpack.c.b16 %v4165, %v4164
        %v4177 = vpack.c.b16 %v4167, %v4166
        %v4178 = vpack.c.b16 %v4169, %v4168
        %v4179 = vpack.c.b16 %v4171, %v4170
        %4188 = vmatpush.bf16.msra.mxu0 %v4179
        %4189 = vmatpush.bf16.msra.mxu0 %v4178
        %4190 = vmatpush.bf16.msra.mxu0 %v4177
        %4191 = vmatpush.bf16.msra.mxu0 %v4176
        %4192 = vmatpush.bf16.msra.mxu0 %v4175
        %4193 = vmatpush.bf16.msra.mxu0 %v4174
        %4194 = vmatpush.bf16.msra.mxu0 %v4173
        %4195 = vmatpush.bf16.msra.mxu0 %v4172
        %4196 = vmatmul.bf16.gmra.mxu0 %v4124
        %v4197 = vpop.f32.mrf.mxu0
        %v4198 = vadd.f32 0.0, %v4197
        %v4199 = vpop.f32.mrf.mxu0
        %v4200 = vadd.f32 0.0, %v4199
        %4201 = vmatmul.bf16.gmra.mxu0 %v4125
        %v4202 = vpop.f32.mrf.mxu0
        %v4203 = vadd.f32 0.0, %v4202
        %v4204 = vpop.f32.mrf.mxu0
        %v4205 = vadd.f32 0.0, %v4204
        %4206 = vmatmul.bf16.gmra.mxu0 %v4126
        %v4207 = vpop.f32.mrf.mxu0
        %v4208 = vadd.f32 0.0, %v4207
        %v4209 = vpop.f32.mrf.mxu0
        %v4210 = vadd.f32 0.0, %v4209
        %4211 = vmatmul.bf16.gmra.mxu0 %v4127
        %v4212 = vpop.f32.mrf.mxu0
        %v4213 = vadd.f32 0.0, %v4212
        %v4214 = vpop.f32.mrf.mxu0
        %v4215 = vadd.f32 0.0, %v4214
        %4216 = vmatmul.bf16.gmra.mxu0 %v4128
        %v4217 = vpop.f32.mrf.mxu0
        %v4218 = vadd.f32 0.0, %v4217
        %v4219 = vpop.f32.mrf.mxu0
        %v4220 = vadd.f32 0.0, %v4219
        %4221 = vmatmul.bf16.gmra.mxu0 %v4129
        %v4222 = vpop.f32.mrf.mxu0
        %v4223 = vadd.f32 0.0, %v4222
        %v4224 = vpop.f32.mrf.mxu0
        %v4225 = vadd.f32 0.0, %v4224
        %4226 = vmatmul.bf16.gmra.mxu0 %v4130
        %v4227 = vpop.f32.mrf.mxu0
        %v4228 = vadd.f32 0.0, %v4227
        %v4229 = vpop.f32.mrf.mxu0
        %v4230 = vadd.f32 0.0, %v4229
        %4231 = vmatmul.bf16.gmra.mxu0 %v4131
        %v4232 = vpop.f32.mrf.mxu0
        %v4233 = vadd.f32 0.0, %v4232
        %v4234 = vpop.f32.mrf.mxu0
        %v4235 = vadd.f32 0.0, %v4234
        %4236 = vmatmul.bf16.gmra.mxu0 %v4132
        %v4237 = vpop.f32.mrf.mxu0
        %v4238 = vadd.f32 0.0, %v4237
        %v4239 = vpop.f32.mrf.mxu0
        %v4240 = vadd.f32 0.0, %v4239
        %4241 = vmatmul.bf16.gmra.mxu0 %v4133
        %v4242 = vpop.f32.mrf.mxu0
        %v4243 = vadd.f32 0.0, %v4242
        %v4244 = vpop.f32.mrf.mxu0
        %v4245 = vadd.f32 0.0, %v4244
        %4246 = vmatmul.bf16.gmra.mxu0 %v4134
        %v4247 = vpop.f32.mrf.mxu0
        %v4248 = vadd.f32 0.0, %v4247
        %v4249 = vpop.f32.mrf.mxu0
        %v4250 = vadd.f32 0.0, %v4249
        %4251 = vmatmul.bf16.gmra.mxu0 %v4135
        %v4252 = vpop.f32.mrf.mxu0
        %v4253 = vadd.f32 0.0, %v4252
        %v4254 = vpop.f32.mrf.mxu0
        %v4255 = vadd.f32 0.0, %v4254
        %4256 = vmatmul.bf16.gmra.mxu0 %v4136
        %v4257 = vpop.f32.mrf.mxu0
        %v4258 = vadd.f32 0.0, %v4257
        %v4259 = vpop.f32.mrf.mxu0
        %v4260 = vadd.f32 0.0, %v4259
        %4261 = vmatmul.bf16.gmra.mxu0 %v4137
        %v4262 = vpop.f32.mrf.mxu0
        %v4263 = vadd.f32 0.0, %v4262
        %v4264 = vpop.f32.mrf.mxu0
        %v4265 = vadd.f32 0.0, %v4264
        %4266 = vmatmul.bf16.gmra.mxu0 %v4138
        %v4267 = vpop.f32.mrf.mxu0
        %v4268 = vadd.f32 0.0, %v4267
        %v4269 = vpop.f32.mrf.mxu0
        %v4270 = vadd.f32 0.0, %v4269
        %4271 = vmatmul.bf16.gmra.mxu0 %v4139
        %v4272 = vpop.f32.mrf.mxu0
        %v4273 = vadd.f32 0.0, %v4272
        %v4274 = vpop.f32.mrf.mxu0
        %v4275 = vadd.f32 0.0, %v4274
        %4276 = vdwg.mxu0
        %v4278 = vrot.slane %v4057, 1
        %v4279 = vrot.slane %v4057, 2
        %v4280 = vrot.slane %v4057, 3
        %v4281 = vperm.slane %v4057, 0
        %v4282 = vperm.slane %v4278, 0
        %v4283 = vperm.slane %v4279, 0
        %v4284 = vperm.slane %v4280, 0
        %v4289 = vadd.f32 %v4198, %v4281
        %v4290 = vadd.f32 %v4200, %v4281
        %v4291 = vadd.f32 %v4203, %v4281
        %v4292 = vadd.f32 %v4205, %v4281
        %v4293 = vadd.f32 %v4208, %v4281
        %v4294 = vadd.f32 %v4210, %v4281
        %v4295 = vadd.f32 %v4213, %v4281
        %v4296 = vadd.f32 %v4215, %v4281
        %v4297 = vadd.f32 %v4218, %v4282
        %v4298 = vadd.f32 %v4220, %v4282
        %v4299 = vadd.f32 %v4223, %v4282
        %v4300 = vadd.f32 %v4225, %v4282
        %v4301 = vadd.f32 %v4228, %v4282
        %v4302 = vadd.f32 %v4230, %v4282
        %v4303 = vadd.f32 %v4233, %v4282
        %v4304 = vadd.f32 %v4235, %v4282
        %v4305 = vadd.f32 %v4238, %v4283
        %v4306 = vadd.f32 %v4240, %v4283
        %v4307 = vadd.f32 %v4243, %v4283
        %v4308 = vadd.f32 %v4245, %v4283
        %v4309 = vadd.f32 %v4248, %v4283
        %v4310 = vadd.f32 %v4250, %v4283
        %v4311 = vadd.f32 %v4253, %v4283
        %v4312 = vadd.f32 %v4255, %v4283
        %v4313 = vadd.f32 %v4258, %v4284
        %v4314 = vadd.f32 %v4260, %v4284
        %v4315 = vadd.f32 %v4263, %v4284
        %v4316 = vadd.f32 %v4265, %v4284
        %v4317 = vadd.f32 %v4268, %v4284
        %v4318 = vadd.f32 %v4270, %v4284
        %v4319 = vadd.f32 %v4273, %v4284
        %v4320 = vadd.f32 %v4275, %v4284
        %v4322 = vperm.slane %v3882, 0
        %v4328 = vperm.slane %v3967, 0
        %v4329 = vperm.slane %v3968, 0
        %v4330 = vperm.slane %v3969, 0
        %v4331 = vperm.slane %v3970, 0
        %v4332 = vunpack.c.l.b16 %v4328
        %v4333 = vunpack.c.l.b16 %v4329
        %v4334 = vunpack.c.l.b16 %v4330
        %v4335 = vunpack.c.l.b16 %v4331
        %v4336 = vsel %vm2889, %v4333, %v4332
        %v4337 = vsel %vm2891, %v4334, %v4336
        %v4338 = vsel %vm2893, %v4335, %v4337
        %v4339 = vpack.c.b16 %v4338, %v4338
        %v4357 = vunpack.c.l.b16 %v3846
        %v4358 = vunpack.c.l.b16 %v3847
        %v4359 = vunpack.c.l.b16 %v3848
        %v4360 = vunpack.c.l.b16 %v3849
        %v4361 = vunpack.c.l.b16 %v3850
        %v4362 = vunpack.c.l.b16 %v3851
        %v4363 = vunpack.c.l.b16 %v3852
        %v4364 = vunpack.c.l.b16 %v3853
        %v4365 = vunpack.c.l.b16 %v3854
        %v4366 = vunpack.c.l.b16 %v3855
        %v4367 = vunpack.c.l.b16 %v3856
        %v4368 = vunpack.c.l.b16 %v3857
        %v4369 = vunpack.c.l.b16 %v3858
        %v4370 = vunpack.c.l.b16 %v3859
        %v4371 = vunpack.c.l.b16 %v3860
        %v4372 = vunpack.c.l.b16 %v3861
        %v4373 = vpack.c.b16 %v4358, %v4357
        %v4374 = vpack.c.b16 %v4360, %v4359
        %v4375 = vpack.c.b16 %v4362, %v4361
        %v4376 = vpack.c.b16 %v4364, %v4363
        %v4377 = vpack.c.b16 %v4366, %v4365
        %v4378 = vpack.c.b16 %v4368, %v4367
        %v4379 = vpack.c.b16 %v4370, %v4369
        %v4380 = vpack.c.b16 %v4372, %v4371
        %4389 = vmatpush.bf16.msra.mxu0 %v4380
        %4390 = vmatpush.bf16.msra.mxu0 %v4379
        %4391 = vmatpush.bf16.msra.mxu0 %v4378
        %4392 = vmatpush.bf16.msra.mxu0 %v4377
        %4393 = vmatpush.bf16.msra.mxu0 %v4376
        %4394 = vmatpush.bf16.msra.mxu0 %v4375
        %4395 = vmatpush.bf16.msra.mxu0 %v4374
        %4396 = vmatpush.bf16.msra.mxu0 %v4373
        %4397 = vmatmul.bf16.gmra.mxu0 %v4339
        %v4398 = vpop.f32.mrf.mxu0
        %v4399 = vadd.f32 %v4322, %v4398
        %v4400 = vpop.f32.mrf.mxu0
        %4401 = vdwg.mxu0
        %v4434 = vunpack.c.l.b16 %v3935
        %v4435 = vunpack.c.l.b16 %v3936
        %v4436 = vunpack.c.l.b16 %v3937
        %v4437 = vunpack.c.l.b16 %v3938
        %v4438 = vunpack.c.l.b16 %v3939
        %v4439 = vunpack.c.l.b16 %v3940
        %v4440 = vunpack.c.l.b16 %v3941
        %v4441 = vunpack.c.l.b16 %v3942
        %v4442 = vunpack.c.l.b16 %v3943
        %v4443 = vunpack.c.l.b16 %v3944
        %v4444 = vunpack.c.l.b16 %v3945
        %v4445 = vunpack.c.l.b16 %v3946
        %v4446 = vunpack.c.l.b16 %v3947
        %v4447 = vunpack.c.l.b16 %v3948
        %v4448 = vunpack.c.l.b16 %v3949
        %v4449 = vunpack.c.l.b16 %v3950
        %v4450 = vunpack.c.l.b16 %v3951
        %v4451 = vunpack.c.l.b16 %v3952
        %v4452 = vunpack.c.l.b16 %v3953
        %v4453 = vunpack.c.l.b16 %v3954
        %v4454 = vunpack.c.l.b16 %v3955
        %v4455 = vunpack.c.l.b16 %v3956
        %v4456 = vunpack.c.l.b16 %v3957
        %v4457 = vunpack.c.l.b16 %v3958
        %v4458 = vunpack.c.l.b16 %v3959
        %v4459 = vunpack.c.l.b16 %v3960
        %v4460 = vunpack.c.l.b16 %v3961
        %v4461 = vunpack.c.l.b16 %v3962
        %v4462 = vunpack.c.l.b16 %v3963
        %v4463 = vunpack.c.l.b16 %v3964
        %v4464 = vunpack.c.l.b16 %v3965
        %v4465 = vunpack.c.l.b16 %v3966
        %v4466 = vpack.c.b16 %v4435, %v4434
        %v4467 = vpack.c.b16 %v4437, %v4436
        %v4468 = vpack.c.b16 %v4439, %v4438
        %v4469 = vpack.c.b16 %v4441, %v4440
        %v4470 = vpack.c.b16 %v4443, %v4442
        %v4471 = vpack.c.b16 %v4445, %v4444
        %v4472 = vpack.c.b16 %v4447, %v4446
        %v4473 = vpack.c.b16 %v4449, %v4448
        %v4474 = vpack.c.b16 %v4451, %v4450
        %v4475 = vpack.c.b16 %v4453, %v4452
        %v4476 = vpack.c.b16 %v4455, %v4454
        %v4477 = vpack.c.b16 %v4457, %v4456
        %v4478 = vpack.c.b16 %v4459, %v4458
        %v4479 = vpack.c.b16 %v4461, %v4460
        %v4480 = vpack.c.b16 %v4463, %v4462
        %v4481 = vpack.c.b16 %v4465, %v4464
        %v4514 = vunpack.c.l.b16 %v3829
        %v4515 = vunpack.c.l.b16 %v3830
        %v4516 = vunpack.c.l.b16 %v3831
        %v4517 = vunpack.c.l.b16 %v3832
        %v4518 = vunpack.c.l.b16 %v3833
        %v4519 = vunpack.c.l.b16 %v3834
        %v4520 = vunpack.c.l.b16 %v3835
        %v4521 = vunpack.c.l.b16 %v3836
        %v4522 = vunpack.c.l.b16 %v3837
        %v4523 = vunpack.c.l.b16 %v3838
        %v4524 = vunpack.c.l.b16 %v3839
        %v4525 = vunpack.c.l.b16 %v3840
        %v4526 = vunpack.c.l.b16 %v3841
        %v4527 = vunpack.c.l.b16 %v3842
        %v4528 = vunpack.c.l.b16 %v3843
        %v4529 = vunpack.c.l.b16 %v3844
        %v4530 = vpack.c.b16 %v4515, %v4514
        %v4531 = vpack.c.b16 %v4517, %v4516
        %v4532 = vpack.c.b16 %v4519, %v4518
        %v4533 = vpack.c.b16 %v4521, %v4520
        %v4534 = vpack.c.b16 %v4523, %v4522
        %v4535 = vpack.c.b16 %v4525, %v4524
        %v4536 = vpack.c.b16 %v4527, %v4526
        %v4537 = vpack.c.b16 %v4529, %v4528
        %4546 = vmatpush.bf16.msra.mxu0 %v4537
        %4547 = vmatpush.bf16.msra.mxu0 %v4536
        %4548 = vmatpush.bf16.msra.mxu0 %v4535
        %4549 = vmatpush.bf16.msra.mxu0 %v4534
        %4550 = vmatpush.bf16.msra.mxu0 %v4533
        %4551 = vmatpush.bf16.msra.mxu0 %v4532
        %4552 = vmatpush.bf16.msra.mxu0 %v4531
        %4553 = vmatpush.bf16.msra.mxu0 %v4530
        %4554 = vmatmul.bf16.gmra.mxu0 %v4466
        %v4555 = vpop.f32.mrf.mxu0
        %v4556 = vadd.f32 0.0, %v4555
        %v4557 = vpop.f32.mrf.mxu0
        %v4558 = vadd.f32 0.0, %v4557
        %4559 = vmatmul.bf16.gmra.mxu0 %v4467
        %v4560 = vpop.f32.mrf.mxu0
        %v4561 = vadd.f32 0.0, %v4560
        %v4562 = vpop.f32.mrf.mxu0
        %v4563 = vadd.f32 0.0, %v4562
        %4564 = vmatmul.bf16.gmra.mxu0 %v4468
        %v4565 = vpop.f32.mrf.mxu0
        %v4566 = vadd.f32 0.0, %v4565
        %v4567 = vpop.f32.mrf.mxu0
        %v4568 = vadd.f32 0.0, %v4567
        %4569 = vmatmul.bf16.gmra.mxu0 %v4469
        %v4570 = vpop.f32.mrf.mxu0
        %v4571 = vadd.f32 0.0, %v4570
        %v4572 = vpop.f32.mrf.mxu0
        %v4573 = vadd.f32 0.0, %v4572
        %4574 = vmatmul.bf16.gmra.mxu0 %v4470
        %v4575 = vpop.f32.mrf.mxu0
        %v4576 = vadd.f32 0.0, %v4575
        %v4577 = vpop.f32.mrf.mxu0
        %v4578 = vadd.f32 0.0, %v4577
        %4579 = vmatmul.bf16.gmra.mxu0 %v4471
        %v4580 = vpop.f32.mrf.mxu0
        %v4581 = vadd.f32 0.0, %v4580
        %v4582 = vpop.f32.mrf.mxu0
        %v4583 = vadd.f32 0.0, %v4582
        %4584 = vmatmul.bf16.gmra.mxu0 %v4472
        %v4585 = vpop.f32.mrf.mxu0
        %v4586 = vadd.f32 0.0, %v4585
        %v4587 = vpop.f32.mrf.mxu0
        %v4588 = vadd.f32 0.0, %v4587
        %4589 = vmatmul.bf16.gmra.mxu0 %v4473
        %v4590 = vpop.f32.mrf.mxu0
        %v4591 = vadd.f32 0.0, %v4590
        %v4592 = vpop.f32.mrf.mxu0
        %v4593 = vadd.f32 0.0, %v4592
        %4594 = vmatmul.bf16.gmra.mxu0 %v4474
        %v4595 = vpop.f32.mrf.mxu0
        %v4596 = vadd.f32 0.0, %v4595
        %v4597 = vpop.f32.mrf.mxu0
        %v4598 = vadd.f32 0.0, %v4597
        %4599 = vmatmul.bf16.gmra.mxu0 %v4475
        %v4600 = vpop.f32.mrf.mxu0
        %v4601 = vadd.f32 0.0, %v4600
        %v4602 = vpop.f32.mrf.mxu0
        %v4603 = vadd.f32 0.0, %v4602
        %4604 = vmatmul.bf16.gmra.mxu0 %v4476
        %v4605 = vpop.f32.mrf.mxu0
        %v4606 = vadd.f32 0.0, %v4605
        %v4607 = vpop.f32.mrf.mxu0
        %v4608 = vadd.f32 0.0, %v4607
        %4609 = vmatmul.bf16.gmra.mxu0 %v4477
        %v4610 = vpop.f32.mrf.mxu0
        %v4611 = vadd.f32 0.0, %v4610
        %v4612 = vpop.f32.mrf.mxu0
        %v4613 = vadd.f32 0.0, %v4612
        %4614 = vmatmul.bf16.gmra.mxu0 %v4478
        %v4615 = vpop.f32.mrf.mxu0
        %v4616 = vadd.f32 0.0, %v4615
        %v4617 = vpop.f32.mrf.mxu0
        %v4618 = vadd.f32 0.0, %v4617
        %4619 = vmatmul.bf16.gmra.mxu0 %v4479
        %v4620 = vpop.f32.mrf.mxu0
        %v4621 = vadd.f32 0.0, %v4620
        %v4622 = vpop.f32.mrf.mxu0
        %v4623 = vadd.f32 0.0, %v4622
        %4624 = vmatmul.bf16.gmra.mxu0 %v4480
        %v4625 = vpop.f32.mrf.mxu0
        %v4626 = vadd.f32 0.0, %v4625
        %v4627 = vpop.f32.mrf.mxu0
        %v4628 = vadd.f32 0.0, %v4627
        %4629 = vmatmul.bf16.gmra.mxu0 %v4481
        %v4630 = vpop.f32.mrf.mxu0
        %v4631 = vadd.f32 0.0, %v4630
        %v4632 = vpop.f32.mrf.mxu0
        %v4633 = vadd.f32 0.0, %v4632
        %4634 = vdwg.mxu0
        %v4636 = vrot.slane %v4399, 1
        %v4637 = vrot.slane %v4399, 2
        %v4638 = vrot.slane %v4399, 3
        %v4639 = vperm.slane %v4399, 0
        %v4640 = vperm.slane %v4636, 0
        %v4641 = vperm.slane %v4637, 0
        %v4642 = vperm.slane %v4638, 0
        %v4647 = vadd.f32 %v4556, %v4639
        %v4648 = vadd.f32 %v4558, %v4639
        %v4649 = vadd.f32 %v4561, %v4639
        %v4650 = vadd.f32 %v4563, %v4639
        %v4651 = vadd.f32 %v4566, %v4639
        %v4652 = vadd.f32 %v4568, %v4639
        %v4653 = vadd.f32 %v4571, %v4639
        %v4654 = vadd.f32 %v4573, %v4639
        %v4655 = vadd.f32 %v4576, %v4640
        %v4656 = vadd.f32 %v4578, %v4640
        %v4657 = vadd.f32 %v4581, %v4640
        %v4658 = vadd.f32 %v4583, %v4640
        %v4659 = vadd.f32 %v4586, %v4640
        %v4660 = vadd.f32 %v4588, %v4640
        %v4661 = vadd.f32 %v4591, %v4640
        %v4662 = vadd.f32 %v4593, %v4640
        %v4663 = vadd.f32 %v4596, %v4641
        %v4664 = vadd.f32 %v4598, %v4641
        %v4665 = vadd.f32 %v4601, %v4641
        %v4666 = vadd.f32 %v4603, %v4641
        %v4667 = vadd.f32 %v4606, %v4641
        %v4668 = vadd.f32 %v4608, %v4641
        %v4669 = vadd.f32 %v4611, %v4641
        %v4670 = vadd.f32 %v4613, %v4641
        %v4671 = vadd.f32 %v4616, %v4642
        %v4672 = vadd.f32 %v4618, %v4642
        %v4673 = vadd.f32 %v4621, %v4642
        %v4674 = vadd.f32 %v4623, %v4642
        %v4675 = vadd.f32 %v4626, %v4642
        %v4676 = vadd.f32 %v4628, %v4642
        %v4677 = vadd.f32 %v4631, %v4642
        %v4678 = vadd.f32 %v4633, %v4642
        %v4679 = vmax.f32 %v4289, 0.0
        %v4680 = vmax.f32 %v4290, 0.0
        %v4681 = vmax.f32 %v4291, 0.0
        %v4682 = vmax.f32 %v4292, 0.0
        %v4683 = vmax.f32 %v4293, 0.0
        %v4684 = vmax.f32 %v4294, 0.0
        %v4685 = vmax.f32 %v4295, 0.0
        %v4686 = vmax.f32 %v4296, 0.0
        %v4687 = vmax.f32 %v4297, 0.0
        %v4688 = vmax.f32 %v4298, 0.0
        %v4689 = vmax.f32 %v4299, 0.0
        %v4690 = vmax.f32 %v4300, 0.0
        %v4691 = vmax.f32 %v4301, 0.0
        %v4692 = vmax.f32 %v4302, 0.0
        %v4693 = vmax.f32 %v4303, 0.0
        %v4694 = vmax.f32 %v4304, 0.0
        %v4695 = vmax.f32 %v4305, 0.0
        %v4696 = vmax.f32 %v4306, 0.0
        %v4697 = vmax.f32 %v4307, 0.0
        %v4698 = vmax.f32 %v4308, 0.0
        %v4699 = vmax.f32 %v4309, 0.0
        %v4700 = vmax.f32 %v4310, 0.0
        %v4701 = vmax.f32 %v4311, 0.0
        %v4702 = vmax.f32 %v4312, 0.0
        %v4703 = vmax.f32 %v4313, 0.0
        %v4704 = vmax.f32 %v4314, 0.0
        %v4705 = vmax.f32 %v4315, 0.0
        %v4706 = vmax.f32 %v4316, 0.0
        %v4707 = vmax.f32 %v4317, 0.0
        %v4708 = vmax.f32 %v4318, 0.0
        %v4709 = vmax.f32 %v4319, 0.0
        %v4710 = vmax.f32 %v4320, 0.0
        %v4711 = vpack.c.bf16 %v4680, %v4679
        %v4712 = vpack.c.bf16 %v4682, %v4681
        %v4713 = vpack.c.bf16 %v4684, %v4683
        %v4714 = vpack.c.bf16 %v4686, %v4685
        %v4715 = vpack.c.bf16 %v4688, %v4687
        %v4716 = vpack.c.bf16 %v4690, %v4689
        %v4717 = vpack.c.bf16 %v4692, %v4691
        %v4718 = vpack.c.bf16 %v4694, %v4693
        %v4719 = vpack.c.bf16 %v4696, %v4695
        %v4720 = vpack.c.bf16 %v4698, %v4697
        %v4721 = vpack.c.bf16 %v4700, %v4699
        %v4722 = vpack.c.bf16 %v4702, %v4701
        %v4723 = vpack.c.bf16 %v4704, %v4703
        %v4724 = vpack.c.bf16 %v4706, %v4705
        %v4725 = vpack.c.bf16 %v4708, %v4707
        %v4726 = vpack.c.bf16 %v4710, %v4709
        %v4743 = vunpack.c.l.b16 %v3863
        %v4744 = vunpack.c.l.b16 %v3864
        %v4745 = vunpack.c.l.b16 %v3865
        %v4746 = vunpack.c.l.b16 %v3866
        %v4747 = vunpack.c.l.b16 %v3867
        %v4748 = vunpack.c.l.b16 %v3868
        %v4749 = vunpack.c.l.b16 %v3869
        %v4750 = vunpack.c.l.b16 %v3870
        %v4751 = vunpack.c.l.b16 %v3871
        %v4752 = vunpack.c.l.b16 %v3872
        %v4753 = vunpack.c.l.b16 %v3873
        %v4754 = vunpack.c.l.b16 %v3874
        %v4755 = vunpack.c.l.b16 %v3875
        %v4756 = vunpack.c.l.b16 %v3876
        %v4757 = vunpack.c.l.b16 %v3877
        %v4758 = vunpack.c.l.b16 %v3878
        %v4759 = vpack.c.b16 %v4744, %v4743
        %v4760 = vpack.c.b16 %v4746, %v4745
        %v4761 = vpack.c.b16 %v4748, %v4747
        %v4762 = vpack.c.b16 %v4750, %v4749
        %v4763 = vpack.c.b16 %v4752, %v4751
        %v4764 = vpack.c.b16 %v4754, %v4753
        %v4765 = vpack.c.b16 %v4756, %v4755
        %v4766 = vpack.c.b16 %v4758, %v4757
        %4775 = vmatpush.bf16.msra.mxu0 %v4766
        %4776 = vmatpush.bf16.msra.mxu0 %v4765
        %4777 = vmatpush.bf16.msra.mxu0 %v4764
        %4778 = vmatpush.bf16.msra.mxu0 %v4763
        %4779 = vmatpush.bf16.msra.mxu0 %v4762
        %4780 = vmatpush.bf16.msra.mxu0 %v4761
        %4781 = vmatpush.bf16.msra.mxu0 %v4760
        %4782 = vmatpush.bf16.msra.mxu0 %v4759
        %4783 = vmatmul.bf16.gmra.mxu0 %v4711
        %v4784 = vpop.f32.mrf.mxu0
        %v4785 = vadd.f32 0.0, %v4784
        %v4786 = vpop.f32.mrf.mxu0
        %v4787 = vadd.f32 0.0, %v4786
        %4788 = vmatmul.bf16.gmra.mxu0 %v4712
        %v4789 = vpop.f32.mrf.mxu0
        %v4790 = vadd.f32 0.0, %v4789
        %v4791 = vpop.f32.mrf.mxu0
        %v4792 = vadd.f32 0.0, %v4791
        %4793 = vmatmul.bf16.gmra.mxu0 %v4713
        %v4794 = vpop.f32.mrf.mxu0
        %v4795 = vadd.f32 0.0, %v4794
        %v4796 = vpop.f32.mrf.mxu0
        %v4797 = vadd.f32 0.0, %v4796
        %4798 = vmatmul.bf16.gmra.mxu0 %v4714
        %v4799 = vpop.f32.mrf.mxu0
        %v4800 = vadd.f32 0.0, %v4799
        %v4801 = vpop.f32.mrf.mxu0
        %v4802 = vadd.f32 0.0, %v4801
        %4803 = vmatmul.bf16.gmra.mxu0 %v4715
        %v4804 = vpop.f32.mrf.mxu0
        %v4805 = vadd.f32 0.0, %v4804
        %v4806 = vpop.f32.mrf.mxu0
        %v4807 = vadd.f32 0.0, %v4806
        %4808 = vmatmul.bf16.gmra.mxu0 %v4716
        %v4809 = vpop.f32.mrf.mxu0
        %v4810 = vadd.f32 0.0, %v4809
        %v4811 = vpop.f32.mrf.mxu0
        %v4812 = vadd.f32 0.0, %v4811
        %4813 = vmatmul.bf16.gmra.mxu0 %v4717
        %v4814 = vpop.f32.mrf.mxu0
        %v4815 = vadd.f32 0.0, %v4814
        %v4816 = vpop.f32.mrf.mxu0
        %v4817 = vadd.f32 0.0, %v4816
        %4818 = vmatmul.bf16.gmra.mxu0 %v4718
        %v4819 = vpop.f32.mrf.mxu0
        %v4820 = vadd.f32 0.0, %v4819
        %v4821 = vpop.f32.mrf.mxu0
        %v4822 = vadd.f32 0.0, %v4821
        %4823 = vmatmul.bf16.gmra.mxu0 %v4719
        %v4824 = vpop.f32.mrf.mxu0
        %v4825 = vadd.f32 0.0, %v4824
        %v4826 = vpop.f32.mrf.mxu0
        %v4827 = vadd.f32 0.0, %v4826
        %4828 = vmatmul.bf16.gmra.mxu0 %v4720
        %v4829 = vpop.f32.mrf.mxu0
        %v4830 = vadd.f32 0.0, %v4829
        %v4831 = vpop.f32.mrf.mxu0
        %v4832 = vadd.f32 0.0, %v4831
        %4833 = vmatmul.bf16.gmra.mxu0 %v4721
        %v4834 = vpop.f32.mrf.mxu0
        %v4835 = vadd.f32 0.0, %v4834
        %v4836 = vpop.f32.mrf.mxu0
        %v4837 = vadd.f32 0.0, %v4836
        %4838 = vmatmul.bf16.gmra.mxu0 %v4722
        %v4839 = vpop.f32.mrf.mxu0
        %v4840 = vadd.f32 0.0, %v4839
        %v4841 = vpop.f32.mrf.mxu0
        %v4842 = vadd.f32 0.0, %v4841
        %4843 = vmatmul.bf16.gmra.mxu0 %v4723
        %v4844 = vpop.f32.mrf.mxu0
        %v4845 = vadd.f32 0.0, %v4844
        %v4846 = vpop.f32.mrf.mxu0
        %v4847 = vadd.f32 0.0, %v4846
        %4848 = vmatmul.bf16.gmra.mxu0 %v4724
        %v4849 = vpop.f32.mrf.mxu0
        %v4850 = vadd.f32 0.0, %v4849
        %v4851 = vpop.f32.mrf.mxu0
        %v4852 = vadd.f32 0.0, %v4851
        %4853 = vmatmul.bf16.gmra.mxu0 %v4725
        %v4854 = vpop.f32.mrf.mxu0
        %v4855 = vadd.f32 0.0, %v4854
        %v4856 = vpop.f32.mrf.mxu0
        %v4857 = vadd.f32 0.0, %v4856
        %4858 = vmatmul.bf16.gmra.mxu0 %v4726
        %v4859 = vpop.f32.mrf.mxu0
        %v4860 = vadd.f32 0.0, %v4859
        %v4861 = vpop.f32.mrf.mxu0
        %v4862 = vadd.f32 0.0, %v4861
        %4863 = vdwg.mxu0
        %v4864 = vadd.f32 %v4647, %v4785
        %v4865 = vadd.f32 %v4648, %v4787
        %v4866 = vadd.f32 %v4649, %v4790
        %v4867 = vadd.f32 %v4650, %v4792
        %v4868 = vadd.f32 %v4651, %v4795
        %v4869 = vadd.f32 %v4652, %v4797
        %v4870 = vadd.f32 %v4653, %v4800
        %v4871 = vadd.f32 %v4654, %v4802
        %v4872 = vadd.f32 %v4655, %v4805
        %v4873 = vadd.f32 %v4656, %v4807
        %v4874 = vadd.f32 %v4657, %v4810
        %v4875 = vadd.f32 %v4658, %v4812
        %v4876 = vadd.f32 %v4659, %v4815
        %v4877 = vadd.f32 %v4660, %v4817
        %v4878 = vadd.f32 %v4661, %v4820
        %v4879 = vadd.f32 %v4662, %v4822
        %v4880 = vadd.f32 %v4663, %v4825
        %v4881 = vadd.f32 %v4664, %v4827
        %v4882 = vadd.f32 %v4665, %v4830
        %v4883 = vadd.f32 %v4666, %v4832
        %v4884 = vadd.f32 %v4667, %v4835
        %v4885 = vadd.f32 %v4668, %v4837
        %v4886 = vadd.f32 %v4669, %v4840
        %v4887 = vadd.f32 %v4670, %v4842
        %v4888 = vadd.f32 %v4671, %v4845
        %v4889 = vadd.f32 %v4672, %v4847
        %v4890 = vadd.f32 %v4673, %v4850
        %v4891 = vadd.f32 %v4674, %v4852
        %v4892 = vadd.f32 %v4675, %v4855
        %v4893 = vadd.f32 %v4676, %v4857
        %v4894 = vadd.f32 %v4677, %v4860
        %v4895 = vadd.f32 %v4678, %v4862
        %s4896 = scalar_lea.vmem %s8, 128
        %v4897 = vld [vmem:[%s4896] sm:$0xf]
        %v4898 = vld [vmem:[%s4896 + $0x4] sm:$0xf]
        %v4899 = vld [vmem:[%s4896 + $0x8] sm:$0xf]
        %v4900 = vld [vmem:[%s4896 + $0xc] sm:$0xf]
        %v4901 = vld [vmem:[%s4896 + $0x10] sm:$0xf]
        %v4902 = vld [vmem:[%s4896 + $0x14] sm:$0xf]
        %v4903 = vld [vmem:[%s4896 + $0x18] sm:$0xf]
        %v4904 = vld [vmem:[%s4896 + $0x1c] sm:$0xf]
        %v4905 = vld [vmem:[%s4896 + $0x20] sm:$0xf]
        %v4906 = vld [vmem:[%s4896 + $0x24] sm:$0xf]
        %v4907 = vld [vmem:[%s4896 + $0x28] sm:$0xf]
        %v4908 = vld [vmem:[%s4896 + $0x2c] sm:$0xf]
        %v4909 = vld [vmem:[%s4896 + $0x30] sm:$0xf]
        %v4910 = vld [vmem:[%s4896 + $0x34] sm:$0xf]
        %v4911 = vld [vmem:[%s4896 + $0x38] sm:$0xf]
        %v4912 = vld [vmem:[%s4896 + $0x3c] sm:$0xf]
        %s4913 = scalar_lea.vmem %s9, 128
        %v4914 = vld [vmem:[%s4913] sm:$0xf]
        %v4915 = vld [vmem:[%s4913 + $0x4] sm:$0xf]
        %v4916 = vld [vmem:[%s4913 + $0x8] sm:$0xf]
        %v4917 = vld [vmem:[%s4913 + $0xc] sm:$0xf]
        %v4918 = vld [vmem:[%s4913 + $0x10] sm:$0xf]
        %v4919 = vld [vmem:[%s4913 + $0x14] sm:$0xf]
        %v4920 = vld [vmem:[%s4913 + $0x18] sm:$0xf]
        %v4921 = vld [vmem:[%s4913 + $0x1c] sm:$0xf]
        %v4922 = vld [vmem:[%s4913 + $0x20] sm:$0xf]
        %v4923 = vld [vmem:[%s4913 + $0x24] sm:$0xf]
        %v4924 = vld [vmem:[%s4913 + $0x28] sm:$0xf]
        %v4925 = vld [vmem:[%s4913 + $0x2c] sm:$0xf]
        %v4926 = vld [vmem:[%s4913 + $0x30] sm:$0xf]
        %v4927 = vld [vmem:[%s4913 + $0x34] sm:$0xf]
        %v4928 = vld [vmem:[%s4913 + $0x38] sm:$0xf]
        %v4929 = vld [vmem:[%s4913 + $0x3c] sm:$0xf]
        %s4930 = scalar_lea.vmem [#allocation10], 128
        %v4931 = vld [vmem:[%s4930] sm:$0xf]
        %v4932 = vld [vmem:[%s4930 + $0x4] sm:$0xf]
        %v4933 = vld [vmem:[%s4930 + $0x8] sm:$0xf]
        %v4934 = vld [vmem:[%s4930 + $0xc] sm:$0xf]
        %v4935 = vld [vmem:[%s4930 + $0x10] sm:$0xf]
        %v4936 = vld [vmem:[%s4930 + $0x14] sm:$0xf]
        %v4937 = vld [vmem:[%s4930 + $0x18] sm:$0xf]
        %v4938 = vld [vmem:[%s4930 + $0x1c] sm:$0xf]
        %v4939 = vld [vmem:[%s4930 + $0x20] sm:$0xf]
        %v4940 = vld [vmem:[%s4930 + $0x24] sm:$0xf]
        %v4941 = vld [vmem:[%s4930 + $0x28] sm:$0xf]
        %v4942 = vld [vmem:[%s4930 + $0x2c] sm:$0xf]
        %v4943 = vld [vmem:[%s4930 + $0x30] sm:$0xf]
        %v4944 = vld [vmem:[%s4930 + $0x34] sm:$0xf]
        %v4945 = vld [vmem:[%s4930 + $0x38] sm:$0xf]
        %v4946 = vld [vmem:[%s4930 + $0x3c] sm:$0xf]
        %s4947 = scalar_lea.vmem [#allocation11], 128
        %v4948 = vld [vmem:[%s4947] sm:$0xf]
        %v4949 = vld [vmem:[%s4947 + $0x4] sm:$0xf]
        %v4950 = vld [vmem:[%s4947 + $0x8] sm:$0xf]
        %v4951 = vld [vmem:[%s4947 + $0xc] sm:$0xf]
        %v4952 = vld [vmem:[%s4947 + $0x10] sm:$0xf]
        %v4953 = vld [vmem:[%s4947 + $0x14] sm:$0xf]
        %v4954 = vld [vmem:[%s4947 + $0x18] sm:$0xf]
        %v4955 = vld [vmem:[%s4947 + $0x1c] sm:$0xf]
        %v4956 = vld [vmem:[%s4947 + $0x20] sm:$0xf]
        %v4957 = vld [vmem:[%s4947 + $0x24] sm:$0xf]
        %v4958 = vld [vmem:[%s4947 + $0x28] sm:$0xf]
        %v4959 = vld [vmem:[%s4947 + $0x2c] sm:$0xf]
        %v4960 = vld [vmem:[%s4947 + $0x30] sm:$0xf]
        %v4961 = vld [vmem:[%s4947 + $0x34] sm:$0xf]
        %v4962 = vld [vmem:[%s4947 + $0x38] sm:$0xf]
        %v4963 = vld [vmem:[%s4947 + $0x3c] sm:$0xf]
        %s4964 = scalar_lea.vmem [#allocation8], 128
        %v4965 = vld [vmem:[%s4964] sm:$0xf]
        %v4966 = vld [vmem:[%s4964 + $0x4] sm:$0xf]
        %v4967 = vld [vmem:[%s4964 + $0x8] sm:$0xf]
        %v4968 = vld [vmem:[%s4964 + $0xc] sm:$0xf]
        %v4969 = vld [vmem:[%s4964 + $0x10] sm:$0xf]
        %v4970 = vld [vmem:[%s4964 + $0x14] sm:$0xf]
        %v4971 = vld [vmem:[%s4964 + $0x18] sm:$0xf]
        %v4972 = vld [vmem:[%s4964 + $0x1c] sm:$0xf]
        %v4973 = vld [vmem:[%s4964 + $0x20] sm:$0xf]
        %v4974 = vld [vmem:[%s4964 + $0x24] sm:$0xf]
        %v4975 = vld [vmem:[%s4964 + $0x28] sm:$0xf]
        %v4976 = vld [vmem:[%s4964 + $0x2c] sm:$0xf]
        %v4977 = vld [vmem:[%s4964 + $0x30] sm:$0xf]
        %v4978 = vld [vmem:[%s4964 + $0x34] sm:$0xf]
        %v4979 = vld [vmem:[%s4964 + $0x38] sm:$0xf]
        %v4980 = vld [vmem:[%s4964 + $0x3c] sm:$0xf]
        %s4981 = scalar_lea.vmem %s10, 2
        %v4982 = vld [vmem:[%s4981] sm:$0x1]
        %s4983 = scalar_lea.vmem %s12, 2
        %v4984 = vld [vmem:[%s4983] sm:$0x1]
        %v4985 = vmax.f32 %v4864, %v4865
        %v4986 = vmax.f32 %v4985, %v4866
        %v4987 = vmax.f32 %v4986, %v4867
        %v4988 = vmax.f32 %v4987, %v4868
        %v4989 = vmax.f32 %v4988, %v4869
        %v4990 = vmax.f32 %v4989, %v4870
        %v4991 = vmax.f32 %v4990, %v4871
        %v4992 = vrot.slane %v4991, 4
        %v4993 = vmax.f32 %v4991, %v4992
        %v4994 = vrot.slane %v4993, 2
        %v4995 = vmax.f32 %v4993, %v4994
        %v4996 = vrot.slane %v4995, 1
        %v4997 = vmax.f32 %v4995, %v4996
        %v4998 = vmax.f32 %v4872, %v4873
        %v4999 = vmax.f32 %v4998, %v4874
        %v5000 = vmax.f32 %v4999, %v4875
        %v5001 = vmax.f32 %v5000, %v4876
        %v5002 = vmax.f32 %v5001, %v4877
        %v5003 = vmax.f32 %v5002, %v4878
        %v5004 = vmax.f32 %v5003, %v4879
        %v5005 = vrot.slane %v5004, 4
        %v5006 = vmax.f32 %v5004, %v5005
        %v5007 = vrot.slane %v5006, 2
        %v5008 = vmax.f32 %v5006, %v5007
        %v5009 = vrot.slane %v5008, 1
        %v5010 = vmax.f32 %v5008, %v5009
        %v5011 = vmax.f32 %v4880, %v4881
        %v5012 = vmax.f32 %v5011, %v4882
        %v5013 = vmax.f32 %v5012, %v4883
        %v5014 = vmax.f32 %v5013, %v4884
        %v5015 = vmax.f32 %v5014, %v4885
        %v5016 = vmax.f32 %v5015, %v4886
        %v5017 = vmax.f32 %v5016, %v4887
        %v5018 = vrot.slane %v5017, 4
        %v5019 = vmax.f32 %v5017, %v5018
        %v5020 = vrot.slane %v5019, 2
        %v5021 = vmax.f32 %v5019, %v5020
        %v5022 = vrot.slane %v5021, 1
        %v5023 = vmax.f32 %v5021, %v5022
        %v5024 = vmax.f32 %v4888, %v4889
        %v5025 = vmax.f32 %v5024, %v4890
        %v5026 = vmax.f32 %v5025, %v4891
        %v5027 = vmax.f32 %v5026, %v4892
        %v5028 = vmax.f32 %v5027, %v4893
        %v5029 = vmax.f32 %v5028, %v4894
        %v5030 = vmax.f32 %v5029, %v4895
        %v5031 = vrot.slane %v5030, 4
        %v5032 = vmax.f32 %v5030, %v5031
        %v5033 = vrot.slane %v5032, 2
        %v5034 = vmax.f32 %v5032, %v5033
        %v5035 = vrot.slane %v5034, 1
        %v5036 = vmax.f32 %v5034, %v5035
        %v5037 = vpack.c.bf16 %v4864, %v4864
        %v5038 = vpack.c.bf16 %v4865, %v4865
        %v5039 = vpack.c.bf16 %v4866, %v4866
        %v5040 = vpack.c.bf16 %v4867, %v4867
        %v5041 = vpack.c.bf16 %v4868, %v4868
        %v5042 = vpack.c.bf16 %v4869, %v4869
        %v5043 = vpack.c.bf16 %v4870, %v4870
        %v5044 = vpack.c.bf16 %v4871, %v4871
        %v5045 = vpack.c.bf16 %v4872, %v4872
        %v5046 = vpack.c.bf16 %v4873, %v4873
        %v5047 = vpack.c.bf16 %v4874, %v4874
        %v5048 = vpack.c.bf16 %v4875, %v4875
        %v5049 = vpack.c.bf16 %v4876, %v4876
        %v5050 = vpack.c.bf16 %v4877, %v4877
        %v5051 = vpack.c.bf16 %v4878, %v4878
        %v5052 = vpack.c.bf16 %v4879, %v4879
        %v5053 = vpack.c.bf16 %v4880, %v4880
        %v5054 = vpack.c.bf16 %v4881, %v4881
        %v5055 = vpack.c.bf16 %v4882, %v4882
        %v5056 = vpack.c.bf16 %v4883, %v4883
        %v5057 = vpack.c.bf16 %v4884, %v4884
        %v5058 = vpack.c.bf16 %v4885, %v4885
        %v5059 = vpack.c.bf16 %v4886, %v4886
        %v5060 = vpack.c.bf16 %v4887, %v4887
        %v5061 = vpack.c.bf16 %v4888, %v4888
        %v5062 = vpack.c.bf16 %v4889, %v4889
        %v5063 = vpack.c.bf16 %v4890, %v4890
        %v5064 = vpack.c.bf16 %v4891, %v4891
        %v5065 = vpack.c.bf16 %v4892, %v4892
        %v5066 = vpack.c.bf16 %v4893, %v4893
        %v5067 = vpack.c.bf16 %v4894, %v4894
        %v5068 = vpack.c.bf16 %v4895, %v4895
        %v5069 = vpack.c.bf16 %v4997, %v4997
        %v5070 = vpack.c.bf16 %v5010, %v5010
        %v5071 = vpack.c.bf16 %v5023, %v5023
        %v5072 = vpack.c.bf16 %v5036, %v5036
        %v5073 = vunpack.c.l.bf16 %v5069
        %v5074 = vunpack.c.l.bf16 %v5070
        %v5075 = vunpack.c.l.bf16 %v5071
        %v5076 = vunpack.c.l.bf16 %v5072
        %v5077 = vmax.f32 %v5073, 0.0
        %v5078 = vmax.f32 %v5074, 0.0
        %v5079 = vmax.f32 %v5075, 0.0
        %v5080 = vmax.f32 %v5076, 0.0
        %v5081 = vpack.c.bf16 %v5077, %v5077
        %v5082 = vpack.c.bf16 %v5078, %v5078
        %v5083 = vpack.c.bf16 %v5079, %v5079
        %v5084 = vpack.c.bf16 %v5080, %v5080
        %v5086 = vperm.slane %v4982, 0
        %v5092 = vunpack.c.l.b16 %v5081
        %v5093 = vunpack.c.l.b16 %v5082
        %v5094 = vunpack.c.l.b16 %v5083
        %v5095 = vunpack.c.l.b16 %v5084
        %v5096 = vsel %vm2889, %v5093, %v5092
        %v5097 = vsel %vm2891, %v5094, %v5096
        %v5098 = vsel %vm2893, %v5095, %v5097
        %v5099 = vpack.c.b16 %v5098, %v5098
        %v5117 = vunpack.c.l.b16 %v4914
        %v5118 = vunpack.c.l.b16 %v4915
        %v5119 = vunpack.c.l.b16 %v4916
        %v5120 = vunpack.c.l.b16 %v4917
        %v5121 = vunpack.c.l.b16 %v4918
        %v5122 = vunpack.c.l.b16 %v4919
        %v5123 = vunpack.c.l.b16 %v4920
        %v5124 = vunpack.c.l.b16 %v4921
        %v5125 = vunpack.c.l.b16 %v4922
        %v5126 = vunpack.c.l.b16 %v4923
        %v5127 = vunpack.c.l.b16 %v4924
        %v5128 = vunpack.c.l.b16 %v4925
        %v5129 = vunpack.c.l.b16 %v4926
        %v5130 = vunpack.c.l.b16 %v4927
        %v5131 = vunpack.c.l.b16 %v4928
        %v5132 = vunpack.c.l.b16 %v4929
        %v5133 = vpack.c.b16 %v5118, %v5117
        %v5134 = vpack.c.b16 %v5120, %v5119
        %v5135 = vpack.c.b16 %v5122, %v5121
        %v5136 = vpack.c.b16 %v5124, %v5123
        %v5137 = vpack.c.b16 %v5126, %v5125
        %v5138 = vpack.c.b16 %v5128, %v5127
        %v5139 = vpack.c.b16 %v5130, %v5129
        %v5140 = vpack.c.b16 %v5132, %v5131
        %5149 = vmatpush.bf16.msra.mxu0 %v5140
        %5150 = vmatpush.bf16.msra.mxu0 %v5139
        %5151 = vmatpush.bf16.msra.mxu0 %v5138
        %5152 = vmatpush.bf16.msra.mxu0 %v5137
        %5153 = vmatpush.bf16.msra.mxu0 %v5136
        %5154 = vmatpush.bf16.msra.mxu0 %v5135
        %5155 = vmatpush.bf16.msra.mxu0 %v5134
        %5156 = vmatpush.bf16.msra.mxu0 %v5133
        %5157 = vmatmul.bf16.gmra.mxu0 %v5099
        %v5158 = vpop.f32.mrf.mxu0
        %v5159 = vadd.f32 %v5086, %v5158
        %v5160 = vpop.f32.mrf.mxu0
        %5161 = vdwg.mxu0
        %v5162 = vunpack.c.l.bf16 %v5037
        %v5163 = vunpack.c.l.bf16 %v5038
        %v5164 = vunpack.c.l.bf16 %v5039
        %v5165 = vunpack.c.l.bf16 %v5040
        %v5166 = vunpack.c.l.bf16 %v5041
        %v5167 = vunpack.c.l.bf16 %v5042
        %v5168 = vunpack.c.l.bf16 %v5043
        %v5169 = vunpack.c.l.bf16 %v5044
        %v5170 = vunpack.c.l.bf16 %v5045
        %v5171 = vunpack.c.l.bf16 %v5046
        %v5172 = vunpack.c.l.bf16 %v5047
        %v5173 = vunpack.c.l.bf16 %v5048
        %v5174 = vunpack.c.l.bf16 %v5049
        %v5175 = vunpack.c.l.bf16 %v5050
        %v5176 = vunpack.c.l.bf16 %v5051
        %v5177 = vunpack.c.l.bf16 %v5052
        %v5178 = vunpack.c.l.bf16 %v5053
        %v5179 = vunpack.c.l.bf16 %v5054
        %v5180 = vunpack.c.l.bf16 %v5055
        %v5181 = vunpack.c.l.bf16 %v5056
        %v5182 = vunpack.c.l.bf16 %v5057
        %v5183 = vunpack.c.l.bf16 %v5058
        %v5184 = vunpack.c.l.bf16 %v5059
        %v5185 = vunpack.c.l.bf16 %v5060
        %v5186 = vunpack.c.l.bf16 %v5061
        %v5187 = vunpack.c.l.bf16 %v5062
        %v5188 = vunpack.c.l.bf16 %v5063
        %v5189 = vunpack.c.l.bf16 %v5064
        %v5190 = vunpack.c.l.bf16 %v5065
        %v5191 = vunpack.c.l.bf16 %v5066
        %v5192 = vunpack.c.l.bf16 %v5067
        %v5193 = vunpack.c.l.bf16 %v5068
        %v5194 = vmax.f32 %v5162, 0.0
        %v5195 = vmax.f32 %v5163, 0.0
        %v5196 = vmax.f32 %v5164, 0.0
        %v5197 = vmax.f32 %v5165, 0.0
        %v5198 = vmax.f32 %v5166, 0.0
        %v5199 = vmax.f32 %v5167, 0.0
        %v5200 = vmax.f32 %v5168, 0.0
        %v5201 = vmax.f32 %v5169, 0.0
        %v5202 = vmax.f32 %v5170, 0.0
        %v5203 = vmax.f32 %v5171, 0.0
        %v5204 = vmax.f32 %v5172, 0.0
        %v5205 = vmax.f32 %v5173, 0.0
        %v5206 = vmax.f32 %v5174, 0.0
        %v5207 = vmax.f32 %v5175, 0.0
        %v5208 = vmax.f32 %v5176, 0.0
        %v5209 = vmax.f32 %v5177, 0.0
        %v5210 = vmax.f32 %v5178, 0.0
        %v5211 = vmax.f32 %v5179, 0.0
        %v5212 = vmax.f32 %v5180, 0.0
        %v5213 = vmax.f32 %v5181, 0.0
        %v5214 = vmax.f32 %v5182, 0.0
        %v5215 = vmax.f32 %v5183, 0.0
        %v5216 = vmax.f32 %v5184, 0.0
        %v5217 = vmax.f32 %v5185, 0.0
        %v5218 = vmax.f32 %v5186, 0.0
        %v5219 = vmax.f32 %v5187, 0.0
        %v5220 = vmax.f32 %v5188, 0.0
        %v5221 = vmax.f32 %v5189, 0.0
        %v5222 = vmax.f32 %v5190, 0.0
        %v5223 = vmax.f32 %v5191, 0.0
        %v5224 = vmax.f32 %v5192, 0.0
        %v5225 = vmax.f32 %v5193, 0.0
        %v5226 = vpack.c.bf16 %v5195, %v5194
        %v5227 = vpack.c.bf16 %v5197, %v5196
        %v5228 = vpack.c.bf16 %v5199, %v5198
        %v5229 = vpack.c.bf16 %v5201, %v5200
        %v5230 = vpack.c.bf16 %v5203, %v5202
        %v5231 = vpack.c.bf16 %v5205, %v5204
        %v5232 = vpack.c.bf16 %v5207, %v5206
        %v5233 = vpack.c.bf16 %v5209, %v5208
        %v5234 = vpack.c.bf16 %v5211, %v5210
        %v5235 = vpack.c.bf16 %v5213, %v5212
        %v5236 = vpack.c.bf16 %v5215, %v5214
        %v5237 = vpack.c.bf16 %v5217, %v5216
        %v5238 = vpack.c.bf16 %v5219, %v5218
        %v5239 = vpack.c.bf16 %v5221, %v5220
        %v5240 = vpack.c.bf16 %v5223, %v5222
        %v5241 = vpack.c.bf16 %v5225, %v5224
        %v5258 = vunpack.c.l.b16 %v4897
        %v5259 = vunpack.c.l.b16 %v4898
        %v5260 = vunpack.c.l.b16 %v4899
        %v5261 = vunpack.c.l.b16 %v4900
        %v5262 = vunpack.c.l.b16 %v4901
        %v5263 = vunpack.c.l.b16 %v4902
        %v5264 = vunpack.c.l.b16 %v4903
        %v5265 = vunpack.c.l.b16 %v4904
        %v5266 = vunpack.c.l.b16 %v4905
        %v5267 = vunpack.c.l.b16 %v4906
        %v5268 = vunpack.c.l.b16 %v4907
        %v5269 = vunpack.c.l.b16 %v4908
        %v5270 = vunpack.c.l.b16 %v4909
        %v5271 = vunpack.c.l.b16 %v4910
        %v5272 = vunpack.c.l.b16 %v4911
        %v5273 = vunpack.c.l.b16 %v4912
        %v5274 = vpack.c.b16 %v5259, %v5258
        %v5275 = vpack.c.b16 %v5261, %v5260
        %v5276 = vpack.c.b16 %v5263, %v5262
        %v5277 = vpack.c.b16 %v5265, %v5264
        %v5278 = vpack.c.b16 %v5267, %v5266
        %v5279 = vpack.c.b16 %v5269, %v5268
        %v5280 = vpack.c.b16 %v5271, %v5270
        %v5281 = vpack.c.b16 %v5273, %v5272
        %5290 = vmatpush.bf16.msra.mxu0 %v5281
        %5291 = vmatpush.bf16.msra.mxu0 %v5280
        %5292 = vmatpush.bf16.msra.mxu0 %v5279
        %5293 = vmatpush.bf16.msra.mxu0 %v5278
        %5294 = vmatpush.bf16.msra.mxu0 %v5277
        %5295 = vmatpush.bf16.msra.mxu0 %v5276
        %5296 = vmatpush.bf16.msra.mxu0 %v5275
        %5297 = vmatpush.bf16.msra.mxu0 %v5274
        %5298 = vmatmul.bf16.gmra.mxu0 %v5226
        %v5299 = vpop.f32.mrf.mxu0
        %v5300 = vadd.f32 0.0, %v5299
        %v5301 = vpop.f32.mrf.mxu0
        %v5302 = vadd.f32 0.0, %v5301
        %5303 = vmatmul.bf16.gmra.mxu0 %v5227
        %v5304 = vpop.f32.mrf.mxu0
        %v5305 = vadd.f32 0.0, %v5304
        %v5306 = vpop.f32.mrf.mxu0
        %v5307 = vadd.f32 0.0, %v5306
        %5308 = vmatmul.bf16.gmra.mxu0 %v5228
        %v5309 = vpop.f32.mrf.mxu0
        %v5310 = vadd.f32 0.0, %v5309
        %v5311 = vpop.f32.mrf.mxu0
        %v5312 = vadd.f32 0.0, %v5311
        %5313 = vmatmul.bf16.gmra.mxu0 %v5229
        %v5314 = vpop.f32.mrf.mxu0
        %v5315 = vadd.f32 0.0, %v5314
        %v5316 = vpop.f32.mrf.mxu0
        %v5317 = vadd.f32 0.0, %v5316
        %5318 = vmatmul.bf16.gmra.mxu0 %v5230
        %v5319 = vpop.f32.mrf.mxu0
        %v5320 = vadd.f32 0.0, %v5319
        %v5321 = vpop.f32.mrf.mxu0
        %v5322 = vadd.f32 0.0, %v5321
        %5323 = vmatmul.bf16.gmra.mxu0 %v5231
        %v5324 = vpop.f32.mrf.mxu0
        %v5325 = vadd.f32 0.0, %v5324
        %v5326 = vpop.f32.mrf.mxu0
        %v5327 = vadd.f32 0.0, %v5326
        %5328 = vmatmul.bf16.gmra.mxu0 %v5232
        %v5329 = vpop.f32.mrf.mxu0
        %v5330 = vadd.f32 0.0, %v5329
        %v5331 = vpop.f32.mrf.mxu0
        %v5332 = vadd.f32 0.0, %v5331
        %5333 = vmatmul.bf16.gmra.mxu0 %v5233
        %v5334 = vpop.f32.mrf.mxu0
        %v5335 = vadd.f32 0.0, %v5334
        %v5336 = vpop.f32.mrf.mxu0
        %v5337 = vadd.f32 0.0, %v5336
        %5338 = vmatmul.bf16.gmra.mxu0 %v5234
        %v5339 = vpop.f32.mrf.mxu0
        %v5340 = vadd.f32 0.0, %v5339
        %v5341 = vpop.f32.mrf.mxu0
        %v5342 = vadd.f32 0.0, %v5341
        %5343 = vmatmul.bf16.gmra.mxu0 %v5235
        %v5344 = vpop.f32.mrf.mxu0
        %v5345 = vadd.f32 0.0, %v5344
        %v5346 = vpop.f32.mrf.mxu0
        %v5347 = vadd.f32 0.0, %v5346
        %5348 = vmatmul.bf16.gmra.mxu0 %v5236
        %v5349 = vpop.f32.mrf.mxu0
        %v5350 = vadd.f32 0.0, %v5349
        %v5351 = vpop.f32.mrf.mxu0
        %v5352 = vadd.f32 0.0, %v5351
        %5353 = vmatmul.bf16.gmra.mxu0 %v5237
        %v5354 = vpop.f32.mrf.mxu0
        %v5355 = vadd.f32 0.0, %v5354
        %v5356 = vpop.f32.mrf.mxu0
        %v5357 = vadd.f32 0.0, %v5356
        %5358 = vmatmul.bf16.gmra.mxu0 %v5238
        %v5359 = vpop.f32.mrf.mxu0
        %v5360 = vadd.f32 0.0, %v5359
        %v5361 = vpop.f32.mrf.mxu0
        %v5362 = vadd.f32 0.0, %v5361
        %5363 = vmatmul.bf16.gmra.mxu0 %v5239
        %v5364 = vpop.f32.mrf.mxu0
        %v5365 = vadd.f32 0.0, %v5364
        %v5366 = vpop.f32.mrf.mxu0
        %v5367 = vadd.f32 0.0, %v5366
        %5368 = vmatmul.bf16.gmra.mxu0 %v5240
        %v5369 = vpop.f32.mrf.mxu0
        %v5370 = vadd.f32 0.0, %v5369
        %v5371 = vpop.f32.mrf.mxu0
        %v5372 = vadd.f32 0.0, %v5371
        %5373 = vmatmul.bf16.gmra.mxu0 %v5241
        %v5374 = vpop.f32.mrf.mxu0
        %v5375 = vadd.f32 0.0, %v5374
        %v5376 = vpop.f32.mrf.mxu0
        %v5377 = vadd.f32 0.0, %v5376
        %5378 = vdwg.mxu0
        %v5380 = vrot.slane %v5159, 1
        %v5381 = vrot.slane %v5159, 2
        %v5382 = vrot.slane %v5159, 3
        %v5383 = vperm.slane %v5159, 0
        %v5384 = vperm.slane %v5380, 0
        %v5385 = vperm.slane %v5381, 0
        %v5386 = vperm.slane %v5382, 0
        %v5391 = vadd.f32 %v5300, %v5383
        %v5392 = vadd.f32 %v5302, %v5383
        %v5393 = vadd.f32 %v5305, %v5383
        %v5394 = vadd.f32 %v5307, %v5383
        %v5395 = vadd.f32 %v5310, %v5383
        %v5396 = vadd.f32 %v5312, %v5383
        %v5397 = vadd.f32 %v5315, %v5383
        %v5398 = vadd.f32 %v5317, %v5383
        %v5399 = vadd.f32 %v5320, %v5384
        %v5400 = vadd.f32 %v5322, %v5384
        %v5401 = vadd.f32 %v5325, %v5384
        %v5402 = vadd.f32 %v5327, %v5384
        %v5403 = vadd.f32 %v5330, %v5384
        %v5404 = vadd.f32 %v5332, %v5384
        %v5405 = vadd.f32 %v5335, %v5384
        %v5406 = vadd.f32 %v5337, %v5384
        %v5407 = vadd.f32 %v5340, %v5385
        %v5408 = vadd.f32 %v5342, %v5385
        %v5409 = vadd.f32 %v5345, %v5385
        %v5410 = vadd.f32 %v5347, %v5385
        %v5411 = vadd.f32 %v5350, %v5385
        %v5412 = vadd.f32 %v5352, %v5385
        %v5413 = vadd.f32 %v5355, %v5385
        %v5414 = vadd.f32 %v5357, %v5385
        %v5415 = vadd.f32 %v5360, %v5386
        %v5416 = vadd.f32 %v5362, %v5386
        %v5417 = vadd.f32 %v5365, %v5386
        %v5418 = vadd.f32 %v5367, %v5386
        %v5419 = vadd.f32 %v5370, %v5386
        %v5420 = vadd.f32 %v5372, %v5386
        %v5421 = vadd.f32 %v5375, %v5386
        %v5422 = vadd.f32 %v5377, %v5386
        %v5424 = vperm.slane %v4984, 0
        %v5430 = vperm.slane %v5069, 0
        %v5431 = vperm.slane %v5070, 0
        %v5432 = vperm.slane %v5071, 0
        %v5433 = vperm.slane %v5072, 0
        %v5434 = vunpack.c.l.b16 %v5430
        %v5435 = vunpack.c.l.b16 %v5431
        %v5436 = vunpack.c.l.b16 %v5432
        %v5437 = vunpack.c.l.b16 %v5433
        %v5438 = vsel %vm2889, %v5435, %v5434
        %v5439 = vsel %vm2891, %v5436, %v5438
        %v5440 = vsel %vm2893, %v5437, %v5439
        %v5441 = vpack.c.b16 %v5440, %v5440
        %v5459 = vunpack.c.l.b16 %v4948
        %v5460 = vunpack.c.l.b16 %v4949
        %v5461 = vunpack.c.l.b16 %v4950
        %v5462 = vunpack.c.l.b16 %v4951
        %v5463 = vunpack.c.l.b16 %v4952
        %v5464 = vunpack.c.l.b16 %v4953
        %v5465 = vunpack.c.l.b16 %v4954
        %v5466 = vunpack.c.l.b16 %v4955
        %v5467 = vunpack.c.l.b16 %v4956
        %v5468 = vunpack.c.l.b16 %v4957
        %v5469 = vunpack.c.l.b16 %v4958
        %v5470 = vunpack.c.l.b16 %v4959
        %v5471 = vunpack.c.l.b16 %v4960
        %v5472 = vunpack.c.l.b16 %v4961
        %v5473 = vunpack.c.l.b16 %v4962
        %v5474 = vunpack.c.l.b16 %v4963
        %v5475 = vpack.c.b16 %v5460, %v5459
        %v5476 = vpack.c.b16 %v5462, %v5461
        %v5477 = vpack.c.b16 %v5464, %v5463
        %v5478 = vpack.c.b16 %v5466, %v5465
        %v5479 = vpack.c.b16 %v5468, %v5467
        %v5480 = vpack.c.b16 %v5470, %v5469
        %v5481 = vpack.c.b16 %v5472, %v5471
        %v5482 = vpack.c.b16 %v5474, %v5473
        %5491 = vmatpush.bf16.msra.mxu0 %v5482
        %5492 = vmatpush.bf16.msra.mxu0 %v5481
        %5493 = vmatpush.bf16.msra.mxu0 %v5480
        %5494 = vmatpush.bf16.msra.mxu0 %v5479
        %5495 = vmatpush.bf16.msra.mxu0 %v5478
        %5496 = vmatpush.bf16.msra.mxu0 %v5477
        %5497 = vmatpush.bf16.msra.mxu0 %v5476
        %5498 = vmatpush.bf16.msra.mxu0 %v5475
        %5499 = vmatmul.bf16.gmra.mxu0 %v5441
        %v5500 = vpop.f32.mrf.mxu0
        %v5501 = vadd.f32 %v5424, %v5500
        %v5502 = vpop.f32.mrf.mxu0
        %5503 = vdwg.mxu0
        %v5536 = vunpack.c.l.b16 %v5037
        %v5537 = vunpack.c.l.b16 %v5038
        %v5538 = vunpack.c.l.b16 %v5039
        %v5539 = vunpack.c.l.b16 %v5040
        %v5540 = vunpack.c.l.b16 %v5041
        %v5541 = vunpack.c.l.b16 %v5042
        %v5542 = vunpack.c.l.b16 %v5043
        %v5543 = vunpack.c.l.b16 %v5044
        %v5544 = vunpack.c.l.b16 %v5045
        %v5545 = vunpack.c.l.b16 %v5046
        %v5546 = vunpack.c.l.b16 %v5047
        %v5547 = vunpack.c.l.b16 %v5048
        %v5548 = vunpack.c.l.b16 %v5049
        %v5549 = vunpack.c.l.b16 %v5050
        %v5550 = vunpack.c.l.b16 %v5051
        %v5551 = vunpack.c.l.b16 %v5052
        %v5552 = vunpack.c.l.b16 %v5053
        %v5553 = vunpack.c.l.b16 %v5054
        %v5554 = vunpack.c.l.b16 %v5055
        %v5555 = vunpack.c.l.b16 %v5056
        %v5556 = vunpack.c.l.b16 %v5057
        %v5557 = vunpack.c.l.b16 %v5058
        %v5558 = vunpack.c.l.b16 %v5059
        %v5559 = vunpack.c.l.b16 %v5060
        %v5560 = vunpack.c.l.b16 %v5061
        %v5561 = vunpack.c.l.b16 %v5062
        %v5562 = vunpack.c.l.b16 %v5063
        %v5563 = vunpack.c.l.b16 %v5064
        %v5564 = vunpack.c.l.b16 %v5065
        %v5565 = vunpack.c.l.b16 %v5066
        %v5566 = vunpack.c.l.b16 %v5067
        %v5567 = vunpack.c.l.b16 %v5068
        %v5568 = vpack.c.b16 %v5537, %v5536
        %v5569 = vpack.c.b16 %v5539, %v5538
        %v5570 = vpack.c.b16 %v5541, %v5540
        %v5571 = vpack.c.b16 %v5543, %v5542
        %v5572 = vpack.c.b16 %v5545, %v5544
        %v5573 = vpack.c.b16 %v5547, %v5546
        %v5574 = vpack.c.b16 %v5549, %v5548
        %v5575 = vpack.c.b16 %v5551, %v5550
        %v5576 = vpack.c.b16 %v5553, %v5552
        %v5577 = vpack.c.b16 %v5555, %v5554
        %v5578 = vpack.c.b16 %v5557, %v5556
        %v5579 = vpack.c.b16 %v5559, %v5558
        %v5580 = vpack.c.b16 %v5561, %v5560
        %v5581 = vpack.c.b16 %v5563, %v5562
        %v5582 = vpack.c.b16 %v5565, %v5564
        %v5583 = vpack.c.b16 %v5567, %v5566
        %v5616 = vunpack.c.l.b16 %v4931
        %v5617 = vunpack.c.l.b16 %v4932
        %v5618 = vunpack.c.l.b16 %v4933
        %v5619 = vunpack.c.l.b16 %v4934
        %v5620 = vunpack.c.l.b16 %v4935
        %v5621 = vunpack.c.l.b16 %v4936
        %v5622 = vunpack.c.l.b16 %v4937
        %v5623 = vunpack.c.l.b16 %v4938
        %v5624 = vunpack.c.l.b16 %v4939
        %v5625 = vunpack.c.l.b16 %v4940
        %v5626 = vunpack.c.l.b16 %v4941
        %v5627 = vunpack.c.l.b16 %v4942
        %v5628 = vunpack.c.l.b16 %v4943
        %v5629 = vunpack.c.l.b16 %v4944
        %v5630 = vunpack.c.l.b16 %v4945
        %v5631 = vunpack.c.l.b16 %v4946
        %v5632 = vpack.c.b16 %v5617, %v5616
        %v5633 = vpack.c.b16 %v5619, %v5618
        %v5634 = vpack.c.b16 %v5621, %v5620
        %v5635 = vpack.c.b16 %v5623, %v5622
        %v5636 = vpack.c.b16 %v5625, %v5624
        %v5637 = vpack.c.b16 %v5627, %v5626
        %v5638 = vpack.c.b16 %v5629, %v5628
        %v5639 = vpack.c.b16 %v5631, %v5630
        %5648 = vmatpush.bf16.msra.mxu0 %v5639
        %5649 = vmatpush.bf16.msra.mxu0 %v5638
        %5650 = vmatpush.bf16.msra.mxu0 %v5637
        %5651 = vmatpush.bf16.msra.mxu0 %v5636
        %5652 = vmatpush.bf16.msra.mxu0 %v5635
        %5653 = vmatpush.bf16.msra.mxu0 %v5634
        %5654 = vmatpush.bf16.msra.mxu0 %v5633
        %5655 = vmatpush.bf16.msra.mxu0 %v5632
        %5656 = vmatmul.bf16.gmra.mxu0 %v5568
        %v5657 = vpop.f32.mrf.mxu0
        %v5658 = vadd.f32 0.0, %v5657
        %v5659 = vpop.f32.mrf.mxu0
        %v5660 = vadd.f32 0.0, %v5659
        %5661 = vmatmul.bf16.gmra.mxu0 %v5569
        %v5662 = vpop.f32.mrf.mxu0
        %v5663 = vadd.f32 0.0, %v5662
        %v5664 = vpop.f32.mrf.mxu0
        %v5665 = vadd.f32 0.0, %v5664
        %5666 = vmatmul.bf16.gmra.mxu0 %v5570
        %v5667 = vpop.f32.mrf.mxu0
        %v5668 = vadd.f32 0.0, %v5667
        %v5669 = vpop.f32.mrf.mxu0
        %v5670 = vadd.f32 0.0, %v5669
        %5671 = vmatmul.bf16.gmra.mxu0 %v5571
        %v5672 = vpop.f32.mrf.mxu0
        %v5673 = vadd.f32 0.0, %v5672
        %v5674 = vpop.f32.mrf.mxu0
        %v5675 = vadd.f32 0.0, %v5674
        %5676 = vmatmul.bf16.gmra.mxu0 %v5572
        %v5677 = vpop.f32.mrf.mxu0
        %v5678 = vadd.f32 0.0, %v5677
        %v5679 = vpop.f32.mrf.mxu0
        %v5680 = vadd.f32 0.0, %v5679
        %5681 = vmatmul.bf16.gmra.mxu0 %v5573
        %v5682 = vpop.f32.mrf.mxu0
        %v5683 = vadd.f32 0.0, %v5682
        %v5684 = vpop.f32.mrf.mxu0
        %v5685 = vadd.f32 0.0, %v5684
        %5686 = vmatmul.bf16.gmra.mxu0 %v5574
        %v5687 = vpop.f32.mrf.mxu0
        %v5688 = vadd.f32 0.0, %v5687
        %v5689 = vpop.f32.mrf.mxu0
        %v5690 = vadd.f32 0.0, %v5689
        %5691 = vmatmul.bf16.gmra.mxu0 %v5575
        %v5692 = vpop.f32.mrf.mxu0
        %v5693 = vadd.f32 0.0, %v5692
        %v5694 = vpop.f32.mrf.mxu0
        %v5695 = vadd.f32 0.0, %v5694
        %5696 = vmatmul.bf16.gmra.mxu0 %v5576
        %v5697 = vpop.f32.mrf.mxu0
        %v5698 = vadd.f32 0.0, %v5697
        %v5699 = vpop.f32.mrf.mxu0
        %v5700 = vadd.f32 0.0, %v5699
        %5701 = vmatmul.bf16.gmra.mxu0 %v5577
        %v5702 = vpop.f32.mrf.mxu0
        %v5703 = vadd.f32 0.0, %v5702
        %v5704 = vpop.f32.mrf.mxu0
        %v5705 = vadd.f32 0.0, %v5704
        %5706 = vmatmul.bf16.gmra.mxu0 %v5578
        %v5707 = vpop.f32.mrf.mxu0
        %v5708 = vadd.f32 0.0, %v5707
        %v5709 = vpop.f32.mrf.mxu0
        %v5710 = vadd.f32 0.0, %v5709
        %5711 = vmatmul.bf16.gmra.mxu0 %v5579
        %v5712 = vpop.f32.mrf.mxu0
        %v5713 = vadd.f32 0.0, %v5712
        %v5714 = vpop.f32.mrf.mxu0
        %v5715 = vadd.f32 0.0, %v5714
        %5716 = vmatmul.bf16.gmra.mxu0 %v5580
        %v5717 = vpop.f32.mrf.mxu0
        %v5718 = vadd.f32 0.0, %v5717
        %v5719 = vpop.f32.mrf.mxu0
        %v5720 = vadd.f32 0.0, %v5719
        %5721 = vmatmul.bf16.gmra.mxu0 %v5581
        %v5722 = vpop.f32.mrf.mxu0
        %v5723 = vadd.f32 0.0, %v5722
        %v5724 = vpop.f32.mrf.mxu0
        %v5725 = vadd.f32 0.0, %v5724
        %5726 = vmatmul.bf16.gmra.mxu0 %v5582
        %v5727 = vpop.f32.mrf.mxu0
        %v5728 = vadd.f32 0.0, %v5727
        %v5729 = vpop.f32.mrf.mxu0
        %v5730 = vadd.f32 0.0, %v5729
        %5731 = vmatmul.bf16.gmra.mxu0 %v5583
        %v5732 = vpop.f32.mrf.mxu0
        %v5733 = vadd.f32 0.0, %v5732
        %v5734 = vpop.f32.mrf.mxu0
        %v5735 = vadd.f32 0.0, %v5734
        %5736 = vdwg.mxu0
        %v5738 = vrot.slane %v5501, 1
        %v5739 = vrot.slane %v5501, 2
        %v5740 = vrot.slane %v5501, 3
        %v5741 = vperm.slane %v5501, 0
        %v5742 = vperm.slane %v5738, 0
        %v5743 = vperm.slane %v5739, 0
        %v5744 = vperm.slane %v5740, 0
        %v5749 = vadd.f32 %v5658, %v5741
        %v5750 = vadd.f32 %v5660, %v5741
        %v5751 = vadd.f32 %v5663, %v5741
        %v5752 = vadd.f32 %v5665, %v5741
        %v5753 = vadd.f32 %v5668, %v5741
        %v5754 = vadd.f32 %v5670, %v5741
        %v5755 = vadd.f32 %v5673, %v5741
        %v5756 = vadd.f32 %v5675, %v5741
        %v5757 = vadd.f32 %v5678, %v5742
        %v5758 = vadd.f32 %v5680, %v5742
        %v5759 = vadd.f32 %v5683, %v5742
        %v5760 = vadd.f32 %v5685, %v5742
        %v5761 = vadd.f32 %v5688, %v5742
        %v5762 = vadd.f32 %v5690, %v5742
        %v5763 = vadd.f32 %v5693, %v5742
        %v5764 = vadd.f32 %v5695, %v5742
        %v5765 = vadd.f32 %v5698, %v5743
        %v5766 = vadd.f32 %v5700, %v5743
        %v5767 = vadd.f32 %v5703, %v5743
        %v5768 = vadd.f32 %v5705, %v5743
        %v5769 = vadd.f32 %v5708, %v5743
        %v5770 = vadd.f32 %v5710, %v5743
        %v5771 = vadd.f32 %v5713, %v5743
        %v5772 = vadd.f32 %v5715, %v5743
        %v5773 = vadd.f32 %v5718, %v5744
        %v5774 = vadd.f32 %v5720, %v5744
        %v5775 = vadd.f32 %v5723, %v5744
        %v5776 = vadd.f32 %v5725, %v5744
        %v5777 = vadd.f32 %v5728, %v5744
        %v5778 = vadd.f32 %v5730, %v5744
        %v5779 = vadd.f32 %v5733, %v5744
        %v5780 = vadd.f32 %v5735, %v5744
        %v5781 = vmax.f32 %v5391, 0.0
        %v5782 = vmax.f32 %v5392, 0.0
        %v5783 = vmax.f32 %v5393, 0.0
        %v5784 = vmax.f32 %v5394, 0.0
        %v5785 = vmax.f32 %v5395, 0.0
        %v5786 = vmax.f32 %v5396, 0.0
        %v5787 = vmax.f32 %v5397, 0.0
        %v5788 = vmax.f32 %v5398, 0.0
        %v5789 = vmax.f32 %v5399, 0.0
        %v5790 = vmax.f32 %v5400, 0.0
        %v5791 = vmax.f32 %v5401, 0.0
        %v5792 = vmax.f32 %v5402, 0.0
        %v5793 = vmax.f32 %v5403, 0.0
        %v5794 = vmax.f32 %v5404, 0.0
        %v5795 = vmax.f32 %v5405, 0.0
        %v5796 = vmax.f32 %v5406, 0.0
        %v5797 = vmax.f32 %v5407, 0.0
        %v5798 = vmax.f32 %v5408, 0.0
        %v5799 = vmax.f32 %v5409, 0.0
        %v5800 = vmax.f32 %v5410, 0.0
        %v5801 = vmax.f32 %v5411, 0.0
        %v5802 = vmax.f32 %v5412, 0.0
        %v5803 = vmax.f32 %v5413, 0.0
        %v5804 = vmax.f32 %v5414, 0.0
        %v5805 = vmax.f32 %v5415, 0.0
        %v5806 = vmax.f32 %v5416, 0.0
        %v5807 = vmax.f32 %v5417, 0.0
        %v5808 = vmax.f32 %v5418, 0.0
        %v5809 = vmax.f32 %v5419, 0.0
        %v5810 = vmax.f32 %v5420, 0.0
        %v5811 = vmax.f32 %v5421, 0.0
        %v5812 = vmax.f32 %v5422, 0.0
        %v5813 = vpack.c.bf16 %v5782, %v5781
        %v5814 = vpack.c.bf16 %v5784, %v5783
        %v5815 = vpack.c.bf16 %v5786, %v5785
        %v5816 = vpack.c.bf16 %v5788, %v5787
        %v5817 = vpack.c.bf16 %v5790, %v5789
        %v5818 = vpack.c.bf16 %v5792, %v5791
        %v5819 = vpack.c.bf16 %v5794, %v5793
        %v5820 = vpack.c.bf16 %v5796, %v5795
        %v5821 = vpack.c.bf16 %v5798, %v5797
        %v5822 = vpack.c.bf16 %v5800, %v5799
        %v5823 = vpack.c.bf16 %v5802, %v5801
        %v5824 = vpack.c.bf16 %v5804, %v5803
        %v5825 = vpack.c.bf16 %v5806, %v5805
        %v5826 = vpack.c.bf16 %v5808, %v5807
        %v5827 = vpack.c.bf16 %v5810, %v5809
        %v5828 = vpack.c.bf16 %v5812, %v5811
        %v5845 = vunpack.c.l.b16 %v4965
        %v5846 = vunpack.c.l.b16 %v4966
        %v5847 = vunpack.c.l.b16 %v4967
        %v5848 = vunpack.c.l.b16 %v4968
        %v5849 = vunpack.c.l.b16 %v4969
        %v5850 = vunpack.c.l.b16 %v4970
        %v5851 = vunpack.c.l.b16 %v4971
        %v5852 = vunpack.c.l.b16 %v4972
        %v5853 = vunpack.c.l.b16 %v4973
        %v5854 = vunpack.c.l.b16 %v4974
        %v5855 = vunpack.c.l.b16 %v4975
        %v5856 = vunpack.c.l.b16 %v4976
        %v5857 = vunpack.c.l.b16 %v4977
        %v5858 = vunpack.c.l.b16 %v4978
        %v5859 = vunpack.c.l.b16 %v4979
        %v5860 = vunpack.c.l.b16 %v4980
        %v5861 = vpack.c.b16 %v5846, %v5845
        %v5862 = vpack.c.b16 %v5848, %v5847
        %v5863 = vpack.c.b16 %v5850, %v5849
        %v5864 = vpack.c.b16 %v5852, %v5851
        %v5865 = vpack.c.b16 %v5854, %v5853
        %v5866 = vpack.c.b16 %v5856, %v5855
        %v5867 = vpack.c.b16 %v5858, %v5857
        %v5868 = vpack.c.b16 %v5860, %v5859
        %5877 = vmatpush.bf16.msra.mxu0 %v5868
        %5878 = vmatpush.bf16.msra.mxu0 %v5867
        %5879 = vmatpush.bf16.msra.mxu0 %v5866
        %5880 = vmatpush.bf16.msra.mxu0 %v5865
        %5881 = vmatpush.bf16.msra.mxu0 %v5864
        %5882 = vmatpush.bf16.msra.mxu0 %v5863
        %5883 = vmatpush.bf16.msra.mxu0 %v5862
        %5884 = vmatpush.bf16.msra.mxu0 %v5861
        %5885 = vmatmul.bf16.gmra.mxu0 %v5813
        %v5886 = vpop.f32.mrf.mxu0
        %v5887 = vadd.f32 0.0, %v5886
        %v5888 = vpop.f32.mrf.mxu0
        %v5889 = vadd.f32 0.0, %v5888
        %5890 = vmatmul.bf16.gmra.mxu0 %v5814
        %v5891 = vpop.f32.mrf.mxu0
        %v5892 = vadd.f32 0.0, %v5891
        %v5893 = vpop.f32.mrf.mxu0
        %v5894 = vadd.f32 0.0, %v5893
        %5895 = vmatmul.bf16.gmra.mxu0 %v5815
        %v5896 = vpop.f32.mrf.mxu0
        %v5897 = vadd.f32 0.0, %v5896
        %v5898 = vpop.f32.mrf.mxu0
        %v5899 = vadd.f32 0.0, %v5898
        %5900 = vmatmul.bf16.gmra.mxu0 %v5816
        %v5901 = vpop.f32.mrf.mxu0
        %v5902 = vadd.f32 0.0, %v5901
        %v5903 = vpop.f32.mrf.mxu0
        %v5904 = vadd.f32 0.0, %v5903
        %5905 = vmatmul.bf16.gmra.mxu0 %v5817
        %v5906 = vpop.f32.mrf.mxu0
        %v5907 = vadd.f32 0.0, %v5906
        %v5908 = vpop.f32.mrf.mxu0
        %v5909 = vadd.f32 0.0, %v5908
        %5910 = vmatmul.bf16.gmra.mxu0 %v5818
        %v5911 = vpop.f32.mrf.mxu0
        %v5912 = vadd.f32 0.0, %v5911
        %v5913 = vpop.f32.mrf.mxu0
        %v5914 = vadd.f32 0.0, %v5913
        %5915 = vmatmul.bf16.gmra.mxu0 %v5819
        %v5916 = vpop.f32.mrf.mxu0
        %v5917 = vadd.f32 0.0, %v5916
        %v5918 = vpop.f32.mrf.mxu0
        %v5919 = vadd.f32 0.0, %v5918
        %5920 = vmatmul.bf16.gmra.mxu0 %v5820
        %v5921 = vpop.f32.mrf.mxu0
        %v5922 = vadd.f32 0.0, %v5921
        %v5923 = vpop.f32.mrf.mxu0
        %v5924 = vadd.f32 0.0, %v5923
        %5925 = vmatmul.bf16.gmra.mxu0 %v5821
        %v5926 = vpop.f32.mrf.mxu0
        %v5927 = vadd.f32 0.0, %v5926
        %v5928 = vpop.f32.mrf.mxu0
        %v5929 = vadd.f32 0.0, %v5928
        %5930 = vmatmul.bf16.gmra.mxu0 %v5822
        %v5931 = vpop.f32.mrf.mxu0
        %v5932 = vadd.f32 0.0, %v5931
        %v5933 = vpop.f32.mrf.mxu0
        %v5934 = vadd.f32 0.0, %v5933
        %5935 = vmatmul.bf16.gmra.mxu0 %v5823
        %v5936 = vpop.f32.mrf.mxu0
        %v5937 = vadd.f32 0.0, %v5936
        %v5938 = vpop.f32.mrf.mxu0
        %v5939 = vadd.f32 0.0, %v5938
        %5940 = vmatmul.bf16.gmra.mxu0 %v5824
        %v5941 = vpop.f32.mrf.mxu0
        %v5942 = vadd.f32 0.0, %v5941
        %v5943 = vpop.f32.mrf.mxu0
        %v5944 = vadd.f32 0.0, %v5943
        %5945 = vmatmul.bf16.gmra.mxu0 %v5825
        %v5946 = vpop.f32.mrf.mxu0
        %v5947 = vadd.f32 0.0, %v5946
        %v5948 = vpop.f32.mrf.mxu0
        %v5949 = vadd.f32 0.0, %v5948
        %5950 = vmatmul.bf16.gmra.mxu0 %v5826
        %v5951 = vpop.f32.mrf.mxu0
        %v5952 = vadd.f32 0.0, %v5951
        %v5953 = vpop.f32.mrf.mxu0
        %v5954 = vadd.f32 0.0, %v5953
        %5955 = vmatmul.bf16.gmra.mxu0 %v5827
        %v5956 = vpop.f32.mrf.mxu0
        %v5957 = vadd.f32 0.0, %v5956
        %v5958 = vpop.f32.mrf.mxu0
        %v5959 = vadd.f32 0.0, %v5958
        %5960 = vmatmul.bf16.gmra.mxu0 %v5828
        %v5961 = vpop.f32.mrf.mxu0
        %v5962 = vadd.f32 0.0, %v5961
        %v5963 = vpop.f32.mrf.mxu0
        %v5964 = vadd.f32 0.0, %v5963
        %5965 = vdwg.mxu0
        %v5966 = vadd.f32 %v5749, %v5887
        %v5967 = vadd.f32 %v5750, %v5889
        %v5968 = vadd.f32 %v5751, %v5892
        %v5969 = vadd.f32 %v5752, %v5894
        %v5970 = vadd.f32 %v5753, %v5897
        %v5971 = vadd.f32 %v5754, %v5899
        %v5972 = vadd.f32 %v5755, %v5902
        %v5973 = vadd.f32 %v5756, %v5904
        %v5974 = vadd.f32 %v5757, %v5907
        %v5975 = vadd.f32 %v5758, %v5909
        %v5976 = vadd.f32 %v5759, %v5912
        %v5977 = vadd.f32 %v5760, %v5914
        %v5978 = vadd.f32 %v5761, %v5917
        %v5979 = vadd.f32 %v5762, %v5919
        %v5980 = vadd.f32 %v5763, %v5922
        %v5981 = vadd.f32 %v5764, %v5924
        %v5982 = vadd.f32 %v5765, %v5927
        %v5983 = vadd.f32 %v5766, %v5929
        %v5984 = vadd.f32 %v5767, %v5932
        %v5985 = vadd.f32 %v5768, %v5934
        %v5986 = vadd.f32 %v5769, %v5937
        %v5987 = vadd.f32 %v5770, %v5939
        %v5988 = vadd.f32 %v5771, %v5942
        %v5989 = vadd.f32 %v5772, %v5944
        %v5990 = vadd.f32 %v5773, %v5947
        %v5991 = vadd.f32 %v5774, %v5949
        %v5992 = vadd.f32 %v5775, %v5952
        %v5993 = vadd.f32 %v5776, %v5954
        %v5994 = vadd.f32 %v5777, %v5957
        %v5995 = vadd.f32 %v5778, %v5959
        %v5996 = vadd.f32 %v5779, %v5962
        %v5997 = vadd.f32 %v5780, %v5964
        %s5998 = scalar_lea.vmem %s8, 192
        %v5999 = vld [vmem:[%s5998] sm:$0xf]
        %v6000 = vld [vmem:[%s5998 + $0x4] sm:$0xf]
        %v6001 = vld [vmem:[%s5998 + $0x8] sm:$0xf]
        %v6002 = vld [vmem:[%s5998 + $0xc] sm:$0xf]
        %v6003 = vld [vmem:[%s5998 + $0x10] sm:$0xf]
        %v6004 = vld [vmem:[%s5998 + $0x14] sm:$0xf]
        %v6005 = vld [vmem:[%s5998 + $0x18] sm:$0xf]
        %v6006 = vld [vmem:[%s5998 + $0x1c] sm:$0xf]
        %v6007 = vld [vmem:[%s5998 + $0x20] sm:$0xf]
        %v6008 = vld [vmem:[%s5998 + $0x24] sm:$0xf]
        %v6009 = vld [vmem:[%s5998 + $0x28] sm:$0xf]
        %v6010 = vld [vmem:[%s5998 + $0x2c] sm:$0xf]
        %v6011 = vld [vmem:[%s5998 + $0x30] sm:$0xf]
        %v6012 = vld [vmem:[%s5998 + $0x34] sm:$0xf]
        %v6013 = vld [vmem:[%s5998 + $0x38] sm:$0xf]
        %v6014 = vld [vmem:[%s5998 + $0x3c] sm:$0xf]
        %s6015 = scalar_lea.vmem %s9, 192
        %v6016 = vld [vmem:[%s6015] sm:$0xf]
        %v6017 = vld [vmem:[%s6015 + $0x4] sm:$0xf]
        %v6018 = vld [vmem:[%s6015 + $0x8] sm:$0xf]
        %v6019 = vld [vmem:[%s6015 + $0xc] sm:$0xf]
        %v6020 = vld [vmem:[%s6015 + $0x10] sm:$0xf]
        %v6021 = vld [vmem:[%s6015 + $0x14] sm:$0xf]
        %v6022 = vld [vmem:[%s6015 + $0x18] sm:$0xf]
        %v6023 = vld [vmem:[%s6015 + $0x1c] sm:$0xf]
        %v6024 = vld [vmem:[%s6015 + $0x20] sm:$0xf]
        %v6025 = vld [vmem:[%s6015 + $0x24] sm:$0xf]
        %v6026 = vld [vmem:[%s6015 + $0x28] sm:$0xf]
        %v6027 = vld [vmem:[%s6015 + $0x2c] sm:$0xf]
        %v6028 = vld [vmem:[%s6015 + $0x30] sm:$0xf]
        %v6029 = vld [vmem:[%s6015 + $0x34] sm:$0xf]
        %v6030 = vld [vmem:[%s6015 + $0x38] sm:$0xf]
        %v6031 = vld [vmem:[%s6015 + $0x3c] sm:$0xf]
        %s6032 = scalar_lea.vmem [#allocation10], 192
        %v6033 = vld [vmem:[%s6032] sm:$0xf]
        %v6034 = vld [vmem:[%s6032 + $0x4] sm:$0xf]
        %v6035 = vld [vmem:[%s6032 + $0x8] sm:$0xf]
        %v6036 = vld [vmem:[%s6032 + $0xc] sm:$0xf]
        %v6037 = vld [vmem:[%s6032 + $0x10] sm:$0xf]
        %v6038 = vld [vmem:[%s6032 + $0x14] sm:$0xf]
        %v6039 = vld [vmem:[%s6032 + $0x18] sm:$0xf]
        %v6040 = vld [vmem:[%s6032 + $0x1c] sm:$0xf]
        %v6041 = vld [vmem:[%s6032 + $0x20] sm:$0xf]
        %v6042 = vld [vmem:[%s6032 + $0x24] sm:$0xf]
        %v6043 = vld [vmem:[%s6032 + $0x28] sm:$0xf]
        %v6044 = vld [vmem:[%s6032 + $0x2c] sm:$0xf]
        %v6045 = vld [vmem:[%s6032 + $0x30] sm:$0xf]
        %v6046 = vld [vmem:[%s6032 + $0x34] sm:$0xf]
        %v6047 = vld [vmem:[%s6032 + $0x38] sm:$0xf]
        %v6048 = vld [vmem:[%s6032 + $0x3c] sm:$0xf]
        %s6049 = scalar_lea.vmem [#allocation11], 192
        %v6050 = vld [vmem:[%s6049] sm:$0xf]
        %v6051 = vld [vmem:[%s6049 + $0x4] sm:$0xf]
        %v6052 = vld [vmem:[%s6049 + $0x8] sm:$0xf]
        %v6053 = vld [vmem:[%s6049 + $0xc] sm:$0xf]
        %v6054 = vld [vmem:[%s6049 + $0x10] sm:$0xf]
        %v6055 = vld [vmem:[%s6049 + $0x14] sm:$0xf]
        %v6056 = vld [vmem:[%s6049 + $0x18] sm:$0xf]
        %v6057 = vld [vmem:[%s6049 + $0x1c] sm:$0xf]
        %v6058 = vld [vmem:[%s6049 + $0x20] sm:$0xf]
        %v6059 = vld [vmem:[%s6049 + $0x24] sm:$0xf]
        %v6060 = vld [vmem:[%s6049 + $0x28] sm:$0xf]
        %v6061 = vld [vmem:[%s6049 + $0x2c] sm:$0xf]
        %v6062 = vld [vmem:[%s6049 + $0x30] sm:$0xf]
        %v6063 = vld [vmem:[%s6049 + $0x34] sm:$0xf]
        %v6064 = vld [vmem:[%s6049 + $0x38] sm:$0xf]
        %v6065 = vld [vmem:[%s6049 + $0x3c] sm:$0xf]
        %s6066 = scalar_lea.vmem [#allocation8], 192
        %v6067 = vld [vmem:[%s6066] sm:$0xf]
        %v6068 = vld [vmem:[%s6066 + $0x4] sm:$0xf]
        %v6069 = vld [vmem:[%s6066 + $0x8] sm:$0xf]
        %v6070 = vld [vmem:[%s6066 + $0xc] sm:$0xf]
        %v6071 = vld [vmem:[%s6066 + $0x10] sm:$0xf]
        %v6072 = vld [vmem:[%s6066 + $0x14] sm:$0xf]
        %v6073 = vld [vmem:[%s6066 + $0x18] sm:$0xf]
        %v6074 = vld [vmem:[%s6066 + $0x1c] sm:$0xf]
        %v6075 = vld [vmem:[%s6066 + $0x20] sm:$0xf]
        %v6076 = vld [vmem:[%s6066 + $0x24] sm:$0xf]
        %v6077 = vld [vmem:[%s6066 + $0x28] sm:$0xf]
        %v6078 = vld [vmem:[%s6066 + $0x2c] sm:$0xf]
        %v6079 = vld [vmem:[%s6066 + $0x30] sm:$0xf]
        %v6080 = vld [vmem:[%s6066 + $0x34] sm:$0xf]
        %v6081 = vld [vmem:[%s6066 + $0x38] sm:$0xf]
        %v6082 = vld [vmem:[%s6066 + $0x3c] sm:$0xf]
        %s6083 = scalar_lea.vmem %s10, 3
        %v6084 = vld [vmem:[%s6083] sm:$0x1]
        %s6085 = scalar_lea.vmem %s12, 3
        %v6086 = vld [vmem:[%s6085] sm:$0x1]
        %v6087 = vmax.f32 %v5966, %v5967
        %v6088 = vmax.f32 %v6087, %v5968
        %v6089 = vmax.f32 %v6088, %v5969
        %v6090 = vmax.f32 %v6089, %v5970
        %v6091 = vmax.f32 %v6090, %v5971
        %v6092 = vmax.f32 %v6091, %v5972
        %v6093 = vmax.f32 %v6092, %v5973
        %v6094 = vrot.slane %v6093, 4
        %v6095 = vmax.f32 %v6093, %v6094
        %v6096 = vrot.slane %v6095, 2
        %v6097 = vmax.f32 %v6095, %v6096
        %v6098 = vrot.slane %v6097, 1
        %v6099 = vmax.f32 %v6097, %v6098
        %v6100 = vmax.f32 %v5974, %v5975
        %v6101 = vmax.f32 %v6100, %v5976
        %v6102 = vmax.f32 %v6101, %v5977
        %v6103 = vmax.f32 %v6102, %v5978
        %v6104 = vmax.f32 %v6103, %v5979
        %v6105 = vmax.f32 %v6104, %v5980
        %v6106 = vmax.f32 %v6105, %v5981
        %v6107 = vrot.slane %v6106, 4
        %v6108 = vmax.f32 %v6106, %v6107
        %v6109 = vrot.slane %v6108, 2
        %v6110 = vmax.f32 %v6108, %v6109
        %v6111 = vrot.slane %v6110, 1
        %v6112 = vmax.f32 %v6110, %v6111
        %v6113 = vmax.f32 %v5982, %v5983
        %v6114 = vmax.f32 %v6113, %v5984
        %v6115 = vmax.f32 %v6114, %v5985
        %v6116 = vmax.f32 %v6115, %v5986
        %v6117 = vmax.f32 %v6116, %v5987
        %v6118 = vmax.f32 %v6117, %v5988
        %v6119 = vmax.f32 %v6118, %v5989
        %v6120 = vrot.slane %v6119, 4
        %v6121 = vmax.f32 %v6119, %v6120
        %v6122 = vrot.slane %v6121, 2
        %v6123 = vmax.f32 %v6121, %v6122
        %v6124 = vrot.slane %v6123, 1
        %v6125 = vmax.f32 %v6123, %v6124
        %v6126 = vmax.f32 %v5990, %v5991
        %v6127 = vmax.f32 %v6126, %v5992
        %v6128 = vmax.f32 %v6127, %v5993
        %v6129 = vmax.f32 %v6128, %v5994
        %v6130 = vmax.f32 %v6129, %v5995
        %v6131 = vmax.f32 %v6130, %v5996
        %v6132 = vmax.f32 %v6131, %v5997
        %v6133 = vrot.slane %v6132, 4
        %v6134 = vmax.f32 %v6132, %v6133
        %v6135 = vrot.slane %v6134, 2
        %v6136 = vmax.f32 %v6134, %v6135
        %v6137 = vrot.slane %v6136, 1
        %v6138 = vmax.f32 %v6136, %v6137
        %v6139 = vpack.c.bf16 %v5966, %v5966
        %v6140 = vpack.c.bf16 %v5967, %v5967
        %v6141 = vpack.c.bf16 %v5968, %v5968
        %v6142 = vpack.c.bf16 %v5969, %v5969
        %v6143 = vpack.c.bf16 %v5970, %v5970
        %v6144 = vpack.c.bf16 %v5971, %v5971
        %v6145 = vpack.c.bf16 %v5972, %v5972
        %v6146 = vpack.c.bf16 %v5973, %v5973
        %v6147 = vpack.c.bf16 %v5974, %v5974
        %v6148 = vpack.c.bf16 %v5975, %v5975
        %v6149 = vpack.c.bf16 %v5976, %v5976
        %v6150 = vpack.c.bf16 %v5977, %v5977
        %v6151 = vpack.c.bf16 %v5978, %v5978
        %v6152 = vpack.c.bf16 %v5979, %v5979
        %v6153 = vpack.c.bf16 %v5980, %v5980
        %v6154 = vpack.c.bf16 %v5981, %v5981
        %v6155 = vpack.c.bf16 %v5982, %v5982
        %v6156 = vpack.c.bf16 %v5983, %v5983
        %v6157 = vpack.c.bf16 %v5984, %v5984
        %v6158 = vpack.c.bf16 %v5985, %v5985
        %v6159 = vpack.c.bf16 %v5986, %v5986
        %v6160 = vpack.c.bf16 %v5987, %v5987
        %v6161 = vpack.c.bf16 %v5988, %v5988
        %v6162 = vpack.c.bf16 %v5989, %v5989
        %v6163 = vpack.c.bf16 %v5990, %v5990
        %v6164 = vpack.c.bf16 %v5991, %v5991
        %v6165 = vpack.c.bf16 %v5992, %v5992
        %v6166 = vpack.c.bf16 %v5993, %v5993
        %v6167 = vpack.c.bf16 %v5994, %v5994
        %v6168 = vpack.c.bf16 %v5995, %v5995
        %v6169 = vpack.c.bf16 %v5996, %v5996
        %v6170 = vpack.c.bf16 %v5997, %v5997
        %v6171 = vpack.c.bf16 %v6099, %v6099
        %v6172 = vpack.c.bf16 %v6112, %v6112
        %v6173 = vpack.c.bf16 %v6125, %v6125
        %v6174 = vpack.c.bf16 %v6138, %v6138
        %v6175 = vunpack.c.l.bf16 %v6171
        %v6176 = vunpack.c.l.bf16 %v6172
        %v6177 = vunpack.c.l.bf16 %v6173
        %v6178 = vunpack.c.l.bf16 %v6174
        %v6179 = vmax.f32 %v6175, 0.0
        %v6180 = vmax.f32 %v6176, 0.0
        %v6181 = vmax.f32 %v6177, 0.0
        %v6182 = vmax.f32 %v6178, 0.0
        %v6183 = vpack.c.bf16 %v6179, %v6179
        %v6184 = vpack.c.bf16 %v6180, %v6180
        %v6185 = vpack.c.bf16 %v6181, %v6181
        %v6186 = vpack.c.bf16 %v6182, %v6182
        %v6188 = vperm.slane %v6084, 0
        %v6194 = vunpack.c.l.b16 %v6183
        %v6195 = vunpack.c.l.b16 %v6184
        %v6196 = vunpack.c.l.b16 %v6185
        %v6197 = vunpack.c.l.b16 %v6186
        %v6198 = vsel %vm2889, %v6195, %v6194
        %v6199 = vsel %vm2891, %v6196, %v6198
        %v6200 = vsel %vm2893, %v6197, %v6199
        %v6201 = vpack.c.b16 %v6200, %v6200
        %v6219 = vunpack.c.l.b16 %v6016
        %v6220 = vunpack.c.l.b16 %v6017
        %v6221 = vunpack.c.l.b16 %v6018
        %v6222 = vunpack.c.l.b16 %v6019
        %v6223 = vunpack.c.l.b16 %v6020
        %v6224 = vunpack.c.l.b16 %v6021
        %v6225 = vunpack.c.l.b16 %v6022
        %v6226 = vunpack.c.l.b16 %v6023
        %v6227 = vunpack.c.l.b16 %v6024
        %v6228 = vunpack.c.l.b16 %v6025
        %v6229 = vunpack.c.l.b16 %v6026
        %v6230 = vunpack.c.l.b16 %v6027
        %v6231 = vunpack.c.l.b16 %v6028
        %v6232 = vunpack.c.l.b16 %v6029
        %v6233 = vunpack.c.l.b16 %v6030
        %v6234 = vunpack.c.l.b16 %v6031
        %v6235 = vpack.c.b16 %v6220, %v6219
        %v6236 = vpack.c.b16 %v6222, %v6221
        %v6237 = vpack.c.b16 %v6224, %v6223
        %v6238 = vpack.c.b16 %v6226, %v6225
        %v6239 = vpack.c.b16 %v6228, %v6227
        %v6240 = vpack.c.b16 %v6230, %v6229
        %v6241 = vpack.c.b16 %v6232, %v6231
        %v6242 = vpack.c.b16 %v6234, %v6233
        %6251 = vmatpush.bf16.msra.mxu0 %v6242
        %6252 = vmatpush.bf16.msra.mxu0 %v6241
        %6253 = vmatpush.bf16.msra.mxu0 %v6240
        %6254 = vmatpush.bf16.msra.mxu0 %v6239
        %6255 = vmatpush.bf16.msra.mxu0 %v6238
        %6256 = vmatpush.bf16.msra.mxu0 %v6237
        %6257 = vmatpush.bf16.msra.mxu0 %v6236
        %6258 = vmatpush.bf16.msra.mxu0 %v6235
        %6259 = vmatmul.bf16.gmra.mxu0 %v6201
        %v6260 = vpop.f32.mrf.mxu0
        %v6261 = vadd.f32 %v6188, %v6260
        %v6262 = vpop.f32.mrf.mxu0
        %6263 = vdwg.mxu0
        %v6264 = vunpack.c.l.bf16 %v6139
        %v6265 = vunpack.c.l.bf16 %v6140
        %v6266 = vunpack.c.l.bf16 %v6141
        %v6267 = vunpack.c.l.bf16 %v6142
        %v6268 = vunpack.c.l.bf16 %v6143
        %v6269 = vunpack.c.l.bf16 %v6144
        %v6270 = vunpack.c.l.bf16 %v6145
        %v6271 = vunpack.c.l.bf16 %v6146
        %v6272 = vunpack.c.l.bf16 %v6147
        %v6273 = vunpack.c.l.bf16 %v6148
        %v6274 = vunpack.c.l.bf16 %v6149
        %v6275 = vunpack.c.l.bf16 %v6150
        %v6276 = vunpack.c.l.bf16 %v6151
        %v6277 = vunpack.c.l.bf16 %v6152
        %v6278 = vunpack.c.l.bf16 %v6153
        %v6279 = vunpack.c.l.bf16 %v6154
        %v6280 = vunpack.c.l.bf16 %v6155
        %v6281 = vunpack.c.l.bf16 %v6156
        %v6282 = vunpack.c.l.bf16 %v6157
        %v6283 = vunpack.c.l.bf16 %v6158
        %v6284 = vunpack.c.l.bf16 %v6159
        %v6285 = vunpack.c.l.bf16 %v6160
        %v6286 = vunpack.c.l.bf16 %v6161
        %v6287 = vunpack.c.l.bf16 %v6162
        %v6288 = vunpack.c.l.bf16 %v6163
        %v6289 = vunpack.c.l.bf16 %v6164
        %v6290 = vunpack.c.l.bf16 %v6165
        %v6291 = vunpack.c.l.bf16 %v6166
        %v6292 = vunpack.c.l.bf16 %v6167
        %v6293 = vunpack.c.l.bf16 %v6168
        %v6294 = vunpack.c.l.bf16 %v6169
        %v6295 = vunpack.c.l.bf16 %v6170
        %v6296 = vmax.f32 %v6264, 0.0
        %v6297 = vmax.f32 %v6265, 0.0
        %v6298 = vmax.f32 %v6266, 0.0
        %v6299 = vmax.f32 %v6267, 0.0
        %v6300 = vmax.f32 %v6268, 0.0
        %v6301 = vmax.f32 %v6269, 0.0
        %v6302 = vmax.f32 %v6270, 0.0
        %v6303 = vmax.f32 %v6271, 0.0
        %v6304 = vmax.f32 %v6272, 0.0
        %v6305 = vmax.f32 %v6273, 0.0
        %v6306 = vmax.f32 %v6274, 0.0
        %v6307 = vmax.f32 %v6275, 0.0
        %v6308 = vmax.f32 %v6276, 0.0
        %v6309 = vmax.f32 %v6277, 0.0
        %v6310 = vmax.f32 %v6278, 0.0
        %v6311 = vmax.f32 %v6279, 0.0
        %v6312 = vmax.f32 %v6280, 0.0
        %v6313 = vmax.f32 %v6281, 0.0
        %v6314 = vmax.f32 %v6282, 0.0
        %v6315 = vmax.f32 %v6283, 0.0
        %v6316 = vmax.f32 %v6284, 0.0
        %v6317 = vmax.f32 %v6285, 0.0
        %v6318 = vmax.f32 %v6286, 0.0
        %v6319 = vmax.f32 %v6287, 0.0
        %v6320 = vmax.f32 %v6288, 0.0
        %v6321 = vmax.f32 %v6289, 0.0
        %v6322 = vmax.f32 %v6290, 0.0
        %v6323 = vmax.f32 %v6291, 0.0
        %v6324 = vmax.f32 %v6292, 0.0
        %v6325 = vmax.f32 %v6293, 0.0
        %v6326 = vmax.f32 %v6294, 0.0
        %v6327 = vmax.f32 %v6295, 0.0
        %v6328 = vpack.c.bf16 %v6297, %v6296
        %v6329 = vpack.c.bf16 %v6299, %v6298
        %v6330 = vpack.c.bf16 %v6301, %v6300
        %v6331 = vpack.c.bf16 %v6303, %v6302
        %v6332 = vpack.c.bf16 %v6305, %v6304
        %v6333 = vpack.c.bf16 %v6307, %v6306
        %v6334 = vpack.c.bf16 %v6309, %v6308
        %v6335 = vpack.c.bf16 %v6311, %v6310
        %v6336 = vpack.c.bf16 %v6313, %v6312
        %v6337 = vpack.c.bf16 %v6315, %v6314
        %v6338 = vpack.c.bf16 %v6317, %v6316
        %v6339 = vpack.c.bf16 %v6319, %v6318
        %v6340 = vpack.c.bf16 %v6321, %v6320
        %v6341 = vpack.c.bf16 %v6323, %v6322
        %v6342 = vpack.c.bf16 %v6325, %v6324
        %v6343 = vpack.c.bf16 %v6327, %v6326
        %v6360 = vunpack.c.l.b16 %v5999
        %v6361 = vunpack.c.l.b16 %v6000
        %v6362 = vunpack.c.l.b16 %v6001
        %v6363 = vunpack.c.l.b16 %v6002
        %v6364 = vunpack.c.l.b16 %v6003
        %v6365 = vunpack.c.l.b16 %v6004
        %v6366 = vunpack.c.l.b16 %v6005
        %v6367 = vunpack.c.l.b16 %v6006
        %v6368 = vunpack.c.l.b16 %v6007
        %v6369 = vunpack.c.l.b16 %v6008
        %v6370 = vunpack.c.l.b16 %v6009
        %v6371 = vunpack.c.l.b16 %v6010
        %v6372 = vunpack.c.l.b16 %v6011
        %v6373 = vunpack.c.l.b16 %v6012
        %v6374 = vunpack.c.l.b16 %v6013
        %v6375 = vunpack.c.l.b16 %v6014
        %v6376 = vpack.c.b16 %v6361, %v6360
        %v6377 = vpack.c.b16 %v6363, %v6362
        %v6378 = vpack.c.b16 %v6365, %v6364
        %v6379 = vpack.c.b16 %v6367, %v6366
        %v6380 = vpack.c.b16 %v6369, %v6368
        %v6381 = vpack.c.b16 %v6371, %v6370
        %v6382 = vpack.c.b16 %v6373, %v6372
        %v6383 = vpack.c.b16 %v6375, %v6374
        %6392 = vmatpush.bf16.msra.mxu0 %v6383
        %6393 = vmatpush.bf16.msra.mxu0 %v6382
        %6394 = vmatpush.bf16.msra.mxu0 %v6381
        %6395 = vmatpush.bf16.msra.mxu0 %v6380
        %6396 = vmatpush.bf16.msra.mxu0 %v6379
        %6397 = vmatpush.bf16.msra.mxu0 %v6378
        %6398 = vmatpush.bf16.msra.mxu0 %v6377
        %6399 = vmatpush.bf16.msra.mxu0 %v6376
        %6400 = vmatmul.bf16.gmra.mxu0 %v6328
        %v6401 = vpop.f32.mrf.mxu0
        %v6402 = vadd.f32 0.0, %v6401
        %v6403 = vpop.f32.mrf.mxu0
        %v6404 = vadd.f32 0.0, %v6403
        %6405 = vmatmul.bf16.gmra.mxu0 %v6329
        %v6406 = vpop.f32.mrf.mxu0
        %v6407 = vadd.f32 0.0, %v6406
        %v6408 = vpop.f32.mrf.mxu0
        %v6409 = vadd.f32 0.0, %v6408
        %6410 = vmatmul.bf16.gmra.mxu0 %v6330
        %v6411 = vpop.f32.mrf.mxu0
        %v6412 = vadd.f32 0.0, %v6411
        %v6413 = vpop.f32.mrf.mxu0
        %v6414 = vadd.f32 0.0, %v6413
        %6415 = vmatmul.bf16.gmra.mxu0 %v6331
        %v6416 = vpop.f32.mrf.mxu0
        %v6417 = vadd.f32 0.0, %v6416
        %v6418 = vpop.f32.mrf.mxu0
        %v6419 = vadd.f32 0.0, %v6418
        %6420 = vmatmul.bf16.gmra.mxu0 %v6332
        %v6421 = vpop.f32.mrf.mxu0
        %v6422 = vadd.f32 0.0, %v6421
        %v6423 = vpop.f32.mrf.mxu0
        %v6424 = vadd.f32 0.0, %v6423
        %6425 = vmatmul.bf16.gmra.mxu0 %v6333
        %v6426 = vpop.f32.mrf.mxu0
        %v6427 = vadd.f32 0.0, %v6426
        %v6428 = vpop.f32.mrf.mxu0
        %v6429 = vadd.f32 0.0, %v6428
        %6430 = vmatmul.bf16.gmra.mxu0 %v6334
        %v6431 = vpop.f32.mrf.mxu0
        %v6432 = vadd.f32 0.0, %v6431
        %v6433 = vpop.f32.mrf.mxu0
        %v6434 = vadd.f32 0.0, %v6433
        %6435 = vmatmul.bf16.gmra.mxu0 %v6335
        %v6436 = vpop.f32.mrf.mxu0
        %v6437 = vadd.f32 0.0, %v6436
        %v6438 = vpop.f32.mrf.mxu0
        %v6439 = vadd.f32 0.0, %v6438
        %6440 = vmatmul.bf16.gmra.mxu0 %v6336
        %v6441 = vpop.f32.mrf.mxu0
        %v6442 = vadd.f32 0.0, %v6441
        %v6443 = vpop.f32.mrf.mxu0
        %v6444 = vadd.f32 0.0, %v6443
        %6445 = vmatmul.bf16.gmra.mxu0 %v6337
        %v6446 = vpop.f32.mrf.mxu0
        %v6447 = vadd.f32 0.0, %v6446
        %v6448 = vpop.f32.mrf.mxu0
        %v6449 = vadd.f32 0.0, %v6448
        %6450 = vmatmul.bf16.gmra.mxu0 %v6338
        %v6451 = vpop.f32.mrf.mxu0
        %v6452 = vadd.f32 0.0, %v6451
        %v6453 = vpop.f32.mrf.mxu0
        %v6454 = vadd.f32 0.0, %v6453
        %6455 = vmatmul.bf16.gmra.mxu0 %v6339
        %v6456 = vpop.f32.mrf.mxu0
        %v6457 = vadd.f32 0.0, %v6456
        %v6458 = vpop.f32.mrf.mxu0
        %v6459 = vadd.f32 0.0, %v6458
        %6460 = vmatmul.bf16.gmra.mxu0 %v6340
        %v6461 = vpop.f32.mrf.mxu0
        %v6462 = vadd.f32 0.0, %v6461
        %v6463 = vpop.f32.mrf.mxu0
        %v6464 = vadd.f32 0.0, %v6463
        %6465 = vmatmul.bf16.gmra.mxu0 %v6341
        %v6466 = vpop.f32.mrf.mxu0
        %v6467 = vadd.f32 0.0, %v6466
        %v6468 = vpop.f32.mrf.mxu0
        %v6469 = vadd.f32 0.0, %v6468
        %6470 = vmatmul.bf16.gmra.mxu0 %v6342
        %v6471 = vpop.f32.mrf.mxu0
        %v6472 = vadd.f32 0.0, %v6471
        %v6473 = vpop.f32.mrf.mxu0
        %v6474 = vadd.f32 0.0, %v6473
        %6475 = vmatmul.bf16.gmra.mxu0 %v6343
        %v6476 = vpop.f32.mrf.mxu0
        %v6477 = vadd.f32 0.0, %v6476
        %v6478 = vpop.f32.mrf.mxu0
        %v6479 = vadd.f32 0.0, %v6478
        %6480 = vdwg.mxu0
        %v6482 = vrot.slane %v6261, 1
        %v6483 = vrot.slane %v6261, 2
        %v6484 = vrot.slane %v6261, 3
        %v6485 = vperm.slane %v6261, 0
        %v6486 = vperm.slane %v6482, 0
        %v6487 = vperm.slane %v6483, 0
        %v6488 = vperm.slane %v6484, 0
        %v6493 = vadd.f32 %v6402, %v6485
        %v6494 = vadd.f32 %v6404, %v6485
        %v6495 = vadd.f32 %v6407, %v6485
        %v6496 = vadd.f32 %v6409, %v6485
        %v6497 = vadd.f32 %v6412, %v6485
        %v6498 = vadd.f32 %v6414, %v6485
        %v6499 = vadd.f32 %v6417, %v6485
        %v6500 = vadd.f32 %v6419, %v6485
        %v6501 = vadd.f32 %v6422, %v6486
        %v6502 = vadd.f32 %v6424, %v6486
        %v6503 = vadd.f32 %v6427, %v6486
        %v6504 = vadd.f32 %v6429, %v6486
        %v6505 = vadd.f32 %v6432, %v6486
        %v6506 = vadd.f32 %v6434, %v6486
        %v6507 = vadd.f32 %v6437, %v6486
        %v6508 = vadd.f32 %v6439, %v6486
        %v6509 = vadd.f32 %v6442, %v6487
        %v6510 = vadd.f32 %v6444, %v6487
        %v6511 = vadd.f32 %v6447, %v6487
        %v6512 = vadd.f32 %v6449, %v6487
        %v6513 = vadd.f32 %v6452, %v6487
        %v6514 = vadd.f32 %v6454, %v6487
        %v6515 = vadd.f32 %v6457, %v6487
        %v6516 = vadd.f32 %v6459, %v6487
        %v6517 = vadd.f32 %v6462, %v6488
        %v6518 = vadd.f32 %v6464, %v6488
        %v6519 = vadd.f32 %v6467, %v6488
        %v6520 = vadd.f32 %v6469, %v6488
        %v6521 = vadd.f32 %v6472, %v6488
        %v6522 = vadd.f32 %v6474, %v6488
        %v6523 = vadd.f32 %v6477, %v6488
        %v6524 = vadd.f32 %v6479, %v6488
        %v6526 = vperm.slane %v6086, 0
        %v6532 = vperm.slane %v6171, 0
        %v6533 = vperm.slane %v6172, 0
        %v6534 = vperm.slane %v6173, 0
        %v6535 = vperm.slane %v6174, 0
        %v6536 = vunpack.c.l.b16 %v6532
        %v6537 = vunpack.c.l.b16 %v6533
        %v6538 = vunpack.c.l.b16 %v6534
        %v6539 = vunpack.c.l.b16 %v6535
        %v6540 = vsel %vm2889, %v6537, %v6536
        %v6541 = vsel %vm2891, %v6538, %v6540
        %v6542 = vsel %vm2893, %v6539, %v6541
        %v6543 = vpack.c.b16 %v6542, %v6542
        %v6561 = vunpack.c.l.b16 %v6050
        %v6562 = vunpack.c.l.b16 %v6051
        %v6563 = vunpack.c.l.b16 %v6052
        %v6564 = vunpack.c.l.b16 %v6053
        %v6565 = vunpack.c.l.b16 %v6054
        %v6566 = vunpack.c.l.b16 %v6055
        %v6567 = vunpack.c.l.b16 %v6056
        %v6568 = vunpack.c.l.b16 %v6057
        %v6569 = vunpack.c.l.b16 %v6058
        %v6570 = vunpack.c.l.b16 %v6059
        %v6571 = vunpack.c.l.b16 %v6060
        %v6572 = vunpack.c.l.b16 %v6061
        %v6573 = vunpack.c.l.b16 %v6062
        %v6574 = vunpack.c.l.b16 %v6063
        %v6575 = vunpack.c.l.b16 %v6064
        %v6576 = vunpack.c.l.b16 %v6065
        %v6577 = vpack.c.b16 %v6562, %v6561
        %v6578 = vpack.c.b16 %v6564, %v6563
        %v6579 = vpack.c.b16 %v6566, %v6565
        %v6580 = vpack.c.b16 %v6568, %v6567
        %v6581 = vpack.c.b16 %v6570, %v6569
        %v6582 = vpack.c.b16 %v6572, %v6571
        %v6583 = vpack.c.b16 %v6574, %v6573
        %v6584 = vpack.c.b16 %v6576, %v6575
        %6593 = vmatpush.bf16.msra.mxu0 %v6584
        %6594 = vmatpush.bf16.msra.mxu0 %v6583
        %6595 = vmatpush.bf16.msra.mxu0 %v6582
        %6596 = vmatpush.bf16.msra.mxu0 %v6581
        %6597 = vmatpush.bf16.msra.mxu0 %v6580
        %6598 = vmatpush.bf16.msra.mxu0 %v6579
        %6599 = vmatpush.bf16.msra.mxu0 %v6578
        %6600 = vmatpush.bf16.msra.mxu0 %v6577
        %6601 = vmatmul.bf16.gmra.mxu0 %v6543
        %v6602 = vpop.f32.mrf.mxu0
        %v6603 = vadd.f32 %v6526, %v6602
        %v6604 = vpop.f32.mrf.mxu0
        %6605 = vdwg.mxu0
        %v6638 = vunpack.c.l.b16 %v6139
        %v6639 = vunpack.c.l.b16 %v6140
        %v6640 = vunpack.c.l.b16 %v6141
        %v6641 = vunpack.c.l.b16 %v6142
        %v6642 = vunpack.c.l.b16 %v6143
        %v6643 = vunpack.c.l.b16 %v6144
        %v6644 = vunpack.c.l.b16 %v6145
        %v6645 = vunpack.c.l.b16 %v6146
        %v6646 = vunpack.c.l.b16 %v6147
        %v6647 = vunpack.c.l.b16 %v6148
        %v6648 = vunpack.c.l.b16 %v6149
        %v6649 = vunpack.c.l.b16 %v6150
        %v6650 = vunpack.c.l.b16 %v6151
        %v6651 = vunpack.c.l.b16 %v6152
        %v6652 = vunpack.c.l.b16 %v6153
        %v6653 = vunpack.c.l.b16 %v6154
        %v6654 = vunpack.c.l.b16 %v6155
        %v6655 = vunpack.c.l.b16 %v6156
        %v6656 = vunpack.c.l.b16 %v6157
        %v6657 = vunpack.c.l.b16 %v6158
        %v6658 = vunpack.c.l.b16 %v6159
        %v6659 = vunpack.c.l.b16 %v6160
        %v6660 = vunpack.c.l.b16 %v6161
        %v6661 = vunpack.c.l.b16 %v6162
        %v6662 = vunpack.c.l.b16 %v6163
        %v6663 = vunpack.c.l.b16 %v6164
        %v6664 = vunpack.c.l.b16 %v6165
        %v6665 = vunpack.c.l.b16 %v6166
        %v6666 = vunpack.c.l.b16 %v6167
        %v6667 = vunpack.c.l.b16 %v6168
        %v6668 = vunpack.c.l.b16 %v6169
        %v6669 = vunpack.c.l.b16 %v6170
        %v6670 = vpack.c.b16 %v6639, %v6638
        %v6671 = vpack.c.b16 %v6641, %v6640
        %v6672 = vpack.c.b16 %v6643, %v6642
        %v6673 = vpack.c.b16 %v6645, %v6644
        %v6674 = vpack.c.b16 %v6647, %v6646
        %v6675 = vpack.c.b16 %v6649, %v6648
        %v6676 = vpack.c.b16 %v6651, %v6650
        %v6677 = vpack.c.b16 %v6653, %v6652
        %v6678 = vpack.c.b16 %v6655, %v6654
        %v6679 = vpack.c.b16 %v6657, %v6656
        %v6680 = vpack.c.b16 %v6659, %v6658
        %v6681 = vpack.c.b16 %v6661, %v6660
        %v6682 = vpack.c.b16 %v6663, %v6662
        %v6683 = vpack.c.b16 %v6665, %v6664
        %v6684 = vpack.c.b16 %v6667, %v6666
        %v6685 = vpack.c.b16 %v6669, %v6668
        %v6718 = vunpack.c.l.b16 %v6033
        %v6719 = vunpack.c.l.b16 %v6034
        %v6720 = vunpack.c.l.b16 %v6035
        %v6721 = vunpack.c.l.b16 %v6036
        %v6722 = vunpack.c.l.b16 %v6037
        %v6723 = vunpack.c.l.b16 %v6038
        %v6724 = vunpack.c.l.b16 %v6039
        %v6725 = vunpack.c.l.b16 %v6040
        %v6726 = vunpack.c.l.b16 %v6041
        %v6727 = vunpack.c.l.b16 %v6042
        %v6728 = vunpack.c.l.b16 %v6043
        %v6729 = vunpack.c.l.b16 %v6044
        %v6730 = vunpack.c.l.b16 %v6045
        %v6731 = vunpack.c.l.b16 %v6046
        %v6732 = vunpack.c.l.b16 %v6047
        %v6733 = vunpack.c.l.b16 %v6048
        %v6734 = vpack.c.b16 %v6719, %v6718
        %v6735 = vpack.c.b16 %v6721, %v6720
        %v6736 = vpack.c.b16 %v6723, %v6722
        %v6737 = vpack.c.b16 %v6725, %v6724
        %v6738 = vpack.c.b16 %v6727, %v6726
        %v6739 = vpack.c.b16 %v6729, %v6728
        %v6740 = vpack.c.b16 %v6731, %v6730
        %v6741 = vpack.c.b16 %v6733, %v6732
        %6750 = vmatpush.bf16.msra.mxu0 %v6741
        %6751 = vmatpush.bf16.msra.mxu0 %v6740
        %6752 = vmatpush.bf16.msra.mxu0 %v6739
        %6753 = vmatpush.bf16.msra.mxu0 %v6738
        %6754 = vmatpush.bf16.msra.mxu0 %v6737
        %6755 = vmatpush.bf16.msra.mxu0 %v6736
        %6756 = vmatpush.bf16.msra.mxu0 %v6735
        %6757 = vmatpush.bf16.msra.mxu0 %v6734
        %6758 = vmatmul.bf16.gmra.mxu0 %v6670
        %v6759 = vpop.f32.mrf.mxu0
        %v6760 = vadd.f32 0.0, %v6759
        %v6761 = vpop.f32.mrf.mxu0
        %v6762 = vadd.f32 0.0, %v6761
        %6763 = vmatmul.bf16.gmra.mxu0 %v6671
        %v6764 = vpop.f32.mrf.mxu0
        %v6765 = vadd.f32 0.0, %v6764
        %v6766 = vpop.f32.mrf.mxu0
        %v6767 = vadd.f32 0.0, %v6766
        %6768 = vmatmul.bf16.gmra.mxu0 %v6672
        %v6769 = vpop.f32.mrf.mxu0
        %v6770 = vadd.f32 0.0, %v6769
        %v6771 = vpop.f32.mrf.mxu0
        %v6772 = vadd.f32 0.0, %v6771
        %6773 = vmatmul.bf16.gmra.mxu0 %v6673
        %v6774 = vpop.f32.mrf.mxu0
        %v6775 = vadd.f32 0.0, %v6774
        %v6776 = vpop.f32.mrf.mxu0
        %v6777 = vadd.f32 0.0, %v6776
        %6778 = vmatmul.bf16.gmra.mxu0 %v6674
        %v6779 = vpop.f32.mrf.mxu0
        %v6780 = vadd.f32 0.0, %v6779
        %v6781 = vpop.f32.mrf.mxu0
        %v6782 = vadd.f32 0.0, %v6781
        %6783 = vmatmul.bf16.gmra.mxu0 %v6675
        %v6784 = vpop.f32.mrf.mxu0
        %v6785 = vadd.f32 0.0, %v6784
        %v6786 = vpop.f32.mrf.mxu0
        %v6787 = vadd.f32 0.0, %v6786
        %6788 = vmatmul.bf16.gmra.mxu0 %v6676
        %v6789 = vpop.f32.mrf.mxu0
        %v6790 = vadd.f32 0.0, %v6789
        %v6791 = vpop.f32.mrf.mxu0
        %v6792 = vadd.f32 0.0, %v6791
        %6793 = vmatmul.bf16.gmra.mxu0 %v6677
        %v6794 = vpop.f32.mrf.mxu0
        %v6795 = vadd.f32 0.0, %v6794
        %v6796 = vpop.f32.mrf.mxu0
        %v6797 = vadd.f32 0.0, %v6796
        %6798 = vmatmul.bf16.gmra.mxu0 %v6678
        %v6799 = vpop.f32.mrf.mxu0
        %v6800 = vadd.f32 0.0, %v6799
        %v6801 = vpop.f32.mrf.mxu0
        %v6802 = vadd.f32 0.0, %v6801
        %6803 = vmatmul.bf16.gmra.mxu0 %v6679
        %v6804 = vpop.f32.mrf.mxu0
        %v6805 = vadd.f32 0.0, %v6804
        %v6806 = vpop.f32.mrf.mxu0
        %v6807 = vadd.f32 0.0, %v6806
        %6808 = vmatmul.bf16.gmra.mxu0 %v6680
        %v6809 = vpop.f32.mrf.mxu0
        %v6810 = vadd.f32 0.0, %v6809
        %v6811 = vpop.f32.mrf.mxu0
        %v6812 = vadd.f32 0.0, %v6811
        %6813 = vmatmul.bf16.gmra.mxu0 %v6681
        %v6814 = vpop.f32.mrf.mxu0
        %v6815 = vadd.f32 0.0, %v6814
        %v6816 = vpop.f32.mrf.mxu0
        %v6817 = vadd.f32 0.0, %v6816
        %6818 = vmatmul.bf16.gmra.mxu0 %v6682
        %v6819 = vpop.f32.mrf.mxu0
        %v6820 = vadd.f32 0.0, %v6819
        %v6821 = vpop.f32.mrf.mxu0
        %v6822 = vadd.f32 0.0, %v6821
        %6823 = vmatmul.bf16.gmra.mxu0 %v6683
        %v6824 = vpop.f32.mrf.mxu0
        %v6825 = vadd.f32 0.0, %v6824
        %v6826 = vpop.f32.mrf.mxu0
        %v6827 = vadd.f32 0.0, %v6826
        %6828 = vmatmul.bf16.gmra.mxu0 %v6684
        %v6829 = vpop.f32.mrf.mxu0
        %v6830 = vadd.f32 0.0, %v6829
        %v6831 = vpop.f32.mrf.mxu0
        %v6832 = vadd.f32 0.0, %v6831
        %6833 = vmatmul.bf16.gmra.mxu0 %v6685
        %v6834 = vpop.f32.mrf.mxu0
        %v6835 = vadd.f32 0.0, %v6834
        %v6836 = vpop.f32.mrf.mxu0
        %v6837 = vadd.f32 0.0, %v6836
        %6838 = vdwg.mxu0
        %v6840 = vrot.slane %v6603, 1
        %v6841 = vrot.slane %v6603, 2
        %v6842 = vrot.slane %v6603, 3
        %v6843 = vperm.slane %v6603, 0
        %v6844 = vperm.slane %v6840, 0
        %v6845 = vperm.slane %v6841, 0
        %v6846 = vperm.slane %v6842, 0
        %v6851 = vadd.f32 %v6760, %v6843
        %v6852 = vadd.f32 %v6762, %v6843
        %v6853 = vadd.f32 %v6765, %v6843
        %v6854 = vadd.f32 %v6767, %v6843
        %v6855 = vadd.f32 %v6770, %v6843
        %v6856 = vadd.f32 %v6772, %v6843
        %v6857 = vadd.f32 %v6775, %v6843
        %v6858 = vadd.f32 %v6777, %v6843
        %v6859 = vadd.f32 %v6780, %v6844
        %v6860 = vadd.f32 %v6782, %v6844
        %v6861 = vadd.f32 %v6785, %v6844
        %v6862 = vadd.f32 %v6787, %v6844
        %v6863 = vadd.f32 %v6790, %v6844
        %v6864 = vadd.f32 %v6792, %v6844
        %v6865 = vadd.f32 %v6795, %v6844
        %v6866 = vadd.f32 %v6797, %v6844
        %v6867 = vadd.f32 %v6800, %v6845
        %v6868 = vadd.f32 %v6802, %v6845
        %v6869 = vadd.f32 %v6805, %v6845
        %v6870 = vadd.f32 %v6807, %v6845
        %v6871 = vadd.f32 %v6810, %v6845
        %v6872 = vadd.f32 %v6812, %v6845
        %v6873 = vadd.f32 %v6815, %v6845
        %v6874 = vadd.f32 %v6817, %v6845
        %v6875 = vadd.f32 %v6820, %v6846
        %v6876 = vadd.f32 %v6822, %v6846
        %v6877 = vadd.f32 %v6825, %v6846
        %v6878 = vadd.f32 %v6827, %v6846
        %v6879 = vadd.f32 %v6830, %v6846
        %v6880 = vadd.f32 %v6832, %v6846
        %v6881 = vadd.f32 %v6835, %v6846
        %v6882 = vadd.f32 %v6837, %v6846
        %v6883 = vmax.f32 %v6493, 0.0
        %v6884 = vmax.f32 %v6494, 0.0
        %v6885 = vmax.f32 %v6495, 0.0
        %v6886 = vmax.f32 %v6496, 0.0
        %v6887 = vmax.f32 %v6497, 0.0
        %v6888 = vmax.f32 %v6498, 0.0
        %v6889 = vmax.f32 %v6499, 0.0
        %v6890 = vmax.f32 %v6500, 0.0
        %v6891 = vmax.f32 %v6501, 0.0
        %v6892 = vmax.f32 %v6502, 0.0
        %v6893 = vmax.f32 %v6503, 0.0
        %v6894 = vmax.f32 %v6504, 0.0
        %v6895 = vmax.f32 %v6505, 0.0
        %v6896 = vmax.f32 %v6506, 0.0
        %v6897 = vmax.f32 %v6507, 0.0
        %v6898 = vmax.f32 %v6508, 0.0
        %v6899 = vmax.f32 %v6509, 0.0
        %v6900 = vmax.f32 %v6510, 0.0
        %v6901 = vmax.f32 %v6511, 0.0
        %v6902 = vmax.f32 %v6512, 0.0
        %v6903 = vmax.f32 %v6513, 0.0
        %v6904 = vmax.f32 %v6514, 0.0
        %v6905 = vmax.f32 %v6515, 0.0
        %v6906 = vmax.f32 %v6516, 0.0
        %v6907 = vmax.f32 %v6517, 0.0
        %v6908 = vmax.f32 %v6518, 0.0
        %v6909 = vmax.f32 %v6519, 0.0
        %v6910 = vmax.f32 %v6520, 0.0
        %v6911 = vmax.f32 %v6521, 0.0
        %v6912 = vmax.f32 %v6522, 0.0
        %v6913 = vmax.f32 %v6523, 0.0
        %v6914 = vmax.f32 %v6524, 0.0
        %v6915 = vpack.c.bf16 %v6884, %v6883
        %v6916 = vpack.c.bf16 %v6886, %v6885
        %v6917 = vpack.c.bf16 %v6888, %v6887
        %v6918 = vpack.c.bf16 %v6890, %v6889
        %v6919 = vpack.c.bf16 %v6892, %v6891
        %v6920 = vpack.c.bf16 %v6894, %v6893
        %v6921 = vpack.c.bf16 %v6896, %v6895
        %v6922 = vpack.c.bf16 %v6898, %v6897
        %v6923 = vpack.c.bf16 %v6900, %v6899
        %v6924 = vpack.c.bf16 %v6902, %v6901
        %v6925 = vpack.c.bf16 %v6904, %v6903
        %v6926 = vpack.c.bf16 %v6906, %v6905
        %v6927 = vpack.c.bf16 %v6908, %v6907
        %v6928 = vpack.c.bf16 %v6910, %v6909
        %v6929 = vpack.c.bf16 %v6912, %v6911
        %v6930 = vpack.c.bf16 %v6914, %v6913
        %v6947 = vunpack.c.l.b16 %v6067
        %v6948 = vunpack.c.l.b16 %v6068
        %v6949 = vunpack.c.l.b16 %v6069
        %v6950 = vunpack.c.l.b16 %v6070
        %v6951 = vunpack.c.l.b16 %v6071
        %v6952 = vunpack.c.l.b16 %v6072
        %v6953 = vunpack.c.l.b16 %v6073
        %v6954 = vunpack.c.l.b16 %v6074
        %v6955 = vunpack.c.l.b16 %v6075
        %v6956 = vunpack.c.l.b16 %v6076
        %v6957 = vunpack.c.l.b16 %v6077
        %v6958 = vunpack.c.l.b16 %v6078
        %v6959 = vunpack.c.l.b16 %v6079
        %v6960 = vunpack.c.l.b16 %v6080
        %v6961 = vunpack.c.l.b16 %v6081
        %v6962 = vunpack.c.l.b16 %v6082
        %v6963 = vpack.c.b16 %v6948, %v6947
        %v6964 = vpack.c.b16 %v6950, %v6949
        %v6965 = vpack.c.b16 %v6952, %v6951
        %v6966 = vpack.c.b16 %v6954, %v6953
        %v6967 = vpack.c.b16 %v6956, %v6955
        %v6968 = vpack.c.b16 %v6958, %v6957
        %v6969 = vpack.c.b16 %v6960, %v6959
        %v6970 = vpack.c.b16 %v6962, %v6961
        %6979 = vmatpush.bf16.msra.mxu0 %v6970
        %6980 = vmatpush.bf16.msra.mxu0 %v6969
        %6981 = vmatpush.bf16.msra.mxu0 %v6968
        %6982 = vmatpush.bf16.msra.mxu0 %v6967
        %6983 = vmatpush.bf16.msra.mxu0 %v6966
        %6984 = vmatpush.bf16.msra.mxu0 %v6965
        %6985 = vmatpush.bf16.msra.mxu0 %v6964
        %6986 = vmatpush.bf16.msra.mxu0 %v6963
        %6987 = vmatmul.bf16.gmra.mxu0 %v6915
        %v6988 = vpop.f32.mrf.mxu0
        %v6989 = vadd.f32 0.0, %v6988
        %v6990 = vpop.f32.mrf.mxu0
        %v6991 = vadd.f32 0.0, %v6990
        %6992 = vmatmul.bf16.gmra.mxu0 %v6916
        %v6993 = vpop.f32.mrf.mxu0
        %v6994 = vadd.f32 0.0, %v6993
        %v6995 = vpop.f32.mrf.mxu0
        %v6996 = vadd.f32 0.0, %v6995
        %6997 = vmatmul.bf16.gmra.mxu0 %v6917
        %v6998 = vpop.f32.mrf.mxu0
        %v6999 = vadd.f32 0.0, %v6998
        %v7000 = vpop.f32.mrf.mxu0
        %v7001 = vadd.f32 0.0, %v7000
        %7002 = vmatmul.bf16.gmra.mxu0 %v6918
        %v7003 = vpop.f32.mrf.mxu0
        %v7004 = vadd.f32 0.0, %v7003
        %v7005 = vpop.f32.mrf.mxu0
        %v7006 = vadd.f32 0.0, %v7005
        %7007 = vmatmul.bf16.gmra.mxu0 %v6919
        %v7008 = vpop.f32.mrf.mxu0
        %v7009 = vadd.f32 0.0, %v7008
        %v7010 = vpop.f32.mrf.mxu0
        %v7011 = vadd.f32 0.0, %v7010
        %7012 = vmatmul.bf16.gmra.mxu0 %v6920
        %v7013 = vpop.f32.mrf.mxu0
        %v7014 = vadd.f32 0.0, %v7013
        %v7015 = vpop.f32.mrf.mxu0
        %v7016 = vadd.f32 0.0, %v7015
        %7017 = vmatmul.bf16.gmra.mxu0 %v6921
        %v7018 = vpop.f32.mrf.mxu0
        %v7019 = vadd.f32 0.0, %v7018
        %v7020 = vpop.f32.mrf.mxu0
        %v7021 = vadd.f32 0.0, %v7020
        %7022 = vmatmul.bf16.gmra.mxu0 %v6922
        %v7023 = vpop.f32.mrf.mxu0
        %v7024 = vadd.f32 0.0, %v7023
        %v7025 = vpop.f32.mrf.mxu0
        %v7026 = vadd.f32 0.0, %v7025
        %7027 = vmatmul.bf16.gmra.mxu0 %v6923
        %v7028 = vpop.f32.mrf.mxu0
        %v7029 = vadd.f32 0.0, %v7028
        %v7030 = vpop.f32.mrf.mxu0
        %v7031 = vadd.f32 0.0, %v7030
        %7032 = vmatmul.bf16.gmra.mxu0 %v6924
        %v7033 = vpop.f32.mrf.mxu0
        %v7034 = vadd.f32 0.0, %v7033
        %v7035 = vpop.f32.mrf.mxu0
        %v7036 = vadd.f32 0.0, %v7035
        %7037 = vmatmul.bf16.gmra.mxu0 %v6925
        %v7038 = vpop.f32.mrf.mxu0
        %v7039 = vadd.f32 0.0, %v7038
        %v7040 = vpop.f32.mrf.mxu0
        %v7041 = vadd.f32 0.0, %v7040
        %7042 = vmatmul.bf16.gmra.mxu0 %v6926
        %v7043 = vpop.f32.mrf.mxu0
        %v7044 = vadd.f32 0.0, %v7043
        %v7045 = vpop.f32.mrf.mxu0
        %v7046 = vadd.f32 0.0, %v7045
        %7047 = vmatmul.bf16.gmra.mxu0 %v6927
        %v7048 = vpop.f32.mrf.mxu0
        %v7049 = vadd.f32 0.0, %v7048
        %v7050 = vpop.f32.mrf.mxu0
        %v7051 = vadd.f32 0.0, %v7050
        %7052 = vmatmul.bf16.gmra.mxu0 %v6928
        %v7053 = vpop.f32.mrf.mxu0
        %v7054 = vadd.f32 0.0, %v7053
        %v7055 = vpop.f32.mrf.mxu0
        %v7056 = vadd.f32 0.0, %v7055
        %7057 = vmatmul.bf16.gmra.mxu0 %v6929
        %v7058 = vpop.f32.mrf.mxu0
        %v7059 = vadd.f32 0.0, %v7058
        %v7060 = vpop.f32.mrf.mxu0
        %v7061 = vadd.f32 0.0, %v7060
        %7062 = vmatmul.bf16.gmra.mxu0 %v6930
        %v7063 = vpop.f32.mrf.mxu0
        %v7064 = vadd.f32 0.0, %v7063
        %v7065 = vpop.f32.mrf.mxu0
        %v7066 = vadd.f32 0.0, %v7065
        %7067 = vdwg.mxu0
        %v7068 = vadd.f32 %v6851, %v6989
        %v7069 = vadd.f32 %v6852, %v6991
        %v7070 = vadd.f32 %v6853, %v6994
        %v7071 = vadd.f32 %v6854, %v6996
        %v7072 = vadd.f32 %v6855, %v6999
        %v7073 = vadd.f32 %v6856, %v7001
        %v7074 = vadd.f32 %v6857, %v7004
        %v7075 = vadd.f32 %v6858, %v7006
        %v7076 = vadd.f32 %v6859, %v7009
        %v7077 = vadd.f32 %v6860, %v7011
        %v7078 = vadd.f32 %v6861, %v7014
        %v7079 = vadd.f32 %v6862, %v7016
        %v7080 = vadd.f32 %v6863, %v7019
        %v7081 = vadd.f32 %v6864, %v7021
        %v7082 = vadd.f32 %v6865, %v7024
        %v7083 = vadd.f32 %v6866, %v7026
        %v7084 = vadd.f32 %v6867, %v7029
        %v7085 = vadd.f32 %v6868, %v7031
        %v7086 = vadd.f32 %v6869, %v7034
        %v7087 = vadd.f32 %v6870, %v7036
        %v7088 = vadd.f32 %v6871, %v7039
        %v7089 = vadd.f32 %v6872, %v7041
        %v7090 = vadd.f32 %v6873, %v7044
        %v7091 = vadd.f32 %v6874, %v7046
        %v7092 = vadd.f32 %v6875, %v7049
        %v7093 = vadd.f32 %v6876, %v7051
        %v7094 = vadd.f32 %v6877, %v7054
        %v7095 = vadd.f32 %v6878, %v7056
        %v7096 = vadd.f32 %v6879, %v7059
        %v7097 = vadd.f32 %v6880, %v7061
        %v7098 = vadd.f32 %v6881, %v7064
        %v7099 = vadd.f32 %v6882, %v7066
        %v7100 = vmax.f32 %v7068, %v7069
        %v7101 = vmax.f32 %v7100, %v7070
        %v7102 = vmax.f32 %v7101, %v7071
        %v7103 = vmax.f32 %v7102, %v7072
        %v7104 = vmax.f32 %v7103, %v7073
        %v7105 = vmax.f32 %v7104, %v7074
        %v7106 = vmax.f32 %v7105, %v7075
        %v7107 = vrot.slane %v7106, 4
        %v7108 = vmax.f32 %v7106, %v7107
        %v7109 = vrot.slane %v7108, 2
        %v7110 = vmax.f32 %v7108, %v7109
        %v7111 = vrot.slane %v7110, 1
        %v7112 = vmax.f32 %v7110, %v7111
        %v7113 = vmax.f32 %v7076, %v7077
        %v7114 = vmax.f32 %v7113, %v7078
        %v7115 = vmax.f32 %v7114, %v7079
        %v7116 = vmax.f32 %v7115, %v7080
        %v7117 = vmax.f32 %v7116, %v7081
        %v7118 = vmax.f32 %v7117, %v7082
        %v7119 = vmax.f32 %v7118, %v7083
        %v7120 = vrot.slane %v7119, 4
        %v7121 = vmax.f32 %v7119, %v7120
        %v7122 = vrot.slane %v7121, 2
        %v7123 = vmax.f32 %v7121, %v7122
        %v7124 = vrot.slane %v7123, 1
        %v7125 = vmax.f32 %v7123, %v7124
        %v7126 = vmax.f32 %v7084, %v7085
        %v7127 = vmax.f32 %v7126, %v7086
        %v7128 = vmax.f32 %v7127, %v7087
        %v7129 = vmax.f32 %v7128, %v7088
        %v7130 = vmax.f32 %v7129, %v7089
        %v7131 = vmax.f32 %v7130, %v7090
        %v7132 = vmax.f32 %v7131, %v7091
        %v7133 = vrot.slane %v7132, 4
        %v7134 = vmax.f32 %v7132, %v7133
        %v7135 = vrot.slane %v7134, 2
        %v7136 = vmax.f32 %v7134, %v7135
        %v7137 = vrot.slane %v7136, 1
        %v7138 = vmax.f32 %v7136, %v7137
        %v7139 = vmax.f32 %v7092, %v7093
        %v7140 = vmax.f32 %v7139, %v7094
        %v7141 = vmax.f32 %v7140, %v7095
        %v7142 = vmax.f32 %v7141, %v7096
        %v7143 = vmax.f32 %v7142, %v7097
        %v7144 = vmax.f32 %v7143, %v7098
        %v7145 = vmax.f32 %v7144, %v7099
        %v7146 = vrot.slane %v7145, 4
        %v7147 = vmax.f32 %v7145, %v7146
        %v7148 = vrot.slane %v7147, 2
        %v7149 = vmax.f32 %v7147, %v7148
        %v7150 = vrot.slane %v7149, 1
        %v7151 = vmax.f32 %v7149, %v7150
        %v7152 = vmax.f32 %v7112, 0.0
        %v7153 = vmax.f32 %v7125, 0.0
        %v7154 = vmax.f32 %v7138, 0.0
        %v7155 = vmax.f32 %v7151, 0.0
        %v7156 = vpack.c.bf16 %v7152, %v7152
        %v7157 = vpack.c.bf16 %v7153, %v7153
        %v7158 = vpack.c.bf16 %v7154, %v7154
        %v7159 = vpack.c.bf16 %v7155, %v7155
        %v7160 = vld [vmem:[#allocation13] sm:$0xf]
        %v7161 = vld [vmem:[#allocation13 + $0x4] sm:$0xf]
        %v7162 = vld [vmem:[#allocation13 + $0x8] sm:$0xf]
        %v7163 = vld [vmem:[#allocation13 + $0xc] sm:$0xf]
        %v7164 = vld [vmem:[#allocation13 + $0x10] sm:$0xf]
        %v7165 = vld [vmem:[#allocation13 + $0x14] sm:$0xf]
        %v7166 = vld [vmem:[#allocation13 + $0x18] sm:$0xf]
        %v7167 = vld [vmem:[#allocation13 + $0x1c] sm:$0xf]
        %v7168 = vld [vmem:[#allocation13 + $0x20] sm:$0xf]
        %v7169 = vld [vmem:[#allocation13 + $0x24] sm:$0xf]
        %v7170 = vld [vmem:[#allocation13 + $0x28] sm:$0xf]
        %v7171 = vld [vmem:[#allocation13 + $0x2c] sm:$0xf]
        %v7172 = vld [vmem:[#allocation13 + $0x30] sm:$0xf]
        %v7173 = vld [vmem:[#allocation13 + $0x34] sm:$0xf]
        %v7174 = vld [vmem:[#allocation13 + $0x38] sm:$0xf]
        %v7175 = vld [vmem:[#allocation13 + $0x3c] sm:$0xf]
        %v7176 = vld [vmem:[%s16] sm:$0x1]
        %v7178 = vperm.slane %v7176, 0
        %v7184 = vunpack.c.l.b16 %v7156
        %v7185 = vunpack.c.l.b16 %v7157
        %v7186 = vunpack.c.l.b16 %v7158
        %v7187 = vunpack.c.l.b16 %v7159
        %v7188 = vsel %vm2889, %v7185, %v7184
        %v7189 = vsel %vm2891, %v7186, %v7188
        %v7190 = vsel %vm2893, %v7187, %v7189
        %v7191 = vpack.c.b16 %v7190, %v7190
        %v7209 = vunpack.c.l.b16 %v7160
        %v7210 = vunpack.c.l.b16 %v7161
        %v7211 = vunpack.c.l.b16 %v7162
        %v7212 = vunpack.c.l.b16 %v7163
        %v7213 = vunpack.c.l.b16 %v7164
        %v7214 = vunpack.c.l.b16 %v7165
        %v7215 = vunpack.c.l.b16 %v7166
        %v7216 = vunpack.c.l.b16 %v7167
        %v7217 = vunpack.c.l.b16 %v7168
        %v7218 = vunpack.c.l.b16 %v7169
        %v7219 = vunpack.c.l.b16 %v7170
        %v7220 = vunpack.c.l.b16 %v7171
        %v7221 = vunpack.c.l.b16 %v7172
        %v7222 = vunpack.c.l.b16 %v7173
        %v7223 = vunpack.c.l.b16 %v7174
        %v7224 = vunpack.c.l.b16 %v7175
        %v7225 = vpack.c.b16 %v7210, %v7209
        %v7226 = vpack.c.b16 %v7212, %v7211
        %v7227 = vpack.c.b16 %v7214, %v7213
        %v7228 = vpack.c.b16 %v7216, %v7215
        %v7229 = vpack.c.b16 %v7218, %v7217
        %v7230 = vpack.c.b16 %v7220, %v7219
        %v7231 = vpack.c.b16 %v7222, %v7221
        %v7232 = vpack.c.b16 %v7224, %v7223
        %7241 = vmatpush.bf16.msra.mxu0 %v7232
        %7242 = vmatpush.bf16.msra.mxu0 %v7231
        %7243 = vmatpush.bf16.msra.mxu0 %v7230
        %7244 = vmatpush.bf16.msra.mxu0 %v7229
        %7245 = vmatpush.bf16.msra.mxu0 %v7228
        %7246 = vmatpush.bf16.msra.mxu0 %v7227
        %7247 = vmatpush.bf16.msra.mxu0 %v7226
        %7248 = vmatpush.bf16.msra.mxu0 %v7225
        %7249 = vmatmul.bf16.gmra.mxu0 %v7191
        %v7250 = vpop.f32.mrf.mxu0
        %v7251 = vadd.f32 %v7178, %v7250
        %v7252 = vpop.f32.mrf.mxu0
        %7253 = vdwg.mxu0
        %7254 = vst [vmem:[%s658] sm:$0xf] %v7251
        %s7255 = sand.u32 %s405, 1
        %s7256 = scalar_lea.sflag [#allocation4], %s7255
        %s7257 = sand.u32 %s405, 1
        %s7258 = smul.addr %s7257, 4
        %s7259 = scalar_lea.vmem [#allocation14], %s7258
        // Predicated region
        $region117: #{tpu_custom_call.1} parent=87 // pred_check
          %p7260 = pneg %p415
        $region118: #{tpu_custom_call.1} parent=87 // pred_check_branch
          %7262 = sbr.rel (%p7260) target = $region120
        $region119: #{tpu_custom_call.1} parent=87 // pred_region
          %7264 = vsyncadd %s7256, 0
          %s7265 = smul.addr %s35, 4
          %s7266 = scalar_lea.hbm %s17, %s7265
          %s7268 = sshll.u32 %s7259, 4
          %s7269 = int_to_ptr.vmem [resolvable:$true] %s7268
          %s7270 = sshll.u32 %s7266, 4
          %s7271 = int_to_ptr.hbm [resolvable:$true] %s7270
          %7273 = dma.vmem_to_hbm [thread:$0]  %s7269, 64, %s7271, %s7256
        $region120: #{tpu_custom_call.1} parent=87 // pred_fallthru
          _
      $region88: #{tpu_custom_call.1} parent=5 // pred_fallthru
        _
      %p7274 = scmp.le.s32.totalorder 2, %s30
      // Predicated region
      $region121: #{tpu_custom_call.1} parent=5 // pred_check
        %p7275 = pneg %p7274
      $region122: #{tpu_custom_call.1} parent=5 // pred_check_branch
        %7277 = sbr.rel (%p7275) target = $region124
      $region123: #{tpu_custom_call.1} parent=5 // pred_region
        %s7278 = ssub.s32 %s30, 2
        // Predicated region
        $region125: #{tpu_custom_call.1} parent=123 // pred_check
          %p7279 = pneg %p421
        $region126: #{tpu_custom_call.1} parent=123 // pred_check_branch
          %7281 = sbr.rel (%p7279) target = $region128
        $region127: #{tpu_custom_call.1} parent=123 // pred_region
          %s7282 = sand.u32 %s406, 1
          %s7283 = scalar_lea.sflag [#allocation4], %s7282
          %s7284 = sand.u32 %s406, 1
          %s7285 = smul.addr %s7284, 4
          %s7286 = scalar_lea.vmem [#allocation14], %s7285
          %7288 = dma.done %s7283, 64
        $region128: #{tpu_custom_call.1} parent=123 // pred_fallthru
          _
      $region124: #{tpu_custom_call.1} parent=5 // pred_fallthru
        _
    $region6: #{tpu_custom_call.1} parent=1 // loop_footer
      %s34 = sadd.s32 1, %s30
    $region7: #{tpu_custom_call.1} parent=1 // loop_footer_branch
      %29 = sbr.rel target = $region3
    $region8: #{tpu_custom_call.1} parent=1 // loop_exit
      _
    %7289 = vsyncpa [#allocation3], 1
    %s7290 = scalar_lea.sflag [#allocation3], 1
    %7291 = vsyncpa %s7290, 1
    %7292 = vsyncpa [#allocation6], 1
    %7293 = vsyncpa [#allocation9], 1
    %7294 = vsyncpa [#allocation12], 1
    %7295 = vsyncpa [#allocation4], 1
    %s7296 = scalar_lea.sflag [#allocation4], 1
    %7297 = vsyncpa %s7296, 1

</llo_original>
